<compile_context>
chip_gen: v5e
topology: v5e:2x2
jax: 0.10.0
libtpu: 0.0.40
codegen_flags: <defaults>
</compile_context>

<pallas_src>
import numpy as np
import jax
import jax.numpy as jnp
from jax.experimental import pallas as pl
from jax.experimental.pallas import tpu as pltpu

# ----------------------- static hparams -----------------------
HID = 32              # hparams['hidden'] == input_size == output_size
EMB = 8               # hparams['emb_dims']
N_NODES = 64          # number of graph nodes (2 graphs x 32 nodes)
D1 = HID + 1          # hidden + appended mean column
CS = 8                # source-chunk size for the pairwise stage
NCHUNK = N_NODES // CS

R = 1.5               # hparams['r'] (float -> property returns it directly)
GRAV_W = 1.0          # hparams['grav_weight'] (float)
SELF_LOOP = True      # hparams['self_loop']
USE_ATTENTION = True  # hparams['use_attention_weight']
NORM_EMBEDDING = True # hparams['norm_embedding']
NORM_HIDDEN = False   # hparams['norm_hidden']
LN_EPS = 1e-5
# aggs = ['add']  (single scatter_add aggregation)
# TODO(synk): radius_graph's max_num_neighbors cap and torch.unique dedup are
#             not applied in the dense-adjacency formulation.
# TODO(synk): edge_index is returned as a dense [N, N] adjacency mask; a
#             variable-length edge list is not expressible as a static TPU output.


def _layernorm(x, g, b):
    mu = jnp.mean(x, axis=-1, keepdims=True)
    var = jnp.mean((x - mu) ** 2, axis=-1, keepdims=True)
    return (x - mu) * jax.lax.rsqrt(var + LN_EPS) * g + b


# ======================= fused FancyConv kernel =======================
def fancyconv_kernel(h_ref, bcol_ref, brow_ref,
                     ws1_ref, ws3_ref, bs3_ref, wc1_ref, wf1h_ref,
                     wslab_ref, vecs_ref,
                     out_ref, adj_ref,
                     pcs_ref, rst_ref, wst_ref):
    h = h_ref[...]                                       # [N, HID]
    m = jnp.mean(h, axis=-1, keepdims=True)              # mean(dim=1)
    haug = jnp.concatenate([h, m], axis=-1)              # [N, D1]

    # ---- unpack packed parameter slabs (static slices, zero DMA cost) ----
    vecs = vecs_ref[...]                                 # [16, HID]
    (bs1, gs1, es1, bs2, gs2, es2,
     b1, g1, e1, b2,
     bf1, gf1, ef1, bf2, gf2, ef2) = [vecs[i:i + 1, :] for i in range(16)]
    wslab = wslab_ref[...]                               # [4*HID, HID]
    ws2 = wslab[0:HID, :]
    w2 = wslab[HID:2 * HID, :]
    wf1a = wslab[2 * HID:3 * HID, :]
    wf2 = wslab[3 * HID:4 * HID, :]

    # ---- spatial_network: (Linear+LN+ReLU) x2, Linear  (kept identical to
    #      the reference op sequence: feeds the bit-exact adjacency check) ----
    x = jnp.dot(haug, ws1_ref[...], preferred_element_type=jnp.float32) + bs1
    x = jnp.maximum(_layernorm(x, gs1, es1), 0.0)
    x = jnp.dot(x, ws2, preferred_element_type=jnp.float32) + bs2
    x = jnp.maximum(_layernorm(x, gs2, es2), 0.0)
    sp = jnp.dot(x, ws3_ref[...], preferred_element_type=jnp.float32) + bs3_ref[...]
    if NORM_EMBEDDING:                                   # F.normalize(p=2)
        nrm = jnp.sqrt(jnp.sum(sp * sp, axis=-1, keepdims=True))
        sp = sp / jnp.maximum(nrm, 1e-12)

    # ---- dense radius graph + gravity attention (symmetric [N, N]) ----
    diff = sp[:, None, :] - sp[None, :, :]               # [N, N, EMB]
    d = jnp.sum(diff * diff, axis=-1)                    # [N, N]
    mask = (bcol_ref[...] == brow_ref[...]) & (d <= (R * R))
    if not SELF_LOOP:
        rows = jax.lax.broadcasted_iota(jnp.int32, (N_NODES, N_NODES), 0)
        cols = jax.lax.broadcasted_iota(jnp.int32, (N_NODES, N_NODES), 1)
        mask = mask & (rows != cols)
    if USE_ATTENTION:
        attn = jnp.exp(-GRAV_W * d / (R * R))
    else:
        attn = jnp.ones_like(d)
    wmat = mask.astype(jnp.float32) * attn               # [N, N] edge weights
    wsum = jnp.sum(wmat, axis=1, keepdims=True)          # [N, 1] weighted degree
    adj_ref[...] = mask.astype(jnp.int32)

    # ---- conv_network first layer on every (target, source) pair ----
    # pre[t,s,:] = fts[s]@w1a + (fts[s]-fts[t])@w1b + b1 = P[s] - Q[t]
    # (single fused [D1, 2*HID] matmul, then split)
    PQ = jnp.dot(haug, wc1_ref[...], preferred_element_type=jnp.float32)   # [N, 2*HID]
    P = PQ[:, :HID] + b1
    Q = PQ[:, HID:]
    # LayerNorm of (P[s]-Q[t]) via hoisted per-node stats + one Gram matmul:
    #   mean[t,s] = mP[s]-mQ[t];  var[t,s] = vP[s]+vQ[t] - (2/HID)*Pc[s].Qc[t]
    mP = jnp.mean(P, axis=-1, keepdims=True)
    Pc = P - mP
    vP = jnp.mean(Pc * Pc, axis=-1, keepdims=True)
    mQ = jnp.mean(Q, axis=-1, keepdims=True)
    Qc = Q - mQ
    vQ = jnp.mean(Qc * Qc, axis=-1, keepdims=True)
    a_aug = jnp.concatenate([Pc * (-2.0 / HID), vP, jnp.ones_like(vP)], axis=1)  # [N, HID+2]
    b_aug = jnp.concatenate([Qc, jnp.ones_like(vQ), vQ], axis=1)                 # [N, HID+2]
    var_st = jax.lax.dot_general(a_aug, b_aug, (((1,), (1,)), ((), ())),
                                 preferred_element_type=jnp.float32)             # [src, tgt]
    rstd_st = jax.lax.rsqrt(jnp.maximum(var_st, 0.0) + LN_EPS)                   # [src, tgt]

    # Stage the source-indexed arrays in VMEM scratch so the streaming loop can
    # slice them with pl.ds (LN gamma pre-folded into Pc/Qc).
    pcs_ref[...] = Pc * g1                               # [N, HID]
    rst_ref[...] = rstd_st                               # [N, N]  (rows = sources)
    wst_ref[...] = wmat                                  # [N, N]  (symmetric)
    qcg = Qc * g1                                        # [N, HID] (targets)

    # ---- streamed pairwise stage: relu(LN(...)) + attention-weighted add ----
    # acc[t,:] = sum_s w[t,s] * relu((Pc[s]-Qc[t])*g*rstd[t,s] + e1)
    def body(c, acc):
        off = pl.multiple_of(c * CS, CS)
        pcg = pcs_ref[pl.ds(off, CS), :]                 # [CS, HID]
        rs = rst_ref[pl.ds(off, CS), :]                  # [CS, N]
        ww = wst_ref[pl.ds(off, CS), :]                  # [CS, N]
        z = (pcg[:, None, :] - qcg[None, :, :]) * rs[:, :, None] + e1
        hh = jnp.maximum(z, 0.0)                         # [CS, N, HID]
        return acc + jnp.sum(hh * ww[:, :, None], axis=0)

    acc = jax.lax.fori_loop(0, NCHUNK, body,
                            jnp.zeros((N_NODES, HID), jnp.float32))

    # conv_network second layer, hoisted out of the pairwise sum
    agg = jnp.dot(acc, w2, preferred_element_type=jnp.float32) + b2 * wsum   # [N, HID]

    # ---- feature_network on concat([agg, haug]) (split first-layer weight) ----
    z = (jnp.dot(agg, wf1a, preferred_element_type=jnp.float32)
         + jnp.dot(haug, wf1h_ref[...], preferred_element_type=jnp.float32)
         + bf1)
    z = jnp.maximum(_layernorm(z, gf1, ef1), 0.0)
    z = jnp.dot(z, wf2, preferred_element_type=jnp.float32) + bf2
    z = jnp.maximum(_layernorm(z, gf2, ef2), 0.0)
    out_ref[...] = z


# ======================= wrappers =======================
def _full_spec(shape):
    return pl.BlockSpec(shape, lambda i, _nd=len(shape): (0,) * _nd)


def fancy_conv_pallas(hidden, bcol, brow, kparams):
    args = (hidden, bcol, brow) + tuple(kparams)
    return pl.pallas_call(
        fancyconv_kernel,
        grid=(1,),
        in_specs=[_full_spec(a.shape) for a in args],
        out_specs=[pl.BlockSpec((N_NODES, HID), lambda i: (0, 0)),
                   pl.BlockSpec((N_NODES, N_NODES), lambda i: (0, 0))],
        out_shape=(jax.ShapeDtypeStruct((N_NODES, HID), jnp.float32),
                   jax.ShapeDtypeStruct((N_NODES, N_NODES), jnp.int32)),
        scratch_shapes=[pltpu.VMEM((N_NODES, HID), jnp.float32),
                        pltpu.VMEM((N_NODES, N_NODES), jnp.float32),
                        pltpu.VMEM((N_NODES, N_NODES), jnp.float32)],
        compiler_params=pltpu.CompilerParams(
            dimension_semantics=("arbitrary",)),
    )(*args)


@jax.jit
def fancy_conv_forward(hidden, batch, kparams):
    # current_epoch only modulates r / grav_weight when they are schedules;
    # here they are floats, so it is a no-op (matches the PyTorch property).
    bcol = batch.reshape(N_NODES, 1).astype(jnp.int32)
    brow = batch.reshape(1, N_NODES).astype(jnp.int32)
    return fancy_conv_pallas(hidden, bcol, brow, kparams)


# ======================= deterministic params =======================
def _linear_init(key, fan_in, fan_out):
    kw, kb = jax.random.split(key)
    bound = 1.0 / np.sqrt(fan_in)
    w = jax.random.uniform(kw, (fan_in, fan_out), jnp.float32, -bound, bound)
    b = jax.random.uniform(kb, (1, fan_out), jnp.float32, -bound, bound)
    return w, b


def init_params(key):
    keys = jax.random.split(key, 8)
    ones = lambda n: jnp.ones((1, n), jnp.float32)
    zeros = lambda n: jnp.zeros((1, n), jnp.float32)

    # spatial_network: (D1 -> HID, LN, ReLU) x2, HID -> EMB
    ws1, bs1 = _linear_init(keys[0], D1, HID)
    ws2, bs2 = _linear_init(keys[1], HID, HID)
    ws3, bs3 = _linear_init(keys[2], HID, EMB)
    pre_params = [ws1, bs1, ones(HID), zeros(HID),
                  ws2, bs2, ones(HID), zeros(HID),
                  ws3, bs3]

    # conv_network: Linear(2*D1 -> HID)+LN+ReLU, Linear(HID -> HID)
    w1_full, b1 = _linear_init(keys[3], 2 * D1, HID)
    w1a = w1_full[0::2, :]   # multiplies x = fts[start]
    w1b = w1_full[1::2, :]   # multiplies x1 = fts[start] - fts[end]
    w2, b2 = _linear_init(keys[4], HID, HID)

    # feature_network: Linear(HID + D1 -> HID)+LN+ReLU, Linear(HID->HID)+LN+ReLU
    wf1_full, bf1 = _linear_init(keys[5], HID + D1, HID)
    wf1a = wf1_full[:HID, :]   # multiplies aggregated_hidden
    wf1h = wf1_full[HID:, :]   # multiplies hidden_features (+mean col)
    wf2, bf2 = _linear_init(keys[6], HID, HID)

    conv_params = [w1a, w1b, b1, ones(HID), zeros(HID), w2, b2,
                   wf1a, wf1h, bf1, ones(HID), zeros(HID),
                   wf2, bf2, ones(HID), zeros(HID)]
    return pre_params, conv_params


def pack_kernel_params(pre_params, conv_params):
    """Pack the many tiny parameter tensors into a few kernel-friendly slabs."""
    (ws1, bs1, gs1, es1, ws2, bs2, gs2, es2, ws3, bs3) = pre_params
    (w1a, w1b, b1, g1, e1, w2, b2,
     wf1a, wf1h, bf1, gf1, ef1, wf2, bf2, gf2, ef2) = conv_params
    wc1 = jnp.concatenate([w1a + w1b, w1b], axis=1)          # [D1, 2*HID]
    wslab = jnp.concatenate([ws2, w2, wf1a, wf2], axis=0)    # [4*HID, HID]
    vecs = jnp.concatenate([bs1, gs1, es1, bs2, gs2, es2,
                            b1, g1, e1, b2,
                            bf1, gf1, ef1, bf2, gf2, ef2], axis=0)  # [16, HID]
    return (ws1, ws3, bs3, wc1, wf1h, wslab, vecs)


# ======================= pure-JAX reference =======================
def reference(hidden, batch, pre_params, conv_params):
    (ws1, bs1, gs1, es1, ws2, bs2, gs2, es2, ws3, bs3) = pre_params
    (w1a, w1b, b1, g1, e1, w2, b2,
     wf1a, wf1h, bf1, gf1, ef1, wf2, bf2, gf2, ef2) = conv_params

    haug = jnp.concatenate([hidden, hidden.mean(axis=-1, keepdims=True)], axis=-1)
    x = jnp.maximum(_layernorm(haug @ ws1 + bs1, gs1, es1), 0.0)
    x = jnp.maximum(_layernorm(x @ ws2 + bs2, gs2, es2), 0.0)
    sp = x @ ws3 + bs3
    if NORM_EMBEDDING:
        sp = sp / jnp.maximum(jnp.linalg.norm(sp, axis=-1, keepdims=True), 1e-12)

    d = jnp.sum((sp[:, None, :] - sp[None, :, :]) ** 2, axis=-1)
    mask = (batch[:, None] == batch[None, :]) & (d <= R * R)
    if not SELF_LOOP:
        mask = mask & ~jnp.eye(N_NODES, dtype=bool)
    attn = jnp.exp(-GRAV_W * d / (R * R)) if USE_ATTENTION else jnp.ones_like(d)

    A = haug @ w1a + b1
    Bs = haug @ w1b
    pre = A[None, :, :] + Bs[None, :, :] - Bs[:, None, :]
    h1 = jnp.maximum(_layernorm(pre, g1, e1), 0.0)
    msgs = jnp.einsum("tsh,hk->tsk", h1, w2) + b2
    agg = jnp.sum(msgs * (mask.astype(jnp.float32) * attn)[:, :, None], axis=1)

    z = jnp.maximum(_layernorm(agg @ wf1a + haug @ wf1h + bf1, gf1, ef1), 0.0)
    z = jnp.maximum(_layernorm(z @ wf2 + bf2, gf2, ef2), 0.0)
    return z, mask.astype(jnp.int32)


# ======================= main =======================
if __name__ == "__main__":
    key = jax.random.PRNGKey(0)
    k_x, k_p = jax.random.split(key)
    hidden_features = jax.random.normal(k_x, (N_NODES, HID), jnp.float32)
    batch = jnp.concatenate([jnp.zeros(N_NODES // 2, jnp.int32),
                             jnp.ones(N_NODES // 2, jnp.int32)])
    pre_params, conv_params = init_params(k_p)
    kparams = pack_kernel_params(pre_params, conv_params)

    out, adj = fancy_conv_forward(hidden_features, batch, kparams)
    jax.block_until_ready((out, adj))

    ref_out, ref_adj = reference(hidden_features, batch, pre_params, conv_params)
    np.testing.assert_allclose(np.asarray(out), np.asarray(ref_out),
                               rtol=1e-3, atol=1e-3)
    np.testing.assert_array_equal(np.asarray(adj), np.asarray(ref_adj))
    print("KERNEL_OK")
</pallas_src>

<mosaic_0001>
module attributes {stable_mosaic.version = 11 : i64} {
  func.func @fancyconv_kernel(%arg0: i32, %arg1: memref<64x32xf32, #tpu.memory_space<vmem>>, %arg2: memref<64x1xi32, #tpu.memory_space<vmem>>, %arg3: memref<1x64xi32, #tpu.memory_space<vmem>>, %arg4: memref<33x32xf32, #tpu.memory_space<vmem>>, %arg5: memref<32x8xf32, #tpu.memory_space<vmem>>, %arg6: memref<1x8xf32, #tpu.memory_space<vmem>>, %arg7: memref<33x64xf32, #tpu.memory_space<vmem>>, %arg8: memref<33x32xf32, #tpu.memory_space<vmem>>, %arg9: memref<128x32xf32, #tpu.memory_space<vmem>>, %arg10: memref<16x32xf32, #tpu.memory_space<vmem>>, %arg11: memref<64x32xf32, #tpu.memory_space<vmem>>, %arg12: memref<64x64xi32, #tpu.memory_space<vmem>>, %arg13: memref<64x32xf32, #tpu.memory_space<vmem>>, %arg14: memref<64x64xf32, #tpu.memory_space<vmem>>, %arg15: memref<64x64xf32, #tpu.memory_space<vmem>>) attributes {dimension_semantics = [#tpu.dimension_semantics<arbitrary>], iteration_bounds = array<i64: 1>, scalar_prefetch = 0 : i64, scratch_operands = 3 : i64, tpu.core_type = #tpu.core_type<tc>, window_params = [{pipeline_mode = #tpu.pipeline_mode<synchronous>, transform_indices = @transform_0, window_bounds = array<i64: 64, 32>}, {pipeline_mode = #tpu.pipeline_mode<synchronous>, transform_indices = @transform_1, window_bounds = array<i64: 64, 1>}, {pipeline_mode = #tpu.pipeline_mode<synchronous>, transform_indices = @transform_2, window_bounds = array<i64: 1, 64>}, {pipeline_mode = #tpu.pipeline_mode<synchronous>, transform_indices = @transform_3, window_bounds = array<i64: 33, 32>}, {pipeline_mode = #tpu.pipeline_mode<synchronous>, transform_indices = @transform_4, window_bounds = array<i64: 32, 8>}, {pipeline_mode = #tpu.pipeline_mode<synchronous>, transform_indices = @transform_5, window_bounds = array<i64: 1, 8>}, {pipeline_mode = #tpu.pipeline_mode<synchronous>, transform_indices = @transform_6, window_bounds = array<i64: 33, 64>}, {pipeline_mode = #tpu.pipeline_mode<synchronous>, transform_indices = @transform_7, window_bounds = array<i64: 33, 32>}, {pipeline_mode = #tpu.pipeline_mode<synchronous>, transform_indices = @transform_8, window_bounds = array<i64: 128, 32>}, {pipeline_mode = #tpu.pipeline_mode<synchronous>, transform_indices = @transform_9, window_bounds = array<i64: 16, 32>}, {pipeline_mode = #tpu.pipeline_mode<synchronous>, transform_indices = @transform_10, window_bounds = array<i64: 64, 32>}, {pipeline_mode = #tpu.pipeline_mode<synchronous>, transform_indices = @transform_11, window_bounds = array<i64: 64, 64>}]} {
    %c0 = arith.constant 0 : index
    %c0_0 = arith.constant 0 : index
    %0 = vector.load %arg1[%c0, %c0_0] : memref<64x32xf32, #tpu.memory_space<vmem>>, vector<64x32xf32>
    %cst = arith.constant dense<0.000000e+00> : vector<64xf32>
    %1 = vector.multi_reduction <add>, %0, %cst [1] : vector<64x32xf32> to vector<64xf32>
    %2 = vector.shape_cast %1 : vector<64xf32> to vector<64x1xf32>
    %cst_1 = arith.constant 3.200000e+01 : f32
    %3 = vector.broadcast %cst_1 : f32 to vector<64x1xf32>
    %4 = arith.divf %2, %3 : vector<64x1xf32>
    %5 = tpu.concatenate %0, %4 in 1 : vector<64x32xf32>, vector<64x1xf32> -> vector<64x33xf32>
    %c0_2 = arith.constant 0 : index
    %c0_3 = arith.constant 0 : index
    %6 = vector.load %arg10[%c0_2, %c0_3] : memref<16x32xf32, #tpu.memory_space<vmem>>, vector<16x32xf32>
    %7 = vector.extract_strided_slice %6 {offsets = [0, 0], sizes = [1, 32], strides = [1, 1]} : vector<16x32xf32> to vector<1x32xf32>
    %8 = vector.extract_strided_slice %6 {offsets = [1, 0], sizes = [1, 32], strides = [1, 1]} : vector<16x32xf32> to vector<1x32xf32>
    %9 = vector.extract_strided_slice %6 {offsets = [2, 0], sizes = [1, 32], strides = [1, 1]} : vector<16x32xf32> to vector<1x32xf32>
    %10 = vector.extract_strided_slice %6 {offsets = [3, 0], sizes = [1, 32], strides = [1, 1]} : vector<16x32xf32> to vector<1x32xf32>
    %11 = vector.extract_strided_slice %6 {offsets = [4, 0], sizes = [1, 32], strides = [1, 1]} : vector<16x32xf32> to vector<1x32xf32>
    %12 = vector.extract_strided_slice %6 {offsets = [5, 0], sizes = [1, 32], strides = [1, 1]} : vector<16x32xf32> to vector<1x32xf32>
    %13 = vector.extract_strided_slice %6 {offsets = [6, 0], sizes = [1, 32], strides = [1, 1]} : vector<16x32xf32> to vector<1x32xf32>
    %14 = vector.extract_strided_slice %6 {offsets = [7, 0], sizes = [1, 32], strides = [1, 1]} : vector<16x32xf32> to vector<1x32xf32>
    %15 = vector.extract_strided_slice %6 {offsets = [8, 0], sizes = [1, 32], strides = [1, 1]} : vector<16x32xf32> to vector<1x32xf32>
    %16 = vector.extract_strided_slice %6 {offsets = [9, 0], sizes = [1, 32], strides = [1, 1]} : vector<16x32xf32> to vector<1x32xf32>
    %17 = vector.extract_strided_slice %6 {offsets = [10, 0], sizes = [1, 32], strides = [1, 1]} : vector<16x32xf32> to vector<1x32xf32>
    %18 = vector.extract_strided_slice %6 {offsets = [11, 0], sizes = [1, 32], strides = [1, 1]} : vector<16x32xf32> to vector<1x32xf32>
    %19 = vector.extract_strided_slice %6 {offsets = [12, 0], sizes = [1, 32], strides = [1, 1]} : vector<16x32xf32> to vector<1x32xf32>
    %20 = vector.extract_strided_slice %6 {offsets = [13, 0], sizes = [1, 32], strides = [1, 1]} : vector<16x32xf32> to vector<1x32xf32>
    %21 = vector.extract_strided_slice %6 {offsets = [14, 0], sizes = [1, 32], strides = [1, 1]} : vector<16x32xf32> to vector<1x32xf32>
    %22 = vector.extract_strided_slice %6 {offsets = [15, 0], sizes = [1, 32], strides = [1, 1]} : vector<16x32xf32> to vector<1x32xf32>
    %c0_4 = arith.constant 0 : index
    %c0_5 = arith.constant 0 : index
    %23 = vector.load %arg9[%c0_4, %c0_5] : memref<128x32xf32, #tpu.memory_space<vmem>>, vector<128x32xf32>
    %24 = vector.extract_strided_slice %23 {offsets = [0, 0], sizes = [32, 32], strides = [1, 1]} : vector<128x32xf32> to vector<32x32xf32>
    %25 = vector.extract_strided_slice %23 {offsets = [32, 0], sizes = [32, 32], strides = [1, 1]} : vector<128x32xf32> to vector<32x32xf32>
    %26 = vector.extract_strided_slice %23 {offsets = [64, 0], sizes = [32, 32], strides = [1, 1]} : vector<128x32xf32> to vector<32x32xf32>
    %27 = vector.extract_strided_slice %23 {offsets = [96, 0], sizes = [32, 32], strides = [1, 1]} : vector<128x32xf32> to vector<32x32xf32>
    %c0_6 = arith.constant 0 : index
    %c0_7 = arith.constant 0 : index
    %28 = vector.load %arg4[%c0_6, %c0_7] : memref<33x32xf32, #tpu.memory_space<vmem>>, vector<33x32xf32>
    %cst_8 = arith.constant dense<0.000000e+00> : vector<64x32xf32>
    %29 = tpu.matmul %5, %28, %cst_8 {dimension_numbers = #tpu.dot_dimension_numbers<[1], [0], [0], [1], [0, 0, 1, 1], [], []>} : vector<64x33xf32>, vector<33x32xf32>, vector<64x32xf32> -> vector<64x32xf32>
    %30 = vector.broadcast %7 : vector<1x32xf32> to vector<64x32xf32>
    %31 = arith.addf %29, %30 : vector<64x32xf32>
    %cst_9 = arith.constant dense<0.000000e+00> : vector<64xf32>
    %32 = vector.multi_reduction <add>, %31, %cst_9 [1] : vector<64x32xf32> to vector<64xf32>
    %33 = vector.shape_cast %32 : vector<64xf32> to vector<64x1xf32>
    %cst_10 = arith.constant 3.200000e+01 : f32
    %34 = vector.broadcast %cst_10 : f32 to vector<64x1xf32>
    %35 = arith.divf %33, %34 : vector<64x1xf32>
    %36 = vector.broadcast %35 : vector<64x1xf32> to vector<64x32xf32>
    %37 = arith.subf %31, %36 : vector<64x32xf32>
    %38 = arith.mulf %37, %37 : vector<64x32xf32>
    %cst_11 = arith.constant dense<0.000000e+00> : vector<64xf32>
    %39 = vector.multi_reduction <add>, %38, %cst_11 [1] : vector<64x32xf32> to vector<64xf32>
    %40 = vector.shape_cast %39 : vector<64xf32> to vector<64x1xf32>
    %cst_12 = arith.constant 3.200000e+01 : f32
    %41 = vector.broadcast %cst_12 : f32 to vector<64x1xf32>
    %42 = arith.divf %40, %41 : vector<64x1xf32>
    %43 = vector.broadcast %35 : vector<64x1xf32> to vector<64x32xf32>
    %44 = arith.subf %31, %43 : vector<64x32xf32>
    %cst_13 = arith.constant 9.99999974E-6 : f32
    %45 = vector.broadcast %cst_13 : f32 to vector<64x1xf32>
    %46 = arith.addf %42, %45 : vector<64x1xf32>
    %47 = math.rsqrt %46 : vector<64x1xf32>
    %48 = vector.broadcast %47 : vector<64x1xf32> to vector<64x32xf32>
    %49 = arith.mulf %44, %48 : vector<64x32xf32>
    %50 = vector.broadcast %8 : vector<1x32xf32> to vector<64x32xf32>
    %51 = arith.mulf %49, %50 : vector<64x32xf32>
    %52 = vector.broadcast %9 : vector<1x32xf32> to vector<64x32xf32>
    %53 = arith.addf %51, %52 : vector<64x32xf32>
    %cst_14 = arith.constant 0.000000e+00 : f32
    %54 = vector.broadcast %cst_14 : f32 to vector<64x32xf32>
    %55 = arith.maximumf %53, %54 : vector<64x32xf32>
    %cst_15 = arith.constant dense<0.000000e+00> : vector<64x32xf32>
    %56 = tpu.matmul %55, %24, %cst_15 {dimension_numbers = #tpu.dot_dimension_numbers<[1], [0], [0], [1], [0, 0, 1, 1], [], []>} : vector<64x32xf32>, vector<32x32xf32>, vector<64x32xf32> -> vector<64x32xf32>
    %57 = vector.broadcast %10 : vector<1x32xf32> to vector<64x32xf32>
    %58 = arith.addf %56, %57 : vector<64x32xf32>
    %cst_16 = arith.constant dense<0.000000e+00> : vector<64xf32>
    %59 = vector.multi_reduction <add>, %58, %cst_16 [1] : vector<64x32xf32> to vector<64xf32>
    %60 = vector.shape_cast %59 : vector<64xf32> to vector<64x1xf32>
    %cst_17 = arith.constant 3.200000e+01 : f32
    %61 = vector.broadcast %cst_17 : f32 to vector<64x1xf32>
    %62 = arith.divf %60, %61 : vector<64x1xf32>
    %63 = vector.broadcast %62 : vector<64x1xf32> to vector<64x32xf32>
    %64 = arith.subf %58, %63 : vector<64x32xf32>
    %65 = arith.mulf %64, %64 : vector<64x32xf32>
    %cst_18 = arith.constant dense<0.000000e+00> : vector<64xf32>
    %66 = vector.multi_reduction <add>, %65, %cst_18 [1] : vector<64x32xf32> to vector<64xf32>
    %67 = vector.shape_cast %66 : vector<64xf32> to vector<64x1xf32>
    %cst_19 = arith.constant 3.200000e+01 : f32
    %68 = vector.broadcast %cst_19 : f32 to vector<64x1xf32>
    %69 = arith.divf %67, %68 : vector<64x1xf32>
    %70 = vector.broadcast %62 : vector<64x1xf32> to vector<64x32xf32>
    %71 = arith.subf %58, %70 : vector<64x32xf32>
    %cst_20 = arith.constant 9.99999974E-6 : f32
    %72 = vector.broadcast %cst_20 : f32 to vector<64x1xf32>
    %73 = arith.addf %69, %72 : vector<64x1xf32>
    %74 = math.rsqrt %73 : vector<64x1xf32>
    %75 = vector.broadcast %74 : vector<64x1xf32> to vector<64x32xf32>
    %76 = arith.mulf %71, %75 : vector<64x32xf32>
    %77 = vector.broadcast %11 : vector<1x32xf32> to vector<64x32xf32>
    %78 = arith.mulf %76, %77 : vector<64x32xf32>
    %79 = vector.broadcast %12 : vector<1x32xf32> to vector<64x32xf32>
    %80 = arith.addf %78, %79 : vector<64x32xf32>
    %cst_21 = arith.constant 0.000000e+00 : f32
    %81 = vector.broadcast %cst_21 : f32 to vector<64x32xf32>
    %82 = arith.maximumf %80, %81 : vector<64x32xf32>
    %c0_22 = arith.constant 0 : index
    %c0_23 = arith.constant 0 : index
    %83 = vector.load %arg5[%c0_22, %c0_23] : memref<32x8xf32, #tpu.memory_space<vmem>>, vector<32x8xf32>
    %cst_24 = arith.constant dense<0.000000e+00> : vector<64x8xf32>
    %84 = tpu.matmul %82, %83, %cst_24 {dimension_numbers = #tpu.dot_dimension_numbers<[1], [0], [0], [1], [0, 0, 1, 1], [], []>} : vector<64x32xf32>, vector<32x8xf32>, vector<64x8xf32> -> vector<64x8xf32>
    %c0_25 = arith.constant 0 : index
    %c0_26 = arith.constant 0 : index
    %85 = vector.load %arg6[%c0_25, %c0_26] : memref<1x8xf32, #tpu.memory_space<vmem>>, vector<1x8xf32>
    %86 = vector.broadcast %85 : vector<1x8xf32> to vector<64x8xf32>
    %87 = arith.addf %84, %86 : vector<64x8xf32>
    %88 = arith.mulf %87, %87 : vector<64x8xf32>
    %cst_27 = arith.constant dense<0.000000e+00> : vector<64xf32>
    %89 = vector.multi_reduction <add>, %88, %cst_27 [1] : vector<64x8xf32> to vector<64xf32>
    %90 = vector.shape_cast %89 : vector<64xf32> to vector<64x1xf32>
    %91 = math.sqrt %90 : vector<64x1xf32>
    %cst_28 = arith.constant 9.99999996E-13 : f32
    %92 = vector.broadcast %cst_28 : f32 to vector<64x1xf32>
    %93 = arith.maximumf %91, %92 : vector<64x1xf32>
    %94 = vector.broadcast %93 : vector<64x1xf32> to vector<64x8xf32>
    %95 = arith.divf %87, %94 : vector<64x8xf32>
    %96 = vector.shape_cast %95 : vector<64x8xf32> to vector<64x1x8xf32>
    %97 = vector.shape_cast %95 : vector<64x8xf32> to vector<1x64x8xf32>
    %98 = vector.broadcast %96 : vector<64x1x8xf32> to vector<64x64x8xf32>
    %99 = vector.broadcast %97 : vector<1x64x8xf32> to vector<64x64x8xf32>
    %100 = arith.subf %98, %99 : vector<64x64x8xf32>
    %101 = arith.mulf %100, %100 : vector<64x64x8xf32>
    %cst_29 = arith.constant dense<0.000000e+00> : vector<64x64xf32>
    %102 = vector.multi_reduction <add>, %101, %cst_29 [2] : vector<64x64x8xf32> to vector<64x64xf32>
    %c0_30 = arith.constant 0 : index
    %c0_31 = arith.constant 0 : index
    %103 = vector.load %arg2[%c0_30, %c0_31] : memref<64x1xi32, #tpu.memory_space<vmem>>, vector<64x1xi32>
    %c0_32 = arith.constant 0 : index
    %c0_33 = arith.constant 0 : index
    %104 = vector.load %arg3[%c0_32, %c0_33] : memref<1x64xi32, #tpu.memory_space<vmem>>, vector<1x64xi32>
    %105 = vector.broadcast %103 : vector<64x1xi32> to vector<64x64xi32>
    %106 = vector.broadcast %104 : vector<1x64xi32> to vector<64x64xi32>
    %107 = arith.cmpi eq, %105, %106 : vector<64x64xi32>
    %cst_34 = arith.constant 2.250000e+00 : f32
    %108 = vector.broadcast %cst_34 : f32 to vector<64x64xf32>
    %109 = arith.cmpf ole, %102, %108 : vector<64x64xf32>
    %110 = arith.andi %107, %109 : vector<64x64xi1>
    %cst_35 = arith.constant -1.000000e+00 : f32
    %111 = vector.broadcast %cst_35 : f32 to vector<64x64xf32>
    %112 = arith.mulf %111, %102 : vector<64x64xf32>
    %cst_36 = arith.constant 2.250000e+00 : f32
    %113 = vector.broadcast %cst_36 : f32 to vector<64x64xf32>
    %114 = arith.divf %112, %113 : vector<64x64xf32>
    %115 = math.exp %114 : vector<64x64xf32>
    %116 = arith.extui %110 : vector<64x64xi1> to vector<64x64xi32>
    %117 = arith.sitofp %116 : vector<64x64xi32> to vector<64x64xf32>
    %118 = arith.mulf %117, %115 : vector<64x64xf32>
    %cst_37 = arith.constant dense<0.000000e+00> : vector<64xf32>
    %119 = vector.multi_reduction <add>, %118, %cst_37 [1] : vector<64x64xf32> to vector<64xf32>
    %120 = vector.shape_cast %119 : vector<64xf32> to vector<64x1xf32>
    %121 = arith.extui %110 : vector<64x64xi1> to vector<64x64xi32>
    %c0_38 = arith.constant 0 : index
    %c0_39 = arith.constant 0 : index
    %122 = vector.load %arg12[%c0_38, %c0_39] : memref<64x64xi32, #tpu.memory_space<vmem>>, vector<64x64xi32>
    tpu.vector_store %arg12[%c0_38, %c0_39], %121 {strides = array<i32>} : memref<64x64xi32, #tpu.memory_space<vmem>>, vector<64x64xi32>,
    %c0_40 = arith.constant 0 : index
    %c0_41 = arith.constant 0 : index
    %123 = vector.load %arg7[%c0_40, %c0_41] : memref<33x64xf32, #tpu.memory_space<vmem>>, vector<33x64xf32>
    %cst_42 = arith.constant dense<0.000000e+00> : vector<64x64xf32>
    %124 = tpu.matmul %5, %123, %cst_42 {dimension_numbers = #tpu.dot_dimension_numbers<[1], [0], [0], [1], [0, 0, 1, 1], [], []>} : vector<64x33xf32>, vector<33x64xf32>, vector<64x64xf32> -> vector<64x64xf32>
    %125 = vector.extract_strided_slice %124 {offsets = [0, 0], sizes = [64, 32], strides = [1, 1]} : vector<64x64xf32> to vector<64x32xf32>
    %126 = vector.broadcast %13 : vector<1x32xf32> to vector<64x32xf32>
    %127 = arith.addf %125, %126 : vector<64x32xf32>
    %128 = vector.extract_strided_slice %124 {offsets = [0, 32], sizes = [64, 32], strides = [1, 1]} : vector<64x64xf32> to vector<64x32xf32>
    %cst_43 = arith.constant dense<0.000000e+00> : vector<64xf32>
    %129 = vector.multi_reduction <add>, %127, %cst_43 [1] : vector<64x32xf32> to vector<64xf32>
    %130 = vector.shape_cast %129 : vector<64xf32> to vector<64x1xf32>
    %cst_44 = arith.constant 3.200000e+01 : f32
    %131 = vector.broadcast %cst_44 : f32 to vector<64x1xf32>
    %132 = arith.divf %130, %131 : vector<64x1xf32>
    %133 = vector.broadcast %132 : vector<64x1xf32> to vector<64x32xf32>
    %134 = arith.subf %127, %133 : vector<64x32xf32>
    %135 = arith.mulf %134, %134 : vector<64x32xf32>
    %cst_45 = arith.constant dense<0.000000e+00> : vector<64xf32>
    %136 = vector.multi_reduction <add>, %135, %cst_45 [1] : vector<64x32xf32> to vector<64xf32>
    %137 = vector.shape_cast %136 : vector<64xf32> to vector<64x1xf32>
    %cst_46 = arith.constant 3.200000e+01 : f32
    %138 = vector.broadcast %cst_46 : f32 to vector<64x1xf32>
    %139 = arith.divf %137, %138 : vector<64x1xf32>
    %cst_47 = arith.constant dense<0.000000e+00> : vector<64xf32>
    %140 = vector.multi_reduction <add>, %128, %cst_47 [1] : vector<64x32xf32> to vector<64xf32>
    %141 = vector.shape_cast %140 : vector<64xf32> to vector<64x1xf32>
    %cst_48 = arith.constant 3.200000e+01 : f32
    %142 = vector.broadcast %cst_48 : f32 to vector<64x1xf32>
    %143 = arith.divf %141, %142 : vector<64x1xf32>
    %144 = vector.broadcast %143 : vector<64x1xf32> to vector<64x32xf32>
    %145 = arith.subf %128, %144 : vector<64x32xf32>
    %146 = arith.mulf %145, %145 : vector<64x32xf32>
    %cst_49 = arith.constant dense<0.000000e+00> : vector<64xf32>
    %147 = vector.multi_reduction <add>, %146, %cst_49 [1] : vector<64x32xf32> to vector<64xf32>
    %148 = vector.shape_cast %147 : vector<64xf32> to vector<64x1xf32>
    %cst_50 = arith.constant 3.200000e+01 : f32
    %149 = vector.broadcast %cst_50 : f32 to vector<64x1xf32>
    %150 = arith.divf %148, %149 : vector<64x1xf32>
    %cst_51 = arith.constant -6.250000e-02 : f32
    %151 = vector.broadcast %cst_51 : f32 to vector<64x32xf32>
    %152 = arith.mulf %134, %151 : vector<64x32xf32>
    %cst_52 = arith.constant 1.000000e+00 : f32
    %153 = vector.broadcast %cst_52 : f32 to vector<64x1xf32>
    %154 = tpu.concatenate %152, %139, %153 in 1 : vector<64x32xf32>, vector<64x1xf32>, vector<64x1xf32> -> vector<64x34xf32>
    %cst_53 = arith.constant 1.000000e+00 : f32
    %155 = vector.broadcast %cst_53 : f32 to vector<64x1xf32>
    %156 = tpu.concatenate %145, %155, %150 in 1 : vector<64x32xf32>, vector<64x1xf32>, vector<64x1xf32> -> vector<64x34xf32>
    %cst_54 = arith.constant dense<0.000000e+00> : vector<64x64xf32>
    %157 = tpu.matmul %154, %156, %cst_54 {dimension_numbers = #tpu.dot_dimension_numbers<[1], [1], [0], [0], [0, 0, 1, 0], [], []>} : vector<64x34xf32>, vector<64x34xf32>, vector<64x64xf32> -> vector<64x64xf32>
    %cst_55 = arith.constant 0.000000e+00 : f32
    %158 = vector.broadcast %cst_55 : f32 to vector<64x64xf32>
    %159 = arith.maximumf %157, %158 : vector<64x64xf32>
    %cst_56 = arith.constant 9.99999974E-6 : f32
    %160 = vector.broadcast %cst_56 : f32 to vector<64x64xf32>
    %161 = arith.addf %159, %160 : vector<64x64xf32>
    %162 = math.rsqrt %161 : vector<64x64xf32>
    %163 = vector.broadcast %14 : vector<1x32xf32> to vector<64x32xf32>
    %164 = arith.mulf %134, %163 : vector<64x32xf32>
    %c0_57 = arith.constant 0 : index
    %c0_58 = arith.constant 0 : index
    %165 = vector.load %arg13[%c0_57, %c0_58] : memref<64x32xf32, #tpu.memory_space<vmem>>, vector<64x32xf32>
    tpu.vector_store %arg13[%c0_57, %c0_58], %164 {strides = array<i32>} : memref<64x32xf32, #tpu.memory_space<vmem>>, vector<64x32xf32>,
    %c0_59 = arith.constant 0 : index
    %c0_60 = arith.constant 0 : index
    %166 = vector.load %arg14[%c0_59, %c0_60] : memref<64x64xf32, #tpu.memory_space<vmem>>, vector<64x64xf32>
    tpu.vector_store %arg14[%c0_59, %c0_60], %162 {strides = array<i32>} : memref<64x64xf32, #tpu.memory_space<vmem>>, vector<64x64xf32>,
    %c0_61 = arith.constant 0 : index
    %c0_62 = arith.constant 0 : index
    %167 = vector.load %arg15[%c0_61, %c0_62] : memref<64x64xf32, #tpu.memory_space<vmem>>, vector<64x64xf32>
    tpu.vector_store %arg15[%c0_61, %c0_62], %118 {strides = array<i32>} : memref<64x64xf32, #tpu.memory_space<vmem>>, vector<64x64xf32>,
    %168 = vector.broadcast %14 : vector<1x32xf32> to vector<64x32xf32>
    %169 = arith.mulf %145, %168 : vector<64x32xf32>
    %cst_63 = arith.constant 0.000000e+00 : f32
    %170 = vector.broadcast %cst_63 : f32 to vector<64x32xf32>
    %c0_i32 = arith.constant 0 : i32
    %c8_i32 = arith.constant 8 : i32
    %171 = arith.addi %c0_i32, %c8_i32 : i32
    %c1_i32 = arith.constant 1 : i32
    %172 = scf.for %arg16 = %c0_i32 to %171 step %c1_i32 iter_args(%arg17 = %170) -> (vector<64x32xf32>)  : i32 {
      %c8_i32_85 = arith.constant 8 : i32
      %236 = arith.muli %arg16, %c8_i32_85 : i32
      %237 = tpu.assume_multiple %236, 8 : i32
      %238 = arith.index_cast %237 : i32 to index
      %c0_86 = arith.constant 0 : index
      %239 = vector.load %arg13[%238, %c0_86] : memref<64x32xf32, #tpu.memory_space<vmem>>, vector<8x32xf32>
      %240 = arith.index_cast %237 : i32 to index
      %c0_87 = arith.constant 0 : index
      %241 = vector.load %arg14[%240, %c0_87] : memref<64x64xf32, #tpu.memory_space<vmem>>, vector<8x64xf32>
      %242 = arith.index_cast %237 : i32 to index
      %c0_88 = arith.constant 0 : index
      %243 = vector.load %arg15[%242, %c0_88] : memref<64x64xf32, #tpu.memory_space<vmem>>, vector<8x64xf32>
      %244 = vector.shape_cast %239 : vector<8x32xf32> to vector<8x1x32xf32>
      %245 = vector.shape_cast %169 : vector<64x32xf32> to vector<1x64x32xf32>
      %246 = vector.broadcast %244 : vector<8x1x32xf32> to vector<8x64x32xf32>
      %247 = vector.broadcast %245 : vector<1x64x32xf32> to vector<8x64x32xf32>
      %248 = arith.subf %246, %247 : vector<8x64x32xf32>
      %249 = vector.shape_cast %241 : vector<8x64xf32> to vector<8x64x1xf32>
      %250 = vector.broadcast %249 : vector<8x64x1xf32> to vector<8x64x32xf32>
      %251 = arith.mulf %248, %250 : vector<8x64x32xf32>
      %252 = vector.shape_cast %15 : vector<1x32xf32> to vector<1x1x32xf32>
      %253 = vector.broadcast %252 : vector<1x1x32xf32> to vector<8x64x32xf32>
      %254 = arith.addf %251, %253 : vector<8x64x32xf32>
      %cst_89 = arith.constant 0.000000e+00 : f32
      %255 = vector.broadcast %cst_89 : f32 to vector<8x64x32xf32>
      %256 = arith.maximumf %254, %255 : vector<8x64x32xf32>
      %257 = vector.shape_cast %243 : vector<8x64xf32> to vector<8x64x1xf32>
      %258 = vector.broadcast %257 : vector<8x64x1xf32> to vector<8x64x32xf32>
      %259 = arith.mulf %256, %258 : vector<8x64x32xf32>
      %cst_90 = arith.constant dense<0.000000e+00> : vector<64x32xf32>
      %260 = vector.multi_reduction <add>, %259, %cst_90 [0] : vector<8x64x32xf32> to vector<64x32xf32>
      %261 = arith.addf %arg17, %260 : vector<64x32xf32>
      scf.yield %261 : vector<64x32xf32>
    }
    %c8_i32_64 = arith.constant 8 : i32
    %cst_65 = arith.constant dense<0.000000e+00> : vector<64x32xf32>
    %173 = tpu.matmul %172, %25, %cst_65 {dimension_numbers = #tpu.dot_dimension_numbers<[1], [0], [0], [1], [0, 0, 1, 1], [], []>} : vector<64x32xf32>, vector<32x32xf32>, vector<64x32xf32> -> vector<64x32xf32>
    %174 = vector.broadcast %16 : vector<1x32xf32> to vector<64x32xf32>
    %175 = vector.broadcast %120 : vector<64x1xf32> to vector<64x32xf32>
    %176 = arith.mulf %174, %175 : vector<64x32xf32>
    %177 = arith.addf %173, %176 : vector<64x32xf32>
    %cst_66 = arith.constant dense<0.000000e+00> : vector<64x32xf32>
    %178 = tpu.matmul %177, %26, %cst_66 {dimension_numbers = #tpu.dot_dimension_numbers<[1], [0], [0], [1], [0, 0, 1, 1], [], []>} : vector<64x32xf32>, vector<32x32xf32>, vector<64x32xf32> -> vector<64x32xf32>
    %c0_67 = arith.constant 0 : index
    %c0_68 = arith.constant 0 : index
    %179 = vector.load %arg8[%c0_67, %c0_68] : memref<33x32xf32, #tpu.memory_space<vmem>>, vector<33x32xf32>
    %cst_69 = arith.constant dense<0.000000e+00> : vector<64x32xf32>
    %180 = tpu.matmul %5, %179, %cst_69 {dimension_numbers = #tpu.dot_dimension_numbers<[1], [0], [0], [1], [0, 0, 1, 1], [], []>} : vector<64x33xf32>, vector<33x32xf32>, vector<64x32xf32> -> vector<64x32xf32>
    %181 = arith.addf %178, %180 : vector<64x32xf32>
    %182 = vector.broadcast %17 : vector<1x32xf32> to vector<64x32xf32>
    %183 = arith.addf %181, %182 : vector<64x32xf32>
    %cst_70 = arith.constant dense<0.000000e+00> : vector<64xf32>
    %184 = vector.multi_reduction <add>, %183, %cst_70 [1] : vector<64x32xf32> to vector<64xf32>
    %185 = vector.shape_cast %184 : vector<64xf32> to vector<64x1xf32>
    %cst_71 = arith.constant 3.200000e+01 : f32
    %186 = vector.broadcast %cst_71 : f32 to vector<64x1xf32>
    %187 = arith.divf %185, %186 : vector<64x1xf32>
    %188 = vector.broadcast %187 : vector<64x1xf32> to vector<64x32xf32>
    %189 = arith.subf %183, %188 : vector<64x32xf32>
    %190 = arith.mulf %189, %189 : vector<64x32xf32>
    %cst_72 = arith.constant dense<0.000000e+00> : vector<64xf32>
    %191 = vector.multi_reduction <add>, %190, %cst_72 [1] : vector<64x32xf32> to vector<64xf32>
    %192 = vector.shape_cast %191 : vector<64xf32> to vector<64x1xf32>
    %cst_73 = arith.constant 3.200000e+01 : f32
    %193 = vector.broadcast %cst_73 : f32 to vector<64x1xf32>
    %194 = arith.divf %192, %193 : vector<64x1xf32>
    %195 = vector.broadcast %187 : vector<64x1xf32> to vector<64x32xf32>
    %196 = arith.subf %183, %195 : vector<64x32xf32>
    %cst_74 = arith.constant 9.99999974E-6 : f32
    %197 = vector.broadcast %cst_74 : f32 to vector<64x1xf32>
    %198 = arith.addf %194, %197 : vector<64x1xf32>
    %199 = math.rsqrt %198 : vector<64x1xf32>
    %200 = vector.broadcast %199 : vector<64x1xf32> to vector<64x32xf32>
    %201 = arith.mulf %196, %200 : vector<64x32xf32>
    %202 = vector.broadcast %18 : vector<1x32xf32> to vector<64x32xf32>
    %203 = arith.mulf %201, %202 : vector<64x32xf32>
    %204 = vector.broadcast %19 : vector<1x32xf32> to vector<64x32xf32>
    %205 = arith.addf %203, %204 : vector<64x32xf32>
    %cst_75 = arith.constant 0.000000e+00 : f32
    %206 = vector.broadcast %cst_75 : f32 to vector<64x32xf32>
    %207 = arith.maximumf %205, %206 : vector<64x32xf32>
    %cst_76 = arith.constant dense<0.000000e+00> : vector<64x32xf32>
    %208 = tpu.matmul %207, %27, %cst_76 {dimension_numbers = #tpu.dot_dimension_numbers<[1], [0], [0], [1], [0, 0, 1, 1], [], []>} : vector<64x32xf32>, vector<32x32xf32>, vector<64x32xf32> -> vector<64x32xf32>
    %209 = vector.broadcast %20 : vector<1x32xf32> to vector<64x32xf32>
    %210 = arith.addf %208, %209 : vector<64x32xf32>
    %cst_77 = arith.constant dense<0.000000e+00> : vector<64xf32>
    %211 = vector.multi_reduction <add>, %210, %cst_77 [1] : vector<64x32xf32> to vector<64xf32>
    %212 = vector.shape_cast %211 : vector<64xf32> to vector<64x1xf32>
    %cst_78 = arith.constant 3.200000e+01 : f32
    %213 = vector.broadcast %cst_78 : f32 to vector<64x1xf32>
    %214 = arith.divf %212, %213 : vector<64x1xf32>
    %215 = vector.broadcast %214 : vector<64x1xf32> to vector<64x32xf32>
    %216 = arith.subf %210, %215 : vector<64x32xf32>
    %217 = arith.mulf %216, %216 : vector<64x32xf32>
    %cst_79 = arith.constant dense<0.000000e+00> : vector<64xf32>
    %218 = vector.multi_reduction <add>, %217, %cst_79 [1] : vector<64x32xf32> to vector<64xf32>
    %219 = vector.shape_cast %218 : vector<64xf32> to vector<64x1xf32>
    %cst_80 = arith.constant 3.200000e+01 : f32
    %220 = vector.broadcast %cst_80 : f32 to vector<64x1xf32>
    %221 = arith.divf %219, %220 : vector<64x1xf32>
    %222 = vector.broadcast %214 : vector<64x1xf32> to vector<64x32xf32>
    %223 = arith.subf %210, %222 : vector<64x32xf32>
    %cst_81 = arith.constant 9.99999974E-6 : f32
    %224 = vector.broadcast %cst_81 : f32 to vector<64x1xf32>
    %225 = arith.addf %221, %224 : vector<64x1xf32>
    %226 = math.rsqrt %225 : vector<64x1xf32>
    %227 = vector.broadcast %226 : vector<64x1xf32> to vector<64x32xf32>
    %228 = arith.mulf %223, %227 : vector<64x32xf32>
    %229 = vector.broadcast %21 : vector<1x32xf32> to vector<64x32xf32>
    %230 = arith.mulf %228, %229 : vector<64x32xf32>
    %231 = vector.broadcast %22 : vector<1x32xf32> to vector<64x32xf32>
    %232 = arith.addf %230, %231 : vector<64x32xf32>
    %cst_82 = arith.constant 0.000000e+00 : f32
    %233 = vector.broadcast %cst_82 : f32 to vector<64x32xf32>
    %234 = arith.maximumf %232, %233 : vector<64x32xf32>
    %c0_83 = arith.constant 0 : index
    %c0_84 = arith.constant 0 : index
    %235 = vector.load %arg11[%c0_83, %c0_84] : memref<64x32xf32, #tpu.memory_space<vmem>>, vector<64x32xf32>
    tpu.vector_store %arg11[%c0_83, %c0_84], %234 {strides = array<i32>} : memref<64x32xf32, #tpu.memory_space<vmem>>, vector<64x32xf32>,
    return
  }
  func.func @transform_0(%arg0: i32) -> (i32, i32) {
    %c0_i32 = arith.constant 0 : i32
    %c0_i32_0 = arith.constant 0 : i32
    %c0_i32_1 = arith.constant 0 : i32
    return %c0_i32, %c0_i32_0 : i32, i32
  }
  func.func @transform_1(%arg0: i32) -> (i32, i32) {
    %c0_i32 = arith.constant 0 : i32
    %c0_i32_0 = arith.constant 0 : i32
    %c0_i32_1 = arith.constant 0 : i32
    return %c0_i32, %c0_i32_0 : i32, i32
  }
  func.func @transform_2(%arg0: i32) -> (i32, i32) {
    %c0_i32 = arith.constant 0 : i32
    %c0_i32_0 = arith.constant 0 : i32
    %c0_i32_1 = arith.constant 0 : i32
    return %c0_i32, %c0_i32_0 : i32, i32
  }
  func.func @transform_3(%arg0: i32) -> (i32, i32) {
    %c0_i32 = arith.constant 0 : i32
    %c0_i32_0 = arith.constant 0 : i32
    %c0_i32_1 = arith.constant 0 : i32
    return %c0_i32, %c0_i32_0 : i32, i32
  }
  func.func @transform_4(%arg0: i32) -> (i32, i32) {
    %c0_i32 = arith.constant 0 : i32
    %c0_i32_0 = arith.constant 0 : i32
    %c0_i32_1 = arith.constant 0 : i32
    return %c0_i32, %c0_i32_0 : i32, i32
  }
  func.func @transform_5(%arg0: i32) -> (i32, i32) {
    %c0_i32 = arith.constant 0 : i32
    %c0_i32_0 = arith.constant 0 : i32
    %c0_i32_1 = arith.constant 0 : i32
    return %c0_i32, %c0_i32_0 : i32, i32
  }
  func.func @transform_6(%arg0: i32) -> (i32, i32) {
    %c0_i32 = arith.constant 0 : i32
    %c0_i32_0 = arith.constant 0 : i32
    %c0_i32_1 = arith.constant 0 : i32
    return %c0_i32, %c0_i32_0 : i32, i32
  }
  func.func @transform_7(%arg0: i32) -> (i32, i32) {
    %c0_i32 = arith.constant 0 : i32
    %c0_i32_0 = arith.constant 0 : i32
    %c0_i32_1 = arith.constant 0 : i32
    return %c0_i32, %c0_i32_0 : i32, i32
  }
  func.func @transform_8(%arg0: i32) -> (i32, i32) {
    %c0_i32 = arith.constant 0 : i32
    %c0_i32_0 = arith.constant 0 : i32
    %c0_i32_1 = arith.constant 0 : i32
    return %c0_i32, %c0_i32_0 : i32, i32
  }
  func.func @transform_9(%arg0: i32) -> (i32, i32) {
    %c0_i32 = arith.constant 0 : i32
    %c0_i32_0 = arith.constant 0 : i32
    %c0_i32_1 = arith.constant 0 : i32
    return %c0_i32, %c0_i32_0 : i32, i32
  }
  func.func @transform_10(%arg0: i32) -> (i32, i32) {
    %c0_i32 = arith.constant 0 : i32
    %c0_i32_0 = arith.constant 0 : i32
    %c0_i32_1 = arith.constant 0 : i32
    return %c0_i32, %c0_i32_0 : i32, i32
  }
  func.func @transform_11(%arg0: i32) -> (i32, i32) {
    %c0_i32 = arith.constant 0 : i32
    %c0_i32_0 = arith.constant 0 : i32
    %c0_i32_1 = arith.constant 0 : i32
    return %c0_i32, %c0_i32_0 : i32, i32
  }
}

</mosaic_0001>

<llo_original>
// kernel: fancy_conv_forward.1
$region0: #{fancy_conv_forward.1}
  #allocation0 [shape = 'u32[]', space=smem, size = 0x4, offset = 0x4, fixed_abs, tag = 'smem constant byte address 0x4 - core index']
  #allocation1 [shape = 'u32[72,128]{1,0:T(1,128)}', space=vmem, size = 0x9000, scoped, tag = 'internal scratch']
  #allocation2 [shape = 'f32[64,32]{1,0:T(8,128)}', space=vmem, size = 0x8000, scoped, tag = 'scratch operand']
  #allocation3 [shape = 'f32[64,64]{1,0:T(8,128)}', space=vmem, size = 0x8000, scoped, tag = 'scratch operand']
  #allocation4 [shape = 'f32[64,64]{1,0:T(8,128)}', space=vmem, size = 0x8000, scoped, tag = 'scratch operand']
  %s0 = inlined_call_operand.vmem [shape: f32[64,32], index: 0, kind: input, shape index: {}]
  %s1 = inlined_call_operand.vmem [shape: s32[64,1], index: 1, kind: input, shape index: {}]
  %s2 = inlined_call_operand.vmem [shape: s32[1,64], index: 2, kind: input, shape index: {}]
  %s3 = inlined_call_operand.vmem [shape: f32[33,32], index: 3, kind: input, shape index: {}]
  %s4 = inlined_call_operand.vmem [shape: f32[32,8], index: 4, kind: input, shape index: {}]
  %s5 = inlined_call_operand.vmem [shape: f32[1,8], index: 5, kind: input, shape index: {}]
  %s6 = inlined_call_operand.vmem [shape: f32[33,64], index: 6, kind: input, shape index: {}]
  %s7 = inlined_call_operand.vmem [shape: f32[33,32], index: 7, kind: input, shape index: {}]
  %s8 = inlined_call_operand.vmem [shape: f32[128,32], index: 8, kind: input, shape index: {}]
  %s9 = inlined_call_operand.vmem [shape: f32[16,32], index: 9, kind: input, shape index: {}]
  %s10 = inlined_call_operand.vmem [shape: f32[64,32], index: 10, kind: output, shape index: {0}]
  %s11 = inlined_call_operand.hbm [shape: s32[64,64], index: 11, kind: output, shape index: {1}]
  %12 = xla_tuple %s10, %s11
  %s13 = sld [smem:[#allocation0]]
  $region65: #{fancy_conv_forward.1} parent=0
    _
  %s15 = ssub.s32 1, %s13
  %s16 = scalar_select 0, %s15, %s13
  $region1: #{fancy_conv_forward.1} parent=0
    #allocation5 [shape = 'u8[32768]{0}', space=vmem, size = 0x8000, scoped, tag = 'output window, operand 1, single buffered']
    #allocation6 [shape = 's32[1]{0}', space=sflag, size = 0x4, scoped, tag = 'scoped memory for fancy_conv_forward.1']
    %17 = vsyncpa [#allocation6], 0
    // Predicated region
    $region2: #{fancy_conv_forward.1} parent=1 // pred_check
      _
    $region3: #{fancy_conv_forward.1} parent=1 // pred_check_branch
      %19 = sbr.rel (0) target = $region5
    $region4: #{fancy_conv_forward.1} parent=1 // pred_region
      _
    $region5: #{fancy_conv_forward.1} parent=1 // pred_fallthru
      _
    // Predicated region
    $region6: #{fancy_conv_forward.1} parent=1 // pred_check
      _
    $region7: #{fancy_conv_forward.1} parent=1 // pred_check_branch
      %21 = sbr.rel (0) target = $region9
    $region8: #{fancy_conv_forward.1} parent=1 // pred_region
      _
    $region9: #{fancy_conv_forward.1} parent=1 // pred_fallthru
      _
    // Predicated region
    $region10: #{fancy_conv_forward.1} parent=1 // pred_check
      _
    $region11: #{fancy_conv_forward.1} parent=1 // pred_check_branch
      %23 = sbr.rel (0) target = $region13
    $region12: #{fancy_conv_forward.1} parent=1 // pred_region
      _
    $region13: #{fancy_conv_forward.1} parent=1 // pred_fallthru
      _
    // Predicated region
    $region14: #{fancy_conv_forward.1} parent=1 // pred_check
      _
    $region15: #{fancy_conv_forward.1} parent=1 // pred_check_branch
      %25 = sbr.rel (0) target = $region17
    $region16: #{fancy_conv_forward.1} parent=1 // pred_region
      _
    $region17: #{fancy_conv_forward.1} parent=1 // pred_fallthru
      _
    // Predicated region
    $region18: #{fancy_conv_forward.1} parent=1 // pred_check
      _
    $region19: #{fancy_conv_forward.1} parent=1 // pred_check_branch
      %27 = sbr.rel (0) target = $region21
    $region20: #{fancy_conv_forward.1} parent=1 // pred_region
      _
    $region21: #{fancy_conv_forward.1} parent=1 // pred_fallthru
      _
    // Predicated region
    $region22: #{fancy_conv_forward.1} parent=1 // pred_check
      _
    $region23: #{fancy_conv_forward.1} parent=1 // pred_check_branch
      %29 = sbr.rel (0) target = $region25
    $region24: #{fancy_conv_forward.1} parent=1 // pred_region
      _
    $region25: #{fancy_conv_forward.1} parent=1 // pred_fallthru
      _
    // Predicated region
    $region26: #{fancy_conv_forward.1} parent=1 // pred_check
      _
    $region27: #{fancy_conv_forward.1} parent=1 // pred_check_branch
      %31 = sbr.rel (0) target = $region29
    $region28: #{fancy_conv_forward.1} parent=1 // pred_region
      _
    $region29: #{fancy_conv_forward.1} parent=1 // pred_fallthru
      _
    // Predicated region
    $region30: #{fancy_conv_forward.1} parent=1 // pred_check
      _
    $region31: #{fancy_conv_forward.1} parent=1 // pred_check_branch
      %33 = sbr.rel (0) target = $region33
    $region32: #{fancy_conv_forward.1} parent=1 // pred_region
      _
    $region33: #{fancy_conv_forward.1} parent=1 // pred_fallthru
      _
    // Predicated region
    $region34: #{fancy_conv_forward.1} parent=1 // pred_check
      _
    $region35: #{fancy_conv_forward.1} parent=1 // pred_check_branch
      %35 = sbr.rel (0) target = $region37
    $region36: #{fancy_conv_forward.1} parent=1 // pred_region
      _
    $region37: #{fancy_conv_forward.1} parent=1 // pred_fallthru
      _
    // Predicated region
    $region38: #{fancy_conv_forward.1} parent=1 // pred_check
      _
    $region39: #{fancy_conv_forward.1} parent=1 // pred_check_branch
      %37 = sbr.rel (0) target = $region41
    $region40: #{fancy_conv_forward.1} parent=1 // pred_region
      _
    $region41: #{fancy_conv_forward.1} parent=1 // pred_fallthru
      _
    %v38 = vld [vmem:[%s0] sm:$0xff]
    %v39 = vld [vmem:[%s0 + $0x8] sm:$0xff]
    %v40 = vld [vmem:[%s0 + $0x10] sm:$0xff]
    %v41 = vld [vmem:[%s0 + $0x18] sm:$0xff]
    %v42 = vld [vmem:[%s0 + $0x20] sm:$0xff]
    %v43 = vld [vmem:[%s0 + $0x28] sm:$0xff]
    %v44 = vld [vmem:[%s0 + $0x30] sm:$0xff]
    %v45 = vld [vmem:[%s0 + $0x38] sm:$0xff]
    %vm46 = vcmask 261120
    %v47 = vsel %vm46, %v38, 0.0
    %48 = vadd.xlane.f32.xlu0 %v47
    %v49 = vpop.xlane.xlu0 %48
    %v50 = vsel %vm46, %v39, 0.0
    %51 = vadd.xlane.f32.xlu0 %v50
    %v52 = vpop.xlane.xlu0 %51
    %v53 = vsel %vm46, %v40, 0.0
    %54 = vadd.xlane.f32.xlu0 %v53
    %v55 = vpop.xlane.xlu0 %54
    %v56 = vsel %vm46, %v41, 0.0
    %57 = vadd.xlane.f32.xlu0 %v56
    %v58 = vpop.xlane.xlu0 %57
    %v59 = vsel %vm46, %v42, 0.0
    %60 = vadd.xlane.f32.xlu0 %v59
    %v61 = vpop.xlane.xlu0 %60
    %v62 = vsel %vm46, %v43, 0.0
    %63 = vadd.xlane.f32.xlu0 %v62
    %v64 = vpop.xlane.xlu0 %63
    %v65 = vsel %vm46, %v44, 0.0
    %66 = vadd.xlane.f32.xlu0 %v65
    %v67 = vpop.xlane.xlu0 %66
    %v68 = vsel %vm46, %v45, 0.0
    %69 = vadd.xlane.f32.xlu0 %v68
    %v70 = vpop.xlane.xlu0 %69
    %v71 = vrcp.pop 32.0
    %v72 = vmul.f32 32.0, %v71
    %v73 = vsub.f32 1.0, %v72
    %v74 = vmul.f32 %v71, %v73
    %v75 = vadd.f32 %v71, %v74
    %vm76 = vweird.f32 %v71
    %v77 = vsel %vm76, %v71, %v75
    %v78 = vmul.f32 %v49, %v77
    %v79 = vmul.f32 %v52, %v77
    %v80 = vmul.f32 %v55, %v77
    %v81 = vmul.f32 %v58, %v77
    %v82 = vmul.f32 %v61, %v77
    %v83 = vmul.f32 %v64, %v77
    %v84 = vmul.f32 %v67, %v77
    %v85 = vmul.f32 %v70, %v77
    %v86 = vsel %vm46, %v38, %v78
    %v87 = vsel %vm46, %v39, %v79
    %v88 = vsel %vm46, %v40, %v80
    %v89 = vsel %vm46, %v41, %v81
    %v90 = vsel %vm46, %v42, %v82
    %v91 = vsel %vm46, %v43, %v83
    %v92 = vsel %vm46, %v44, %v84
    %v93 = vsel %vm46, %v45, %v85
    %v94 = vld [vmem:[%s9] sm:$0xff]
    %v95 = vld [vmem:[%s9 + $0x8] sm:$0xff]
    %v96 = vld [vmem:[%s8] sm:$0xff]
    %v97 = vld [vmem:[%s8 + $0x8] sm:$0xff]
    %v98 = vld [vmem:[%s8 + $0x10] sm:$0xff]
    %v99 = vld [vmem:[%s8 + $0x18] sm:$0xff]
    %v100 = vld [vmem:[%s8 + $0x20] sm:$0xff]
    %v101 = vld [vmem:[%s8 + $0x28] sm:$0xff]
    %v102 = vld [vmem:[%s8 + $0x30] sm:$0xff]
    %v103 = vld [vmem:[%s8 + $0x38] sm:$0xff]
    %v104 = vld [vmem:[%s8 + $0x40] sm:$0xff]
    %v105 = vld [vmem:[%s8 + $0x48] sm:$0xff]
    %v106 = vld [vmem:[%s8 + $0x50] sm:$0xff]
    %v107 = vld [vmem:[%s8 + $0x58] sm:$0xff]
    %v108 = vld [vmem:[%s8 + $0x60] sm:$0xff]
    %v109 = vld [vmem:[%s8 + $0x68] sm:$0xff]
    %v110 = vld [vmem:[%s8 + $0x70] sm:$0xff]
    %v111 = vld [vmem:[%s8 + $0x78] sm:$0xff]
    %v112 = vld [vmem:[%s3] sm:$0xff]
    %v113 = vld [vmem:[%s3 + $0x8] sm:$0xff]
    %v114 = vld [vmem:[%s3 + $0x10] sm:$0xff]
    %v115 = vld [vmem:[%s3 + $0x18] sm:$0xff]
    %v116 = vld [vmem:[%s3 + $0x20] sm:$0x1]
    %v117 = vperm.slane %v94, 0
    %vm118 = vcmask 269312
    %v120 = vsel %vm118, %v86, 0
    %v123 = vsel %vm118, %v87, 0
    %v126 = vsel %vm118, %v88, 0
    %v129 = vsel %vm118, %v89, 0
    %v132 = vsel %vm118, %v90, 0
    %v135 = vsel %vm118, %v91, 0
    %v138 = vsel %vm118, %v92, 0
    %v141 = vsel %vm118, %v93, 0
    %vm143 = vcmask 1040384
    %v145 = vsel %vm143, %v116, 0
    %147 = vmatpush.msra.mxu0 0.0
    %148 = vmatpush.msra.mxu0 0.0
    %149 = vmatpush.msra.mxu0 0.0
    %150 = vmatpush.msra.mxu0 0.0
    %151 = vmatpush.msra.mxu0 0.0
    %152 = vmatpush.msra.mxu0 0.0
    %153 = vmatpush.msra.mxu0 0.0
    %154 = vmatpush.msra.mxu0 0.0
    %155 = vmatpush.msra.mxu0 0.0
    %156 = vmatpush.msra.mxu0 0.0
    %157 = vmatpush.msra.mxu0 0.0
    %158 = vmatpush.msra.mxu0 %v145
    %159 = vmatpush.msra.mxu0 %v115
    %160 = vmatpush.msra.mxu0 %v114
    %161 = vmatpush.msra.mxu0 %v113
    %162 = vmatpush.msra.mxu0 %v112
    %163 = vmatmul.f32.gmra.mxu0 %v120
    %v164 = vpop.f32.mrf.mxu0
    %v165 = vadd.f32 %v117, %v164
    %166 = vmatmul.f32.gmra.mxu0 %v123
    %v167 = vpop.f32.mrf.mxu0
    %v168 = vadd.f32 %v117, %v167
    %169 = vmatmul.f32.gmra.mxu0 %v126
    %v170 = vpop.f32.mrf.mxu0
    %v171 = vadd.f32 %v117, %v170
    %172 = vmatmul.f32.gmra.mxu0 %v129
    %v173 = vpop.f32.mrf.mxu0
    %v174 = vadd.f32 %v117, %v173
    %175 = vmatmul.f32.gmra.mxu0 %v132
    %v176 = vpop.f32.mrf.mxu0
    %v177 = vadd.f32 %v117, %v176
    %178 = vmatmul.f32.gmra.mxu0 %v135
    %v179 = vpop.f32.mrf.mxu0
    %v180 = vadd.f32 %v117, %v179
    %181 = vmatmul.f32.gmra.mxu0 %v138
    %v182 = vpop.f32.mrf.mxu0
    %v183 = vadd.f32 %v117, %v182
    %184 = vmatmul.f32.gmra.mxu0 %v141
    %v185 = vpop.f32.mrf.mxu0
    %v186 = vadd.f32 %v117, %v185
    %187 = vdwg.mxu0
    %v188 = vsel %vm46, %v165, 0.0
    %189 = vadd.xlane.f32.xlu0 %v188
    %v190 = vpop.xlane.xlu0 %189
    %v191 = vsel %vm46, %v168, 0.0
    %192 = vadd.xlane.f32.xlu0 %v191
    %v193 = vpop.xlane.xlu0 %192
    %v194 = vsel %vm46, %v171, 0.0
    %195 = vadd.xlane.f32.xlu0 %v194
    %v196 = vpop.xlane.xlu0 %195
    %v197 = vsel %vm46, %v174, 0.0
    %198 = vadd.xlane.f32.xlu0 %v197
    %v199 = vpop.xlane.xlu0 %198
    %v200 = vsel %vm46, %v177, 0.0
    %201 = vadd.xlane.f32.xlu0 %v200
    %v202 = vpop.xlane.xlu0 %201
    %v203 = vsel %vm46, %v180, 0.0
    %204 = vadd.xlane.f32.xlu0 %v203
    %v205 = vpop.xlane.xlu0 %204
    %v206 = vsel %vm46, %v183, 0.0
    %207 = vadd.xlane.f32.xlu0 %v206
    %v208 = vpop.xlane.xlu0 %207
    %v209 = vsel %vm46, %v186, 0.0
    %210 = vadd.xlane.f32.xlu0 %v209
    %v211 = vpop.xlane.xlu0 %210
    %v212 = vmul.f32 %v190, %v77
    %v213 = vmul.f32 %v193, %v77
    %v214 = vmul.f32 %v196, %v77
    %v215 = vmul.f32 %v199, %v77
    %v216 = vmul.f32 %v202, %v77
    %v217 = vmul.f32 %v205, %v77
    %v218 = vmul.f32 %v208, %v77
    %v219 = vmul.f32 %v211, %v77
    %v220 = vsub.f32 %v165, %v212
    %v221 = vsub.f32 %v168, %v213
    %v222 = vsub.f32 %v171, %v214
    %v223 = vsub.f32 %v174, %v215
    %v224 = vsub.f32 %v177, %v216
    %v225 = vsub.f32 %v180, %v217
    %v226 = vsub.f32 %v183, %v218
    %v227 = vsub.f32 %v186, %v219
    %v228 = vmul.f32 %v220, %v220
    %v229 = vmul.f32 %v221, %v221
    %v230 = vmul.f32 %v222, %v222
    %v231 = vmul.f32 %v223, %v223
    %v232 = vmul.f32 %v224, %v224
    %v233 = vmul.f32 %v225, %v225
    %v234 = vmul.f32 %v226, %v226
    %v235 = vmul.f32 %v227, %v227
    %v236 = vsel %vm46, %v228, 0.0
    %237 = vadd.xlane.f32.xlu0 %v236
    %v238 = vpop.xlane.xlu0 %237
    %v239 = vsel %vm46, %v229, 0.0
    %240 = vadd.xlane.f32.xlu0 %v239
    %v241 = vpop.xlane.xlu0 %240
    %v242 = vsel %vm46, %v230, 0.0
    %243 = vadd.xlane.f32.xlu0 %v242
    %v244 = vpop.xlane.xlu0 %243
    %v245 = vsel %vm46, %v231, 0.0
    %246 = vadd.xlane.f32.xlu0 %v245
    %v247 = vpop.xlane.xlu0 %246
    %v248 = vsel %vm46, %v232, 0.0
    %249 = vadd.xlane.f32.xlu0 %v248
    %v250 = vpop.xlane.xlu0 %249
    %v251 = vsel %vm46, %v233, 0.0
    %252 = vadd.xlane.f32.xlu0 %v251
    %v253 = vpop.xlane.xlu0 %252
    %v254 = vsel %vm46, %v234, 0.0
    %255 = vadd.xlane.f32.xlu0 %v254
    %v256 = vpop.xlane.xlu0 %255
    %v257 = vsel %vm46, %v235, 0.0
    %258 = vadd.xlane.f32.xlu0 %v257
    %v259 = vpop.xlane.xlu0 %258
    %v260 = vmul.f32 %v238, %v77
    %v261 = vmul.f32 %v241, %v77
    %v262 = vmul.f32 %v244, %v77
    %v263 = vmul.f32 %v247, %v77
    %v264 = vmul.f32 %v250, %v77
    %v265 = vmul.f32 %v253, %v77
    %v266 = vmul.f32 %v256, %v77
    %v267 = vmul.f32 %v259, %v77
    %v268 = vadd.f32 %v260, 1e-05
    %v269 = vadd.f32 %v261, 1e-05
    %v270 = vadd.f32 %v262, 1e-05
    %v271 = vadd.f32 %v263, 1e-05
    %v272 = vadd.f32 %v264, 1e-05
    %v273 = vadd.f32 %v265, 1e-05
    %v274 = vadd.f32 %v266, 1e-05
    %v275 = vadd.f32 %v267, 1e-05
    %v276 = vrsqrt.pop %v268
    %v277 = vmul.f32 %v276, %v268
    %v278 = vmul.f32 %v277, %v276
    %v279 = vmul.f32 0.5, %v278
    %v280 = vsub.f32 1.5, %v279
    %v281 = vmul.f32 %v276, %v280
    %vm282 = vweird.f32 %v268
    %vm283 = vweird.f32 %v276
    %vm284 = vmor %vm282, %vm283
    %v285 = vsel %vm284, %v276, %v281
    %v286 = vrsqrt.pop %v269
    %v287 = vmul.f32 %v286, %v269
    %v288 = vmul.f32 %v287, %v286
    %v289 = vmul.f32 0.5, %v288
    %v290 = vsub.f32 1.5, %v289
    %v291 = vmul.f32 %v286, %v290
    %vm292 = vweird.f32 %v269
    %vm293 = vweird.f32 %v286
    %vm294 = vmor %vm292, %vm293
    %v295 = vsel %vm294, %v286, %v291
    %v296 = vrsqrt.pop %v270
    %v297 = vmul.f32 %v296, %v270
    %v298 = vmul.f32 %v297, %v296
    %v299 = vmul.f32 0.5, %v298
    %v300 = vsub.f32 1.5, %v299
    %v301 = vmul.f32 %v296, %v300
    %vm302 = vweird.f32 %v270
    %vm303 = vweird.f32 %v296
    %vm304 = vmor %vm302, %vm303
    %v305 = vsel %vm304, %v296, %v301
    %v306 = vrsqrt.pop %v271
    %v307 = vmul.f32 %v306, %v271
    %v308 = vmul.f32 %v307, %v306
    %v309 = vmul.f32 0.5, %v308
    %v310 = vsub.f32 1.5, %v309
    %v311 = vmul.f32 %v306, %v310
    %vm312 = vweird.f32 %v271
    %vm313 = vweird.f32 %v306
    %vm314 = vmor %vm312, %vm313
    %v315 = vsel %vm314, %v306, %v311
    %v316 = vrsqrt.pop %v272
    %v317 = vmul.f32 %v316, %v272
    %v318 = vmul.f32 %v317, %v316
    %v319 = vmul.f32 0.5, %v318
    %v320 = vsub.f32 1.5, %v319
    %v321 = vmul.f32 %v316, %v320
    %vm322 = vweird.f32 %v272
    %vm323 = vweird.f32 %v316
    %vm324 = vmor %vm322, %vm323
    %v325 = vsel %vm324, %v316, %v321
    %v326 = vrsqrt.pop %v273
    %v327 = vmul.f32 %v326, %v273
    %v328 = vmul.f32 %v327, %v326
    %v329 = vmul.f32 0.5, %v328
    %v330 = vsub.f32 1.5, %v329
    %v331 = vmul.f32 %v326, %v330
    %vm332 = vweird.f32 %v273
    %vm333 = vweird.f32 %v326
    %vm334 = vmor %vm332, %vm333
    %v335 = vsel %vm334, %v326, %v331
    %v336 = vrsqrt.pop %v274
    %v337 = vmul.f32 %v336, %v274
    %v338 = vmul.f32 %v337, %v336
    %v339 = vmul.f32 0.5, %v338
    %v340 = vsub.f32 1.5, %v339
    %v341 = vmul.f32 %v336, %v340
    %vm342 = vweird.f32 %v274
    %vm343 = vweird.f32 %v336
    %vm344 = vmor %vm342, %vm343
    %v345 = vsel %vm344, %v336, %v341
    %v346 = vrsqrt.pop %v275
    %v347 = vmul.f32 %v346, %v275
    %v348 = vmul.f32 %v347, %v346
    %v349 = vmul.f32 0.5, %v348
    %v350 = vsub.f32 1.5, %v349
    %v351 = vmul.f32 %v346, %v350
    %vm352 = vweird.f32 %v275
    %vm353 = vweird.f32 %v346
    %vm354 = vmor %vm352, %vm353
    %v355 = vsel %vm354, %v346, %v351
    %v356 = vmul.f32 %v220, %v285
    %v357 = vmul.f32 %v221, %v295
    %v358 = vmul.f32 %v222, %v305
    %v359 = vmul.f32 %v223, %v315
    %v360 = vmul.f32 %v224, %v325
    %v361 = vmul.f32 %v225, %v335
    %v362 = vmul.f32 %v226, %v345
    %v363 = vmul.f32 %v227, %v355
    %v364 = vperm.slane %v94, 1
    %v365 = vmul.f32 %v356, %v364
    %v366 = vmul.f32 %v357, %v364
    %v367 = vmul.f32 %v358, %v364
    %v368 = vmul.f32 %v359, %v364
    %v369 = vmul.f32 %v360, %v364
    %v370 = vmul.f32 %v361, %v364
    %v371 = vmul.f32 %v362, %v364
    %v372 = vmul.f32 %v363, %v364
    %v373 = vperm.slane %v94, 2
    %v374 = vadd.f32 %v365, %v373
    %v375 = vadd.f32 %v366, %v373
    %v376 = vadd.f32 %v367, %v373
    %v377 = vadd.f32 %v368, %v373
    %v378 = vadd.f32 %v369, %v373
    %v379 = vadd.f32 %v370, %v373
    %v380 = vadd.f32 %v371, %v373
    %v381 = vadd.f32 %v372, %v373
    %v382 = vmax.f32 %v374, 0.0
    %v383 = vmax.f32 %v375, 0.0
    %v384 = vmax.f32 %v376, 0.0
    %v385 = vmax.f32 %v377, 0.0
    %v386 = vmax.f32 %v378, 0.0
    %v387 = vmax.f32 %v379, 0.0
    %v388 = vmax.f32 %v380, 0.0
    %v389 = vmax.f32 %v381, 0.0
    %v390 = vperm.slane %v94, 3
    %v392 = vsel %vm46, %v382, 0
    %v395 = vsel %vm46, %v383, 0
    %v398 = vsel %vm46, %v384, 0
    %v401 = vsel %vm46, %v385, 0
    %v404 = vsel %vm46, %v386, 0
    %v407 = vsel %vm46, %v387, 0
    %v410 = vsel %vm46, %v388, 0
    %v413 = vsel %vm46, %v389, 0
    %415 = vmatpush.msra.mxu0 0.0
    %416 = vmatpush.msra.mxu0 0.0
    %417 = vmatpush.msra.mxu0 0.0
    %418 = vmatpush.msra.mxu0 0.0
    %419 = vmatpush.msra.mxu0 0.0
    %420 = vmatpush.msra.mxu0 0.0
    %421 = vmatpush.msra.mxu0 0.0
    %422 = vmatpush.msra.mxu0 0.0
    %423 = vmatpush.msra.mxu0 0.0
    %424 = vmatpush.msra.mxu0 0.0
    %425 = vmatpush.msra.mxu0 0.0
    %426 = vmatpush.msra.mxu0 0.0
    %427 = vmatpush.msra.mxu0 %v99
    %428 = vmatpush.msra.mxu0 %v98
    %429 = vmatpush.msra.mxu0 %v97
    %430 = vmatpush.msra.mxu0 %v96
    %431 = vmatmul.f32.gmra.mxu0 %v392
    %v432 = vpop.f32.mrf.mxu0
    %v433 = vadd.f32 %v390, %v432
    %434 = vmatmul.f32.gmra.mxu0 %v395
    %v435 = vpop.f32.mrf.mxu0
    %v436 = vadd.f32 %v390, %v435
    %437 = vmatmul.f32.gmra.mxu0 %v398
    %v438 = vpop.f32.mrf.mxu0
    %v439 = vadd.f32 %v390, %v438
    %440 = vmatmul.f32.gmra.mxu0 %v401
    %v441 = vpop.f32.mrf.mxu0
    %v442 = vadd.f32 %v390, %v441
    %443 = vmatmul.f32.gmra.mxu0 %v404
    %v444 = vpop.f32.mrf.mxu0
    %v445 = vadd.f32 %v390, %v444
    %446 = vmatmul.f32.gmra.mxu0 %v407
    %v447 = vpop.f32.mrf.mxu0
    %v448 = vadd.f32 %v390, %v447
    %449 = vmatmul.f32.gmra.mxu0 %v410
    %v450 = vpop.f32.mrf.mxu0
    %v451 = vadd.f32 %v390, %v450
    %452 = vmatmul.f32.gmra.mxu0 %v413
    %v453 = vpop.f32.mrf.mxu0
    %v454 = vadd.f32 %v390, %v453
    %455 = vdwg.mxu0
    %v456 = vsel %vm46, %v433, 0.0
    %457 = vadd.xlane.f32.xlu0 %v456
    %v458 = vpop.xlane.xlu0 %457
    %v459 = vsel %vm46, %v436, 0.0
    %460 = vadd.xlane.f32.xlu0 %v459
    %v461 = vpop.xlane.xlu0 %460
    %v462 = vsel %vm46, %v439, 0.0
    %463 = vadd.xlane.f32.xlu0 %v462
    %v464 = vpop.xlane.xlu0 %463
    %v465 = vsel %vm46, %v442, 0.0
    %466 = vadd.xlane.f32.xlu0 %v465
    %v467 = vpop.xlane.xlu0 %466
    %v468 = vsel %vm46, %v445, 0.0
    %469 = vadd.xlane.f32.xlu0 %v468
    %v470 = vpop.xlane.xlu0 %469
    %v471 = vsel %vm46, %v448, 0.0
    %472 = vadd.xlane.f32.xlu0 %v471
    %v473 = vpop.xlane.xlu0 %472
    %v474 = vsel %vm46, %v451, 0.0
    %475 = vadd.xlane.f32.xlu0 %v474
    %v476 = vpop.xlane.xlu0 %475
    %v477 = vsel %vm46, %v454, 0.0
    %478 = vadd.xlane.f32.xlu0 %v477
    %v479 = vpop.xlane.xlu0 %478
    %v480 = vmul.f32 %v458, %v77
    %v481 = vmul.f32 %v461, %v77
    %v482 = vmul.f32 %v464, %v77
    %v483 = vmul.f32 %v467, %v77
    %v484 = vmul.f32 %v470, %v77
    %v485 = vmul.f32 %v473, %v77
    %v486 = vmul.f32 %v476, %v77
    %v487 = vmul.f32 %v479, %v77
    %v488 = vsub.f32 %v433, %v480
    %v489 = vsub.f32 %v436, %v481
    %v490 = vsub.f32 %v439, %v482
    %v491 = vsub.f32 %v442, %v483
    %v492 = vsub.f32 %v445, %v484
    %v493 = vsub.f32 %v448, %v485
    %v494 = vsub.f32 %v451, %v486
    %v495 = vsub.f32 %v454, %v487
    %v496 = vmul.f32 %v488, %v488
    %v497 = vmul.f32 %v489, %v489
    %v498 = vmul.f32 %v490, %v490
    %v499 = vmul.f32 %v491, %v491
    %v500 = vmul.f32 %v492, %v492
    %v501 = vmul.f32 %v493, %v493
    %v502 = vmul.f32 %v494, %v494
    %v503 = vmul.f32 %v495, %v495
    %v504 = vsel %vm46, %v496, 0.0
    %505 = vadd.xlane.f32.xlu0 %v504
    %v506 = vpop.xlane.xlu0 %505
    %v507 = vsel %vm46, %v497, 0.0
    %508 = vadd.xlane.f32.xlu0 %v507
    %v509 = vpop.xlane.xlu0 %508
    %v510 = vsel %vm46, %v498, 0.0
    %511 = vadd.xlane.f32.xlu0 %v510
    %v512 = vpop.xlane.xlu0 %511
    %v513 = vsel %vm46, %v499, 0.0
    %514 = vadd.xlane.f32.xlu0 %v513
    %v515 = vpop.xlane.xlu0 %514
    %v516 = vsel %vm46, %v500, 0.0
    %517 = vadd.xlane.f32.xlu0 %v516
    %v518 = vpop.xlane.xlu0 %517
    %v519 = vsel %vm46, %v501, 0.0
    %520 = vadd.xlane.f32.xlu0 %v519
    %v521 = vpop.xlane.xlu0 %520
    %v522 = vsel %vm46, %v502, 0.0
    %523 = vadd.xlane.f32.xlu0 %v522
    %v524 = vpop.xlane.xlu0 %523
    %v525 = vsel %vm46, %v503, 0.0
    %526 = vadd.xlane.f32.xlu0 %v525
    %v527 = vpop.xlane.xlu0 %526
    %v528 = vmul.f32 %v506, %v77
    %v529 = vmul.f32 %v509, %v77
    %v530 = vmul.f32 %v512, %v77
    %v531 = vmul.f32 %v515, %v77
    %v532 = vmul.f32 %v518, %v77
    %v533 = vmul.f32 %v521, %v77
    %v534 = vmul.f32 %v524, %v77
    %v535 = vmul.f32 %v527, %v77
    %v536 = vadd.f32 %v528, 1e-05
    %v537 = vadd.f32 %v529, 1e-05
    %v538 = vadd.f32 %v530, 1e-05
    %v539 = vadd.f32 %v531, 1e-05
    %v540 = vadd.f32 %v532, 1e-05
    %v541 = vadd.f32 %v533, 1e-05
    %v542 = vadd.f32 %v534, 1e-05
    %v543 = vadd.f32 %v535, 1e-05
    %v544 = vrsqrt.pop %v536
    %v545 = vmul.f32 %v544, %v536
    %v546 = vmul.f32 %v545, %v544
    %v547 = vmul.f32 0.5, %v546
    %v548 = vsub.f32 1.5, %v547
    %v549 = vmul.f32 %v544, %v548
    %vm550 = vweird.f32 %v536
    %vm551 = vweird.f32 %v544
    %vm552 = vmor %vm550, %vm551
    %v553 = vsel %vm552, %v544, %v549
    %v554 = vrsqrt.pop %v537
    %v555 = vmul.f32 %v554, %v537
    %v556 = vmul.f32 %v555, %v554
    %v557 = vmul.f32 0.5, %v556
    %v558 = vsub.f32 1.5, %v557
    %v559 = vmul.f32 %v554, %v558
    %vm560 = vweird.f32 %v537
    %vm561 = vweird.f32 %v554
    %vm562 = vmor %vm560, %vm561
    %v563 = vsel %vm562, %v554, %v559
    %v564 = vrsqrt.pop %v538
    %v565 = vmul.f32 %v564, %v538
    %v566 = vmul.f32 %v565, %v564
    %v567 = vmul.f32 0.5, %v566
    %v568 = vsub.f32 1.5, %v567
    %v569 = vmul.f32 %v564, %v568
    %vm570 = vweird.f32 %v538
    %vm571 = vweird.f32 %v564
    %vm572 = vmor %vm570, %vm571
    %v573 = vsel %vm572, %v564, %v569
    %v574 = vrsqrt.pop %v539
    %v575 = vmul.f32 %v574, %v539
    %v576 = vmul.f32 %v575, %v574
    %v577 = vmul.f32 0.5, %v576
    %v578 = vsub.f32 1.5, %v577
    %v579 = vmul.f32 %v574, %v578
    %vm580 = vweird.f32 %v539
    %vm581 = vweird.f32 %v574
    %vm582 = vmor %vm580, %vm581
    %v583 = vsel %vm582, %v574, %v579
    %v584 = vrsqrt.pop %v540
    %v585 = vmul.f32 %v584, %v540
    %v586 = vmul.f32 %v585, %v584
    %v587 = vmul.f32 0.5, %v586
    %v588 = vsub.f32 1.5, %v587
    %v589 = vmul.f32 %v584, %v588
    %vm590 = vweird.f32 %v540
    %vm591 = vweird.f32 %v584
    %vm592 = vmor %vm590, %vm591
    %v593 = vsel %vm592, %v584, %v589
    %v594 = vrsqrt.pop %v541
    %v595 = vmul.f32 %v594, %v541
    %v596 = vmul.f32 %v595, %v594
    %v597 = vmul.f32 0.5, %v596
    %v598 = vsub.f32 1.5, %v597
    %v599 = vmul.f32 %v594, %v598
    %vm600 = vweird.f32 %v541
    %vm601 = vweird.f32 %v594
    %vm602 = vmor %vm600, %vm601
    %v603 = vsel %vm602, %v594, %v599
    %v604 = vrsqrt.pop %v542
    %v605 = vmul.f32 %v604, %v542
    %v606 = vmul.f32 %v605, %v604
    %v607 = vmul.f32 0.5, %v606
    %v608 = vsub.f32 1.5, %v607
    %v609 = vmul.f32 %v604, %v608
    %vm610 = vweird.f32 %v542
    %vm611 = vweird.f32 %v604
    %vm612 = vmor %vm610, %vm611
    %v613 = vsel %vm612, %v604, %v609
    %v614 = vrsqrt.pop %v543
    %v615 = vmul.f32 %v614, %v543
    %v616 = vmul.f32 %v615, %v614
    %v617 = vmul.f32 0.5, %v616
    %v618 = vsub.f32 1.5, %v617
    %v619 = vmul.f32 %v614, %v618
    %vm620 = vweird.f32 %v543
    %vm621 = vweird.f32 %v614
    %vm622 = vmor %vm620, %vm621
    %v623 = vsel %vm622, %v614, %v619
    %v624 = vmul.f32 %v488, %v553
    %v625 = vmul.f32 %v489, %v563
    %v626 = vmul.f32 %v490, %v573
    %v627 = vmul.f32 %v491, %v583
    %v628 = vmul.f32 %v492, %v593
    %v629 = vmul.f32 %v493, %v603
    %v630 = vmul.f32 %v494, %v613
    %v631 = vmul.f32 %v495, %v623
    %v632 = vperm.slane %v94, 4
    %v633 = vmul.f32 %v624, %v632
    %v634 = vmul.f32 %v625, %v632
    %v635 = vmul.f32 %v626, %v632
    %v636 = vmul.f32 %v627, %v632
    %v637 = vmul.f32 %v628, %v632
    %v638 = vmul.f32 %v629, %v632
    %v639 = vmul.f32 %v630, %v632
    %v640 = vmul.f32 %v631, %v632
    %v641 = vperm.slane %v94, 5
    %v642 = vadd.f32 %v633, %v641
    %v643 = vadd.f32 %v634, %v641
    %v644 = vadd.f32 %v635, %v641
    %v645 = vadd.f32 %v636, %v641
    %v646 = vadd.f32 %v637, %v641
    %v647 = vadd.f32 %v638, %v641
    %v648 = vadd.f32 %v639, %v641
    %v649 = vadd.f32 %v640, %v641
    %v650 = vmax.f32 %v642, 0.0
    %v651 = vmax.f32 %v643, 0.0
    %v652 = vmax.f32 %v644, 0.0
    %v653 = vmax.f32 %v645, 0.0
    %v654 = vmax.f32 %v646, 0.0
    %v655 = vmax.f32 %v647, 0.0
    %v656 = vmax.f32 %v648, 0.0
    %v657 = vmax.f32 %v649, 0.0
    %v658 = vld [vmem:[%s4] sm:$0xff]
    %v659 = vld [vmem:[%s4 + $0x8] sm:$0xff]
    %v660 = vld [vmem:[%s4 + $0x10] sm:$0xff]
    %v661 = vld [vmem:[%s4 + $0x18] sm:$0xff]
    %v662 = vld [vmem:[%s5] sm:$0x1]
    %v664 = vperm.slane %v662, 0
    %v667 = vsel %vm46, %v650, 0
    %v670 = vsel %vm46, %v651, 0
    %v673 = vsel %vm46, %v652, 0
    %v676 = vsel %vm46, %v653, 0
    %v679 = vsel %vm46, %v654, 0
    %v682 = vsel %vm46, %v655, 0
    %v685 = vsel %vm46, %v656, 0
    %v688 = vsel %vm46, %v657, 0
    %690 = vmatpush.msra.mxu0 0.0
    %691 = vmatpush.msra.mxu0 0.0
    %692 = vmatpush.msra.mxu0 0.0
    %693 = vmatpush.msra.mxu0 0.0
    %694 = vmatpush.msra.mxu0 0.0
    %695 = vmatpush.msra.mxu0 0.0
    %696 = vmatpush.msra.mxu0 0.0
    %697 = vmatpush.msra.mxu0 0.0
    %698 = vmatpush.msra.mxu0 0.0
    %699 = vmatpush.msra.mxu0 0.0
    %700 = vmatpush.msra.mxu0 0.0
    %701 = vmatpush.msra.mxu0 0.0
    %702 = vmatpush.msra.mxu0 %v661
    %703 = vmatpush.msra.mxu0 %v660
    %704 = vmatpush.msra.mxu0 %v659
    %705 = vmatpush.msra.mxu0 %v658
    %706 = vmatmul.f32.gmra.mxu0 %v667
    %v707 = vpop.f32.mrf.mxu0
    %v708 = vadd.f32 %v664, %v707
    %709 = vmatmul.f32.gmra.mxu0 %v670
    %v710 = vpop.f32.mrf.mxu0
    %v711 = vadd.f32 %v664, %v710
    %712 = vmatmul.f32.gmra.mxu0 %v673
    %v713 = vpop.f32.mrf.mxu0
    %v714 = vadd.f32 %v664, %v713
    %715 = vmatmul.f32.gmra.mxu0 %v676
    %v716 = vpop.f32.mrf.mxu0
    %v717 = vadd.f32 %v664, %v716
    %718 = vmatmul.f32.gmra.mxu0 %v679
    %v719 = vpop.f32.mrf.mxu0
    %v720 = vadd.f32 %v664, %v719
    %721 = vmatmul.f32.gmra.mxu0 %v682
    %v722 = vpop.f32.mrf.mxu0
    %v723 = vadd.f32 %v664, %v722
    %724 = vmatmul.f32.gmra.mxu0 %v685
    %v725 = vpop.f32.mrf.mxu0
    %v726 = vadd.f32 %v664, %v725
    %727 = vmatmul.f32.gmra.mxu0 %v688
    %v728 = vpop.f32.mrf.mxu0
    %v729 = vadd.f32 %v664, %v728
    %730 = vdwg.mxu0
    %v731 = vmul.f32 %v708, %v708
    %v732 = vmul.f32 %v711, %v711
    %v733 = vmul.f32 %v714, %v714
    %v734 = vmul.f32 %v717, %v717
    %v735 = vmul.f32 %v720, %v720
    %v736 = vmul.f32 %v723, %v723
    %v737 = vmul.f32 %v726, %v726
    %v738 = vmul.f32 %v729, %v729
    %vm739 = vcmask 64512
    %v740 = vsel %vm739, %v731, 0.0
    %741 = vadd.xlane.f32.xlu0 %v740
    %v742 = vpop.xlane.xlu0 %741
    %v743 = vsel %vm739, %v732, 0.0
    %744 = vadd.xlane.f32.xlu0 %v743
    %v745 = vpop.xlane.xlu0 %744
    %v746 = vsel %vm739, %v733, 0.0
    %747 = vadd.xlane.f32.xlu0 %v746
    %v748 = vpop.xlane.xlu0 %747
    %v749 = vsel %vm739, %v734, 0.0
    %750 = vadd.xlane.f32.xlu0 %v749
    %v751 = vpop.xlane.xlu0 %750
    %v752 = vsel %vm739, %v735, 0.0
    %753 = vadd.xlane.f32.xlu0 %v752
    %v754 = vpop.xlane.xlu0 %753
    %v755 = vsel %vm739, %v736, 0.0
    %756 = vadd.xlane.f32.xlu0 %v755
    %v757 = vpop.xlane.xlu0 %756
    %v758 = vsel %vm739, %v737, 0.0
    %759 = vadd.xlane.f32.xlu0 %v758
    %v760 = vpop.xlane.xlu0 %759
    %v761 = vsel %vm739, %v738, 0.0
    %762 = vadd.xlane.f32.xlu0 %v761
    %v763 = vpop.xlane.xlu0 %762
    %v764 = vrsqrt.pop %v742
    %v765 = vmul.f32 %v764, %v742
    %v766 = vmul.f32 %v765, %v764
    %v767 = vmul.f32 0.5, %v766
    %v768 = vsub.f32 1.5, %v767
    %v769 = vmul.f32 %v764, %v768
    %v770 = vmul.f32 %v742, %v769
    %vm771 = vcmp.eq.f32.partialorder %v742, inf
    %v772 = vsel %vm771, %v742, %v770
    %vm773 = vcmp.eq.f32.partialorder %v742, 0.0
    %v774 = vand.u32 %v742, 2147483648
    %v775 = vsel %vm773, %v774, %v772
    %v776 = vrsqrt.pop %v745
    %v777 = vmul.f32 %v776, %v745
    %v778 = vmul.f32 %v777, %v776
    %v779 = vmul.f32 0.5, %v778
    %v780 = vsub.f32 1.5, %v779
    %v781 = vmul.f32 %v776, %v780
    %v782 = vmul.f32 %v745, %v781
    %vm783 = vcmp.eq.f32.partialorder %v745, inf
    %v784 = vsel %vm783, %v745, %v782
    %vm785 = vcmp.eq.f32.partialorder %v745, 0.0
    %v786 = vand.u32 %v745, 2147483648
    %v787 = vsel %vm785, %v786, %v784
    %v788 = vrsqrt.pop %v748
    %v789 = vmul.f32 %v788, %v748
    %v790 = vmul.f32 %v789, %v788
    %v791 = vmul.f32 0.5, %v790
    %v792 = vsub.f32 1.5, %v791
    %v793 = vmul.f32 %v788, %v792
    %v794 = vmul.f32 %v748, %v793
    %vm795 = vcmp.eq.f32.partialorder %v748, inf
    %v796 = vsel %vm795, %v748, %v794
    %vm797 = vcmp.eq.f32.partialorder %v748, 0.0
    %v798 = vand.u32 %v748, 2147483648
    %v799 = vsel %vm797, %v798, %v796
    %v800 = vrsqrt.pop %v751
    %v801 = vmul.f32 %v800, %v751
    %v802 = vmul.f32 %v801, %v800
    %v803 = vmul.f32 0.5, %v802
    %v804 = vsub.f32 1.5, %v803
    %v805 = vmul.f32 %v800, %v804
    %v806 = vmul.f32 %v751, %v805
    %vm807 = vcmp.eq.f32.partialorder %v751, inf
    %v808 = vsel %vm807, %v751, %v806
    %vm809 = vcmp.eq.f32.partialorder %v751, 0.0
    %v810 = vand.u32 %v751, 2147483648
    %v811 = vsel %vm809, %v810, %v808
    %v812 = vrsqrt.pop %v754
    %v813 = vmul.f32 %v812, %v754
    %v814 = vmul.f32 %v813, %v812
    %v815 = vmul.f32 0.5, %v814
    %v816 = vsub.f32 1.5, %v815
    %v817 = vmul.f32 %v812, %v816
    %v818 = vmul.f32 %v754, %v817
    %vm819 = vcmp.eq.f32.partialorder %v754, inf
    %v820 = vsel %vm819, %v754, %v818
    %vm821 = vcmp.eq.f32.partialorder %v754, 0.0
    %v822 = vand.u32 %v754, 2147483648
    %v823 = vsel %vm821, %v822, %v820
    %v824 = vrsqrt.pop %v757
    %v825 = vmul.f32 %v824, %v757
    %v826 = vmul.f32 %v825, %v824
    %v827 = vmul.f32 0.5, %v826
    %v828 = vsub.f32 1.5, %v827
    %v829 = vmul.f32 %v824, %v828
    %v830 = vmul.f32 %v757, %v829
    %vm831 = vcmp.eq.f32.partialorder %v757, inf
    %v832 = vsel %vm831, %v757, %v830
    %vm833 = vcmp.eq.f32.partialorder %v757, 0.0
    %v834 = vand.u32 %v757, 2147483648
    %v835 = vsel %vm833, %v834, %v832
    %v836 = vrsqrt.pop %v760
    %v837 = vmul.f32 %v836, %v760
    %v838 = vmul.f32 %v837, %v836
    %v839 = vmul.f32 0.5, %v838
    %v840 = vsub.f32 1.5, %v839
    %v841 = vmul.f32 %v836, %v840
    %v842 = vmul.f32 %v760, %v841
    %vm843 = vcmp.eq.f32.partialorder %v760, inf
    %v844 = vsel %vm843, %v760, %v842
    %vm845 = vcmp.eq.f32.partialorder %v760, 0.0
    %v846 = vand.u32 %v760, 2147483648
    %v847 = vsel %vm845, %v846, %v844
    %v848 = vrsqrt.pop %v763
    %v849 = vmul.f32 %v848, %v763
    %v850 = vmul.f32 %v849, %v848
    %v851 = vmul.f32 0.5, %v850
    %v852 = vsub.f32 1.5, %v851
    %v853 = vmul.f32 %v848, %v852
    %v854 = vmul.f32 %v763, %v853
    %vm855 = vcmp.eq.f32.partialorder %v763, inf
    %v856 = vsel %vm855, %v763, %v854
    %vm857 = vcmp.eq.f32.partialorder %v763, 0.0
    %v858 = vand.u32 %v763, 2147483648
    %v859 = vsel %vm857, %v858, %v856
    %v860 = vmax.f32 %v775, 1e-12
    %v861 = vmax.f32 %v787, 1e-12
    %v862 = vmax.f32 %v799, 1e-12
    %v863 = vmax.f32 %v811, 1e-12
    %v864 = vmax.f32 %v823, 1e-12
    %v865 = vmax.f32 %v835, 1e-12
    %v866 = vmax.f32 %v847, 1e-12
    %v867 = vmax.f32 %v859, 1e-12
    %v868 = vrcp.pop %v860
    %v869 = vmul.f32 %v860, %v868
    %v870 = vsub.f32 1.0, %v869
    %v871 = vmul.f32 %v868, %v870
    %v872 = vadd.f32 %v868, %v871
    %vm873 = vweird.f32 %v860
    %vm874 = vweird.f32 %v868
    %vm875 = vmor %vm873, %vm874
    %v876 = vsel %vm875, %v868, %v872
    %v877 = vand.u32 2147483647, %v860
    %vm878 = vcmp.eq.f32.partialorder %v877, 8.507059e+37
    %v879 = vand.u32 %v860, 2147483648
    %v880 = vor.u32 1.1754944e-38, %v879
    %v881 = vsel %vm878, %v880, %v876
    %v882 = vmul.f32 %v708, %v881
    %v883 = vrcp.pop %v861
    %v884 = vmul.f32 %v861, %v883
    %v885 = vsub.f32 1.0, %v884
    %v886 = vmul.f32 %v883, %v885
    %v887 = vadd.f32 %v883, %v886
    %vm888 = vweird.f32 %v861
    %vm889 = vweird.f32 %v883
    %vm890 = vmor %vm888, %vm889
    %v891 = vsel %vm890, %v883, %v887
    %v892 = vand.u32 2147483647, %v861
    %vm893 = vcmp.eq.f32.partialorder %v892, 8.507059e+37
    %v894 = vand.u32 %v861, 2147483648
    %v895 = vor.u32 1.1754944e-38, %v894
    %v896 = vsel %vm893, %v895, %v891
    %v897 = vmul.f32 %v711, %v896
    %v898 = vrcp.pop %v862
    %v899 = vmul.f32 %v862, %v898
    %v900 = vsub.f32 1.0, %v899
    %v901 = vmul.f32 %v898, %v900
    %v902 = vadd.f32 %v898, %v901
    %vm903 = vweird.f32 %v862
    %vm904 = vweird.f32 %v898
    %vm905 = vmor %vm903, %vm904
    %v906 = vsel %vm905, %v898, %v902
    %v907 = vand.u32 2147483647, %v862
    %vm908 = vcmp.eq.f32.partialorder %v907, 8.507059e+37
    %v909 = vand.u32 %v862, 2147483648
    %v910 = vor.u32 1.1754944e-38, %v909
    %v911 = vsel %vm908, %v910, %v906
    %v912 = vmul.f32 %v714, %v911
    %v913 = vrcp.pop %v863
    %v914 = vmul.f32 %v863, %v913
    %v915 = vsub.f32 1.0, %v914
    %v916 = vmul.f32 %v913, %v915
    %v917 = vadd.f32 %v913, %v916
    %vm918 = vweird.f32 %v863
    %vm919 = vweird.f32 %v913
    %vm920 = vmor %vm918, %vm919
    %v921 = vsel %vm920, %v913, %v917
    %v922 = vand.u32 2147483647, %v863
    %vm923 = vcmp.eq.f32.partialorder %v922, 8.507059e+37
    %v924 = vand.u32 %v863, 2147483648
    %v925 = vor.u32 1.1754944e-38, %v924
    %v926 = vsel %vm923, %v925, %v921
    %v927 = vmul.f32 %v717, %v926
    %v928 = vrcp.pop %v864
    %v929 = vmul.f32 %v864, %v928
    %v930 = vsub.f32 1.0, %v929
    %v931 = vmul.f32 %v928, %v930
    %v932 = vadd.f32 %v928, %v931
    %vm933 = vweird.f32 %v864
    %vm934 = vweird.f32 %v928
    %vm935 = vmor %vm933, %vm934
    %v936 = vsel %vm935, %v928, %v932
    %v937 = vand.u32 2147483647, %v864
    %vm938 = vcmp.eq.f32.partialorder %v937, 8.507059e+37
    %v939 = vand.u32 %v864, 2147483648
    %v940 = vor.u32 1.1754944e-38, %v939
    %v941 = vsel %vm938, %v940, %v936
    %v942 = vmul.f32 %v720, %v941
    %v943 = vrcp.pop %v865
    %v944 = vmul.f32 %v865, %v943
    %v945 = vsub.f32 1.0, %v944
    %v946 = vmul.f32 %v943, %v945
    %v947 = vadd.f32 %v943, %v946
    %vm948 = vweird.f32 %v865
    %vm949 = vweird.f32 %v943
    %vm950 = vmor %vm948, %vm949
    %v951 = vsel %vm950, %v943, %v947
    %v952 = vand.u32 2147483647, %v865
    %vm953 = vcmp.eq.f32.partialorder %v952, 8.507059e+37
    %v954 = vand.u32 %v865, 2147483648
    %v955 = vor.u32 1.1754944e-38, %v954
    %v956 = vsel %vm953, %v955, %v951
    %v957 = vmul.f32 %v723, %v956
    %v958 = vrcp.pop %v866
    %v959 = vmul.f32 %v866, %v958
    %v960 = vsub.f32 1.0, %v959
    %v961 = vmul.f32 %v958, %v960
    %v962 = vadd.f32 %v958, %v961
    %vm963 = vweird.f32 %v866
    %vm964 = vweird.f32 %v958
    %vm965 = vmor %vm963, %vm964
    %v966 = vsel %vm965, %v958, %v962
    %v967 = vand.u32 2147483647, %v866
    %vm968 = vcmp.eq.f32.partialorder %v967, 8.507059e+37
    %v969 = vand.u32 %v866, 2147483648
    %v970 = vor.u32 1.1754944e-38, %v969
    %v971 = vsel %vm968, %v970, %v966
    %v972 = vmul.f32 %v726, %v971
    %v973 = vrcp.pop %v867
    %v974 = vmul.f32 %v867, %v973
    %v975 = vsub.f32 1.0, %v974
    %v976 = vmul.f32 %v973, %v975
    %v977 = vadd.f32 %v973, %v976
    %vm978 = vweird.f32 %v867
    %vm979 = vweird.f32 %v973
    %vm980 = vmor %vm978, %vm979
    %v981 = vsel %vm980, %v973, %v977
    %v982 = vand.u32 2147483647, %v867
    %vm983 = vcmp.eq.f32.partialorder %v982, 8.507059e+37
    %v984 = vand.u32 %v867, 2147483648
    %v985 = vor.u32 1.1754944e-38, %v984
    %v986 = vsel %vm983, %v985, %v981
    %v987 = vmul.f32 %v729, %v986
    %v996 = vrot.slane %v882, 1
    %v997 = vrot.slane %v882, 2
    %v998 = vrot.slane %v882, 3
    %v999 = vrot.slane %v882, 4
    %v1000 = vrot.slane %v882, 5
    %v1001 = vrot.slane %v882, 6
    %v1002 = vrot.slane %v882, 7
    %v1003 = vrot.slane %v897, 1
    %v1004 = vrot.slane %v897, 2
    %v1005 = vrot.slane %v897, 3
    %v1006 = vrot.slane %v897, 4
    %v1007 = vrot.slane %v897, 5
    %v1008 = vrot.slane %v897, 6
    %v1009 = vrot.slane %v897, 7
    %v1010 = vrot.slane %v912, 1
    %v1011 = vrot.slane %v912, 2
    %v1012 = vrot.slane %v912, 3
    %v1013 = vrot.slane %v912, 4
    %v1014 = vrot.slane %v912, 5
    %v1015 = vrot.slane %v912, 6
    %v1016 = vrot.slane %v912, 7
    %v1017 = vrot.slane %v927, 1
    %v1018 = vrot.slane %v927, 2
    %v1019 = vrot.slane %v927, 3
    %v1020 = vrot.slane %v927, 4
    %v1021 = vrot.slane %v927, 5
    %v1022 = vrot.slane %v927, 6
    %v1023 = vrot.slane %v927, 7
    %v1024 = vrot.slane %v942, 1
    %v1025 = vrot.slane %v942, 2
    %v1026 = vrot.slane %v942, 3
    %v1027 = vrot.slane %v942, 4
    %v1028 = vrot.slane %v942, 5
    %v1029 = vrot.slane %v942, 6
    %v1030 = vrot.slane %v942, 7
    %v1031 = vrot.slane %v957, 1
    %v1032 = vrot.slane %v957, 2
    %v1033 = vrot.slane %v957, 3
    %v1034 = vrot.slane %v957, 4
    %v1035 = vrot.slane %v957, 5
    %v1036 = vrot.slane %v957, 6
    %v1037 = vrot.slane %v957, 7
    %v1038 = vrot.slane %v972, 1
    %v1039 = vrot.slane %v972, 2
    %v1040 = vrot.slane %v972, 3
    %v1041 = vrot.slane %v972, 4
    %v1042 = vrot.slane %v972, 5
    %v1043 = vrot.slane %v972, 6
    %v1044 = vrot.slane %v972, 7
    %v1045 = vrot.slane %v987, 1
    %v1046 = vrot.slane %v987, 2
    %v1047 = vrot.slane %v987, 3
    %v1048 = vrot.slane %v987, 4
    %v1049 = vrot.slane %v987, 5
    %v1050 = vrot.slane %v987, 6
    %v1051 = vrot.slane %v987, 7
    %v1052 = vperm.slane %v882, 0
    %v1053 = vperm.slane %v996, 0
    %v1054 = vperm.slane %v997, 0
    %v1055 = vperm.slane %v998, 0
    %v1056 = vperm.slane %v999, 0
    %v1057 = vperm.slane %v1000, 0
    %v1058 = vperm.slane %v1001, 0
    %v1059 = vperm.slane %v1002, 0
    %v1060 = vperm.slane %v897, 0
    %v1061 = vperm.slane %v1003, 0
    %v1062 = vperm.slane %v1004, 0
    %v1063 = vperm.slane %v1005, 0
    %v1064 = vperm.slane %v1006, 0
    %v1065 = vperm.slane %v1007, 0
    %v1066 = vperm.slane %v1008, 0
    %v1067 = vperm.slane %v1009, 0
    %v1068 = vperm.slane %v912, 0
    %v1069 = vperm.slane %v1010, 0
    %v1070 = vperm.slane %v1011, 0
    %v1071 = vperm.slane %v1012, 0
    %v1072 = vperm.slane %v1013, 0
    %v1073 = vperm.slane %v1014, 0
    %v1074 = vperm.slane %v1015, 0
    %v1075 = vperm.slane %v1016, 0
    %v1076 = vperm.slane %v927, 0
    %v1077 = vperm.slane %v1017, 0
    %v1078 = vperm.slane %v1018, 0
    %v1079 = vperm.slane %v1019, 0
    %v1080 = vperm.slane %v1020, 0
    %v1081 = vperm.slane %v1021, 0
    %v1082 = vperm.slane %v1022, 0
    %v1083 = vperm.slane %v1023, 0
    %v1084 = vperm.slane %v942, 0
    %v1085 = vperm.slane %v1024, 0
    %v1086 = vperm.slane %v1025, 0
    %v1087 = vperm.slane %v1026, 0
    %v1088 = vperm.slane %v1027, 0
    %v1089 = vperm.slane %v1028, 0
    %v1090 = vperm.slane %v1029, 0
    %v1091 = vperm.slane %v1030, 0
    %v1092 = vperm.slane %v957, 0
    %v1093 = vperm.slane %v1031, 0
    %v1094 = vperm.slane %v1032, 0
    %v1095 = vperm.slane %v1033, 0
    %v1096 = vperm.slane %v1034, 0
    %v1097 = vperm.slane %v1035, 0
    %v1098 = vperm.slane %v1036, 0
    %v1099 = vperm.slane %v1037, 0
    %v1100 = vperm.slane %v972, 0
    %v1101 = vperm.slane %v1038, 0
    %v1102 = vperm.slane %v1039, 0
    %v1103 = vperm.slane %v1040, 0
    %v1104 = vperm.slane %v1041, 0
    %v1105 = vperm.slane %v1042, 0
    %v1106 = vperm.slane %v1043, 0
    %v1107 = vperm.slane %v1044, 0
    %v1108 = vperm.slane %v987, 0
    %v1109 = vperm.slane %v1045, 0
    %v1110 = vperm.slane %v1046, 0
    %v1111 = vperm.slane %v1047, 0
    %v1112 = vperm.slane %v1048, 0
    %v1113 = vperm.slane %v1049, 0
    %v1114 = vperm.slane %v1050, 0
    %v1115 = vperm.slane %v1051, 0
    %v1180 = vsub.f32 %v1052, %v882
    %v1181 = vsub.f32 %v1052, %v897
    %v1182 = vsub.f32 %v1052, %v912
    %v1183 = vsub.f32 %v1052, %v927
    %v1184 = vsub.f32 %v1052, %v942
    %v1185 = vsub.f32 %v1052, %v957
    %v1186 = vsub.f32 %v1052, %v972
    %v1187 = vsub.f32 %v1052, %v987
    %v1188 = vsub.f32 %v1053, %v882
    %v1189 = vsub.f32 %v1053, %v897
    %v1190 = vsub.f32 %v1053, %v912
    %v1191 = vsub.f32 %v1053, %v927
    %v1192 = vsub.f32 %v1053, %v942
    %v1193 = vsub.f32 %v1053, %v957
    %v1194 = vsub.f32 %v1053, %v972
    %v1195 = vsub.f32 %v1053, %v987
    %v1196 = vsub.f32 %v1054, %v882
    %v1197 = vsub.f32 %v1054, %v897
    %v1198 = vsub.f32 %v1054, %v912
    %v1199 = vsub.f32 %v1054, %v927
    %v1200 = vsub.f32 %v1054, %v942
    %v1201 = vsub.f32 %v1054, %v957
    %v1202 = vsub.f32 %v1054, %v972
    %v1203 = vsub.f32 %v1054, %v987
    %v1204 = vsub.f32 %v1055, %v882
    %v1205 = vsub.f32 %v1055, %v897
    %v1206 = vsub.f32 %v1055, %v912
    %v1207 = vsub.f32 %v1055, %v927
    %v1208 = vsub.f32 %v1055, %v942
    %v1209 = vsub.f32 %v1055, %v957
    %v1210 = vsub.f32 %v1055, %v972
    %v1211 = vsub.f32 %v1055, %v987
    %v1212 = vsub.f32 %v1056, %v882
    %v1213 = vsub.f32 %v1056, %v897
    %v1214 = vsub.f32 %v1056, %v912
    %v1215 = vsub.f32 %v1056, %v927
    %v1216 = vsub.f32 %v1056, %v942
    %v1217 = vsub.f32 %v1056, %v957
    %v1218 = vsub.f32 %v1056, %v972
    %v1219 = vsub.f32 %v1056, %v987
    %v1220 = vsub.f32 %v1057, %v882
    %v1221 = vsub.f32 %v1057, %v897
    %v1222 = vsub.f32 %v1057, %v912
    %v1223 = vsub.f32 %v1057, %v927
    %v1224 = vsub.f32 %v1057, %v942
    %v1225 = vsub.f32 %v1057, %v957
    %v1226 = vsub.f32 %v1057, %v972
    %v1227 = vsub.f32 %v1057, %v987
    %v1228 = vsub.f32 %v1058, %v882
    %v1229 = vsub.f32 %v1058, %v897
    %v1230 = vsub.f32 %v1058, %v912
    %v1231 = vsub.f32 %v1058, %v927
    %v1232 = vsub.f32 %v1058, %v942
    %v1233 = vsub.f32 %v1058, %v957
    %v1234 = vsub.f32 %v1058, %v972
    %v1235 = vsub.f32 %v1058, %v987
    %v1236 = vsub.f32 %v1059, %v882
    %v1237 = vsub.f32 %v1059, %v897
    %v1238 = vsub.f32 %v1059, %v912
    %v1239 = vsub.f32 %v1059, %v927
    %v1240 = vsub.f32 %v1059, %v942
    %v1241 = vsub.f32 %v1059, %v957
    %v1242 = vsub.f32 %v1059, %v972
    %v1243 = vsub.f32 %v1059, %v987
    %v1244 = vsub.f32 %v1060, %v882
    %v1245 = vsub.f32 %v1060, %v897
    %v1246 = vsub.f32 %v1060, %v912
    %v1247 = vsub.f32 %v1060, %v927
    %v1248 = vsub.f32 %v1060, %v942
    %v1249 = vsub.f32 %v1060, %v957
    %v1250 = vsub.f32 %v1060, %v972
    %v1251 = vsub.f32 %v1060, %v987
    %v1252 = vsub.f32 %v1061, %v882
    %v1253 = vsub.f32 %v1061, %v897
    %v1254 = vsub.f32 %v1061, %v912
    %v1255 = vsub.f32 %v1061, %v927
    %v1256 = vsub.f32 %v1061, %v942
    %v1257 = vsub.f32 %v1061, %v957
    %v1258 = vsub.f32 %v1061, %v972
    %v1259 = vsub.f32 %v1061, %v987
    %v1260 = vsub.f32 %v1062, %v882
    %v1261 = vsub.f32 %v1062, %v897
    %v1262 = vsub.f32 %v1062, %v912
    %v1263 = vsub.f32 %v1062, %v927
    %v1264 = vsub.f32 %v1062, %v942
    %v1265 = vsub.f32 %v1062, %v957
    %v1266 = vsub.f32 %v1062, %v972
    %v1267 = vsub.f32 %v1062, %v987
    %v1268 = vsub.f32 %v1063, %v882
    %v1269 = vsub.f32 %v1063, %v897
    %v1270 = vsub.f32 %v1063, %v912
    %v1271 = vsub.f32 %v1063, %v927
    %v1272 = vsub.f32 %v1063, %v942
    %v1273 = vsub.f32 %v1063, %v957
    %v1274 = vsub.f32 %v1063, %v972
    %v1275 = vsub.f32 %v1063, %v987
    %v1276 = vsub.f32 %v1064, %v882
    %v1277 = vsub.f32 %v1064, %v897
    %v1278 = vsub.f32 %v1064, %v912
    %v1279 = vsub.f32 %v1064, %v927
    %v1280 = vsub.f32 %v1064, %v942
    %v1281 = vsub.f32 %v1064, %v957
    %v1282 = vsub.f32 %v1064, %v972
    %v1283 = vsub.f32 %v1064, %v987
    %v1284 = vsub.f32 %v1065, %v882
    %v1285 = vsub.f32 %v1065, %v897
    %v1286 = vsub.f32 %v1065, %v912
    %v1287 = vsub.f32 %v1065, %v927
    %v1288 = vsub.f32 %v1065, %v942
    %v1289 = vsub.f32 %v1065, %v957
    %v1290 = vsub.f32 %v1065, %v972
    %v1291 = vsub.f32 %v1065, %v987
    %v1292 = vsub.f32 %v1066, %v882
    %v1293 = vsub.f32 %v1066, %v897
    %v1294 = vsub.f32 %v1066, %v912
    %v1295 = vsub.f32 %v1066, %v927
    %v1296 = vsub.f32 %v1066, %v942
    %v1297 = vsub.f32 %v1066, %v957
    %v1298 = vsub.f32 %v1066, %v972
    %v1299 = vsub.f32 %v1066, %v987
    %v1300 = vsub.f32 %v1067, %v882
    %v1301 = vsub.f32 %v1067, %v897
    %v1302 = vsub.f32 %v1067, %v912
    %v1303 = vsub.f32 %v1067, %v927
    %v1304 = vsub.f32 %v1067, %v942
    %v1305 = vsub.f32 %v1067, %v957
    %v1306 = vsub.f32 %v1067, %v972
    %v1307 = vsub.f32 %v1067, %v987
    %v1308 = vsub.f32 %v1068, %v882
    %v1309 = vsub.f32 %v1068, %v897
    %v1310 = vsub.f32 %v1068, %v912
    %v1311 = vsub.f32 %v1068, %v927
    %v1312 = vsub.f32 %v1068, %v942
    %v1313 = vsub.f32 %v1068, %v957
    %v1314 = vsub.f32 %v1068, %v972
    %v1315 = vsub.f32 %v1068, %v987
    %v1316 = vsub.f32 %v1069, %v882
    %v1317 = vsub.f32 %v1069, %v897
    %v1318 = vsub.f32 %v1069, %v912
    %v1319 = vsub.f32 %v1069, %v927
    %v1320 = vsub.f32 %v1069, %v942
    %v1321 = vsub.f32 %v1069, %v957
    %v1322 = vsub.f32 %v1069, %v972
    %v1323 = vsub.f32 %v1069, %v987
    %v1324 = vsub.f32 %v1070, %v882
    %v1325 = vsub.f32 %v1070, %v897
    %v1326 = vsub.f32 %v1070, %v912
    %v1327 = vsub.f32 %v1070, %v927
    %v1328 = vsub.f32 %v1070, %v942
    %v1329 = vsub.f32 %v1070, %v957
    %v1330 = vsub.f32 %v1070, %v972
    %v1331 = vsub.f32 %v1070, %v987
    %v1332 = vsub.f32 %v1071, %v882
    %v1333 = vsub.f32 %v1071, %v897
    %v1334 = vsub.f32 %v1071, %v912
    %v1335 = vsub.f32 %v1071, %v927
    %v1336 = vsub.f32 %v1071, %v942
    %v1337 = vsub.f32 %v1071, %v957
    %v1338 = vsub.f32 %v1071, %v972
    %v1339 = vsub.f32 %v1071, %v987
    %v1340 = vsub.f32 %v1072, %v882
    %v1341 = vsub.f32 %v1072, %v897
    %v1342 = vsub.f32 %v1072, %v912
    %v1343 = vsub.f32 %v1072, %v927
    %v1344 = vsub.f32 %v1072, %v942
    %v1345 = vsub.f32 %v1072, %v957
    %v1346 = vsub.f32 %v1072, %v972
    %v1347 = vsub.f32 %v1072, %v987
    %v1348 = vsub.f32 %v1073, %v882
    %v1349 = vsub.f32 %v1073, %v897
    %v1350 = vsub.f32 %v1073, %v912
    %v1351 = vsub.f32 %v1073, %v927
    %v1352 = vsub.f32 %v1073, %v942
    %v1353 = vsub.f32 %v1073, %v957
    %v1354 = vsub.f32 %v1073, %v972
    %v1355 = vsub.f32 %v1073, %v987
    %v1356 = vsub.f32 %v1074, %v882
    %v1357 = vsub.f32 %v1074, %v897
    %v1358 = vsub.f32 %v1074, %v912
    %v1359 = vsub.f32 %v1074, %v927
    %v1360 = vsub.f32 %v1074, %v942
    %v1361 = vsub.f32 %v1074, %v957
    %v1362 = vsub.f32 %v1074, %v972
    %v1363 = vsub.f32 %v1074, %v987
    %v1364 = vsub.f32 %v1075, %v882
    %v1365 = vsub.f32 %v1075, %v897
    %v1366 = vsub.f32 %v1075, %v912
    %v1367 = vsub.f32 %v1075, %v927
    %v1368 = vsub.f32 %v1075, %v942
    %v1369 = vsub.f32 %v1075, %v957
    %v1370 = vsub.f32 %v1075, %v972
    %v1371 = vsub.f32 %v1075, %v987
    %v1372 = vsub.f32 %v1076, %v882
    %v1373 = vsub.f32 %v1076, %v897
    %v1374 = vsub.f32 %v1076, %v912
    %v1375 = vsub.f32 %v1076, %v927
    %v1376 = vsub.f32 %v1076, %v942
    %v1377 = vsub.f32 %v1076, %v957
    %v1378 = vsub.f32 %v1076, %v972
    %v1379 = vsub.f32 %v1076, %v987
    %v1380 = vsub.f32 %v1077, %v882
    %v1381 = vsub.f32 %v1077, %v897
    %v1382 = vsub.f32 %v1077, %v912
    %v1383 = vsub.f32 %v1077, %v927
    %v1384 = vsub.f32 %v1077, %v942
    %v1385 = vsub.f32 %v1077, %v957
    %v1386 = vsub.f32 %v1077, %v972
    %v1387 = vsub.f32 %v1077, %v987
    %v1388 = vsub.f32 %v1078, %v882
    %v1389 = vsub.f32 %v1078, %v897
    %v1390 = vsub.f32 %v1078, %v912
    %v1391 = vsub.f32 %v1078, %v927
    %v1392 = vsub.f32 %v1078, %v942
    %v1393 = vsub.f32 %v1078, %v957
    %v1394 = vsub.f32 %v1078, %v972
    %v1395 = vsub.f32 %v1078, %v987
    %v1396 = vsub.f32 %v1079, %v882
    %v1397 = vsub.f32 %v1079, %v897
    %v1398 = vsub.f32 %v1079, %v912
    %v1399 = vsub.f32 %v1079, %v927
    %v1400 = vsub.f32 %v1079, %v942
    %v1401 = vsub.f32 %v1079, %v957
    %v1402 = vsub.f32 %v1079, %v972
    %v1403 = vsub.f32 %v1079, %v987
    %v1404 = vsub.f32 %v1080, %v882
    %v1405 = vsub.f32 %v1080, %v897
    %v1406 = vsub.f32 %v1080, %v912
    %v1407 = vsub.f32 %v1080, %v927
    %v1408 = vsub.f32 %v1080, %v942
    %v1409 = vsub.f32 %v1080, %v957
    %v1410 = vsub.f32 %v1080, %v972
    %v1411 = vsub.f32 %v1080, %v987
    %v1412 = vsub.f32 %v1081, %v882
    %v1413 = vsub.f32 %v1081, %v897
    %v1414 = vsub.f32 %v1081, %v912
    %v1415 = vsub.f32 %v1081, %v927
    %v1416 = vsub.f32 %v1081, %v942
    %v1417 = vsub.f32 %v1081, %v957
    %v1418 = vsub.f32 %v1081, %v972
    %v1419 = vsub.f32 %v1081, %v987
    %v1420 = vsub.f32 %v1082, %v882
    %v1421 = vsub.f32 %v1082, %v897
    %v1422 = vsub.f32 %v1082, %v912
    %v1423 = vsub.f32 %v1082, %v927
    %v1424 = vsub.f32 %v1082, %v942
    %v1425 = vsub.f32 %v1082, %v957
    %v1426 = vsub.f32 %v1082, %v972
    %v1427 = vsub.f32 %v1082, %v987
    %v1428 = vsub.f32 %v1083, %v882
    %v1429 = vsub.f32 %v1083, %v897
    %v1430 = vsub.f32 %v1083, %v912
    %v1431 = vsub.f32 %v1083, %v927
    %v1432 = vsub.f32 %v1083, %v942
    %v1433 = vsub.f32 %v1083, %v957
    %v1434 = vsub.f32 %v1083, %v972
    %v1435 = vsub.f32 %v1083, %v987
    %v1436 = vsub.f32 %v1084, %v882
    %v1437 = vsub.f32 %v1084, %v897
    %v1438 = vsub.f32 %v1084, %v912
    %v1439 = vsub.f32 %v1084, %v927
    %v1440 = vsub.f32 %v1084, %v942
    %v1441 = vsub.f32 %v1084, %v957
    %v1442 = vsub.f32 %v1084, %v972
    %v1443 = vsub.f32 %v1084, %v987
    %v1444 = vsub.f32 %v1085, %v882
    %v1445 = vsub.f32 %v1085, %v897
    %v1446 = vsub.f32 %v1085, %v912
    %v1447 = vsub.f32 %v1085, %v927
    %v1448 = vsub.f32 %v1085, %v942
    %v1449 = vsub.f32 %v1085, %v957
    %v1450 = vsub.f32 %v1085, %v972
    %v1451 = vsub.f32 %v1085, %v987
    %v1452 = vsub.f32 %v1086, %v882
    %v1453 = vsub.f32 %v1086, %v897
    %v1454 = vsub.f32 %v1086, %v912
    %v1455 = vsub.f32 %v1086, %v927
    %v1456 = vsub.f32 %v1086, %v942
    %v1457 = vsub.f32 %v1086, %v957
    %v1458 = vsub.f32 %v1086, %v972
    %v1459 = vsub.f32 %v1086, %v987
    %v1460 = vsub.f32 %v1087, %v882
    %v1461 = vsub.f32 %v1087, %v897
    %v1462 = vsub.f32 %v1087, %v912
    %v1463 = vsub.f32 %v1087, %v927
    %v1464 = vsub.f32 %v1087, %v942
    %v1465 = vsub.f32 %v1087, %v957
    %v1466 = vsub.f32 %v1087, %v972
    %v1467 = vsub.f32 %v1087, %v987
    %v1468 = vsub.f32 %v1088, %v882
    %v1469 = vsub.f32 %v1088, %v897
    %v1470 = vsub.f32 %v1088, %v912
    %v1471 = vsub.f32 %v1088, %v927
    %v1472 = vsub.f32 %v1088, %v942
    %v1473 = vsub.f32 %v1088, %v957
    %v1474 = vsub.f32 %v1088, %v972
    %v1475 = vsub.f32 %v1088, %v987
    %v1476 = vsub.f32 %v1089, %v882
    %v1477 = vsub.f32 %v1089, %v897
    %v1478 = vsub.f32 %v1089, %v912
    %v1479 = vsub.f32 %v1089, %v927
    %v1480 = vsub.f32 %v1089, %v942
    %v1481 = vsub.f32 %v1089, %v957
    %v1482 = vsub.f32 %v1089, %v972
    %v1483 = vsub.f32 %v1089, %v987
    %v1484 = vsub.f32 %v1090, %v882
    %v1485 = vsub.f32 %v1090, %v897
    %v1486 = vsub.f32 %v1090, %v912
    %v1487 = vsub.f32 %v1090, %v927
    %v1488 = vsub.f32 %v1090, %v942
    %v1489 = vsub.f32 %v1090, %v957
    %v1490 = vsub.f32 %v1090, %v972
    %v1491 = vsub.f32 %v1090, %v987
    %v1492 = vsub.f32 %v1091, %v882
    %v1493 = vsub.f32 %v1091, %v897
    %v1494 = vsub.f32 %v1091, %v912
    %v1495 = vsub.f32 %v1091, %v927
    %v1496 = vsub.f32 %v1091, %v942
    %v1497 = vsub.f32 %v1091, %v957
    %v1498 = vsub.f32 %v1091, %v972
    %v1499 = vsub.f32 %v1091, %v987
    %v1500 = vsub.f32 %v1092, %v882
    %v1501 = vsub.f32 %v1092, %v897
    %v1502 = vsub.f32 %v1092, %v912
    %v1503 = vsub.f32 %v1092, %v927
    %v1504 = vsub.f32 %v1092, %v942
    %v1505 = vsub.f32 %v1092, %v957
    %v1506 = vsub.f32 %v1092, %v972
    %v1507 = vsub.f32 %v1092, %v987
    %v1508 = vsub.f32 %v1093, %v882
    %v1509 = vsub.f32 %v1093, %v897
    %v1510 = vsub.f32 %v1093, %v912
    %v1511 = vsub.f32 %v1093, %v927
    %v1512 = vsub.f32 %v1093, %v942
    %v1513 = vsub.f32 %v1093, %v957
    %v1514 = vsub.f32 %v1093, %v972
    %v1515 = vsub.f32 %v1093, %v987
    %v1516 = vsub.f32 %v1094, %v882
    %v1517 = vsub.f32 %v1094, %v897
    %v1518 = vsub.f32 %v1094, %v912
    %v1519 = vsub.f32 %v1094, %v927
    %v1520 = vsub.f32 %v1094, %v942
    %v1521 = vsub.f32 %v1094, %v957
    %v1522 = vsub.f32 %v1094, %v972
    %v1523 = vsub.f32 %v1094, %v987
    %v1524 = vsub.f32 %v1095, %v882
    %v1525 = vsub.f32 %v1095, %v897
    %v1526 = vsub.f32 %v1095, %v912
    %v1527 = vsub.f32 %v1095, %v927
    %v1528 = vsub.f32 %v1095, %v942
    %v1529 = vsub.f32 %v1095, %v957
    %v1530 = vsub.f32 %v1095, %v972
    %v1531 = vsub.f32 %v1095, %v987
    %v1532 = vsub.f32 %v1096, %v882
    %v1533 = vsub.f32 %v1096, %v897
    %v1534 = vsub.f32 %v1096, %v912
    %v1535 = vsub.f32 %v1096, %v927
    %v1536 = vsub.f32 %v1096, %v942
    %v1537 = vsub.f32 %v1096, %v957
    %v1538 = vsub.f32 %v1096, %v972
    %v1539 = vsub.f32 %v1096, %v987
    %v1540 = vsub.f32 %v1097, %v882
    %v1541 = vsub.f32 %v1097, %v897
    %v1542 = vsub.f32 %v1097, %v912
    %v1543 = vsub.f32 %v1097, %v927
    %v1544 = vsub.f32 %v1097, %v942
    %v1545 = vsub.f32 %v1097, %v957
    %v1546 = vsub.f32 %v1097, %v972
    %v1547 = vsub.f32 %v1097, %v987
    %v1548 = vsub.f32 %v1098, %v882
    %v1549 = vsub.f32 %v1098, %v897
    %v1550 = vsub.f32 %v1098, %v912
    %v1551 = vsub.f32 %v1098, %v927
    %v1552 = vsub.f32 %v1098, %v942
    %v1553 = vsub.f32 %v1098, %v957
    %v1554 = vsub.f32 %v1098, %v972
    %v1555 = vsub.f32 %v1098, %v987
    %v1556 = vsub.f32 %v1099, %v882
    %v1557 = vsub.f32 %v1099, %v897
    %v1558 = vsub.f32 %v1099, %v912
    %v1559 = vsub.f32 %v1099, %v927
    %v1560 = vsub.f32 %v1099, %v942
    %v1561 = vsub.f32 %v1099, %v957
    %v1562 = vsub.f32 %v1099, %v972
    %v1563 = vsub.f32 %v1099, %v987
    %v1564 = vsub.f32 %v1100, %v882
    %v1565 = vsub.f32 %v1100, %v897
    %v1566 = vsub.f32 %v1100, %v912
    %v1567 = vsub.f32 %v1100, %v927
    %v1568 = vsub.f32 %v1100, %v942
    %v1569 = vsub.f32 %v1100, %v957
    %v1570 = vsub.f32 %v1100, %v972
    %v1571 = vsub.f32 %v1100, %v987
    %v1572 = vsub.f32 %v1101, %v882
    %v1573 = vsub.f32 %v1101, %v897
    %v1574 = vsub.f32 %v1101, %v912
    %v1575 = vsub.f32 %v1101, %v927
    %v1576 = vsub.f32 %v1101, %v942
    %v1577 = vsub.f32 %v1101, %v957
    %v1578 = vsub.f32 %v1101, %v972
    %v1579 = vsub.f32 %v1101, %v987
    %v1580 = vsub.f32 %v1102, %v882
    %v1581 = vsub.f32 %v1102, %v897
    %v1582 = vsub.f32 %v1102, %v912
    %v1583 = vsub.f32 %v1102, %v927
    %v1584 = vsub.f32 %v1102, %v942
    %v1585 = vsub.f32 %v1102, %v957
    %v1586 = vsub.f32 %v1102, %v972
    %v1587 = vsub.f32 %v1102, %v987
    %v1588 = vsub.f32 %v1103, %v882
    %v1589 = vsub.f32 %v1103, %v897
    %v1590 = vsub.f32 %v1103, %v912
    %v1591 = vsub.f32 %v1103, %v927
    %v1592 = vsub.f32 %v1103, %v942
    %v1593 = vsub.f32 %v1103, %v957
    %v1594 = vsub.f32 %v1103, %v972
    %v1595 = vsub.f32 %v1103, %v987
    %v1596 = vsub.f32 %v1104, %v882
    %v1597 = vsub.f32 %v1104, %v897
    %v1598 = vsub.f32 %v1104, %v912
    %v1599 = vsub.f32 %v1104, %v927
    %v1600 = vsub.f32 %v1104, %v942
    %v1601 = vsub.f32 %v1104, %v957
    %v1602 = vsub.f32 %v1104, %v972
    %v1603 = vsub.f32 %v1104, %v987
    %v1604 = vsub.f32 %v1105, %v882
    %v1605 = vsub.f32 %v1105, %v897
    %v1606 = vsub.f32 %v1105, %v912
    %v1607 = vsub.f32 %v1105, %v927
    %v1608 = vsub.f32 %v1105, %v942
    %v1609 = vsub.f32 %v1105, %v957
    %v1610 = vsub.f32 %v1105, %v972
    %v1611 = vsub.f32 %v1105, %v987
    %v1612 = vsub.f32 %v1106, %v882
    %v1613 = vsub.f32 %v1106, %v897
    %v1614 = vsub.f32 %v1106, %v912
    %v1615 = vsub.f32 %v1106, %v927
    %v1616 = vsub.f32 %v1106, %v942
    %v1617 = vsub.f32 %v1106, %v957
    %v1618 = vsub.f32 %v1106, %v972
    %v1619 = vsub.f32 %v1106, %v987
    %v1620 = vsub.f32 %v1107, %v882
    %v1621 = vsub.f32 %v1107, %v897
    %v1622 = vsub.f32 %v1107, %v912
    %v1623 = vsub.f32 %v1107, %v927
    %v1624 = vsub.f32 %v1107, %v942
    %v1625 = vsub.f32 %v1107, %v957
    %v1626 = vsub.f32 %v1107, %v972
    %v1627 = vsub.f32 %v1107, %v987
    %v1628 = vsub.f32 %v1108, %v882
    %v1629 = vsub.f32 %v1108, %v897
    %v1630 = vsub.f32 %v1108, %v912
    %v1631 = vsub.f32 %v1108, %v927
    %v1632 = vsub.f32 %v1108, %v942
    %v1633 = vsub.f32 %v1108, %v957
    %v1634 = vsub.f32 %v1108, %v972
    %v1635 = vsub.f32 %v1108, %v987
    %v1636 = vsub.f32 %v1109, %v882
    %v1637 = vsub.f32 %v1109, %v897
    %v1638 = vsub.f32 %v1109, %v912
    %v1639 = vsub.f32 %v1109, %v927
    %v1640 = vsub.f32 %v1109, %v942
    %v1641 = vsub.f32 %v1109, %v957
    %v1642 = vsub.f32 %v1109, %v972
    %v1643 = vsub.f32 %v1109, %v987
    %v1644 = vsub.f32 %v1110, %v882
    %v1645 = vsub.f32 %v1110, %v897
    %v1646 = vsub.f32 %v1110, %v912
    %v1647 = vsub.f32 %v1110, %v927
    %v1648 = vsub.f32 %v1110, %v942
    %v1649 = vsub.f32 %v1110, %v957
    %v1650 = vsub.f32 %v1110, %v972
    %v1651 = vsub.f32 %v1110, %v987
    %v1652 = vsub.f32 %v1111, %v882
    %v1653 = vsub.f32 %v1111, %v897
    %v1654 = vsub.f32 %v1111, %v912
    %v1655 = vsub.f32 %v1111, %v927
    %v1656 = vsub.f32 %v1111, %v942
    %v1657 = vsub.f32 %v1111, %v957
    %v1658 = vsub.f32 %v1111, %v972
    %v1659 = vsub.f32 %v1111, %v987
    %v1660 = vsub.f32 %v1112, %v882
    %v1661 = vsub.f32 %v1112, %v897
    %v1662 = vsub.f32 %v1112, %v912
    %v1663 = vsub.f32 %v1112, %v927
    %v1664 = vsub.f32 %v1112, %v942
    %v1665 = vsub.f32 %v1112, %v957
    %v1666 = vsub.f32 %v1112, %v972
    %v1667 = vsub.f32 %v1112, %v987
    %v1668 = vsub.f32 %v1113, %v882
    %v1669 = vsub.f32 %v1113, %v897
    %v1670 = vsub.f32 %v1113, %v912
    %v1671 = vsub.f32 %v1113, %v927
    %v1672 = vsub.f32 %v1113, %v942
    %v1673 = vsub.f32 %v1113, %v957
    %v1674 = vsub.f32 %v1113, %v972
    %v1675 = vsub.f32 %v1113, %v987
    %v1676 = vsub.f32 %v1114, %v882
    %v1677 = vsub.f32 %v1114, %v897
    %v1678 = vsub.f32 %v1114, %v912
    %v1679 = vsub.f32 %v1114, %v927
    %v1680 = vsub.f32 %v1114, %v942
    %v1681 = vsub.f32 %v1114, %v957
    %v1682 = vsub.f32 %v1114, %v972
    %v1683 = vsub.f32 %v1114, %v987
    %v1684 = vsub.f32 %v1115, %v882
    %v1685 = vsub.f32 %v1115, %v897
    %v1686 = vsub.f32 %v1115, %v912
    %v1687 = vsub.f32 %v1115, %v927
    %v1688 = vsub.f32 %v1115, %v942
    %v1689 = vsub.f32 %v1115, %v957
    %v1690 = vsub.f32 %v1115, %v972
    %v1691 = vsub.f32 %v1115, %v987
    %v1692 = vmul.f32 %v1180, %v1180
    %v1693 = vmul.f32 %v1181, %v1181
    %v1694 = vmul.f32 %v1182, %v1182
    %v1695 = vmul.f32 %v1183, %v1183
    %v1696 = vmul.f32 %v1184, %v1184
    %v1697 = vmul.f32 %v1185, %v1185
    %v1698 = vmul.f32 %v1186, %v1186
    %v1699 = vmul.f32 %v1187, %v1187
    %v1700 = vmul.f32 %v1188, %v1188
    %v1701 = vmul.f32 %v1189, %v1189
    %v1702 = vmul.f32 %v1190, %v1190
    %v1703 = vmul.f32 %v1191, %v1191
    %v1704 = vmul.f32 %v1192, %v1192
    %v1705 = vmul.f32 %v1193, %v1193
    %v1706 = vmul.f32 %v1194, %v1194
    %v1707 = vmul.f32 %v1195, %v1195
    %v1708 = vmul.f32 %v1196, %v1196
    %v1709 = vmul.f32 %v1197, %v1197
    %v1710 = vmul.f32 %v1198, %v1198
    %v1711 = vmul.f32 %v1199, %v1199
    %v1712 = vmul.f32 %v1200, %v1200
    %v1713 = vmul.f32 %v1201, %v1201
    %v1714 = vmul.f32 %v1202, %v1202
    %v1715 = vmul.f32 %v1203, %v1203
    %v1716 = vmul.f32 %v1204, %v1204
    %v1717 = vmul.f32 %v1205, %v1205
    %v1718 = vmul.f32 %v1206, %v1206
    %v1719 = vmul.f32 %v1207, %v1207
    %v1720 = vmul.f32 %v1208, %v1208
    %v1721 = vmul.f32 %v1209, %v1209
    %v1722 = vmul.f32 %v1210, %v1210
    %v1723 = vmul.f32 %v1211, %v1211
    %v1724 = vmul.f32 %v1212, %v1212
    %v1725 = vmul.f32 %v1213, %v1213
    %v1726 = vmul.f32 %v1214, %v1214
    %v1727 = vmul.f32 %v1215, %v1215
    %v1728 = vmul.f32 %v1216, %v1216
    %v1729 = vmul.f32 %v1217, %v1217
    %v1730 = vmul.f32 %v1218, %v1218
    %v1731 = vmul.f32 %v1219, %v1219
    %v1732 = vmul.f32 %v1220, %v1220
    %v1733 = vmul.f32 %v1221, %v1221
    %v1734 = vmul.f32 %v1222, %v1222
    %v1735 = vmul.f32 %v1223, %v1223
    %v1736 = vmul.f32 %v1224, %v1224
    %v1737 = vmul.f32 %v1225, %v1225
    %v1738 = vmul.f32 %v1226, %v1226
    %v1739 = vmul.f32 %v1227, %v1227
    %v1740 = vmul.f32 %v1228, %v1228
    %v1741 = vmul.f32 %v1229, %v1229
    %v1742 = vmul.f32 %v1230, %v1230
    %v1743 = vmul.f32 %v1231, %v1231
    %v1744 = vmul.f32 %v1232, %v1232
    %v1745 = vmul.f32 %v1233, %v1233
    %v1746 = vmul.f32 %v1234, %v1234
    %v1747 = vmul.f32 %v1235, %v1235
    %v1748 = vmul.f32 %v1236, %v1236
    %v1749 = vmul.f32 %v1237, %v1237
    %v1750 = vmul.f32 %v1238, %v1238
    %v1751 = vmul.f32 %v1239, %v1239
    %v1752 = vmul.f32 %v1240, %v1240
    %v1753 = vmul.f32 %v1241, %v1241
    %v1754 = vmul.f32 %v1242, %v1242
    %v1755 = vmul.f32 %v1243, %v1243
    %v1756 = vmul.f32 %v1244, %v1244
    %v1757 = vmul.f32 %v1245, %v1245
    %v1758 = vmul.f32 %v1246, %v1246
    %v1759 = vmul.f32 %v1247, %v1247
    %v1760 = vmul.f32 %v1248, %v1248
    %v1761 = vmul.f32 %v1249, %v1249
    %v1762 = vmul.f32 %v1250, %v1250
    %v1763 = vmul.f32 %v1251, %v1251
    %v1764 = vmul.f32 %v1252, %v1252
    %v1765 = vmul.f32 %v1253, %v1253
    %v1766 = vmul.f32 %v1254, %v1254
    %v1767 = vmul.f32 %v1255, %v1255
    %v1768 = vmul.f32 %v1256, %v1256
    %v1769 = vmul.f32 %v1257, %v1257
    %v1770 = vmul.f32 %v1258, %v1258
    %v1771 = vmul.f32 %v1259, %v1259
    %v1772 = vmul.f32 %v1260, %v1260
    %v1773 = vmul.f32 %v1261, %v1261
    %v1774 = vmul.f32 %v1262, %v1262
    %v1775 = vmul.f32 %v1263, %v1263
    %v1776 = vmul.f32 %v1264, %v1264
    %v1777 = vmul.f32 %v1265, %v1265
    %v1778 = vmul.f32 %v1266, %v1266
    %v1779 = vmul.f32 %v1267, %v1267
    %v1780 = vmul.f32 %v1268, %v1268
    %v1781 = vmul.f32 %v1269, %v1269
    %v1782 = vmul.f32 %v1270, %v1270
    %v1783 = vmul.f32 %v1271, %v1271
    %v1784 = vmul.f32 %v1272, %v1272
    %v1785 = vmul.f32 %v1273, %v1273
    %v1786 = vmul.f32 %v1274, %v1274
    %v1787 = vmul.f32 %v1275, %v1275
    %v1788 = vmul.f32 %v1276, %v1276
    %v1789 = vmul.f32 %v1277, %v1277
    %v1790 = vmul.f32 %v1278, %v1278
    %v1791 = vmul.f32 %v1279, %v1279
    %v1792 = vmul.f32 %v1280, %v1280
    %v1793 = vmul.f32 %v1281, %v1281
    %v1794 = vmul.f32 %v1282, %v1282
    %v1795 = vmul.f32 %v1283, %v1283
    %v1796 = vmul.f32 %v1284, %v1284
    %v1797 = vmul.f32 %v1285, %v1285
    %v1798 = vmul.f32 %v1286, %v1286
    %v1799 = vmul.f32 %v1287, %v1287
    %v1800 = vmul.f32 %v1288, %v1288
    %v1801 = vmul.f32 %v1289, %v1289
    %v1802 = vmul.f32 %v1290, %v1290
    %v1803 = vmul.f32 %v1291, %v1291
    %v1804 = vmul.f32 %v1292, %v1292
    %v1805 = vmul.f32 %v1293, %v1293
    %v1806 = vmul.f32 %v1294, %v1294
    %v1807 = vmul.f32 %v1295, %v1295
    %v1808 = vmul.f32 %v1296, %v1296
    %v1809 = vmul.f32 %v1297, %v1297
    %v1810 = vmul.f32 %v1298, %v1298
    %v1811 = vmul.f32 %v1299, %v1299
    %v1812 = vmul.f32 %v1300, %v1300
    %v1813 = vmul.f32 %v1301, %v1301
    %v1814 = vmul.f32 %v1302, %v1302
    %v1815 = vmul.f32 %v1303, %v1303
    %v1816 = vmul.f32 %v1304, %v1304
    %v1817 = vmul.f32 %v1305, %v1305
    %v1818 = vmul.f32 %v1306, %v1306
    %v1819 = vmul.f32 %v1307, %v1307
    %v1820 = vmul.f32 %v1308, %v1308
    %v1821 = vmul.f32 %v1309, %v1309
    %v1822 = vmul.f32 %v1310, %v1310
    %v1823 = vmul.f32 %v1311, %v1311
    %v1824 = vmul.f32 %v1312, %v1312
    %v1825 = vmul.f32 %v1313, %v1313
    %v1826 = vmul.f32 %v1314, %v1314
    %v1827 = vmul.f32 %v1315, %v1315
    %v1828 = vmul.f32 %v1316, %v1316
    %v1829 = vmul.f32 %v1317, %v1317
    %v1830 = vmul.f32 %v1318, %v1318
    %v1831 = vmul.f32 %v1319, %v1319
    %v1832 = vmul.f32 %v1320, %v1320
    %v1833 = vmul.f32 %v1321, %v1321
    %v1834 = vmul.f32 %v1322, %v1322
    %v1835 = vmul.f32 %v1323, %v1323
    %v1836 = vmul.f32 %v1324, %v1324
    %v1837 = vmul.f32 %v1325, %v1325
    %v1838 = vmul.f32 %v1326, %v1326
    %v1839 = vmul.f32 %v1327, %v1327
    %v1840 = vmul.f32 %v1328, %v1328
    %v1841 = vmul.f32 %v1329, %v1329
    %v1842 = vmul.f32 %v1330, %v1330
    %v1843 = vmul.f32 %v1331, %v1331
    %v1844 = vmul.f32 %v1332, %v1332
    %v1845 = vmul.f32 %v1333, %v1333
    %v1846 = vmul.f32 %v1334, %v1334
    %v1847 = vmul.f32 %v1335, %v1335
    %v1848 = vmul.f32 %v1336, %v1336
    %v1849 = vmul.f32 %v1337, %v1337
    %v1850 = vmul.f32 %v1338, %v1338
    %v1851 = vmul.f32 %v1339, %v1339
    %v1852 = vmul.f32 %v1340, %v1340
    %v1853 = vmul.f32 %v1341, %v1341
    %v1854 = vmul.f32 %v1342, %v1342
    %v1855 = vmul.f32 %v1343, %v1343
    %v1856 = vmul.f32 %v1344, %v1344
    %v1857 = vmul.f32 %v1345, %v1345
    %v1858 = vmul.f32 %v1346, %v1346
    %v1859 = vmul.f32 %v1347, %v1347
    %v1860 = vmul.f32 %v1348, %v1348
    %v1861 = vmul.f32 %v1349, %v1349
    %v1862 = vmul.f32 %v1350, %v1350
    %v1863 = vmul.f32 %v1351, %v1351
    %v1864 = vmul.f32 %v1352, %v1352
    %v1865 = vmul.f32 %v1353, %v1353
    %v1866 = vmul.f32 %v1354, %v1354
    %v1867 = vmul.f32 %v1355, %v1355
    %v1868 = vmul.f32 %v1356, %v1356
    %v1869 = vmul.f32 %v1357, %v1357
    %v1870 = vmul.f32 %v1358, %v1358
    %v1871 = vmul.f32 %v1359, %v1359
    %v1872 = vmul.f32 %v1360, %v1360
    %v1873 = vmul.f32 %v1361, %v1361
    %v1874 = vmul.f32 %v1362, %v1362
    %v1875 = vmul.f32 %v1363, %v1363
    %v1876 = vmul.f32 %v1364, %v1364
    %v1877 = vmul.f32 %v1365, %v1365
    %v1878 = vmul.f32 %v1366, %v1366
    %v1879 = vmul.f32 %v1367, %v1367
    %v1880 = vmul.f32 %v1368, %v1368
    %v1881 = vmul.f32 %v1369, %v1369
    %v1882 = vmul.f32 %v1370, %v1370
    %v1883 = vmul.f32 %v1371, %v1371
    %v1884 = vmul.f32 %v1372, %v1372
    %v1885 = vmul.f32 %v1373, %v1373
    %v1886 = vmul.f32 %v1374, %v1374
    %v1887 = vmul.f32 %v1375, %v1375
    %v1888 = vmul.f32 %v1376, %v1376
    %v1889 = vmul.f32 %v1377, %v1377
    %v1890 = vmul.f32 %v1378, %v1378
    %v1891 = vmul.f32 %v1379, %v1379
    %v1892 = vmul.f32 %v1380, %v1380
    %v1893 = vmul.f32 %v1381, %v1381
    %v1894 = vmul.f32 %v1382, %v1382
    %v1895 = vmul.f32 %v1383, %v1383
    %v1896 = vmul.f32 %v1384, %v1384
    %v1897 = vmul.f32 %v1385, %v1385
    %v1898 = vmul.f32 %v1386, %v1386
    %v1899 = vmul.f32 %v1387, %v1387
    %v1900 = vmul.f32 %v1388, %v1388
    %v1901 = vmul.f32 %v1389, %v1389
    %v1902 = vmul.f32 %v1390, %v1390
    %v1903 = vmul.f32 %v1391, %v1391
    %v1904 = vmul.f32 %v1392, %v1392
    %v1905 = vmul.f32 %v1393, %v1393
    %v1906 = vmul.f32 %v1394, %v1394
    %v1907 = vmul.f32 %v1395, %v1395
    %v1908 = vmul.f32 %v1396, %v1396
    %v1909 = vmul.f32 %v1397, %v1397
    %v1910 = vmul.f32 %v1398, %v1398
    %v1911 = vmul.f32 %v1399, %v1399
    %v1912 = vmul.f32 %v1400, %v1400
    %v1913 = vmul.f32 %v1401, %v1401
    %v1914 = vmul.f32 %v1402, %v1402
    %v1915 = vmul.f32 %v1403, %v1403
    %v1916 = vmul.f32 %v1404, %v1404
    %v1917 = vmul.f32 %v1405, %v1405
    %v1918 = vmul.f32 %v1406, %v1406
    %v1919 = vmul.f32 %v1407, %v1407
    %v1920 = vmul.f32 %v1408, %v1408
    %v1921 = vmul.f32 %v1409, %v1409
    %v1922 = vmul.f32 %v1410, %v1410
    %v1923 = vmul.f32 %v1411, %v1411
    %v1924 = vmul.f32 %v1412, %v1412
    %v1925 = vmul.f32 %v1413, %v1413
    %v1926 = vmul.f32 %v1414, %v1414
    %v1927 = vmul.f32 %v1415, %v1415
    %v1928 = vmul.f32 %v1416, %v1416
    %v1929 = vmul.f32 %v1417, %v1417
    %v1930 = vmul.f32 %v1418, %v1418
    %v1931 = vmul.f32 %v1419, %v1419
    %v1932 = vmul.f32 %v1420, %v1420
    %v1933 = vmul.f32 %v1421, %v1421
    %v1934 = vmul.f32 %v1422, %v1422
    %v1935 = vmul.f32 %v1423, %v1423
    %v1936 = vmul.f32 %v1424, %v1424
    %v1937 = vmul.f32 %v1425, %v1425
    %v1938 = vmul.f32 %v1426, %v1426
    %v1939 = vmul.f32 %v1427, %v1427
    %v1940 = vmul.f32 %v1428, %v1428
    %v1941 = vmul.f32 %v1429, %v1429
    %v1942 = vmul.f32 %v1430, %v1430
    %v1943 = vmul.f32 %v1431, %v1431
    %v1944 = vmul.f32 %v1432, %v1432
    %v1945 = vmul.f32 %v1433, %v1433
    %v1946 = vmul.f32 %v1434, %v1434
    %v1947 = vmul.f32 %v1435, %v1435
    %v1948 = vmul.f32 %v1436, %v1436
    %v1949 = vmul.f32 %v1437, %v1437
    %v1950 = vmul.f32 %v1438, %v1438
    %v1951 = vmul.f32 %v1439, %v1439
    %v1952 = vmul.f32 %v1440, %v1440
    %v1953 = vmul.f32 %v1441, %v1441
    %v1954 = vmul.f32 %v1442, %v1442
    %v1955 = vmul.f32 %v1443, %v1443
    %v1956 = vmul.f32 %v1444, %v1444
    %v1957 = vmul.f32 %v1445, %v1445
    %v1958 = vmul.f32 %v1446, %v1446
    %v1959 = vmul.f32 %v1447, %v1447
    %v1960 = vmul.f32 %v1448, %v1448
    %v1961 = vmul.f32 %v1449, %v1449
    %v1962 = vmul.f32 %v1450, %v1450
    %v1963 = vmul.f32 %v1451, %v1451
    %v1964 = vmul.f32 %v1452, %v1452
    %v1965 = vmul.f32 %v1453, %v1453
    %v1966 = vmul.f32 %v1454, %v1454
    %v1967 = vmul.f32 %v1455, %v1455
    %v1968 = vmul.f32 %v1456, %v1456
    %v1969 = vmul.f32 %v1457, %v1457
    %v1970 = vmul.f32 %v1458, %v1458
    %v1971 = vmul.f32 %v1459, %v1459
    %v1972 = vmul.f32 %v1460, %v1460
    %v1973 = vmul.f32 %v1461, %v1461
    %v1974 = vmul.f32 %v1462, %v1462
    %v1975 = vmul.f32 %v1463, %v1463
    %v1976 = vmul.f32 %v1464, %v1464
    %v1977 = vmul.f32 %v1465, %v1465
    %v1978 = vmul.f32 %v1466, %v1466
    %v1979 = vmul.f32 %v1467, %v1467
    %v1980 = vmul.f32 %v1468, %v1468
    %v1981 = vmul.f32 %v1469, %v1469
    %v1982 = vmul.f32 %v1470, %v1470
    %v1983 = vmul.f32 %v1471, %v1471
    %v1984 = vmul.f32 %v1472, %v1472
    %v1985 = vmul.f32 %v1473, %v1473
    %v1986 = vmul.f32 %v1474, %v1474
    %v1987 = vmul.f32 %v1475, %v1475
    %v1988 = vmul.f32 %v1476, %v1476
    %v1989 = vmul.f32 %v1477, %v1477
    %v1990 = vmul.f32 %v1478, %v1478
    %v1991 = vmul.f32 %v1479, %v1479
    %v1992 = vmul.f32 %v1480, %v1480
    %v1993 = vmul.f32 %v1481, %v1481
    %v1994 = vmul.f32 %v1482, %v1482
    %v1995 = vmul.f32 %v1483, %v1483
    %v1996 = vmul.f32 %v1484, %v1484
    %v1997 = vmul.f32 %v1485, %v1485
    %v1998 = vmul.f32 %v1486, %v1486
    %v1999 = vmul.f32 %v1487, %v1487
    %v2000 = vmul.f32 %v1488, %v1488
    %v2001 = vmul.f32 %v1489, %v1489
    %v2002 = vmul.f32 %v1490, %v1490
    %v2003 = vmul.f32 %v1491, %v1491
    %v2004 = vmul.f32 %v1492, %v1492
    %v2005 = vmul.f32 %v1493, %v1493
    %v2006 = vmul.f32 %v1494, %v1494
    %v2007 = vmul.f32 %v1495, %v1495
    %v2008 = vmul.f32 %v1496, %v1496
    %v2009 = vmul.f32 %v1497, %v1497
    %v2010 = vmul.f32 %v1498, %v1498
    %v2011 = vmul.f32 %v1499, %v1499
    %v2012 = vmul.f32 %v1500, %v1500
    %v2013 = vmul.f32 %v1501, %v1501
    %v2014 = vmul.f32 %v1502, %v1502
    %v2015 = vmul.f32 %v1503, %v1503
    %v2016 = vmul.f32 %v1504, %v1504
    %v2017 = vmul.f32 %v1505, %v1505
    %v2018 = vmul.f32 %v1506, %v1506
    %v2019 = vmul.f32 %v1507, %v1507
    %v2020 = vmul.f32 %v1508, %v1508
    %v2021 = vmul.f32 %v1509, %v1509
    %v2022 = vmul.f32 %v1510, %v1510
    %v2023 = vmul.f32 %v1511, %v1511
    %v2024 = vmul.f32 %v1512, %v1512
    %v2025 = vmul.f32 %v1513, %v1513
    %v2026 = vmul.f32 %v1514, %v1514
    %v2027 = vmul.f32 %v1515, %v1515
    %v2028 = vmul.f32 %v1516, %v1516
    %v2029 = vmul.f32 %v1517, %v1517
    %v2030 = vmul.f32 %v1518, %v1518
    %v2031 = vmul.f32 %v1519, %v1519
    %v2032 = vmul.f32 %v1520, %v1520
    %v2033 = vmul.f32 %v1521, %v1521
    %v2034 = vmul.f32 %v1522, %v1522
    %v2035 = vmul.f32 %v1523, %v1523
    %v2036 = vmul.f32 %v1524, %v1524
    %v2037 = vmul.f32 %v1525, %v1525
    %v2038 = vmul.f32 %v1526, %v1526
    %v2039 = vmul.f32 %v1527, %v1527
    %v2040 = vmul.f32 %v1528, %v1528
    %v2041 = vmul.f32 %v1529, %v1529
    %v2042 = vmul.f32 %v1530, %v1530
    %v2043 = vmul.f32 %v1531, %v1531
    %v2044 = vmul.f32 %v1532, %v1532
    %v2045 = vmul.f32 %v1533, %v1533
    %v2046 = vmul.f32 %v1534, %v1534
    %v2047 = vmul.f32 %v1535, %v1535
    %v2048 = vmul.f32 %v1536, %v1536
    %v2049 = vmul.f32 %v1537, %v1537
    %v2050 = vmul.f32 %v1538, %v1538
    %v2051 = vmul.f32 %v1539, %v1539
    %v2052 = vmul.f32 %v1540, %v1540
    %v2053 = vmul.f32 %v1541, %v1541
    %v2054 = vmul.f32 %v1542, %v1542
    %v2055 = vmul.f32 %v1543, %v1543
    %v2056 = vmul.f32 %v1544, %v1544
    %v2057 = vmul.f32 %v1545, %v1545
    %v2058 = vmul.f32 %v1546, %v1546
    %v2059 = vmul.f32 %v1547, %v1547
    %v2060 = vmul.f32 %v1548, %v1548
    %v2061 = vmul.f32 %v1549, %v1549
    %v2062 = vmul.f32 %v1550, %v1550
    %v2063 = vmul.f32 %v1551, %v1551
    %v2064 = vmul.f32 %v1552, %v1552
    %v2065 = vmul.f32 %v1553, %v1553
    %v2066 = vmul.f32 %v1554, %v1554
    %v2067 = vmul.f32 %v1555, %v1555
    %v2068 = vmul.f32 %v1556, %v1556
    %v2069 = vmul.f32 %v1557, %v1557
    %v2070 = vmul.f32 %v1558, %v1558
    %v2071 = vmul.f32 %v1559, %v1559
    %v2072 = vmul.f32 %v1560, %v1560
    %v2073 = vmul.f32 %v1561, %v1561
    %v2074 = vmul.f32 %v1562, %v1562
    %v2075 = vmul.f32 %v1563, %v1563
    %v2076 = vmul.f32 %v1564, %v1564
    %v2077 = vmul.f32 %v1565, %v1565
    %v2078 = vmul.f32 %v1566, %v1566
    %v2079 = vmul.f32 %v1567, %v1567
    %v2080 = vmul.f32 %v1568, %v1568
    %v2081 = vmul.f32 %v1569, %v1569
    %v2082 = vmul.f32 %v1570, %v1570
    %v2083 = vmul.f32 %v1571, %v1571
    %v2084 = vmul.f32 %v1572, %v1572
    %v2085 = vmul.f32 %v1573, %v1573
    %v2086 = vmul.f32 %v1574, %v1574
    %v2087 = vmul.f32 %v1575, %v1575
    %v2088 = vmul.f32 %v1576, %v1576
    %v2089 = vmul.f32 %v1577, %v1577
    %v2090 = vmul.f32 %v1578, %v1578
    %v2091 = vmul.f32 %v1579, %v1579
    %v2092 = vmul.f32 %v1580, %v1580
    %v2093 = vmul.f32 %v1581, %v1581
    %v2094 = vmul.f32 %v1582, %v1582
    %v2095 = vmul.f32 %v1583, %v1583
    %v2096 = vmul.f32 %v1584, %v1584
    %v2097 = vmul.f32 %v1585, %v1585
    %v2098 = vmul.f32 %v1586, %v1586
    %v2099 = vmul.f32 %v1587, %v1587
    %v2100 = vmul.f32 %v1588, %v1588
    %v2101 = vmul.f32 %v1589, %v1589
    %v2102 = vmul.f32 %v1590, %v1590
    %v2103 = vmul.f32 %v1591, %v1591
    %v2104 = vmul.f32 %v1592, %v1592
    %v2105 = vmul.f32 %v1593, %v1593
    %v2106 = vmul.f32 %v1594, %v1594
    %v2107 = vmul.f32 %v1595, %v1595
    %v2108 = vmul.f32 %v1596, %v1596
    %v2109 = vmul.f32 %v1597, %v1597
    %v2110 = vmul.f32 %v1598, %v1598
    %v2111 = vmul.f32 %v1599, %v1599
    %v2112 = vmul.f32 %v1600, %v1600
    %v2113 = vmul.f32 %v1601, %v1601
    %v2114 = vmul.f32 %v1602, %v1602
    %v2115 = vmul.f32 %v1603, %v1603
    %v2116 = vmul.f32 %v1604, %v1604
    %v2117 = vmul.f32 %v1605, %v1605
    %v2118 = vmul.f32 %v1606, %v1606
    %v2119 = vmul.f32 %v1607, %v1607
    %v2120 = vmul.f32 %v1608, %v1608
    %v2121 = vmul.f32 %v1609, %v1609
    %v2122 = vmul.f32 %v1610, %v1610
    %v2123 = vmul.f32 %v1611, %v1611
    %v2124 = vmul.f32 %v1612, %v1612
    %v2125 = vmul.f32 %v1613, %v1613
    %v2126 = vmul.f32 %v1614, %v1614
    %v2127 = vmul.f32 %v1615, %v1615
    %v2128 = vmul.f32 %v1616, %v1616
    %v2129 = vmul.f32 %v1617, %v1617
    %v2130 = vmul.f32 %v1618, %v1618
    %v2131 = vmul.f32 %v1619, %v1619
    %v2132 = vmul.f32 %v1620, %v1620
    %v2133 = vmul.f32 %v1621, %v1621
    %v2134 = vmul.f32 %v1622, %v1622
    %v2135 = vmul.f32 %v1623, %v1623
    %v2136 = vmul.f32 %v1624, %v1624
    %v2137 = vmul.f32 %v1625, %v1625
    %v2138 = vmul.f32 %v1626, %v1626
    %v2139 = vmul.f32 %v1627, %v1627
    %v2140 = vmul.f32 %v1628, %v1628
    %v2141 = vmul.f32 %v1629, %v1629
    %v2142 = vmul.f32 %v1630, %v1630
    %v2143 = vmul.f32 %v1631, %v1631
    %v2144 = vmul.f32 %v1632, %v1632
    %v2145 = vmul.f32 %v1633, %v1633
    %v2146 = vmul.f32 %v1634, %v1634
    %v2147 = vmul.f32 %v1635, %v1635
    %v2148 = vmul.f32 %v1636, %v1636
    %v2149 = vmul.f32 %v1637, %v1637
    %v2150 = vmul.f32 %v1638, %v1638
    %v2151 = vmul.f32 %v1639, %v1639
    %v2152 = vmul.f32 %v1640, %v1640
    %v2153 = vmul.f32 %v1641, %v1641
    %v2154 = vmul.f32 %v1642, %v1642
    %v2155 = vmul.f32 %v1643, %v1643
    %v2156 = vmul.f32 %v1644, %v1644
    %v2157 = vmul.f32 %v1645, %v1645
    %v2158 = vmul.f32 %v1646, %v1646
    %v2159 = vmul.f32 %v1647, %v1647
    %v2160 = vmul.f32 %v1648, %v1648
    %v2161 = vmul.f32 %v1649, %v1649
    %v2162 = vmul.f32 %v1650, %v1650
    %v2163 = vmul.f32 %v1651, %v1651
    %v2164 = vmul.f32 %v1652, %v1652
    %v2165 = vmul.f32 %v1653, %v1653
    %v2166 = vmul.f32 %v1654, %v1654
    %v2167 = vmul.f32 %v1655, %v1655
    %v2168 = vmul.f32 %v1656, %v1656
    %v2169 = vmul.f32 %v1657, %v1657
    %v2170 = vmul.f32 %v1658, %v1658
    %v2171 = vmul.f32 %v1659, %v1659
    %v2172 = vmul.f32 %v1660, %v1660
    %v2173 = vmul.f32 %v1661, %v1661
    %v2174 = vmul.f32 %v1662, %v1662
    %v2175 = vmul.f32 %v1663, %v1663
    %v2176 = vmul.f32 %v1664, %v1664
    %v2177 = vmul.f32 %v1665, %v1665
    %v2178 = vmul.f32 %v1666, %v1666
    %v2179 = vmul.f32 %v1667, %v1667
    %v2180 = vmul.f32 %v1668, %v1668
    %v2181 = vmul.f32 %v1669, %v1669
    %v2182 = vmul.f32 %v1670, %v1670
    %v2183 = vmul.f32 %v1671, %v1671
    %v2184 = vmul.f32 %v1672, %v1672
    %v2185 = vmul.f32 %v1673, %v1673
    %v2186 = vmul.f32 %v1674, %v1674
    %v2187 = vmul.f32 %v1675, %v1675
    %v2188 = vmul.f32 %v1676, %v1676
    %v2189 = vmul.f32 %v1677, %v1677
    %v2190 = vmul.f32 %v1678, %v1678
    %v2191 = vmul.f32 %v1679, %v1679
    %v2192 = vmul.f32 %v1680, %v1680
    %v2193 = vmul.f32 %v1681, %v1681
    %v2194 = vmul.f32 %v1682, %v1682
    %v2195 = vmul.f32 %v1683, %v1683
    %v2196 = vmul.f32 %v1684, %v1684
    %v2197 = vmul.f32 %v1685, %v1685
    %v2198 = vmul.f32 %v1686, %v1686
    %v2199 = vmul.f32 %v1687, %v1687
    %v2200 = vmul.f32 %v1688, %v1688
    %v2201 = vmul.f32 %v1689, %v1689
    %v2202 = vmul.f32 %v1690, %v1690
    %v2203 = vmul.f32 %v1691, %v1691
    %v2204 = vsel %vm739, %v1692, 0.0
    %2205 = vadd.xlane.f32.xlu0 %v2204
    %v2206 = vpop.xlane.xlu0 %2205
    %v2207 = vsel %vm739, %v1693, 0.0
    %2208 = vadd.xlane.f32.xlu0 %v2207
    %v2209 = vpop.xlane.xlu0 %2208
    %v2210 = vsel %vm739, %v1694, 0.0
    %2211 = vadd.xlane.f32.xlu0 %v2210
    %v2212 = vpop.xlane.xlu0 %2211
    %v2213 = vsel %vm739, %v1695, 0.0
    %2214 = vadd.xlane.f32.xlu0 %v2213
    %v2215 = vpop.xlane.xlu0 %2214
    %v2216 = vsel %vm739, %v1696, 0.0
    %2217 = vadd.xlane.f32.xlu0 %v2216
    %v2218 = vpop.xlane.xlu0 %2217
    %v2219 = vsel %vm739, %v1697, 0.0
    %2220 = vadd.xlane.f32.xlu0 %v2219
    %v2221 = vpop.xlane.xlu0 %2220
    %v2222 = vsel %vm739, %v1698, 0.0
    %2223 = vadd.xlane.f32.xlu0 %v2222
    %v2224 = vpop.xlane.xlu0 %2223
    %v2225 = vsel %vm739, %v1699, 0.0
    %2226 = vadd.xlane.f32.xlu0 %v2225
    %v2227 = vpop.xlane.xlu0 %2226
    %v2228 = vsel %vm739, %v1700, 0.0
    %2229 = vadd.xlane.f32.xlu0 %v2228
    %v2230 = vpop.xlane.xlu0 %2229
    %v2231 = vsel %vm739, %v1701, 0.0
    %2232 = vadd.xlane.f32.xlu0 %v2231
    %v2233 = vpop.xlane.xlu0 %2232
    %v2234 = vsel %vm739, %v1702, 0.0
    %2235 = vadd.xlane.f32.xlu0 %v2234
    %v2236 = vpop.xlane.xlu0 %2235
    %v2237 = vsel %vm739, %v1703, 0.0
    %2238 = vadd.xlane.f32.xlu0 %v2237
    %v2239 = vpop.xlane.xlu0 %2238
    %v2240 = vsel %vm739, %v1704, 0.0
    %2241 = vadd.xlane.f32.xlu0 %v2240
    %v2242 = vpop.xlane.xlu0 %2241
    %v2243 = vsel %vm739, %v1705, 0.0
    %2244 = vadd.xlane.f32.xlu0 %v2243
    %v2245 = vpop.xlane.xlu0 %2244
    %v2246 = vsel %vm739, %v1706, 0.0
    %2247 = vadd.xlane.f32.xlu0 %v2246
    %v2248 = vpop.xlane.xlu0 %2247
    %v2249 = vsel %vm739, %v1707, 0.0
    %2250 = vadd.xlane.f32.xlu0 %v2249
    %v2251 = vpop.xlane.xlu0 %2250
    %v2252 = vsel %vm739, %v1708, 0.0
    %2253 = vadd.xlane.f32.xlu0 %v2252
    %v2254 = vpop.xlane.xlu0 %2253
    %v2255 = vsel %vm739, %v1709, 0.0
    %2256 = vadd.xlane.f32.xlu0 %v2255
    %v2257 = vpop.xlane.xlu0 %2256
    %v2258 = vsel %vm739, %v1710, 0.0
    %2259 = vadd.xlane.f32.xlu0 %v2258
    %v2260 = vpop.xlane.xlu0 %2259
    %v2261 = vsel %vm739, %v1711, 0.0
    %2262 = vadd.xlane.f32.xlu0 %v2261
    %v2263 = vpop.xlane.xlu0 %2262
    %v2264 = vsel %vm739, %v1712, 0.0
    %2265 = vadd.xlane.f32.xlu0 %v2264
    %v2266 = vpop.xlane.xlu0 %2265
    %v2267 = vsel %vm739, %v1713, 0.0
    %2268 = vadd.xlane.f32.xlu0 %v2267
    %v2269 = vpop.xlane.xlu0 %2268
    %v2270 = vsel %vm739, %v1714, 0.0
    %2271 = vadd.xlane.f32.xlu0 %v2270
    %v2272 = vpop.xlane.xlu0 %2271
    %v2273 = vsel %vm739, %v1715, 0.0
    %2274 = vadd.xlane.f32.xlu0 %v2273
    %v2275 = vpop.xlane.xlu0 %2274
    %v2276 = vsel %vm739, %v1716, 0.0
    %2277 = vadd.xlane.f32.xlu0 %v2276
    %v2278 = vpop.xlane.xlu0 %2277
    %v2279 = vsel %vm739, %v1717, 0.0
    %2280 = vadd.xlane.f32.xlu0 %v2279
    %v2281 = vpop.xlane.xlu0 %2280
    %v2282 = vsel %vm739, %v1718, 0.0
    %2283 = vadd.xlane.f32.xlu0 %v2282
    %v2284 = vpop.xlane.xlu0 %2283
    %v2285 = vsel %vm739, %v1719, 0.0
    %2286 = vadd.xlane.f32.xlu0 %v2285
    %v2287 = vpop.xlane.xlu0 %2286
    %v2288 = vsel %vm739, %v1720, 0.0
    %2289 = vadd.xlane.f32.xlu0 %v2288
    %v2290 = vpop.xlane.xlu0 %2289
    %v2291 = vsel %vm739, %v1721, 0.0
    %2292 = vadd.xlane.f32.xlu0 %v2291
    %v2293 = vpop.xlane.xlu0 %2292
    %v2294 = vsel %vm739, %v1722, 0.0
    %2295 = vadd.xlane.f32.xlu0 %v2294
    %v2296 = vpop.xlane.xlu0 %2295
    %v2297 = vsel %vm739, %v1723, 0.0
    %2298 = vadd.xlane.f32.xlu0 %v2297
    %v2299 = vpop.xlane.xlu0 %2298
    %v2300 = vsel %vm739, %v1724, 0.0
    %2301 = vadd.xlane.f32.xlu0 %v2300
    %v2302 = vpop.xlane.xlu0 %2301
    %v2303 = vsel %vm739, %v1725, 0.0
    %2304 = vadd.xlane.f32.xlu0 %v2303
    %v2305 = vpop.xlane.xlu0 %2304
    %v2306 = vsel %vm739, %v1726, 0.0
    %2307 = vadd.xlane.f32.xlu0 %v2306
    %v2308 = vpop.xlane.xlu0 %2307
    %v2309 = vsel %vm739, %v1727, 0.0
    %2310 = vadd.xlane.f32.xlu0 %v2309
    %v2311 = vpop.xlane.xlu0 %2310
    %v2312 = vsel %vm739, %v1728, 0.0
    %2313 = vadd.xlane.f32.xlu0 %v2312
    %v2314 = vpop.xlane.xlu0 %2313
    %v2315 = vsel %vm739, %v1729, 0.0
    %2316 = vadd.xlane.f32.xlu0 %v2315
    %v2317 = vpop.xlane.xlu0 %2316
    %v2318 = vsel %vm739, %v1730, 0.0
    %2319 = vadd.xlane.f32.xlu0 %v2318
    %v2320 = vpop.xlane.xlu0 %2319
    %v2321 = vsel %vm739, %v1731, 0.0
    %2322 = vadd.xlane.f32.xlu0 %v2321
    %v2323 = vpop.xlane.xlu0 %2322
    %v2324 = vsel %vm739, %v1732, 0.0
    %2325 = vadd.xlane.f32.xlu0 %v2324
    %v2326 = vpop.xlane.xlu0 %2325
    %v2327 = vsel %vm739, %v1733, 0.0
    %2328 = vadd.xlane.f32.xlu0 %v2327
    %v2329 = vpop.xlane.xlu0 %2328
    %v2330 = vsel %vm739, %v1734, 0.0
    %2331 = vadd.xlane.f32.xlu0 %v2330
    %v2332 = vpop.xlane.xlu0 %2331
    %v2333 = vsel %vm739, %v1735, 0.0
    %2334 = vadd.xlane.f32.xlu0 %v2333
    %v2335 = vpop.xlane.xlu0 %2334
    %v2336 = vsel %vm739, %v1736, 0.0
    %2337 = vadd.xlane.f32.xlu0 %v2336
    %v2338 = vpop.xlane.xlu0 %2337
    %v2339 = vsel %vm739, %v1737, 0.0
    %2340 = vadd.xlane.f32.xlu0 %v2339
    %v2341 = vpop.xlane.xlu0 %2340
    %v2342 = vsel %vm739, %v1738, 0.0
    %2343 = vadd.xlane.f32.xlu0 %v2342
    %v2344 = vpop.xlane.xlu0 %2343
    %v2345 = vsel %vm739, %v1739, 0.0
    %2346 = vadd.xlane.f32.xlu0 %v2345
    %v2347 = vpop.xlane.xlu0 %2346
    %v2348 = vsel %vm739, %v1740, 0.0
    %2349 = vadd.xlane.f32.xlu0 %v2348
    %v2350 = vpop.xlane.xlu0 %2349
    %v2351 = vsel %vm739, %v1741, 0.0
    %2352 = vadd.xlane.f32.xlu0 %v2351
    %v2353 = vpop.xlane.xlu0 %2352
    %v2354 = vsel %vm739, %v1742, 0.0
    %2355 = vadd.xlane.f32.xlu0 %v2354
    %v2356 = vpop.xlane.xlu0 %2355
    %v2357 = vsel %vm739, %v1743, 0.0
    %2358 = vadd.xlane.f32.xlu0 %v2357
    %v2359 = vpop.xlane.xlu0 %2358
    %v2360 = vsel %vm739, %v1744, 0.0
    %2361 = vadd.xlane.f32.xlu0 %v2360
    %v2362 = vpop.xlane.xlu0 %2361
    %v2363 = vsel %vm739, %v1745, 0.0
    %2364 = vadd.xlane.f32.xlu0 %v2363
    %v2365 = vpop.xlane.xlu0 %2364
    %v2366 = vsel %vm739, %v1746, 0.0
    %2367 = vadd.xlane.f32.xlu0 %v2366
    %v2368 = vpop.xlane.xlu0 %2367
    %v2369 = vsel %vm739, %v1747, 0.0
    %2370 = vadd.xlane.f32.xlu0 %v2369
    %v2371 = vpop.xlane.xlu0 %2370
    %v2372 = vsel %vm739, %v1748, 0.0
    %2373 = vadd.xlane.f32.xlu0 %v2372
    %v2374 = vpop.xlane.xlu0 %2373
    %v2375 = vsel %vm739, %v1749, 0.0
    %2376 = vadd.xlane.f32.xlu0 %v2375
    %v2377 = vpop.xlane.xlu0 %2376
    %v2378 = vsel %vm739, %v1750, 0.0
    %2379 = vadd.xlane.f32.xlu0 %v2378
    %v2380 = vpop.xlane.xlu0 %2379
    %v2381 = vsel %vm739, %v1751, 0.0
    %2382 = vadd.xlane.f32.xlu0 %v2381
    %v2383 = vpop.xlane.xlu0 %2382
    %v2384 = vsel %vm739, %v1752, 0.0
    %2385 = vadd.xlane.f32.xlu0 %v2384
    %v2386 = vpop.xlane.xlu0 %2385
    %v2387 = vsel %vm739, %v1753, 0.0
    %2388 = vadd.xlane.f32.xlu0 %v2387
    %v2389 = vpop.xlane.xlu0 %2388
    %v2390 = vsel %vm739, %v1754, 0.0
    %2391 = vadd.xlane.f32.xlu0 %v2390
    %v2392 = vpop.xlane.xlu0 %2391
    %v2393 = vsel %vm739, %v1755, 0.0
    %2394 = vadd.xlane.f32.xlu0 %v2393
    %v2395 = vpop.xlane.xlu0 %2394
    %v2396 = vsel %vm739, %v1756, 0.0
    %2397 = vadd.xlane.f32.xlu0 %v2396
    %v2398 = vpop.xlane.xlu0 %2397
    %v2399 = vsel %vm739, %v1757, 0.0
    %2400 = vadd.xlane.f32.xlu0 %v2399
    %v2401 = vpop.xlane.xlu0 %2400
    %v2402 = vsel %vm739, %v1758, 0.0
    %2403 = vadd.xlane.f32.xlu0 %v2402
    %v2404 = vpop.xlane.xlu0 %2403
    %v2405 = vsel %vm739, %v1759, 0.0
    %2406 = vadd.xlane.f32.xlu0 %v2405
    %v2407 = vpop.xlane.xlu0 %2406
    %v2408 = vsel %vm739, %v1760, 0.0
    %2409 = vadd.xlane.f32.xlu0 %v2408
    %v2410 = vpop.xlane.xlu0 %2409
    %v2411 = vsel %vm739, %v1761, 0.0
    %2412 = vadd.xlane.f32.xlu0 %v2411
    %v2413 = vpop.xlane.xlu0 %2412
    %v2414 = vsel %vm739, %v1762, 0.0
    %2415 = vadd.xlane.f32.xlu0 %v2414
    %v2416 = vpop.xlane.xlu0 %2415
    %v2417 = vsel %vm739, %v1763, 0.0
    %2418 = vadd.xlane.f32.xlu0 %v2417
    %v2419 = vpop.xlane.xlu0 %2418
    %v2420 = vsel %vm739, %v1764, 0.0
    %2421 = vadd.xlane.f32.xlu0 %v2420
    %v2422 = vpop.xlane.xlu0 %2421
    %v2423 = vsel %vm739, %v1765, 0.0
    %2424 = vadd.xlane.f32.xlu0 %v2423
    %v2425 = vpop.xlane.xlu0 %2424
    %v2426 = vsel %vm739, %v1766, 0.0
    %2427 = vadd.xlane.f32.xlu0 %v2426
    %v2428 = vpop.xlane.xlu0 %2427
    %v2429 = vsel %vm739, %v1767, 0.0
    %2430 = vadd.xlane.f32.xlu0 %v2429
    %v2431 = vpop.xlane.xlu0 %2430
    %v2432 = vsel %vm739, %v1768, 0.0
    %2433 = vadd.xlane.f32.xlu0 %v2432
    %v2434 = vpop.xlane.xlu0 %2433
    %v2435 = vsel %vm739, %v1769, 0.0
    %2436 = vadd.xlane.f32.xlu0 %v2435
    %v2437 = vpop.xlane.xlu0 %2436
    %v2438 = vsel %vm739, %v1770, 0.0
    %2439 = vadd.xlane.f32.xlu0 %v2438
    %v2440 = vpop.xlane.xlu0 %2439
    %v2441 = vsel %vm739, %v1771, 0.0
    %2442 = vadd.xlane.f32.xlu0 %v2441
    %v2443 = vpop.xlane.xlu0 %2442
    %v2444 = vsel %vm739, %v1772, 0.0
    %2445 = vadd.xlane.f32.xlu0 %v2444
    %v2446 = vpop.xlane.xlu0 %2445
    %v2447 = vsel %vm739, %v1773, 0.0
    %2448 = vadd.xlane.f32.xlu0 %v2447
    %v2449 = vpop.xlane.xlu0 %2448
    %v2450 = vsel %vm739, %v1774, 0.0
    %2451 = vadd.xlane.f32.xlu0 %v2450
    %v2452 = vpop.xlane.xlu0 %2451
    %v2453 = vsel %vm739, %v1775, 0.0
    %2454 = vadd.xlane.f32.xlu0 %v2453
    %v2455 = vpop.xlane.xlu0 %2454
    %v2456 = vsel %vm739, %v1776, 0.0
    %2457 = vadd.xlane.f32.xlu0 %v2456
    %v2458 = vpop.xlane.xlu0 %2457
    %v2459 = vsel %vm739, %v1777, 0.0
    %2460 = vadd.xlane.f32.xlu0 %v2459
    %v2461 = vpop.xlane.xlu0 %2460
    %v2462 = vsel %vm739, %v1778, 0.0
    %2463 = vadd.xlane.f32.xlu0 %v2462
    %v2464 = vpop.xlane.xlu0 %2463
    %v2465 = vsel %vm739, %v1779, 0.0
    %2466 = vadd.xlane.f32.xlu0 %v2465
    %v2467 = vpop.xlane.xlu0 %2466
    %v2468 = vsel %vm739, %v1780, 0.0
    %2469 = vadd.xlane.f32.xlu0 %v2468
    %v2470 = vpop.xlane.xlu0 %2469
    %v2471 = vsel %vm739, %v1781, 0.0
    %2472 = vadd.xlane.f32.xlu0 %v2471
    %v2473 = vpop.xlane.xlu0 %2472
    %v2474 = vsel %vm739, %v1782, 0.0
    %2475 = vadd.xlane.f32.xlu0 %v2474
    %v2476 = vpop.xlane.xlu0 %2475
    %v2477 = vsel %vm739, %v1783, 0.0
    %2478 = vadd.xlane.f32.xlu0 %v2477
    %v2479 = vpop.xlane.xlu0 %2478
    %v2480 = vsel %vm739, %v1784, 0.0
    %2481 = vadd.xlane.f32.xlu0 %v2480
    %v2482 = vpop.xlane.xlu0 %2481
    %v2483 = vsel %vm739, %v1785, 0.0
    %2484 = vadd.xlane.f32.xlu0 %v2483
    %v2485 = vpop.xlane.xlu0 %2484
    %v2486 = vsel %vm739, %v1786, 0.0
    %2487 = vadd.xlane.f32.xlu0 %v2486
    %v2488 = vpop.xlane.xlu0 %2487
    %v2489 = vsel %vm739, %v1787, 0.0
    %2490 = vadd.xlane.f32.xlu0 %v2489
    %v2491 = vpop.xlane.xlu0 %2490
    %v2492 = vsel %vm739, %v1788, 0.0
    %2493 = vadd.xlane.f32.xlu0 %v2492
    %v2494 = vpop.xlane.xlu0 %2493
    %v2495 = vsel %vm739, %v1789, 0.0
    %2496 = vadd.xlane.f32.xlu0 %v2495
    %v2497 = vpop.xlane.xlu0 %2496
    %v2498 = vsel %vm739, %v1790, 0.0
    %2499 = vadd.xlane.f32.xlu0 %v2498
    %v2500 = vpop.xlane.xlu0 %2499
    %v2501 = vsel %vm739, %v1791, 0.0
    %2502 = vadd.xlane.f32.xlu0 %v2501
    %v2503 = vpop.xlane.xlu0 %2502
    %v2504 = vsel %vm739, %v1792, 0.0
    %2505 = vadd.xlane.f32.xlu0 %v2504
    %v2506 = vpop.xlane.xlu0 %2505
    %v2507 = vsel %vm739, %v1793, 0.0
    %2508 = vadd.xlane.f32.xlu0 %v2507
    %v2509 = vpop.xlane.xlu0 %2508
    %v2510 = vsel %vm739, %v1794, 0.0
    %2511 = vadd.xlane.f32.xlu0 %v2510
    %v2512 = vpop.xlane.xlu0 %2511
    %v2513 = vsel %vm739, %v1795, 0.0
    %2514 = vadd.xlane.f32.xlu0 %v2513
    %v2515 = vpop.xlane.xlu0 %2514
    %v2516 = vsel %vm739, %v1796, 0.0
    %2517 = vadd.xlane.f32.xlu0 %v2516
    %v2518 = vpop.xlane.xlu0 %2517
    %v2519 = vsel %vm739, %v1797, 0.0
    %2520 = vadd.xlane.f32.xlu0 %v2519
    %v2521 = vpop.xlane.xlu0 %2520
    %v2522 = vsel %vm739, %v1798, 0.0
    %2523 = vadd.xlane.f32.xlu0 %v2522
    %v2524 = vpop.xlane.xlu0 %2523
    %v2525 = vsel %vm739, %v1799, 0.0
    %2526 = vadd.xlane.f32.xlu0 %v2525
    %v2527 = vpop.xlane.xlu0 %2526
    %v2528 = vsel %vm739, %v1800, 0.0
    %2529 = vadd.xlane.f32.xlu0 %v2528
    %v2530 = vpop.xlane.xlu0 %2529
    %v2531 = vsel %vm739, %v1801, 0.0
    %2532 = vadd.xlane.f32.xlu0 %v2531
    %v2533 = vpop.xlane.xlu0 %2532
    %v2534 = vsel %vm739, %v1802, 0.0
    %2535 = vadd.xlane.f32.xlu0 %v2534
    %v2536 = vpop.xlane.xlu0 %2535
    %v2537 = vsel %vm739, %v1803, 0.0
    %2538 = vadd.xlane.f32.xlu0 %v2537
    %v2539 = vpop.xlane.xlu0 %2538
    %v2540 = vsel %vm739, %v1804, 0.0
    %2541 = vadd.xlane.f32.xlu0 %v2540
    %v2542 = vpop.xlane.xlu0 %2541
    %v2543 = vsel %vm739, %v1805, 0.0
    %2544 = vadd.xlane.f32.xlu0 %v2543
    %v2545 = vpop.xlane.xlu0 %2544
    %v2546 = vsel %vm739, %v1806, 0.0
    %2547 = vadd.xlane.f32.xlu0 %v2546
    %v2548 = vpop.xlane.xlu0 %2547
    %v2549 = vsel %vm739, %v1807, 0.0
    %2550 = vadd.xlane.f32.xlu0 %v2549
    %v2551 = vpop.xlane.xlu0 %2550
    %v2552 = vsel %vm739, %v1808, 0.0
    %2553 = vadd.xlane.f32.xlu0 %v2552
    %v2554 = vpop.xlane.xlu0 %2553
    %v2555 = vsel %vm739, %v1809, 0.0
    %2556 = vadd.xlane.f32.xlu0 %v2555
    %v2557 = vpop.xlane.xlu0 %2556
    %v2558 = vsel %vm739, %v1810, 0.0
    %2559 = vadd.xlane.f32.xlu0 %v2558
    %v2560 = vpop.xlane.xlu0 %2559
    %v2561 = vsel %vm739, %v1811, 0.0
    %2562 = vadd.xlane.f32.xlu0 %v2561
    %v2563 = vpop.xlane.xlu0 %2562
    %v2564 = vsel %vm739, %v1812, 0.0
    %2565 = vadd.xlane.f32.xlu0 %v2564
    %v2566 = vpop.xlane.xlu0 %2565
    %v2567 = vsel %vm739, %v1813, 0.0
    %2568 = vadd.xlane.f32.xlu0 %v2567
    %v2569 = vpop.xlane.xlu0 %2568
    %v2570 = vsel %vm739, %v1814, 0.0
    %2571 = vadd.xlane.f32.xlu0 %v2570
    %v2572 = vpop.xlane.xlu0 %2571
    %v2573 = vsel %vm739, %v1815, 0.0
    %2574 = vadd.xlane.f32.xlu0 %v2573
    %v2575 = vpop.xlane.xlu0 %2574
    %v2576 = vsel %vm739, %v1816, 0.0
    %2577 = vadd.xlane.f32.xlu0 %v2576
    %v2578 = vpop.xlane.xlu0 %2577
    %v2579 = vsel %vm739, %v1817, 0.0
    %2580 = vadd.xlane.f32.xlu0 %v2579
    %v2581 = vpop.xlane.xlu0 %2580
    %v2582 = vsel %vm739, %v1818, 0.0
    %2583 = vadd.xlane.f32.xlu0 %v2582
    %v2584 = vpop.xlane.xlu0 %2583
    %v2585 = vsel %vm739, %v1819, 0.0
    %2586 = vadd.xlane.f32.xlu0 %v2585
    %v2587 = vpop.xlane.xlu0 %2586
    %v2588 = vsel %vm739, %v1820, 0.0
    %2589 = vadd.xlane.f32.xlu0 %v2588
    %v2590 = vpop.xlane.xlu0 %2589
    %v2591 = vsel %vm739, %v1821, 0.0
    %2592 = vadd.xlane.f32.xlu0 %v2591
    %v2593 = vpop.xlane.xlu0 %2592
    %v2594 = vsel %vm739, %v1822, 0.0
    %2595 = vadd.xlane.f32.xlu0 %v2594
    %v2596 = vpop.xlane.xlu0 %2595
    %v2597 = vsel %vm739, %v1823, 0.0
    %2598 = vadd.xlane.f32.xlu0 %v2597
    %v2599 = vpop.xlane.xlu0 %2598
    %v2600 = vsel %vm739, %v1824, 0.0
    %2601 = vadd.xlane.f32.xlu0 %v2600
    %v2602 = vpop.xlane.xlu0 %2601
    %v2603 = vsel %vm739, %v1825, 0.0
    %2604 = vadd.xlane.f32.xlu0 %v2603
    %v2605 = vpop.xlane.xlu0 %2604
    %v2606 = vsel %vm739, %v1826, 0.0
    %2607 = vadd.xlane.f32.xlu0 %v2606
    %v2608 = vpop.xlane.xlu0 %2607
    %v2609 = vsel %vm739, %v1827, 0.0
    %2610 = vadd.xlane.f32.xlu0 %v2609
    %v2611 = vpop.xlane.xlu0 %2610
    %v2612 = vsel %vm739, %v1828, 0.0
    %2613 = vadd.xlane.f32.xlu0 %v2612
    %v2614 = vpop.xlane.xlu0 %2613
    %v2615 = vsel %vm739, %v1829, 0.0
    %2616 = vadd.xlane.f32.xlu0 %v2615
    %v2617 = vpop.xlane.xlu0 %2616
    %v2618 = vsel %vm739, %v1830, 0.0
    %2619 = vadd.xlane.f32.xlu0 %v2618
    %v2620 = vpop.xlane.xlu0 %2619
    %v2621 = vsel %vm739, %v1831, 0.0
    %2622 = vadd.xlane.f32.xlu0 %v2621
    %v2623 = vpop.xlane.xlu0 %2622
    %v2624 = vsel %vm739, %v1832, 0.0
    %2625 = vadd.xlane.f32.xlu0 %v2624
    %v2626 = vpop.xlane.xlu0 %2625
    %v2627 = vsel %vm739, %v1833, 0.0
    %2628 = vadd.xlane.f32.xlu0 %v2627
    %v2629 = vpop.xlane.xlu0 %2628
    %v2630 = vsel %vm739, %v1834, 0.0
    %2631 = vadd.xlane.f32.xlu0 %v2630
    %v2632 = vpop.xlane.xlu0 %2631
    %v2633 = vsel %vm739, %v1835, 0.0
    %2634 = vadd.xlane.f32.xlu0 %v2633
    %v2635 = vpop.xlane.xlu0 %2634
    %v2636 = vsel %vm739, %v1836, 0.0
    %2637 = vadd.xlane.f32.xlu0 %v2636
    %v2638 = vpop.xlane.xlu0 %2637
    %v2639 = vsel %vm739, %v1837, 0.0
    %2640 = vadd.xlane.f32.xlu0 %v2639
    %v2641 = vpop.xlane.xlu0 %2640
    %v2642 = vsel %vm739, %v1838, 0.0
    %2643 = vadd.xlane.f32.xlu0 %v2642
    %v2644 = vpop.xlane.xlu0 %2643
    %v2645 = vsel %vm739, %v1839, 0.0
    %2646 = vadd.xlane.f32.xlu0 %v2645
    %v2647 = vpop.xlane.xlu0 %2646
    %v2648 = vsel %vm739, %v1840, 0.0
    %2649 = vadd.xlane.f32.xlu0 %v2648
    %v2650 = vpop.xlane.xlu0 %2649
    %v2651 = vsel %vm739, %v1841, 0.0
    %2652 = vadd.xlane.f32.xlu0 %v2651
    %v2653 = vpop.xlane.xlu0 %2652
    %v2654 = vsel %vm739, %v1842, 0.0
    %2655 = vadd.xlane.f32.xlu0 %v2654
    %v2656 = vpop.xlane.xlu0 %2655
    %v2657 = vsel %vm739, %v1843, 0.0
    %2658 = vadd.xlane.f32.xlu0 %v2657
    %v2659 = vpop.xlane.xlu0 %2658
    %v2660 = vsel %vm739, %v1844, 0.0
    %2661 = vadd.xlane.f32.xlu0 %v2660
    %v2662 = vpop.xlane.xlu0 %2661
    %v2663 = vsel %vm739, %v1845, 0.0
    %2664 = vadd.xlane.f32.xlu0 %v2663
    %v2665 = vpop.xlane.xlu0 %2664
    %v2666 = vsel %vm739, %v1846, 0.0
    %2667 = vadd.xlane.f32.xlu0 %v2666
    %v2668 = vpop.xlane.xlu0 %2667
    %v2669 = vsel %vm739, %v1847, 0.0
    %2670 = vadd.xlane.f32.xlu0 %v2669
    %v2671 = vpop.xlane.xlu0 %2670
    %v2672 = vsel %vm739, %v1848, 0.0
    %2673 = vadd.xlane.f32.xlu0 %v2672
    %v2674 = vpop.xlane.xlu0 %2673
    %v2675 = vsel %vm739, %v1849, 0.0
    %2676 = vadd.xlane.f32.xlu0 %v2675
    %v2677 = vpop.xlane.xlu0 %2676
    %v2678 = vsel %vm739, %v1850, 0.0
    %2679 = vadd.xlane.f32.xlu0 %v2678
    %v2680 = vpop.xlane.xlu0 %2679
    %v2681 = vsel %vm739, %v1851, 0.0
    %2682 = vadd.xlane.f32.xlu0 %v2681
    %v2683 = vpop.xlane.xlu0 %2682
    %v2684 = vsel %vm739, %v1852, 0.0
    %2685 = vadd.xlane.f32.xlu0 %v2684
    %v2686 = vpop.xlane.xlu0 %2685
    %v2687 = vsel %vm739, %v1853, 0.0
    %2688 = vadd.xlane.f32.xlu0 %v2687
    %v2689 = vpop.xlane.xlu0 %2688
    %v2690 = vsel %vm739, %v1854, 0.0
    %2691 = vadd.xlane.f32.xlu0 %v2690
    %v2692 = vpop.xlane.xlu0 %2691
    %v2693 = vsel %vm739, %v1855, 0.0
    %2694 = vadd.xlane.f32.xlu0 %v2693
    %v2695 = vpop.xlane.xlu0 %2694
    %v2696 = vsel %vm739, %v1856, 0.0
    %2697 = vadd.xlane.f32.xlu0 %v2696
    %v2698 = vpop.xlane.xlu0 %2697
    %v2699 = vsel %vm739, %v1857, 0.0
    %2700 = vadd.xlane.f32.xlu0 %v2699
    %v2701 = vpop.xlane.xlu0 %2700
    %v2702 = vsel %vm739, %v1858, 0.0
    %2703 = vadd.xlane.f32.xlu0 %v2702
    %v2704 = vpop.xlane.xlu0 %2703
    %v2705 = vsel %vm739, %v1859, 0.0
    %2706 = vadd.xlane.f32.xlu0 %v2705
    %v2707 = vpop.xlane.xlu0 %2706
    %v2708 = vsel %vm739, %v1860, 0.0
    %2709 = vadd.xlane.f32.xlu0 %v2708
    %v2710 = vpop.xlane.xlu0 %2709
    %v2711 = vsel %vm739, %v1861, 0.0
    %2712 = vadd.xlane.f32.xlu0 %v2711
    %v2713 = vpop.xlane.xlu0 %2712
    %v2714 = vsel %vm739, %v1862, 0.0
    %2715 = vadd.xlane.f32.xlu0 %v2714
    %v2716 = vpop.xlane.xlu0 %2715
    %v2717 = vsel %vm739, %v1863, 0.0
    %2718 = vadd.xlane.f32.xlu0 %v2717
    %v2719 = vpop.xlane.xlu0 %2718
    %v2720 = vsel %vm739, %v1864, 0.0
    %2721 = vadd.xlane.f32.xlu0 %v2720
    %v2722 = vpop.xlane.xlu0 %2721
    %v2723 = vsel %vm739, %v1865, 0.0
    %2724 = vadd.xlane.f32.xlu0 %v2723
    %v2725 = vpop.xlane.xlu0 %2724
    %v2726 = vsel %vm739, %v1866, 0.0
    %2727 = vadd.xlane.f32.xlu0 %v2726
    %v2728 = vpop.xlane.xlu0 %2727
    %v2729 = vsel %vm739, %v1867, 0.0
    %2730 = vadd.xlane.f32.xlu0 %v2729
    %v2731 = vpop.xlane.xlu0 %2730
    %v2732 = vsel %vm739, %v1868, 0.0
    %2733 = vadd.xlane.f32.xlu0 %v2732
    %v2734 = vpop.xlane.xlu0 %2733
    %v2735 = vsel %vm739, %v1869, 0.0
    %2736 = vadd.xlane.f32.xlu0 %v2735
    %v2737 = vpop.xlane.xlu0 %2736
    %v2738 = vsel %vm739, %v1870, 0.0
    %2739 = vadd.xlane.f32.xlu0 %v2738
    %v2740 = vpop.xlane.xlu0 %2739
    %v2741 = vsel %vm739, %v1871, 0.0
    %2742 = vadd.xlane.f32.xlu0 %v2741
    %v2743 = vpop.xlane.xlu0 %2742
    %v2744 = vsel %vm739, %v1872, 0.0
    %2745 = vadd.xlane.f32.xlu0 %v2744
    %v2746 = vpop.xlane.xlu0 %2745
    %v2747 = vsel %vm739, %v1873, 0.0
    %2748 = vadd.xlane.f32.xlu0 %v2747
    %v2749 = vpop.xlane.xlu0 %2748
    %v2750 = vsel %vm739, %v1874, 0.0
    %2751 = vadd.xlane.f32.xlu0 %v2750
    %v2752 = vpop.xlane.xlu0 %2751
    %v2753 = vsel %vm739, %v1875, 0.0
    %2754 = vadd.xlane.f32.xlu0 %v2753
    %v2755 = vpop.xlane.xlu0 %2754
    %v2756 = vsel %vm739, %v1876, 0.0
    %2757 = vadd.xlane.f32.xlu0 %v2756
    %v2758 = vpop.xlane.xlu0 %2757
    %v2759 = vsel %vm739, %v1877, 0.0
    %2760 = vadd.xlane.f32.xlu0 %v2759
    %v2761 = vpop.xlane.xlu0 %2760
    %v2762 = vsel %vm739, %v1878, 0.0
    %2763 = vadd.xlane.f32.xlu0 %v2762
    %v2764 = vpop.xlane.xlu0 %2763
    %v2765 = vsel %vm739, %v1879, 0.0
    %2766 = vadd.xlane.f32.xlu0 %v2765
    %v2767 = vpop.xlane.xlu0 %2766
    %v2768 = vsel %vm739, %v1880, 0.0
    %2769 = vadd.xlane.f32.xlu0 %v2768
    %v2770 = vpop.xlane.xlu0 %2769
    %v2771 = vsel %vm739, %v1881, 0.0
    %2772 = vadd.xlane.f32.xlu0 %v2771
    %v2773 = vpop.xlane.xlu0 %2772
    %v2774 = vsel %vm739, %v1882, 0.0
    %2775 = vadd.xlane.f32.xlu0 %v2774
    %v2776 = vpop.xlane.xlu0 %2775
    %v2777 = vsel %vm739, %v1883, 0.0
    %2778 = vadd.xlane.f32.xlu0 %v2777
    %v2779 = vpop.xlane.xlu0 %2778
    %v2780 = vsel %vm739, %v1884, 0.0
    %2781 = vadd.xlane.f32.xlu0 %v2780
    %v2782 = vpop.xlane.xlu0 %2781
    %v2783 = vsel %vm739, %v1885, 0.0
    %2784 = vadd.xlane.f32.xlu0 %v2783
    %v2785 = vpop.xlane.xlu0 %2784
    %v2786 = vsel %vm739, %v1886, 0.0
    %2787 = vadd.xlane.f32.xlu0 %v2786
    %v2788 = vpop.xlane.xlu0 %2787
    %v2789 = vsel %vm739, %v1887, 0.0
    %2790 = vadd.xlane.f32.xlu0 %v2789
    %v2791 = vpop.xlane.xlu0 %2790
    %v2792 = vsel %vm739, %v1888, 0.0
    %2793 = vadd.xlane.f32.xlu0 %v2792
    %v2794 = vpop.xlane.xlu0 %2793
    %v2795 = vsel %vm739, %v1889, 0.0
    %2796 = vadd.xlane.f32.xlu0 %v2795
    %v2797 = vpop.xlane.xlu0 %2796
    %v2798 = vsel %vm739, %v1890, 0.0
    %2799 = vadd.xlane.f32.xlu0 %v2798
    %v2800 = vpop.xlane.xlu0 %2799
    %v2801 = vsel %vm739, %v1891, 0.0
    %2802 = vadd.xlane.f32.xlu0 %v2801
    %v2803 = vpop.xlane.xlu0 %2802
    %v2804 = vsel %vm739, %v1892, 0.0
    %2805 = vadd.xlane.f32.xlu0 %v2804
    %v2806 = vpop.xlane.xlu0 %2805
    %v2807 = vsel %vm739, %v1893, 0.0
    %2808 = vadd.xlane.f32.xlu0 %v2807
    %v2809 = vpop.xlane.xlu0 %2808
    %v2810 = vsel %vm739, %v1894, 0.0
    %2811 = vadd.xlane.f32.xlu0 %v2810
    %v2812 = vpop.xlane.xlu0 %2811
    %v2813 = vsel %vm739, %v1895, 0.0
    %2814 = vadd.xlane.f32.xlu0 %v2813
    %v2815 = vpop.xlane.xlu0 %2814
    %v2816 = vsel %vm739, %v1896, 0.0
    %2817 = vadd.xlane.f32.xlu0 %v2816
    %v2818 = vpop.xlane.xlu0 %2817
    %v2819 = vsel %vm739, %v1897, 0.0
    %2820 = vadd.xlane.f32.xlu0 %v2819
    %v2821 = vpop.xlane.xlu0 %2820
    %v2822 = vsel %vm739, %v1898, 0.0
    %2823 = vadd.xlane.f32.xlu0 %v2822
    %v2824 = vpop.xlane.xlu0 %2823
    %v2825 = vsel %vm739, %v1899, 0.0
    %2826 = vadd.xlane.f32.xlu0 %v2825
    %v2827 = vpop.xlane.xlu0 %2826
    %v2828 = vsel %vm739, %v1900, 0.0
    %2829 = vadd.xlane.f32.xlu0 %v2828
    %v2830 = vpop.xlane.xlu0 %2829
    %v2831 = vsel %vm739, %v1901, 0.0
    %2832 = vadd.xlane.f32.xlu0 %v2831
    %v2833 = vpop.xlane.xlu0 %2832
    %v2834 = vsel %vm739, %v1902, 0.0
    %2835 = vadd.xlane.f32.xlu0 %v2834
    %v2836 = vpop.xlane.xlu0 %2835
    %v2837 = vsel %vm739, %v1903, 0.0
    %2838 = vadd.xlane.f32.xlu0 %v2837
    %v2839 = vpop.xlane.xlu0 %2838
    %v2840 = vsel %vm739, %v1904, 0.0
    %2841 = vadd.xlane.f32.xlu0 %v2840
    %v2842 = vpop.xlane.xlu0 %2841
    %v2843 = vsel %vm739, %v1905, 0.0
    %2844 = vadd.xlane.f32.xlu0 %v2843
    %v2845 = vpop.xlane.xlu0 %2844
    %v2846 = vsel %vm739, %v1906, 0.0
    %2847 = vadd.xlane.f32.xlu0 %v2846
    %v2848 = vpop.xlane.xlu0 %2847
    %v2849 = vsel %vm739, %v1907, 0.0
    %2850 = vadd.xlane.f32.xlu0 %v2849
    %v2851 = vpop.xlane.xlu0 %2850
    %v2852 = vsel %vm739, %v1908, 0.0
    %2853 = vadd.xlane.f32.xlu0 %v2852
    %v2854 = vpop.xlane.xlu0 %2853
    %v2855 = vsel %vm739, %v1909, 0.0
    %2856 = vadd.xlane.f32.xlu0 %v2855
    %v2857 = vpop.xlane.xlu0 %2856
    %v2858 = vsel %vm739, %v1910, 0.0
    %2859 = vadd.xlane.f32.xlu0 %v2858
    %v2860 = vpop.xlane.xlu0 %2859
    %v2861 = vsel %vm739, %v1911, 0.0
    %2862 = vadd.xlane.f32.xlu0 %v2861
    %v2863 = vpop.xlane.xlu0 %2862
    %v2864 = vsel %vm739, %v1912, 0.0
    %2865 = vadd.xlane.f32.xlu0 %v2864
    %v2866 = vpop.xlane.xlu0 %2865
    %v2867 = vsel %vm739, %v1913, 0.0
    %2868 = vadd.xlane.f32.xlu0 %v2867
    %v2869 = vpop.xlane.xlu0 %2868
    %v2870 = vsel %vm739, %v1914, 0.0
    %2871 = vadd.xlane.f32.xlu0 %v2870
    %v2872 = vpop.xlane.xlu0 %2871
    %v2873 = vsel %vm739, %v1915, 0.0
    %2874 = vadd.xlane.f32.xlu0 %v2873
    %v2875 = vpop.xlane.xlu0 %2874
    %v2876 = vsel %vm739, %v1916, 0.0
    %2877 = vadd.xlane.f32.xlu0 %v2876
    %v2878 = vpop.xlane.xlu0 %2877
    %v2879 = vsel %vm739, %v1917, 0.0
    %2880 = vadd.xlane.f32.xlu0 %v2879
    %v2881 = vpop.xlane.xlu0 %2880
    %v2882 = vsel %vm739, %v1918, 0.0
    %2883 = vadd.xlane.f32.xlu0 %v2882
    %v2884 = vpop.xlane.xlu0 %2883
    %v2885 = vsel %vm739, %v1919, 0.0
    %2886 = vadd.xlane.f32.xlu0 %v2885
    %v2887 = vpop.xlane.xlu0 %2886
    %v2888 = vsel %vm739, %v1920, 0.0
    %2889 = vadd.xlane.f32.xlu0 %v2888
    %v2890 = vpop.xlane.xlu0 %2889
    %v2891 = vsel %vm739, %v1921, 0.0
    %2892 = vadd.xlane.f32.xlu0 %v2891
    %v2893 = vpop.xlane.xlu0 %2892
    %v2894 = vsel %vm739, %v1922, 0.0
    %2895 = vadd.xlane.f32.xlu0 %v2894
    %v2896 = vpop.xlane.xlu0 %2895
    %v2897 = vsel %vm739, %v1923, 0.0
    %2898 = vadd.xlane.f32.xlu0 %v2897
    %v2899 = vpop.xlane.xlu0 %2898
    %v2900 = vsel %vm739, %v1924, 0.0
    %2901 = vadd.xlane.f32.xlu0 %v2900
    %v2902 = vpop.xlane.xlu0 %2901
    %v2903 = vsel %vm739, %v1925, 0.0
    %2904 = vadd.xlane.f32.xlu0 %v2903
    %v2905 = vpop.xlane.xlu0 %2904
    %v2906 = vsel %vm739, %v1926, 0.0
    %2907 = vadd.xlane.f32.xlu0 %v2906
    %v2908 = vpop.xlane.xlu0 %2907
    %v2909 = vsel %vm739, %v1927, 0.0
    %2910 = vadd.xlane.f32.xlu0 %v2909
    %v2911 = vpop.xlane.xlu0 %2910
    %v2912 = vsel %vm739, %v1928, 0.0
    %2913 = vadd.xlane.f32.xlu0 %v2912
    %v2914 = vpop.xlane.xlu0 %2913
    %v2915 = vsel %vm739, %v1929, 0.0
    %2916 = vadd.xlane.f32.xlu0 %v2915
    %v2917 = vpop.xlane.xlu0 %2916
    %v2918 = vsel %vm739, %v1930, 0.0
    %2919 = vadd.xlane.f32.xlu0 %v2918
    %v2920 = vpop.xlane.xlu0 %2919
    %v2921 = vsel %vm739, %v1931, 0.0
    %2922 = vadd.xlane.f32.xlu0 %v2921
    %v2923 = vpop.xlane.xlu0 %2922
    %v2924 = vsel %vm739, %v1932, 0.0
    %2925 = vadd.xlane.f32.xlu0 %v2924
    %v2926 = vpop.xlane.xlu0 %2925
    %v2927 = vsel %vm739, %v1933, 0.0
    %2928 = vadd.xlane.f32.xlu0 %v2927
    %v2929 = vpop.xlane.xlu0 %2928
    %v2930 = vsel %vm739, %v1934, 0.0
    %2931 = vadd.xlane.f32.xlu0 %v2930
    %v2932 = vpop.xlane.xlu0 %2931
    %v2933 = vsel %vm739, %v1935, 0.0
    %2934 = vadd.xlane.f32.xlu0 %v2933
    %v2935 = vpop.xlane.xlu0 %2934
    %v2936 = vsel %vm739, %v1936, 0.0
    %2937 = vadd.xlane.f32.xlu0 %v2936
    %v2938 = vpop.xlane.xlu0 %2937
    %v2939 = vsel %vm739, %v1937, 0.0
    %2940 = vadd.xlane.f32.xlu0 %v2939
    %v2941 = vpop.xlane.xlu0 %2940
    %v2942 = vsel %vm739, %v1938, 0.0
    %2943 = vadd.xlane.f32.xlu0 %v2942
    %v2944 = vpop.xlane.xlu0 %2943
    %v2945 = vsel %vm739, %v1939, 0.0
    %2946 = vadd.xlane.f32.xlu0 %v2945
    %v2947 = vpop.xlane.xlu0 %2946
    %v2948 = vsel %vm739, %v1940, 0.0
    %2949 = vadd.xlane.f32.xlu0 %v2948
    %v2950 = vpop.xlane.xlu0 %2949
    %v2951 = vsel %vm739, %v1941, 0.0
    %2952 = vadd.xlane.f32.xlu0 %v2951
    %v2953 = vpop.xlane.xlu0 %2952
    %v2954 = vsel %vm739, %v1942, 0.0
    %2955 = vadd.xlane.f32.xlu0 %v2954
    %v2956 = vpop.xlane.xlu0 %2955
    %v2957 = vsel %vm739, %v1943, 0.0
    %2958 = vadd.xlane.f32.xlu0 %v2957
    %v2959 = vpop.xlane.xlu0 %2958
    %v2960 = vsel %vm739, %v1944, 0.0
    %2961 = vadd.xlane.f32.xlu0 %v2960
    %v2962 = vpop.xlane.xlu0 %2961
    %v2963 = vsel %vm739, %v1945, 0.0
    %2964 = vadd.xlane.f32.xlu0 %v2963
    %v2965 = vpop.xlane.xlu0 %2964
    %v2966 = vsel %vm739, %v1946, 0.0
    %2967 = vadd.xlane.f32.xlu0 %v2966
    %v2968 = vpop.xlane.xlu0 %2967
    %v2969 = vsel %vm739, %v1947, 0.0
    %2970 = vadd.xlane.f32.xlu0 %v2969
    %v2971 = vpop.xlane.xlu0 %2970
    %v2972 = vsel %vm739, %v1948, 0.0
    %2973 = vadd.xlane.f32.xlu0 %v2972
    %v2974 = vpop.xlane.xlu0 %2973
    %v2975 = vsel %vm739, %v1949, 0.0
    %2976 = vadd.xlane.f32.xlu0 %v2975
    %v2977 = vpop.xlane.xlu0 %2976
    %v2978 = vsel %vm739, %v1950, 0.0
    %2979 = vadd.xlane.f32.xlu0 %v2978
    %v2980 = vpop.xlane.xlu0 %2979
    %v2981 = vsel %vm739, %v1951, 0.0
    %2982 = vadd.xlane.f32.xlu0 %v2981
    %v2983 = vpop.xlane.xlu0 %2982
    %v2984 = vsel %vm739, %v1952, 0.0
    %2985 = vadd.xlane.f32.xlu0 %v2984
    %v2986 = vpop.xlane.xlu0 %2985
    %v2987 = vsel %vm739, %v1953, 0.0
    %2988 = vadd.xlane.f32.xlu0 %v2987
    %v2989 = vpop.xlane.xlu0 %2988
    %v2990 = vsel %vm739, %v1954, 0.0
    %2991 = vadd.xlane.f32.xlu0 %v2990
    %v2992 = vpop.xlane.xlu0 %2991
    %v2993 = vsel %vm739, %v1955, 0.0
    %2994 = vadd.xlane.f32.xlu0 %v2993
    %v2995 = vpop.xlane.xlu0 %2994
    %v2996 = vsel %vm739, %v1956, 0.0
    %2997 = vadd.xlane.f32.xlu0 %v2996
    %v2998 = vpop.xlane.xlu0 %2997
    %v2999 = vsel %vm739, %v1957, 0.0
    %3000 = vadd.xlane.f32.xlu0 %v2999
    %v3001 = vpop.xlane.xlu0 %3000
    %v3002 = vsel %vm739, %v1958, 0.0
    %3003 = vadd.xlane.f32.xlu0 %v3002
    %v3004 = vpop.xlane.xlu0 %3003
    %v3005 = vsel %vm739, %v1959, 0.0
    %3006 = vadd.xlane.f32.xlu0 %v3005
    %v3007 = vpop.xlane.xlu0 %3006
    %v3008 = vsel %vm739, %v1960, 0.0
    %3009 = vadd.xlane.f32.xlu0 %v3008
    %v3010 = vpop.xlane.xlu0 %3009
    %v3011 = vsel %vm739, %v1961, 0.0
    %3012 = vadd.xlane.f32.xlu0 %v3011
    %v3013 = vpop.xlane.xlu0 %3012
    %v3014 = vsel %vm739, %v1962, 0.0
    %3015 = vadd.xlane.f32.xlu0 %v3014
    %v3016 = vpop.xlane.xlu0 %3015
    %v3017 = vsel %vm739, %v1963, 0.0
    %3018 = vadd.xlane.f32.xlu0 %v3017
    %v3019 = vpop.xlane.xlu0 %3018
    %v3020 = vsel %vm739, %v1964, 0.0
    %3021 = vadd.xlane.f32.xlu0 %v3020
    %v3022 = vpop.xlane.xlu0 %3021
    %v3023 = vsel %vm739, %v1965, 0.0
    %3024 = vadd.xlane.f32.xlu0 %v3023
    %v3025 = vpop.xlane.xlu0 %3024
    %v3026 = vsel %vm739, %v1966, 0.0
    %3027 = vadd.xlane.f32.xlu0 %v3026
    %v3028 = vpop.xlane.xlu0 %3027
    %v3029 = vsel %vm739, %v1967, 0.0
    %3030 = vadd.xlane.f32.xlu0 %v3029
    %v3031 = vpop.xlane.xlu0 %3030
    %v3032 = vsel %vm739, %v1968, 0.0
    %3033 = vadd.xlane.f32.xlu0 %v3032
    %v3034 = vpop.xlane.xlu0 %3033
    %v3035 = vsel %vm739, %v1969, 0.0
    %3036 = vadd.xlane.f32.xlu0 %v3035
    %v3037 = vpop.xlane.xlu0 %3036
    %v3038 = vsel %vm739, %v1970, 0.0
    %3039 = vadd.xlane.f32.xlu0 %v3038
    %v3040 = vpop.xlane.xlu0 %3039
    %v3041 = vsel %vm739, %v1971, 0.0
    %3042 = vadd.xlane.f32.xlu0 %v3041
    %v3043 = vpop.xlane.xlu0 %3042
    %v3044 = vsel %vm739, %v1972, 0.0
    %3045 = vadd.xlane.f32.xlu0 %v3044
    %v3046 = vpop.xlane.xlu0 %3045
    %v3047 = vsel %vm739, %v1973, 0.0
    %3048 = vadd.xlane.f32.xlu0 %v3047
    %v3049 = vpop.xlane.xlu0 %3048
    %v3050 = vsel %vm739, %v1974, 0.0
    %3051 = vadd.xlane.f32.xlu0 %v3050
    %v3052 = vpop.xlane.xlu0 %3051
    %v3053 = vsel %vm739, %v1975, 0.0
    %3054 = vadd.xlane.f32.xlu0 %v3053
    %v3055 = vpop.xlane.xlu0 %3054
    %v3056 = vsel %vm739, %v1976, 0.0
    %3057 = vadd.xlane.f32.xlu0 %v3056
    %v3058 = vpop.xlane.xlu0 %3057
    %v3059 = vsel %vm739, %v1977, 0.0
    %3060 = vadd.xlane.f32.xlu0 %v3059
    %v3061 = vpop.xlane.xlu0 %3060
    %v3062 = vsel %vm739, %v1978, 0.0
    %3063 = vadd.xlane.f32.xlu0 %v3062
    %v3064 = vpop.xlane.xlu0 %3063
    %v3065 = vsel %vm739, %v1979, 0.0
    %3066 = vadd.xlane.f32.xlu0 %v3065
    %v3067 = vpop.xlane.xlu0 %3066
    %v3068 = vsel %vm739, %v1980, 0.0
    %3069 = vadd.xlane.f32.xlu0 %v3068
    %v3070 = vpop.xlane.xlu0 %3069
    %v3071 = vsel %vm739, %v1981, 0.0
    %3072 = vadd.xlane.f32.xlu0 %v3071
    %v3073 = vpop.xlane.xlu0 %3072
    %v3074 = vsel %vm739, %v1982, 0.0
    %3075 = vadd.xlane.f32.xlu0 %v3074
    %v3076 = vpop.xlane.xlu0 %3075
    %v3077 = vsel %vm739, %v1983, 0.0
    %3078 = vadd.xlane.f32.xlu0 %v3077
    %v3079 = vpop.xlane.xlu0 %3078
    %v3080 = vsel %vm739, %v1984, 0.0
    %3081 = vadd.xlane.f32.xlu0 %v3080
    %v3082 = vpop.xlane.xlu0 %3081
    %v3083 = vsel %vm739, %v1985, 0.0
    %3084 = vadd.xlane.f32.xlu0 %v3083
    %v3085 = vpop.xlane.xlu0 %3084
    %v3086 = vsel %vm739, %v1986, 0.0
    %3087 = vadd.xlane.f32.xlu0 %v3086
    %v3088 = vpop.xlane.xlu0 %3087
    %v3089 = vsel %vm739, %v1987, 0.0
    %3090 = vadd.xlane.f32.xlu0 %v3089
    %v3091 = vpop.xlane.xlu0 %3090
    %v3092 = vsel %vm739, %v1988, 0.0
    %3093 = vadd.xlane.f32.xlu0 %v3092
    %v3094 = vpop.xlane.xlu0 %3093
    %v3095 = vsel %vm739, %v1989, 0.0
    %3096 = vadd.xlane.f32.xlu0 %v3095
    %v3097 = vpop.xlane.xlu0 %3096
    %v3098 = vsel %vm739, %v1990, 0.0
    %3099 = vadd.xlane.f32.xlu0 %v3098
    %v3100 = vpop.xlane.xlu0 %3099
    %v3101 = vsel %vm739, %v1991, 0.0
    %3102 = vadd.xlane.f32.xlu0 %v3101
    %v3103 = vpop.xlane.xlu0 %3102
    %v3104 = vsel %vm739, %v1992, 0.0
    %3105 = vadd.xlane.f32.xlu0 %v3104
    %v3106 = vpop.xlane.xlu0 %3105
    %v3107 = vsel %vm739, %v1993, 0.0
    %3108 = vadd.xlane.f32.xlu0 %v3107
    %v3109 = vpop.xlane.xlu0 %3108
    %v3110 = vsel %vm739, %v1994, 0.0
    %3111 = vadd.xlane.f32.xlu0 %v3110
    %v3112 = vpop.xlane.xlu0 %3111
    %v3113 = vsel %vm739, %v1995, 0.0
    %3114 = vadd.xlane.f32.xlu0 %v3113
    %v3115 = vpop.xlane.xlu0 %3114
    %v3116 = vsel %vm739, %v1996, 0.0
    %3117 = vadd.xlane.f32.xlu0 %v3116
    %v3118 = vpop.xlane.xlu0 %3117
    %v3119 = vsel %vm739, %v1997, 0.0
    %3120 = vadd.xlane.f32.xlu0 %v3119
    %v3121 = vpop.xlane.xlu0 %3120
    %v3122 = vsel %vm739, %v1998, 0.0
    %3123 = vadd.xlane.f32.xlu0 %v3122
    %v3124 = vpop.xlane.xlu0 %3123
    %v3125 = vsel %vm739, %v1999, 0.0
    %3126 = vadd.xlane.f32.xlu0 %v3125
    %v3127 = vpop.xlane.xlu0 %3126
    %v3128 = vsel %vm739, %v2000, 0.0
    %3129 = vadd.xlane.f32.xlu0 %v3128
    %v3130 = vpop.xlane.xlu0 %3129
    %v3131 = vsel %vm739, %v2001, 0.0
    %3132 = vadd.xlane.f32.xlu0 %v3131
    %v3133 = vpop.xlane.xlu0 %3132
    %v3134 = vsel %vm739, %v2002, 0.0
    %3135 = vadd.xlane.f32.xlu0 %v3134
    %v3136 = vpop.xlane.xlu0 %3135
    %v3137 = vsel %vm739, %v2003, 0.0
    %3138 = vadd.xlane.f32.xlu0 %v3137
    %v3139 = vpop.xlane.xlu0 %3138
    %v3140 = vsel %vm739, %v2004, 0.0
    %3141 = vadd.xlane.f32.xlu0 %v3140
    %v3142 = vpop.xlane.xlu0 %3141
    %v3143 = vsel %vm739, %v2005, 0.0
    %3144 = vadd.xlane.f32.xlu0 %v3143
    %v3145 = vpop.xlane.xlu0 %3144
    %v3146 = vsel %vm739, %v2006, 0.0
    %3147 = vadd.xlane.f32.xlu0 %v3146
    %v3148 = vpop.xlane.xlu0 %3147
    %v3149 = vsel %vm739, %v2007, 0.0
    %3150 = vadd.xlane.f32.xlu0 %v3149
    %v3151 = vpop.xlane.xlu0 %3150
    %v3152 = vsel %vm739, %v2008, 0.0
    %3153 = vadd.xlane.f32.xlu0 %v3152
    %v3154 = vpop.xlane.xlu0 %3153
    %v3155 = vsel %vm739, %v2009, 0.0
    %3156 = vadd.xlane.f32.xlu0 %v3155
    %v3157 = vpop.xlane.xlu0 %3156
    %v3158 = vsel %vm739, %v2010, 0.0
    %3159 = vadd.xlane.f32.xlu0 %v3158
    %v3160 = vpop.xlane.xlu0 %3159
    %v3161 = vsel %vm739, %v2011, 0.0
    %3162 = vadd.xlane.f32.xlu0 %v3161
    %v3163 = vpop.xlane.xlu0 %3162
    %v3164 = vsel %vm739, %v2012, 0.0
    %3165 = vadd.xlane.f32.xlu0 %v3164
    %v3166 = vpop.xlane.xlu0 %3165
    %v3167 = vsel %vm739, %v2013, 0.0
    %3168 = vadd.xlane.f32.xlu0 %v3167
    %v3169 = vpop.xlane.xlu0 %3168
    %v3170 = vsel %vm739, %v2014, 0.0
    %3171 = vadd.xlane.f32.xlu0 %v3170
    %v3172 = vpop.xlane.xlu0 %3171
    %v3173 = vsel %vm739, %v2015, 0.0
    %3174 = vadd.xlane.f32.xlu0 %v3173
    %v3175 = vpop.xlane.xlu0 %3174
    %v3176 = vsel %vm739, %v2016, 0.0
    %3177 = vadd.xlane.f32.xlu0 %v3176
    %v3178 = vpop.xlane.xlu0 %3177
    %v3179 = vsel %vm739, %v2017, 0.0
    %3180 = vadd.xlane.f32.xlu0 %v3179
    %v3181 = vpop.xlane.xlu0 %3180
    %v3182 = vsel %vm739, %v2018, 0.0
    %3183 = vadd.xlane.f32.xlu0 %v3182
    %v3184 = vpop.xlane.xlu0 %3183
    %v3185 = vsel %vm739, %v2019, 0.0
    %3186 = vadd.xlane.f32.xlu0 %v3185
    %v3187 = vpop.xlane.xlu0 %3186
    %v3188 = vsel %vm739, %v2020, 0.0
    %3189 = vadd.xlane.f32.xlu0 %v3188
    %v3190 = vpop.xlane.xlu0 %3189
    %v3191 = vsel %vm739, %v2021, 0.0
    %3192 = vadd.xlane.f32.xlu0 %v3191
    %v3193 = vpop.xlane.xlu0 %3192
    %v3194 = vsel %vm739, %v2022, 0.0
    %3195 = vadd.xlane.f32.xlu0 %v3194
    %v3196 = vpop.xlane.xlu0 %3195
    %v3197 = vsel %vm739, %v2023, 0.0
    %3198 = vadd.xlane.f32.xlu0 %v3197
    %v3199 = vpop.xlane.xlu0 %3198
    %v3200 = vsel %vm739, %v2024, 0.0
    %3201 = vadd.xlane.f32.xlu0 %v3200
    %v3202 = vpop.xlane.xlu0 %3201
    %v3203 = vsel %vm739, %v2025, 0.0
    %3204 = vadd.xlane.f32.xlu0 %v3203
    %v3205 = vpop.xlane.xlu0 %3204
    %v3206 = vsel %vm739, %v2026, 0.0
    %3207 = vadd.xlane.f32.xlu0 %v3206
    %v3208 = vpop.xlane.xlu0 %3207
    %v3209 = vsel %vm739, %v2027, 0.0
    %3210 = vadd.xlane.f32.xlu0 %v3209
    %v3211 = vpop.xlane.xlu0 %3210
    %v3212 = vsel %vm739, %v2028, 0.0
    %3213 = vadd.xlane.f32.xlu0 %v3212
    %v3214 = vpop.xlane.xlu0 %3213
    %v3215 = vsel %vm739, %v2029, 0.0
    %3216 = vadd.xlane.f32.xlu0 %v3215
    %v3217 = vpop.xlane.xlu0 %3216
    %v3218 = vsel %vm739, %v2030, 0.0
    %3219 = vadd.xlane.f32.xlu0 %v3218
    %v3220 = vpop.xlane.xlu0 %3219
    %v3221 = vsel %vm739, %v2031, 0.0
    %3222 = vadd.xlane.f32.xlu0 %v3221
    %v3223 = vpop.xlane.xlu0 %3222
    %v3224 = vsel %vm739, %v2032, 0.0
    %3225 = vadd.xlane.f32.xlu0 %v3224
    %v3226 = vpop.xlane.xlu0 %3225
    %v3227 = vsel %vm739, %v2033, 0.0
    %3228 = vadd.xlane.f32.xlu0 %v3227
    %v3229 = vpop.xlane.xlu0 %3228
    %v3230 = vsel %vm739, %v2034, 0.0
    %3231 = vadd.xlane.f32.xlu0 %v3230
    %v3232 = vpop.xlane.xlu0 %3231
    %v3233 = vsel %vm739, %v2035, 0.0
    %3234 = vadd.xlane.f32.xlu0 %v3233
    %v3235 = vpop.xlane.xlu0 %3234
    %v3236 = vsel %vm739, %v2036, 0.0
    %3237 = vadd.xlane.f32.xlu0 %v3236
    %v3238 = vpop.xlane.xlu0 %3237
    %v3239 = vsel %vm739, %v2037, 0.0
    %3240 = vadd.xlane.f32.xlu0 %v3239
    %v3241 = vpop.xlane.xlu0 %3240
    %v3242 = vsel %vm739, %v2038, 0.0
    %3243 = vadd.xlane.f32.xlu0 %v3242
    %v3244 = vpop.xlane.xlu0 %3243
    %v3245 = vsel %vm739, %v2039, 0.0
    %3246 = vadd.xlane.f32.xlu0 %v3245
    %v3247 = vpop.xlane.xlu0 %3246
    %v3248 = vsel %vm739, %v2040, 0.0
    %3249 = vadd.xlane.f32.xlu0 %v3248
    %v3250 = vpop.xlane.xlu0 %3249
    %v3251 = vsel %vm739, %v2041, 0.0
    %3252 = vadd.xlane.f32.xlu0 %v3251
    %v3253 = vpop.xlane.xlu0 %3252
    %v3254 = vsel %vm739, %v2042, 0.0
    %3255 = vadd.xlane.f32.xlu0 %v3254
    %v3256 = vpop.xlane.xlu0 %3255
    %v3257 = vsel %vm739, %v2043, 0.0
    %3258 = vadd.xlane.f32.xlu0 %v3257
    %v3259 = vpop.xlane.xlu0 %3258
    %v3260 = vsel %vm739, %v2044, 0.0
    %3261 = vadd.xlane.f32.xlu0 %v3260
    %v3262 = vpop.xlane.xlu0 %3261
    %v3263 = vsel %vm739, %v2045, 0.0
    %3264 = vadd.xlane.f32.xlu0 %v3263
    %v3265 = vpop.xlane.xlu0 %3264
    %v3266 = vsel %vm739, %v2046, 0.0
    %3267 = vadd.xlane.f32.xlu0 %v3266
    %v3268 = vpop.xlane.xlu0 %3267
    %v3269 = vsel %vm739, %v2047, 0.0
    %3270 = vadd.xlane.f32.xlu0 %v3269
    %v3271 = vpop.xlane.xlu0 %3270
    %v3272 = vsel %vm739, %v2048, 0.0
    %3273 = vadd.xlane.f32.xlu0 %v3272
    %v3274 = vpop.xlane.xlu0 %3273
    %v3275 = vsel %vm739, %v2049, 0.0
    %3276 = vadd.xlane.f32.xlu0 %v3275
    %v3277 = vpop.xlane.xlu0 %3276
    %v3278 = vsel %vm739, %v2050, 0.0
    %3279 = vadd.xlane.f32.xlu0 %v3278
    %v3280 = vpop.xlane.xlu0 %3279
    %v3281 = vsel %vm739, %v2051, 0.0
    %3282 = vadd.xlane.f32.xlu0 %v3281
    %v3283 = vpop.xlane.xlu0 %3282
    %v3284 = vsel %vm739, %v2052, 0.0
    %3285 = vadd.xlane.f32.xlu0 %v3284
    %v3286 = vpop.xlane.xlu0 %3285
    %v3287 = vsel %vm739, %v2053, 0.0
    %3288 = vadd.xlane.f32.xlu0 %v3287
    %v3289 = vpop.xlane.xlu0 %3288
    %v3290 = vsel %vm739, %v2054, 0.0
    %3291 = vadd.xlane.f32.xlu0 %v3290
    %v3292 = vpop.xlane.xlu0 %3291
    %v3293 = vsel %vm739, %v2055, 0.0
    %3294 = vadd.xlane.f32.xlu0 %v3293
    %v3295 = vpop.xlane.xlu0 %3294
    %v3296 = vsel %vm739, %v2056, 0.0
    %3297 = vadd.xlane.f32.xlu0 %v3296
    %v3298 = vpop.xlane.xlu0 %3297
    %v3299 = vsel %vm739, %v2057, 0.0
    %3300 = vadd.xlane.f32.xlu0 %v3299
    %v3301 = vpop.xlane.xlu0 %3300
    %v3302 = vsel %vm739, %v2058, 0.0
    %3303 = vadd.xlane.f32.xlu0 %v3302
    %v3304 = vpop.xlane.xlu0 %3303
    %v3305 = vsel %vm739, %v2059, 0.0
    %3306 = vadd.xlane.f32.xlu0 %v3305
    %v3307 = vpop.xlane.xlu0 %3306
    %v3308 = vsel %vm739, %v2060, 0.0
    %3309 = vadd.xlane.f32.xlu0 %v3308
    %v3310 = vpop.xlane.xlu0 %3309
    %v3311 = vsel %vm739, %v2061, 0.0
    %3312 = vadd.xlane.f32.xlu0 %v3311
    %v3313 = vpop.xlane.xlu0 %3312
    %v3314 = vsel %vm739, %v2062, 0.0
    %3315 = vadd.xlane.f32.xlu0 %v3314
    %v3316 = vpop.xlane.xlu0 %3315
    %v3317 = vsel %vm739, %v2063, 0.0
    %3318 = vadd.xlane.f32.xlu0 %v3317
    %v3319 = vpop.xlane.xlu0 %3318
    %v3320 = vsel %vm739, %v2064, 0.0
    %3321 = vadd.xlane.f32.xlu0 %v3320
    %v3322 = vpop.xlane.xlu0 %3321
    %v3323 = vsel %vm739, %v2065, 0.0
    %3324 = vadd.xlane.f32.xlu0 %v3323
    %v3325 = vpop.xlane.xlu0 %3324
    %v3326 = vsel %vm739, %v2066, 0.0
    %3327 = vadd.xlane.f32.xlu0 %v3326
    %v3328 = vpop.xlane.xlu0 %3327
    %v3329 = vsel %vm739, %v2067, 0.0
    %3330 = vadd.xlane.f32.xlu0 %v3329
    %v3331 = vpop.xlane.xlu0 %3330
    %v3332 = vsel %vm739, %v2068, 0.0
    %3333 = vadd.xlane.f32.xlu0 %v3332
    %v3334 = vpop.xlane.xlu0 %3333
    %v3335 = vsel %vm739, %v2069, 0.0
    %3336 = vadd.xlane.f32.xlu0 %v3335
    %v3337 = vpop.xlane.xlu0 %3336
    %v3338 = vsel %vm739, %v2070, 0.0
    %3339 = vadd.xlane.f32.xlu0 %v3338
    %v3340 = vpop.xlane.xlu0 %3339
    %v3341 = vsel %vm739, %v2071, 0.0
    %3342 = vadd.xlane.f32.xlu0 %v3341
    %v3343 = vpop.xlane.xlu0 %3342
    %v3344 = vsel %vm739, %v2072, 0.0
    %3345 = vadd.xlane.f32.xlu0 %v3344
    %v3346 = vpop.xlane.xlu0 %3345
    %v3347 = vsel %vm739, %v2073, 0.0
    %3348 = vadd.xlane.f32.xlu0 %v3347
    %v3349 = vpop.xlane.xlu0 %3348
    %v3350 = vsel %vm739, %v2074, 0.0
    %3351 = vadd.xlane.f32.xlu0 %v3350
    %v3352 = vpop.xlane.xlu0 %3351
    %v3353 = vsel %vm739, %v2075, 0.0
    %3354 = vadd.xlane.f32.xlu0 %v3353
    %v3355 = vpop.xlane.xlu0 %3354
    %v3356 = vsel %vm739, %v2076, 0.0
    %3357 = vadd.xlane.f32.xlu0 %v3356
    %v3358 = vpop.xlane.xlu0 %3357
    %v3359 = vsel %vm739, %v2077, 0.0
    %3360 = vadd.xlane.f32.xlu0 %v3359
    %v3361 = vpop.xlane.xlu0 %3360
    %v3362 = vsel %vm739, %v2078, 0.0
    %3363 = vadd.xlane.f32.xlu0 %v3362
    %v3364 = vpop.xlane.xlu0 %3363
    %v3365 = vsel %vm739, %v2079, 0.0
    %3366 = vadd.xlane.f32.xlu0 %v3365
    %v3367 = vpop.xlane.xlu0 %3366
    %v3368 = vsel %vm739, %v2080, 0.0
    %3369 = vadd.xlane.f32.xlu0 %v3368
    %v3370 = vpop.xlane.xlu0 %3369
    %v3371 = vsel %vm739, %v2081, 0.0
    %3372 = vadd.xlane.f32.xlu0 %v3371
    %v3373 = vpop.xlane.xlu0 %3372
    %v3374 = vsel %vm739, %v2082, 0.0
    %3375 = vadd.xlane.f32.xlu0 %v3374
    %v3376 = vpop.xlane.xlu0 %3375
    %v3377 = vsel %vm739, %v2083, 0.0
    %3378 = vadd.xlane.f32.xlu0 %v3377
    %v3379 = vpop.xlane.xlu0 %3378
    %v3380 = vsel %vm739, %v2084, 0.0
    %3381 = vadd.xlane.f32.xlu0 %v3380
    %v3382 = vpop.xlane.xlu0 %3381
    %v3383 = vsel %vm739, %v2085, 0.0
    %3384 = vadd.xlane.f32.xlu0 %v3383
    %v3385 = vpop.xlane.xlu0 %3384
    %v3386 = vsel %vm739, %v2086, 0.0
    %3387 = vadd.xlane.f32.xlu0 %v3386
    %v3388 = vpop.xlane.xlu0 %3387
    %v3389 = vsel %vm739, %v2087, 0.0
    %3390 = vadd.xlane.f32.xlu0 %v3389
    %v3391 = vpop.xlane.xlu0 %3390
    %v3392 = vsel %vm739, %v2088, 0.0
    %3393 = vadd.xlane.f32.xlu0 %v3392
    %v3394 = vpop.xlane.xlu0 %3393
    %v3395 = vsel %vm739, %v2089, 0.0
    %3396 = vadd.xlane.f32.xlu0 %v3395
    %v3397 = vpop.xlane.xlu0 %3396
    %v3398 = vsel %vm739, %v2090, 0.0
    %3399 = vadd.xlane.f32.xlu0 %v3398
    %v3400 = vpop.xlane.xlu0 %3399
    %v3401 = vsel %vm739, %v2091, 0.0
    %3402 = vadd.xlane.f32.xlu0 %v3401
    %v3403 = vpop.xlane.xlu0 %3402
    %v3404 = vsel %vm739, %v2092, 0.0
    %3405 = vadd.xlane.f32.xlu0 %v3404
    %v3406 = vpop.xlane.xlu0 %3405
    %v3407 = vsel %vm739, %v2093, 0.0
    %3408 = vadd.xlane.f32.xlu0 %v3407
    %v3409 = vpop.xlane.xlu0 %3408
    %v3410 = vsel %vm739, %v2094, 0.0
    %3411 = vadd.xlane.f32.xlu0 %v3410
    %v3412 = vpop.xlane.xlu0 %3411
    %v3413 = vsel %vm739, %v2095, 0.0
    %3414 = vadd.xlane.f32.xlu0 %v3413
    %v3415 = vpop.xlane.xlu0 %3414
    %v3416 = vsel %vm739, %v2096, 0.0
    %3417 = vadd.xlane.f32.xlu0 %v3416
    %v3418 = vpop.xlane.xlu0 %3417
    %v3419 = vsel %vm739, %v2097, 0.0
    %3420 = vadd.xlane.f32.xlu0 %v3419
    %v3421 = vpop.xlane.xlu0 %3420
    %v3422 = vsel %vm739, %v2098, 0.0
    %3423 = vadd.xlane.f32.xlu0 %v3422
    %v3424 = vpop.xlane.xlu0 %3423
    %v3425 = vsel %vm739, %v2099, 0.0
    %3426 = vadd.xlane.f32.xlu0 %v3425
    %v3427 = vpop.xlane.xlu0 %3426
    %v3428 = vsel %vm739, %v2100, 0.0
    %3429 = vadd.xlane.f32.xlu0 %v3428
    %v3430 = vpop.xlane.xlu0 %3429
    %v3431 = vsel %vm739, %v2101, 0.0
    %3432 = vadd.xlane.f32.xlu0 %v3431
    %v3433 = vpop.xlane.xlu0 %3432
    %v3434 = vsel %vm739, %v2102, 0.0
    %3435 = vadd.xlane.f32.xlu0 %v3434
    %v3436 = vpop.xlane.xlu0 %3435
    %v3437 = vsel %vm739, %v2103, 0.0
    %3438 = vadd.xlane.f32.xlu0 %v3437
    %v3439 = vpop.xlane.xlu0 %3438
    %v3440 = vsel %vm739, %v2104, 0.0
    %3441 = vadd.xlane.f32.xlu0 %v3440
    %v3442 = vpop.xlane.xlu0 %3441
    %v3443 = vsel %vm739, %v2105, 0.0
    %3444 = vadd.xlane.f32.xlu0 %v3443
    %v3445 = vpop.xlane.xlu0 %3444
    %v3446 = vsel %vm739, %v2106, 0.0
    %3447 = vadd.xlane.f32.xlu0 %v3446
    %v3448 = vpop.xlane.xlu0 %3447
    %v3449 = vsel %vm739, %v2107, 0.0
    %3450 = vadd.xlane.f32.xlu0 %v3449
    %v3451 = vpop.xlane.xlu0 %3450
    %v3452 = vsel %vm739, %v2108, 0.0
    %3453 = vadd.xlane.f32.xlu0 %v3452
    %v3454 = vpop.xlane.xlu0 %3453
    %v3455 = vsel %vm739, %v2109, 0.0
    %3456 = vadd.xlane.f32.xlu0 %v3455
    %v3457 = vpop.xlane.xlu0 %3456
    %v3458 = vsel %vm739, %v2110, 0.0
    %3459 = vadd.xlane.f32.xlu0 %v3458
    %v3460 = vpop.xlane.xlu0 %3459
    %v3461 = vsel %vm739, %v2111, 0.0
    %3462 = vadd.xlane.f32.xlu0 %v3461
    %v3463 = vpop.xlane.xlu0 %3462
    %v3464 = vsel %vm739, %v2112, 0.0
    %3465 = vadd.xlane.f32.xlu0 %v3464
    %v3466 = vpop.xlane.xlu0 %3465
    %v3467 = vsel %vm739, %v2113, 0.0
    %3468 = vadd.xlane.f32.xlu0 %v3467
    %v3469 = vpop.xlane.xlu0 %3468
    %v3470 = vsel %vm739, %v2114, 0.0
    %3471 = vadd.xlane.f32.xlu0 %v3470
    %v3472 = vpop.xlane.xlu0 %3471
    %v3473 = vsel %vm739, %v2115, 0.0
    %3474 = vadd.xlane.f32.xlu0 %v3473
    %v3475 = vpop.xlane.xlu0 %3474
    %v3476 = vsel %vm739, %v2116, 0.0
    %3477 = vadd.xlane.f32.xlu0 %v3476
    %v3478 = vpop.xlane.xlu0 %3477
    %v3479 = vsel %vm739, %v2117, 0.0
    %3480 = vadd.xlane.f32.xlu0 %v3479
    %v3481 = vpop.xlane.xlu0 %3480
    %v3482 = vsel %vm739, %v2118, 0.0
    %3483 = vadd.xlane.f32.xlu0 %v3482
    %v3484 = vpop.xlane.xlu0 %3483
    %v3485 = vsel %vm739, %v2119, 0.0
    %3486 = vadd.xlane.f32.xlu0 %v3485
    %v3487 = vpop.xlane.xlu0 %3486
    %v3488 = vsel %vm739, %v2120, 0.0
    %3489 = vadd.xlane.f32.xlu0 %v3488
    %v3490 = vpop.xlane.xlu0 %3489
    %v3491 = vsel %vm739, %v2121, 0.0
    %3492 = vadd.xlane.f32.xlu0 %v3491
    %v3493 = vpop.xlane.xlu0 %3492
    %v3494 = vsel %vm739, %v2122, 0.0
    %3495 = vadd.xlane.f32.xlu0 %v3494
    %v3496 = vpop.xlane.xlu0 %3495
    %v3497 = vsel %vm739, %v2123, 0.0
    %3498 = vadd.xlane.f32.xlu0 %v3497
    %v3499 = vpop.xlane.xlu0 %3498
    %v3500 = vsel %vm739, %v2124, 0.0
    %3501 = vadd.xlane.f32.xlu0 %v3500
    %v3502 = vpop.xlane.xlu0 %3501
    %v3503 = vsel %vm739, %v2125, 0.0
    %3504 = vadd.xlane.f32.xlu0 %v3503
    %v3505 = vpop.xlane.xlu0 %3504
    %v3506 = vsel %vm739, %v2126, 0.0
    %3507 = vadd.xlane.f32.xlu0 %v3506
    %v3508 = vpop.xlane.xlu0 %3507
    %v3509 = vsel %vm739, %v2127, 0.0
    %3510 = vadd.xlane.f32.xlu0 %v3509
    %v3511 = vpop.xlane.xlu0 %3510
    %v3512 = vsel %vm739, %v2128, 0.0
    %3513 = vadd.xlane.f32.xlu0 %v3512
    %v3514 = vpop.xlane.xlu0 %3513
    %v3515 = vsel %vm739, %v2129, 0.0
    %3516 = vadd.xlane.f32.xlu0 %v3515
    %v3517 = vpop.xlane.xlu0 %3516
    %v3518 = vsel %vm739, %v2130, 0.0
    %3519 = vadd.xlane.f32.xlu0 %v3518
    %v3520 = vpop.xlane.xlu0 %3519
    %v3521 = vsel %vm739, %v2131, 0.0
    %3522 = vadd.xlane.f32.xlu0 %v3521
    %v3523 = vpop.xlane.xlu0 %3522
    %v3524 = vsel %vm739, %v2132, 0.0
    %3525 = vadd.xlane.f32.xlu0 %v3524
    %v3526 = vpop.xlane.xlu0 %3525
    %v3527 = vsel %vm739, %v2133, 0.0
    %3528 = vadd.xlane.f32.xlu0 %v3527
    %v3529 = vpop.xlane.xlu0 %3528
    %v3530 = vsel %vm739, %v2134, 0.0
    %3531 = vadd.xlane.f32.xlu0 %v3530
    %v3532 = vpop.xlane.xlu0 %3531
    %v3533 = vsel %vm739, %v2135, 0.0
    %3534 = vadd.xlane.f32.xlu0 %v3533
    %v3535 = vpop.xlane.xlu0 %3534
    %v3536 = vsel %vm739, %v2136, 0.0
    %3537 = vadd.xlane.f32.xlu0 %v3536
    %v3538 = vpop.xlane.xlu0 %3537
    %v3539 = vsel %vm739, %v2137, 0.0
    %3540 = vadd.xlane.f32.xlu0 %v3539
    %v3541 = vpop.xlane.xlu0 %3540
    %v3542 = vsel %vm739, %v2138, 0.0
    %3543 = vadd.xlane.f32.xlu0 %v3542
    %v3544 = vpop.xlane.xlu0 %3543
    %v3545 = vsel %vm739, %v2139, 0.0
    %3546 = vadd.xlane.f32.xlu0 %v3545
    %v3547 = vpop.xlane.xlu0 %3546
    %v3548 = vsel %vm739, %v2140, 0.0
    %3549 = vadd.xlane.f32.xlu0 %v3548
    %v3550 = vpop.xlane.xlu0 %3549
    %v3551 = vsel %vm739, %v2141, 0.0
    %3552 = vadd.xlane.f32.xlu0 %v3551
    %v3553 = vpop.xlane.xlu0 %3552
    %v3554 = vsel %vm739, %v2142, 0.0
    %3555 = vadd.xlane.f32.xlu0 %v3554
    %v3556 = vpop.xlane.xlu0 %3555
    %v3557 = vsel %vm739, %v2143, 0.0
    %3558 = vadd.xlane.f32.xlu0 %v3557
    %v3559 = vpop.xlane.xlu0 %3558
    %v3560 = vsel %vm739, %v2144, 0.0
    %3561 = vadd.xlane.f32.xlu0 %v3560
    %v3562 = vpop.xlane.xlu0 %3561
    %v3563 = vsel %vm739, %v2145, 0.0
    %3564 = vadd.xlane.f32.xlu0 %v3563
    %v3565 = vpop.xlane.xlu0 %3564
    %v3566 = vsel %vm739, %v2146, 0.0
    %3567 = vadd.xlane.f32.xlu0 %v3566
    %v3568 = vpop.xlane.xlu0 %3567
    %v3569 = vsel %vm739, %v2147, 0.0
    %3570 = vadd.xlane.f32.xlu0 %v3569
    %v3571 = vpop.xlane.xlu0 %3570
    %v3572 = vsel %vm739, %v2148, 0.0
    %3573 = vadd.xlane.f32.xlu0 %v3572
    %v3574 = vpop.xlane.xlu0 %3573
    %v3575 = vsel %vm739, %v2149, 0.0
    %3576 = vadd.xlane.f32.xlu0 %v3575
    %v3577 = vpop.xlane.xlu0 %3576
    %v3578 = vsel %vm739, %v2150, 0.0
    %3579 = vadd.xlane.f32.xlu0 %v3578
    %v3580 = vpop.xlane.xlu0 %3579
    %v3581 = vsel %vm739, %v2151, 0.0
    %3582 = vadd.xlane.f32.xlu0 %v3581
    %v3583 = vpop.xlane.xlu0 %3582
    %v3584 = vsel %vm739, %v2152, 0.0
    %3585 = vadd.xlane.f32.xlu0 %v3584
    %v3586 = vpop.xlane.xlu0 %3585
    %v3587 = vsel %vm739, %v2153, 0.0
    %3588 = vadd.xlane.f32.xlu0 %v3587
    %v3589 = vpop.xlane.xlu0 %3588
    %v3590 = vsel %vm739, %v2154, 0.0
    %3591 = vadd.xlane.f32.xlu0 %v3590
    %v3592 = vpop.xlane.xlu0 %3591
    %v3593 = vsel %vm739, %v2155, 0.0
    %3594 = vadd.xlane.f32.xlu0 %v3593
    %v3595 = vpop.xlane.xlu0 %3594
    %v3596 = vsel %vm739, %v2156, 0.0
    %3597 = vadd.xlane.f32.xlu0 %v3596
    %v3598 = vpop.xlane.xlu0 %3597
    %v3599 = vsel %vm739, %v2157, 0.0
    %3600 = vadd.xlane.f32.xlu0 %v3599
    %v3601 = vpop.xlane.xlu0 %3600
    %v3602 = vsel %vm739, %v2158, 0.0
    %3603 = vadd.xlane.f32.xlu0 %v3602
    %v3604 = vpop.xlane.xlu0 %3603
    %v3605 = vsel %vm739, %v2159, 0.0
    %3606 = vadd.xlane.f32.xlu0 %v3605
    %v3607 = vpop.xlane.xlu0 %3606
    %v3608 = vsel %vm739, %v2160, 0.0
    %3609 = vadd.xlane.f32.xlu0 %v3608
    %v3610 = vpop.xlane.xlu0 %3609
    %v3611 = vsel %vm739, %v2161, 0.0
    %3612 = vadd.xlane.f32.xlu0 %v3611
    %v3613 = vpop.xlane.xlu0 %3612
    %v3614 = vsel %vm739, %v2162, 0.0
    %3615 = vadd.xlane.f32.xlu0 %v3614
    %v3616 = vpop.xlane.xlu0 %3615
    %v3617 = vsel %vm739, %v2163, 0.0
    %3618 = vadd.xlane.f32.xlu0 %v3617
    %v3619 = vpop.xlane.xlu0 %3618
    %v3620 = vsel %vm739, %v2164, 0.0
    %3621 = vadd.xlane.f32.xlu0 %v3620
    %v3622 = vpop.xlane.xlu0 %3621
    %v3623 = vsel %vm739, %v2165, 0.0
    %3624 = vadd.xlane.f32.xlu0 %v3623
    %v3625 = vpop.xlane.xlu0 %3624
    %v3626 = vsel %vm739, %v2166, 0.0
    %3627 = vadd.xlane.f32.xlu0 %v3626
    %v3628 = vpop.xlane.xlu0 %3627
    %v3629 = vsel %vm739, %v2167, 0.0
    %3630 = vadd.xlane.f32.xlu0 %v3629
    %v3631 = vpop.xlane.xlu0 %3630
    %v3632 = vsel %vm739, %v2168, 0.0
    %3633 = vadd.xlane.f32.xlu0 %v3632
    %v3634 = vpop.xlane.xlu0 %3633
    %v3635 = vsel %vm739, %v2169, 0.0
    %3636 = vadd.xlane.f32.xlu0 %v3635
    %v3637 = vpop.xlane.xlu0 %3636
    %v3638 = vsel %vm739, %v2170, 0.0
    %3639 = vadd.xlane.f32.xlu0 %v3638
    %v3640 = vpop.xlane.xlu0 %3639
    %v3641 = vsel %vm739, %v2171, 0.0
    %3642 = vadd.xlane.f32.xlu0 %v3641
    %v3643 = vpop.xlane.xlu0 %3642
    %v3644 = vsel %vm739, %v2172, 0.0
    %3645 = vadd.xlane.f32.xlu0 %v3644
    %v3646 = vpop.xlane.xlu0 %3645
    %v3647 = vsel %vm739, %v2173, 0.0
    %3648 = vadd.xlane.f32.xlu0 %v3647
    %v3649 = vpop.xlane.xlu0 %3648
    %v3650 = vsel %vm739, %v2174, 0.0
    %3651 = vadd.xlane.f32.xlu0 %v3650
    %v3652 = vpop.xlane.xlu0 %3651
    %v3653 = vsel %vm739, %v2175, 0.0
    %3654 = vadd.xlane.f32.xlu0 %v3653
    %v3655 = vpop.xlane.xlu0 %3654
    %v3656 = vsel %vm739, %v2176, 0.0
    %3657 = vadd.xlane.f32.xlu0 %v3656
    %v3658 = vpop.xlane.xlu0 %3657
    %v3659 = vsel %vm739, %v2177, 0.0
    %3660 = vadd.xlane.f32.xlu0 %v3659
    %v3661 = vpop.xlane.xlu0 %3660
    %v3662 = vsel %vm739, %v2178, 0.0
    %3663 = vadd.xlane.f32.xlu0 %v3662
    %v3664 = vpop.xlane.xlu0 %3663
    %v3665 = vsel %vm739, %v2179, 0.0
    %3666 = vadd.xlane.f32.xlu0 %v3665
    %v3667 = vpop.xlane.xlu0 %3666
    %v3668 = vsel %vm739, %v2180, 0.0
    %3669 = vadd.xlane.f32.xlu0 %v3668
    %v3670 = vpop.xlane.xlu0 %3669
    %v3671 = vsel %vm739, %v2181, 0.0
    %3672 = vadd.xlane.f32.xlu0 %v3671
    %v3673 = vpop.xlane.xlu0 %3672
    %v3674 = vsel %vm739, %v2182, 0.0
    %3675 = vadd.xlane.f32.xlu0 %v3674
    %v3676 = vpop.xlane.xlu0 %3675
    %v3677 = vsel %vm739, %v2183, 0.0
    %3678 = vadd.xlane.f32.xlu0 %v3677
    %v3679 = vpop.xlane.xlu0 %3678
    %v3680 = vsel %vm739, %v2184, 0.0
    %3681 = vadd.xlane.f32.xlu0 %v3680
    %v3682 = vpop.xlane.xlu0 %3681
    %v3683 = vsel %vm739, %v2185, 0.0
    %3684 = vadd.xlane.f32.xlu0 %v3683
    %v3685 = vpop.xlane.xlu0 %3684
    %v3686 = vsel %vm739, %v2186, 0.0
    %3687 = vadd.xlane.f32.xlu0 %v3686
    %v3688 = vpop.xlane.xlu0 %3687
    %v3689 = vsel %vm739, %v2187, 0.0
    %3690 = vadd.xlane.f32.xlu0 %v3689
    %v3691 = vpop.xlane.xlu0 %3690
    %v3692 = vsel %vm739, %v2188, 0.0
    %3693 = vadd.xlane.f32.xlu0 %v3692
    %v3694 = vpop.xlane.xlu0 %3693
    %v3695 = vsel %vm739, %v2189, 0.0
    %3696 = vadd.xlane.f32.xlu0 %v3695
    %v3697 = vpop.xlane.xlu0 %3696
    %v3698 = vsel %vm739, %v2190, 0.0
    %3699 = vadd.xlane.f32.xlu0 %v3698
    %v3700 = vpop.xlane.xlu0 %3699
    %v3701 = vsel %vm739, %v2191, 0.0
    %3702 = vadd.xlane.f32.xlu0 %v3701
    %v3703 = vpop.xlane.xlu0 %3702
    %v3704 = vsel %vm739, %v2192, 0.0
    %3705 = vadd.xlane.f32.xlu0 %v3704
    %v3706 = vpop.xlane.xlu0 %3705
    %v3707 = vsel %vm739, %v2193, 0.0
    %3708 = vadd.xlane.f32.xlu0 %v3707
    %v3709 = vpop.xlane.xlu0 %3708
    %v3710 = vsel %vm739, %v2194, 0.0
    %3711 = vadd.xlane.f32.xlu0 %v3710
    %v3712 = vpop.xlane.xlu0 %3711
    %v3713 = vsel %vm739, %v2195, 0.0
    %3714 = vadd.xlane.f32.xlu0 %v3713
    %v3715 = vpop.xlane.xlu0 %3714
    %v3716 = vsel %vm739, %v2196, 0.0
    %3717 = vadd.xlane.f32.xlu0 %v3716
    %v3718 = vpop.xlane.xlu0 %3717
    %v3719 = vsel %vm739, %v2197, 0.0
    %3720 = vadd.xlane.f32.xlu0 %v3719
    %v3721 = vpop.xlane.xlu0 %3720
    %v3722 = vsel %vm739, %v2198, 0.0
    %3723 = vadd.xlane.f32.xlu0 %v3722
    %v3724 = vpop.xlane.xlu0 %3723
    %v3725 = vsel %vm739, %v2199, 0.0
    %3726 = vadd.xlane.f32.xlu0 %v3725
    %v3727 = vpop.xlane.xlu0 %3726
    %v3728 = vsel %vm739, %v2200, 0.0
    %3729 = vadd.xlane.f32.xlu0 %v3728
    %v3730 = vpop.xlane.xlu0 %3729
    %v3731 = vsel %vm739, %v2201, 0.0
    %3732 = vadd.xlane.f32.xlu0 %v3731
    %v3733 = vpop.xlane.xlu0 %3732
    %v3734 = vsel %vm739, %v2202, 0.0
    %3735 = vadd.xlane.f32.xlu0 %v3734
    %v3736 = vpop.xlane.xlu0 %3735
    %v3737 = vsel %vm739, %v2203, 0.0
    %3738 = vadd.xlane.f32.xlu0 %v3737
    %v3739 = vpop.xlane.xlu0 %3738
    %v3740 = vld [vmem:[%s1] sm:$0xff]
    %v3741 = vld [vmem:[%s1 + $0x8] sm:$0xff]
    %v3742 = vld [vmem:[%s1 + $0x10] sm:$0xff]
    %v3743 = vld [vmem:[%s1 + $0x18] sm:$0xff]
    %v3744 = vld [vmem:[%s1 + $0x20] sm:$0xff]
    %v3745 = vld [vmem:[%s1 + $0x28] sm:$0xff]
    %v3746 = vld [vmem:[%s1 + $0x30] sm:$0xff]
    %v3747 = vld [vmem:[%s1 + $0x38] sm:$0xff]
    %v3748 = vld [vmem:[%s2] sm:$0x1]
    %3749 = vset.pattern.permute.xlu0 0
    %3750 = vperm.xlu0 %3749, %v3740
    %v3751 = vpop.permute.xlu0 %3750
    %3752 = vset.pattern.permute.xlu0 0
    %3753 = vperm.xlu0 %3752, %v3741
    %v3754 = vpop.permute.xlu0 %3753
    %3755 = vset.pattern.permute.xlu0 0
    %3756 = vperm.xlu0 %3755, %v3742
    %v3757 = vpop.permute.xlu0 %3756
    %3758 = vset.pattern.permute.xlu0 0
    %3759 = vperm.xlu0 %3758, %v3743
    %v3760 = vpop.permute.xlu0 %3759
    %3761 = vset.pattern.permute.xlu0 0
    %3762 = vperm.xlu0 %3761, %v3744
    %v3763 = vpop.permute.xlu0 %3762
    %3764 = vset.pattern.permute.xlu0 0
    %3765 = vperm.xlu0 %3764, %v3745
    %v3766 = vpop.permute.xlu0 %3765
    %3767 = vset.pattern.permute.xlu0 0
    %3768 = vperm.xlu0 %3767, %v3746
    %v3769 = vpop.permute.xlu0 %3768
    %3770 = vset.pattern.permute.xlu0 0
    %3771 = vperm.xlu0 %3770, %v3747
    %v3772 = vpop.permute.xlu0 %3771
    %v3773 = vperm.slane %v3748, 0
    %vm3774 = vcmp.eq.s32.totalorder %v3751, %v3773
    %vm3775 = vcmp.eq.s32.totalorder %v3754, %v3773
    %vm3776 = vcmp.eq.s32.totalorder %v3757, %v3773
    %vm3777 = vcmp.eq.s32.totalorder %v3760, %v3773
    %vm3778 = vcmp.eq.s32.totalorder %v3763, %v3773
    %vm3779 = vcmp.eq.s32.totalorder %v3766, %v3773
    %vm3780 = vcmp.eq.s32.totalorder %v3769, %v3773
    %vm3781 = vcmp.eq.s32.totalorder %v3772, %v3773
    %vm3782 = vcmp.le.f32.partialorder %v2206, 2.25
    %vm3783 = vcmp.le.f32.partialorder %v2209, 2.25
    %vm3784 = vcmp.le.f32.partialorder %v2212, 2.25
    %vm3785 = vcmp.le.f32.partialorder %v2215, 2.25
    %vm3786 = vcmp.le.f32.partialorder %v2218, 2.25
    %vm3787 = vcmp.le.f32.partialorder %v2221, 2.25
    %vm3788 = vcmp.le.f32.partialorder %v2224, 2.25
    %vm3789 = vcmp.le.f32.partialorder %v2227, 2.25
    %vm3790 = vcmp.le.f32.partialorder %v2230, 2.25
    %vm3791 = vcmp.le.f32.partialorder %v2233, 2.25
    %vm3792 = vcmp.le.f32.partialorder %v2236, 2.25
    %vm3793 = vcmp.le.f32.partialorder %v2239, 2.25
    %vm3794 = vcmp.le.f32.partialorder %v2242, 2.25
    %vm3795 = vcmp.le.f32.partialorder %v2245, 2.25
    %vm3796 = vcmp.le.f32.partialorder %v2248, 2.25
    %vm3797 = vcmp.le.f32.partialorder %v2251, 2.25
    %vm3798 = vcmp.le.f32.partialorder %v2254, 2.25
    %vm3799 = vcmp.le.f32.partialorder %v2257, 2.25
    %vm3800 = vcmp.le.f32.partialorder %v2260, 2.25
    %vm3801 = vcmp.le.f32.partialorder %v2263, 2.25
    %vm3802 = vcmp.le.f32.partialorder %v2266, 2.25
    %vm3803 = vcmp.le.f32.partialorder %v2269, 2.25
    %vm3804 = vcmp.le.f32.partialorder %v2272, 2.25
    %vm3805 = vcmp.le.f32.partialorder %v2275, 2.25
    %vm3806 = vcmp.le.f32.partialorder %v2278, 2.25
    %vm3807 = vcmp.le.f32.partialorder %v2281, 2.25
    %vm3808 = vcmp.le.f32.partialorder %v2284, 2.25
    %vm3809 = vcmp.le.f32.partialorder %v2287, 2.25
    %vm3810 = vcmp.le.f32.partialorder %v2290, 2.25
    %vm3811 = vcmp.le.f32.partialorder %v2293, 2.25
    %vm3812 = vcmp.le.f32.partialorder %v2296, 2.25
    %vm3813 = vcmp.le.f32.partialorder %v2299, 2.25
    %vm3814 = vcmp.le.f32.partialorder %v2302, 2.25
    %vm3815 = vcmp.le.f32.partialorder %v2305, 2.25
    %vm3816 = vcmp.le.f32.partialorder %v2308, 2.25
    %vm3817 = vcmp.le.f32.partialorder %v2311, 2.25
    %vm3818 = vcmp.le.f32.partialorder %v2314, 2.25
    %vm3819 = vcmp.le.f32.partialorder %v2317, 2.25
    %vm3820 = vcmp.le.f32.partialorder %v2320, 2.25
    %vm3821 = vcmp.le.f32.partialorder %v2323, 2.25
    %vm3822 = vcmp.le.f32.partialorder %v2326, 2.25
    %vm3823 = vcmp.le.f32.partialorder %v2329, 2.25
    %vm3824 = vcmp.le.f32.partialorder %v2332, 2.25
    %vm3825 = vcmp.le.f32.partialorder %v2335, 2.25
    %vm3826 = vcmp.le.f32.partialorder %v2338, 2.25
    %vm3827 = vcmp.le.f32.partialorder %v2341, 2.25
    %vm3828 = vcmp.le.f32.partialorder %v2344, 2.25
    %vm3829 = vcmp.le.f32.partialorder %v2347, 2.25
    %vm3830 = vcmp.le.f32.partialorder %v2350, 2.25
    %vm3831 = vcmp.le.f32.partialorder %v2353, 2.25
    %vm3832 = vcmp.le.f32.partialorder %v2356, 2.25
    %vm3833 = vcmp.le.f32.partialorder %v2359, 2.25
    %vm3834 = vcmp.le.f32.partialorder %v2362, 2.25
    %vm3835 = vcmp.le.f32.partialorder %v2365, 2.25
    %vm3836 = vcmp.le.f32.partialorder %v2368, 2.25
    %vm3837 = vcmp.le.f32.partialorder %v2371, 2.25
    %vm3838 = vcmp.le.f32.partialorder %v2374, 2.25
    %vm3839 = vcmp.le.f32.partialorder %v2377, 2.25
    %vm3840 = vcmp.le.f32.partialorder %v2380, 2.25
    %vm3841 = vcmp.le.f32.partialorder %v2383, 2.25
    %vm3842 = vcmp.le.f32.partialorder %v2386, 2.25
    %vm3843 = vcmp.le.f32.partialorder %v2389, 2.25
    %vm3844 = vcmp.le.f32.partialorder %v2392, 2.25
    %vm3845 = vcmp.le.f32.partialorder %v2395, 2.25
    %vm3846 = vcmp.le.f32.partialorder %v2398, 2.25
    %vm3847 = vcmp.le.f32.partialorder %v2401, 2.25
    %vm3848 = vcmp.le.f32.partialorder %v2404, 2.25
    %vm3849 = vcmp.le.f32.partialorder %v2407, 2.25
    %vm3850 = vcmp.le.f32.partialorder %v2410, 2.25
    %vm3851 = vcmp.le.f32.partialorder %v2413, 2.25
    %vm3852 = vcmp.le.f32.partialorder %v2416, 2.25
    %vm3853 = vcmp.le.f32.partialorder %v2419, 2.25
    %vm3854 = vcmp.le.f32.partialorder %v2422, 2.25
    %vm3855 = vcmp.le.f32.partialorder %v2425, 2.25
    %vm3856 = vcmp.le.f32.partialorder %v2428, 2.25
    %vm3857 = vcmp.le.f32.partialorder %v2431, 2.25
    %vm3858 = vcmp.le.f32.partialorder %v2434, 2.25
    %vm3859 = vcmp.le.f32.partialorder %v2437, 2.25
    %vm3860 = vcmp.le.f32.partialorder %v2440, 2.25
    %vm3861 = vcmp.le.f32.partialorder %v2443, 2.25
    %vm3862 = vcmp.le.f32.partialorder %v2446, 2.25
    %vm3863 = vcmp.le.f32.partialorder %v2449, 2.25
    %vm3864 = vcmp.le.f32.partialorder %v2452, 2.25
    %vm3865 = vcmp.le.f32.partialorder %v2455, 2.25
    %vm3866 = vcmp.le.f32.partialorder %v2458, 2.25
    %vm3867 = vcmp.le.f32.partialorder %v2461, 2.25
    %vm3868 = vcmp.le.f32.partialorder %v2464, 2.25
    %vm3869 = vcmp.le.f32.partialorder %v2467, 2.25
    %vm3870 = vcmp.le.f32.partialorder %v2470, 2.25
    %vm3871 = vcmp.le.f32.partialorder %v2473, 2.25
    %vm3872 = vcmp.le.f32.partialorder %v2476, 2.25
    %vm3873 = vcmp.le.f32.partialorder %v2479, 2.25
    %vm3874 = vcmp.le.f32.partialorder %v2482, 2.25
    %vm3875 = vcmp.le.f32.partialorder %v2485, 2.25
    %vm3876 = vcmp.le.f32.partialorder %v2488, 2.25
    %vm3877 = vcmp.le.f32.partialorder %v2491, 2.25
    %vm3878 = vcmp.le.f32.partialorder %v2494, 2.25
    %vm3879 = vcmp.le.f32.partialorder %v2497, 2.25
    %vm3880 = vcmp.le.f32.partialorder %v2500, 2.25
    %vm3881 = vcmp.le.f32.partialorder %v2503, 2.25
    %vm3882 = vcmp.le.f32.partialorder %v2506, 2.25
    %vm3883 = vcmp.le.f32.partialorder %v2509, 2.25
    %vm3884 = vcmp.le.f32.partialorder %v2512, 2.25
    %vm3885 = vcmp.le.f32.partialorder %v2515, 2.25
    %vm3886 = vcmp.le.f32.partialorder %v2518, 2.25
    %vm3887 = vcmp.le.f32.partialorder %v2521, 2.25
    %vm3888 = vcmp.le.f32.partialorder %v2524, 2.25
    %vm3889 = vcmp.le.f32.partialorder %v2527, 2.25
    %vm3890 = vcmp.le.f32.partialorder %v2530, 2.25
    %vm3891 = vcmp.le.f32.partialorder %v2533, 2.25
    %vm3892 = vcmp.le.f32.partialorder %v2536, 2.25
    %vm3893 = vcmp.le.f32.partialorder %v2539, 2.25
    %vm3894 = vcmp.le.f32.partialorder %v2542, 2.25
    %vm3895 = vcmp.le.f32.partialorder %v2545, 2.25
    %vm3896 = vcmp.le.f32.partialorder %v2548, 2.25
    %vm3897 = vcmp.le.f32.partialorder %v2551, 2.25
    %vm3898 = vcmp.le.f32.partialorder %v2554, 2.25
    %vm3899 = vcmp.le.f32.partialorder %v2557, 2.25
    %vm3900 = vcmp.le.f32.partialorder %v2560, 2.25
    %vm3901 = vcmp.le.f32.partialorder %v2563, 2.25
    %vm3902 = vcmp.le.f32.partialorder %v2566, 2.25
    %vm3903 = vcmp.le.f32.partialorder %v2569, 2.25
    %vm3904 = vcmp.le.f32.partialorder %v2572, 2.25
    %vm3905 = vcmp.le.f32.partialorder %v2575, 2.25
    %vm3906 = vcmp.le.f32.partialorder %v2578, 2.25
    %vm3907 = vcmp.le.f32.partialorder %v2581, 2.25
    %vm3908 = vcmp.le.f32.partialorder %v2584, 2.25
    %vm3909 = vcmp.le.f32.partialorder %v2587, 2.25
    %vm3910 = vcmp.le.f32.partialorder %v2590, 2.25
    %vm3911 = vcmp.le.f32.partialorder %v2593, 2.25
    %vm3912 = vcmp.le.f32.partialorder %v2596, 2.25
    %vm3913 = vcmp.le.f32.partialorder %v2599, 2.25
    %vm3914 = vcmp.le.f32.partialorder %v2602, 2.25
    %vm3915 = vcmp.le.f32.partialorder %v2605, 2.25
    %vm3916 = vcmp.le.f32.partialorder %v2608, 2.25
    %vm3917 = vcmp.le.f32.partialorder %v2611, 2.25
    %vm3918 = vcmp.le.f32.partialorder %v2614, 2.25
    %vm3919 = vcmp.le.f32.partialorder %v2617, 2.25
    %vm3920 = vcmp.le.f32.partialorder %v2620, 2.25
    %vm3921 = vcmp.le.f32.partialorder %v2623, 2.25
    %vm3922 = vcmp.le.f32.partialorder %v2626, 2.25
    %vm3923 = vcmp.le.f32.partialorder %v2629, 2.25
    %vm3924 = vcmp.le.f32.partialorder %v2632, 2.25
    %vm3925 = vcmp.le.f32.partialorder %v2635, 2.25
    %vm3926 = vcmp.le.f32.partialorder %v2638, 2.25
    %vm3927 = vcmp.le.f32.partialorder %v2641, 2.25
    %vm3928 = vcmp.le.f32.partialorder %v2644, 2.25
    %vm3929 = vcmp.le.f32.partialorder %v2647, 2.25
    %vm3930 = vcmp.le.f32.partialorder %v2650, 2.25
    %vm3931 = vcmp.le.f32.partialorder %v2653, 2.25
    %vm3932 = vcmp.le.f32.partialorder %v2656, 2.25
    %vm3933 = vcmp.le.f32.partialorder %v2659, 2.25
    %vm3934 = vcmp.le.f32.partialorder %v2662, 2.25
    %vm3935 = vcmp.le.f32.partialorder %v2665, 2.25
    %vm3936 = vcmp.le.f32.partialorder %v2668, 2.25
    %vm3937 = vcmp.le.f32.partialorder %v2671, 2.25
    %vm3938 = vcmp.le.f32.partialorder %v2674, 2.25
    %vm3939 = vcmp.le.f32.partialorder %v2677, 2.25
    %vm3940 = vcmp.le.f32.partialorder %v2680, 2.25
    %vm3941 = vcmp.le.f32.partialorder %v2683, 2.25
    %vm3942 = vcmp.le.f32.partialorder %v2686, 2.25
    %vm3943 = vcmp.le.f32.partialorder %v2689, 2.25
    %vm3944 = vcmp.le.f32.partialorder %v2692, 2.25
    %vm3945 = vcmp.le.f32.partialorder %v2695, 2.25
    %vm3946 = vcmp.le.f32.partialorder %v2698, 2.25
    %vm3947 = vcmp.le.f32.partialorder %v2701, 2.25
    %vm3948 = vcmp.le.f32.partialorder %v2704, 2.25
    %vm3949 = vcmp.le.f32.partialorder %v2707, 2.25
    %vm3950 = vcmp.le.f32.partialorder %v2710, 2.25
    %vm3951 = vcmp.le.f32.partialorder %v2713, 2.25
    %vm3952 = vcmp.le.f32.partialorder %v2716, 2.25
    %vm3953 = vcmp.le.f32.partialorder %v2719, 2.25
    %vm3954 = vcmp.le.f32.partialorder %v2722, 2.25
    %vm3955 = vcmp.le.f32.partialorder %v2725, 2.25
    %vm3956 = vcmp.le.f32.partialorder %v2728, 2.25
    %vm3957 = vcmp.le.f32.partialorder %v2731, 2.25
    %vm3958 = vcmp.le.f32.partialorder %v2734, 2.25
    %vm3959 = vcmp.le.f32.partialorder %v2737, 2.25
    %vm3960 = vcmp.le.f32.partialorder %v2740, 2.25
    %vm3961 = vcmp.le.f32.partialorder %v2743, 2.25
    %vm3962 = vcmp.le.f32.partialorder %v2746, 2.25
    %vm3963 = vcmp.le.f32.partialorder %v2749, 2.25
    %vm3964 = vcmp.le.f32.partialorder %v2752, 2.25
    %vm3965 = vcmp.le.f32.partialorder %v2755, 2.25
    %vm3966 = vcmp.le.f32.partialorder %v2758, 2.25
    %vm3967 = vcmp.le.f32.partialorder %v2761, 2.25
    %vm3968 = vcmp.le.f32.partialorder %v2764, 2.25
    %vm3969 = vcmp.le.f32.partialorder %v2767, 2.25
    %vm3970 = vcmp.le.f32.partialorder %v2770, 2.25
    %vm3971 = vcmp.le.f32.partialorder %v2773, 2.25
    %vm3972 = vcmp.le.f32.partialorder %v2776, 2.25
    %vm3973 = vcmp.le.f32.partialorder %v2779, 2.25
    %vm3974 = vcmp.le.f32.partialorder %v2782, 2.25
    %vm3975 = vcmp.le.f32.partialorder %v2785, 2.25
    %vm3976 = vcmp.le.f32.partialorder %v2788, 2.25
    %vm3977 = vcmp.le.f32.partialorder %v2791, 2.25
    %vm3978 = vcmp.le.f32.partialorder %v2794, 2.25
    %vm3979 = vcmp.le.f32.partialorder %v2797, 2.25
    %vm3980 = vcmp.le.f32.partialorder %v2800, 2.25
    %vm3981 = vcmp.le.f32.partialorder %v2803, 2.25
    %vm3982 = vcmp.le.f32.partialorder %v2806, 2.25
    %vm3983 = vcmp.le.f32.partialorder %v2809, 2.25
    %vm3984 = vcmp.le.f32.partialorder %v2812, 2.25
    %vm3985 = vcmp.le.f32.partialorder %v2815, 2.25
    %vm3986 = vcmp.le.f32.partialorder %v2818, 2.25
    %vm3987 = vcmp.le.f32.partialorder %v2821, 2.25
    %vm3988 = vcmp.le.f32.partialorder %v2824, 2.25
    %vm3989 = vcmp.le.f32.partialorder %v2827, 2.25
    %vm3990 = vcmp.le.f32.partialorder %v2830, 2.25
    %vm3991 = vcmp.le.f32.partialorder %v2833, 2.25
    %vm3992 = vcmp.le.f32.partialorder %v2836, 2.25
    %vm3993 = vcmp.le.f32.partialorder %v2839, 2.25
    %vm3994 = vcmp.le.f32.partialorder %v2842, 2.25
    %vm3995 = vcmp.le.f32.partialorder %v2845, 2.25
    %vm3996 = vcmp.le.f32.partialorder %v2848, 2.25
    %vm3997 = vcmp.le.f32.partialorder %v2851, 2.25
    %vm3998 = vcmp.le.f32.partialorder %v2854, 2.25
    %vm3999 = vcmp.le.f32.partialorder %v2857, 2.25
    %vm4000 = vcmp.le.f32.partialorder %v2860, 2.25
    %vm4001 = vcmp.le.f32.partialorder %v2863, 2.25
    %vm4002 = vcmp.le.f32.partialorder %v2866, 2.25
    %vm4003 = vcmp.le.f32.partialorder %v2869, 2.25
    %vm4004 = vcmp.le.f32.partialorder %v2872, 2.25
    %vm4005 = vcmp.le.f32.partialorder %v2875, 2.25
    %vm4006 = vcmp.le.f32.partialorder %v2878, 2.25
    %vm4007 = vcmp.le.f32.partialorder %v2881, 2.25
    %vm4008 = vcmp.le.f32.partialorder %v2884, 2.25
    %vm4009 = vcmp.le.f32.partialorder %v2887, 2.25
    %vm4010 = vcmp.le.f32.partialorder %v2890, 2.25
    %vm4011 = vcmp.le.f32.partialorder %v2893, 2.25
    %vm4012 = vcmp.le.f32.partialorder %v2896, 2.25
    %vm4013 = vcmp.le.f32.partialorder %v2899, 2.25
    %vm4014 = vcmp.le.f32.partialorder %v2902, 2.25
    %vm4015 = vcmp.le.f32.partialorder %v2905, 2.25
    %vm4016 = vcmp.le.f32.partialorder %v2908, 2.25
    %vm4017 = vcmp.le.f32.partialorder %v2911, 2.25
    %vm4018 = vcmp.le.f32.partialorder %v2914, 2.25
    %vm4019 = vcmp.le.f32.partialorder %v2917, 2.25
    %vm4020 = vcmp.le.f32.partialorder %v2920, 2.25
    %vm4021 = vcmp.le.f32.partialorder %v2923, 2.25
    %vm4022 = vcmp.le.f32.partialorder %v2926, 2.25
    %vm4023 = vcmp.le.f32.partialorder %v2929, 2.25
    %vm4024 = vcmp.le.f32.partialorder %v2932, 2.25
    %vm4025 = vcmp.le.f32.partialorder %v2935, 2.25
    %vm4026 = vcmp.le.f32.partialorder %v2938, 2.25
    %vm4027 = vcmp.le.f32.partialorder %v2941, 2.25
    %vm4028 = vcmp.le.f32.partialorder %v2944, 2.25
    %vm4029 = vcmp.le.f32.partialorder %v2947, 2.25
    %vm4030 = vcmp.le.f32.partialorder %v2950, 2.25
    %vm4031 = vcmp.le.f32.partialorder %v2953, 2.25
    %vm4032 = vcmp.le.f32.partialorder %v2956, 2.25
    %vm4033 = vcmp.le.f32.partialorder %v2959, 2.25
    %vm4034 = vcmp.le.f32.partialorder %v2962, 2.25
    %vm4035 = vcmp.le.f32.partialorder %v2965, 2.25
    %vm4036 = vcmp.le.f32.partialorder %v2968, 2.25
    %vm4037 = vcmp.le.f32.partialorder %v2971, 2.25
    %vm4038 = vcmp.le.f32.partialorder %v2974, 2.25
    %vm4039 = vcmp.le.f32.partialorder %v2977, 2.25
    %vm4040 = vcmp.le.f32.partialorder %v2980, 2.25
    %vm4041 = vcmp.le.f32.partialorder %v2983, 2.25
    %vm4042 = vcmp.le.f32.partialorder %v2986, 2.25
    %vm4043 = vcmp.le.f32.partialorder %v2989, 2.25
    %vm4044 = vcmp.le.f32.partialorder %v2992, 2.25
    %vm4045 = vcmp.le.f32.partialorder %v2995, 2.25
    %vm4046 = vcmp.le.f32.partialorder %v2998, 2.25
    %vm4047 = vcmp.le.f32.partialorder %v3001, 2.25
    %vm4048 = vcmp.le.f32.partialorder %v3004, 2.25
    %vm4049 = vcmp.le.f32.partialorder %v3007, 2.25
    %vm4050 = vcmp.le.f32.partialorder %v3010, 2.25
    %vm4051 = vcmp.le.f32.partialorder %v3013, 2.25
    %vm4052 = vcmp.le.f32.partialorder %v3016, 2.25
    %vm4053 = vcmp.le.f32.partialorder %v3019, 2.25
    %vm4054 = vcmp.le.f32.partialorder %v3022, 2.25
    %vm4055 = vcmp.le.f32.partialorder %v3025, 2.25
    %vm4056 = vcmp.le.f32.partialorder %v3028, 2.25
    %vm4057 = vcmp.le.f32.partialorder %v3031, 2.25
    %vm4058 = vcmp.le.f32.partialorder %v3034, 2.25
    %vm4059 = vcmp.le.f32.partialorder %v3037, 2.25
    %vm4060 = vcmp.le.f32.partialorder %v3040, 2.25
    %vm4061 = vcmp.le.f32.partialorder %v3043, 2.25
    %vm4062 = vcmp.le.f32.partialorder %v3046, 2.25
    %vm4063 = vcmp.le.f32.partialorder %v3049, 2.25
    %vm4064 = vcmp.le.f32.partialorder %v3052, 2.25
    %vm4065 = vcmp.le.f32.partialorder %v3055, 2.25
    %vm4066 = vcmp.le.f32.partialorder %v3058, 2.25
    %vm4067 = vcmp.le.f32.partialorder %v3061, 2.25
    %vm4068 = vcmp.le.f32.partialorder %v3064, 2.25
    %vm4069 = vcmp.le.f32.partialorder %v3067, 2.25
    %vm4070 = vcmp.le.f32.partialorder %v3070, 2.25
    %vm4071 = vcmp.le.f32.partialorder %v3073, 2.25
    %vm4072 = vcmp.le.f32.partialorder %v3076, 2.25
    %vm4073 = vcmp.le.f32.partialorder %v3079, 2.25
    %vm4074 = vcmp.le.f32.partialorder %v3082, 2.25
    %vm4075 = vcmp.le.f32.partialorder %v3085, 2.25
    %vm4076 = vcmp.le.f32.partialorder %v3088, 2.25
    %vm4077 = vcmp.le.f32.partialorder %v3091, 2.25
    %vm4078 = vcmp.le.f32.partialorder %v3094, 2.25
    %vm4079 = vcmp.le.f32.partialorder %v3097, 2.25
    %vm4080 = vcmp.le.f32.partialorder %v3100, 2.25
    %vm4081 = vcmp.le.f32.partialorder %v3103, 2.25
    %vm4082 = vcmp.le.f32.partialorder %v3106, 2.25
    %vm4083 = vcmp.le.f32.partialorder %v3109, 2.25
    %vm4084 = vcmp.le.f32.partialorder %v3112, 2.25
    %vm4085 = vcmp.le.f32.partialorder %v3115, 2.25
    %vm4086 = vcmp.le.f32.partialorder %v3118, 2.25
    %vm4087 = vcmp.le.f32.partialorder %v3121, 2.25
    %vm4088 = vcmp.le.f32.partialorder %v3124, 2.25
    %vm4089 = vcmp.le.f32.partialorder %v3127, 2.25
    %vm4090 = vcmp.le.f32.partialorder %v3130, 2.25
    %vm4091 = vcmp.le.f32.partialorder %v3133, 2.25
    %vm4092 = vcmp.le.f32.partialorder %v3136, 2.25
    %vm4093 = vcmp.le.f32.partialorder %v3139, 2.25
    %vm4094 = vcmp.le.f32.partialorder %v3142, 2.25
    %vm4095 = vcmp.le.f32.partialorder %v3145, 2.25
    %vm4096 = vcmp.le.f32.partialorder %v3148, 2.25
    %vm4097 = vcmp.le.f32.partialorder %v3151, 2.25
    %vm4098 = vcmp.le.f32.partialorder %v3154, 2.25
    %vm4099 = vcmp.le.f32.partialorder %v3157, 2.25
    %vm4100 = vcmp.le.f32.partialorder %v3160, 2.25
    %vm4101 = vcmp.le.f32.partialorder %v3163, 2.25
    %vm4102 = vcmp.le.f32.partialorder %v3166, 2.25
    %vm4103 = vcmp.le.f32.partialorder %v3169, 2.25
    %vm4104 = vcmp.le.f32.partialorder %v3172, 2.25
    %vm4105 = vcmp.le.f32.partialorder %v3175, 2.25
    %vm4106 = vcmp.le.f32.partialorder %v3178, 2.25
    %vm4107 = vcmp.le.f32.partialorder %v3181, 2.25
    %vm4108 = vcmp.le.f32.partialorder %v3184, 2.25
    %vm4109 = vcmp.le.f32.partialorder %v3187, 2.25
    %vm4110 = vcmp.le.f32.partialorder %v3190, 2.25
    %vm4111 = vcmp.le.f32.partialorder %v3193, 2.25
    %vm4112 = vcmp.le.f32.partialorder %v3196, 2.25
    %vm4113 = vcmp.le.f32.partialorder %v3199, 2.25
    %vm4114 = vcmp.le.f32.partialorder %v3202, 2.25
    %vm4115 = vcmp.le.f32.partialorder %v3205, 2.25
    %vm4116 = vcmp.le.f32.partialorder %v3208, 2.25
    %vm4117 = vcmp.le.f32.partialorder %v3211, 2.25
    %vm4118 = vcmp.le.f32.partialorder %v3214, 2.25
    %vm4119 = vcmp.le.f32.partialorder %v3217, 2.25
    %vm4120 = vcmp.le.f32.partialorder %v3220, 2.25
    %vm4121 = vcmp.le.f32.partialorder %v3223, 2.25
    %vm4122 = vcmp.le.f32.partialorder %v3226, 2.25
    %vm4123 = vcmp.le.f32.partialorder %v3229, 2.25
    %vm4124 = vcmp.le.f32.partialorder %v3232, 2.25
    %vm4125 = vcmp.le.f32.partialorder %v3235, 2.25
    %vm4126 = vcmp.le.f32.partialorder %v3238, 2.25
    %vm4127 = vcmp.le.f32.partialorder %v3241, 2.25
    %vm4128 = vcmp.le.f32.partialorder %v3244, 2.25
    %vm4129 = vcmp.le.f32.partialorder %v3247, 2.25
    %vm4130 = vcmp.le.f32.partialorder %v3250, 2.25
    %vm4131 = vcmp.le.f32.partialorder %v3253, 2.25
    %vm4132 = vcmp.le.f32.partialorder %v3256, 2.25
    %vm4133 = vcmp.le.f32.partialorder %v3259, 2.25
    %vm4134 = vcmp.le.f32.partialorder %v3262, 2.25
    %vm4135 = vcmp.le.f32.partialorder %v3265, 2.25
    %vm4136 = vcmp.le.f32.partialorder %v3268, 2.25
    %vm4137 = vcmp.le.f32.partialorder %v3271, 2.25
    %vm4138 = vcmp.le.f32.partialorder %v3274, 2.25
    %vm4139 = vcmp.le.f32.partialorder %v3277, 2.25
    %vm4140 = vcmp.le.f32.partialorder %v3280, 2.25
    %vm4141 = vcmp.le.f32.partialorder %v3283, 2.25
    %vm4142 = vcmp.le.f32.partialorder %v3286, 2.25
    %vm4143 = vcmp.le.f32.partialorder %v3289, 2.25
    %vm4144 = vcmp.le.f32.partialorder %v3292, 2.25
    %vm4145 = vcmp.le.f32.partialorder %v3295, 2.25
    %vm4146 = vcmp.le.f32.partialorder %v3298, 2.25
    %vm4147 = vcmp.le.f32.partialorder %v3301, 2.25
    %vm4148 = vcmp.le.f32.partialorder %v3304, 2.25
    %vm4149 = vcmp.le.f32.partialorder %v3307, 2.25
    %vm4150 = vcmp.le.f32.partialorder %v3310, 2.25
    %vm4151 = vcmp.le.f32.partialorder %v3313, 2.25
    %vm4152 = vcmp.le.f32.partialorder %v3316, 2.25
    %vm4153 = vcmp.le.f32.partialorder %v3319, 2.25
    %vm4154 = vcmp.le.f32.partialorder %v3322, 2.25
    %vm4155 = vcmp.le.f32.partialorder %v3325, 2.25
    %vm4156 = vcmp.le.f32.partialorder %v3328, 2.25
    %vm4157 = vcmp.le.f32.partialorder %v3331, 2.25
    %vm4158 = vcmp.le.f32.partialorder %v3334, 2.25
    %vm4159 = vcmp.le.f32.partialorder %v3337, 2.25
    %vm4160 = vcmp.le.f32.partialorder %v3340, 2.25
    %vm4161 = vcmp.le.f32.partialorder %v3343, 2.25
    %vm4162 = vcmp.le.f32.partialorder %v3346, 2.25
    %vm4163 = vcmp.le.f32.partialorder %v3349, 2.25
    %vm4164 = vcmp.le.f32.partialorder %v3352, 2.25
    %vm4165 = vcmp.le.f32.partialorder %v3355, 2.25
    %vm4166 = vcmp.le.f32.partialorder %v3358, 2.25
    %vm4167 = vcmp.le.f32.partialorder %v3361, 2.25
    %vm4168 = vcmp.le.f32.partialorder %v3364, 2.25
    %vm4169 = vcmp.le.f32.partialorder %v3367, 2.25
    %vm4170 = vcmp.le.f32.partialorder %v3370, 2.25
    %vm4171 = vcmp.le.f32.partialorder %v3373, 2.25
    %vm4172 = vcmp.le.f32.partialorder %v3376, 2.25
    %vm4173 = vcmp.le.f32.partialorder %v3379, 2.25
    %vm4174 = vcmp.le.f32.partialorder %v3382, 2.25
    %vm4175 = vcmp.le.f32.partialorder %v3385, 2.25
    %vm4176 = vcmp.le.f32.partialorder %v3388, 2.25
    %vm4177 = vcmp.le.f32.partialorder %v3391, 2.25
    %vm4178 = vcmp.le.f32.partialorder %v3394, 2.25
    %vm4179 = vcmp.le.f32.partialorder %v3397, 2.25
    %vm4180 = vcmp.le.f32.partialorder %v3400, 2.25
    %vm4181 = vcmp.le.f32.partialorder %v3403, 2.25
    %vm4182 = vcmp.le.f32.partialorder %v3406, 2.25
    %vm4183 = vcmp.le.f32.partialorder %v3409, 2.25
    %vm4184 = vcmp.le.f32.partialorder %v3412, 2.25
    %vm4185 = vcmp.le.f32.partialorder %v3415, 2.25
    %vm4186 = vcmp.le.f32.partialorder %v3418, 2.25
    %vm4187 = vcmp.le.f32.partialorder %v3421, 2.25
    %vm4188 = vcmp.le.f32.partialorder %v3424, 2.25
    %vm4189 = vcmp.le.f32.partialorder %v3427, 2.25
    %vm4190 = vcmp.le.f32.partialorder %v3430, 2.25
    %vm4191 = vcmp.le.f32.partialorder %v3433, 2.25
    %vm4192 = vcmp.le.f32.partialorder %v3436, 2.25
    %vm4193 = vcmp.le.f32.partialorder %v3439, 2.25
    %vm4194 = vcmp.le.f32.partialorder %v3442, 2.25
    %vm4195 = vcmp.le.f32.partialorder %v3445, 2.25
    %vm4196 = vcmp.le.f32.partialorder %v3448, 2.25
    %vm4197 = vcmp.le.f32.partialorder %v3451, 2.25
    %vm4198 = vcmp.le.f32.partialorder %v3454, 2.25
    %vm4199 = vcmp.le.f32.partialorder %v3457, 2.25
    %vm4200 = vcmp.le.f32.partialorder %v3460, 2.25
    %vm4201 = vcmp.le.f32.partialorder %v3463, 2.25
    %vm4202 = vcmp.le.f32.partialorder %v3466, 2.25
    %vm4203 = vcmp.le.f32.partialorder %v3469, 2.25
    %vm4204 = vcmp.le.f32.partialorder %v3472, 2.25
    %vm4205 = vcmp.le.f32.partialorder %v3475, 2.25
    %vm4206 = vcmp.le.f32.partialorder %v3478, 2.25
    %vm4207 = vcmp.le.f32.partialorder %v3481, 2.25
    %vm4208 = vcmp.le.f32.partialorder %v3484, 2.25
    %vm4209 = vcmp.le.f32.partialorder %v3487, 2.25
    %vm4210 = vcmp.le.f32.partialorder %v3490, 2.25
    %vm4211 = vcmp.le.f32.partialorder %v3493, 2.25
    %vm4212 = vcmp.le.f32.partialorder %v3496, 2.25
    %vm4213 = vcmp.le.f32.partialorder %v3499, 2.25
    %vm4214 = vcmp.le.f32.partialorder %v3502, 2.25
    %vm4215 = vcmp.le.f32.partialorder %v3505, 2.25
    %vm4216 = vcmp.le.f32.partialorder %v3508, 2.25
    %vm4217 = vcmp.le.f32.partialorder %v3511, 2.25
    %vm4218 = vcmp.le.f32.partialorder %v3514, 2.25
    %vm4219 = vcmp.le.f32.partialorder %v3517, 2.25
    %vm4220 = vcmp.le.f32.partialorder %v3520, 2.25
    %vm4221 = vcmp.le.f32.partialorder %v3523, 2.25
    %vm4222 = vcmp.le.f32.partialorder %v3526, 2.25
    %vm4223 = vcmp.le.f32.partialorder %v3529, 2.25
    %vm4224 = vcmp.le.f32.partialorder %v3532, 2.25
    %vm4225 = vcmp.le.f32.partialorder %v3535, 2.25
    %vm4226 = vcmp.le.f32.partialorder %v3538, 2.25
    %vm4227 = vcmp.le.f32.partialorder %v3541, 2.25
    %vm4228 = vcmp.le.f32.partialorder %v3544, 2.25
    %vm4229 = vcmp.le.f32.partialorder %v3547, 2.25
    %vm4230 = vcmp.le.f32.partialorder %v3550, 2.25
    %vm4231 = vcmp.le.f32.partialorder %v3553, 2.25
    %vm4232 = vcmp.le.f32.partialorder %v3556, 2.25
    %vm4233 = vcmp.le.f32.partialorder %v3559, 2.25
    %vm4234 = vcmp.le.f32.partialorder %v3562, 2.25
    %vm4235 = vcmp.le.f32.partialorder %v3565, 2.25
    %vm4236 = vcmp.le.f32.partialorder %v3568, 2.25
    %vm4237 = vcmp.le.f32.partialorder %v3571, 2.25
    %vm4238 = vcmp.le.f32.partialorder %v3574, 2.25
    %vm4239 = vcmp.le.f32.partialorder %v3577, 2.25
    %vm4240 = vcmp.le.f32.partialorder %v3580, 2.25
    %vm4241 = vcmp.le.f32.partialorder %v3583, 2.25
    %vm4242 = vcmp.le.f32.partialorder %v3586, 2.25
    %vm4243 = vcmp.le.f32.partialorder %v3589, 2.25
    %vm4244 = vcmp.le.f32.partialorder %v3592, 2.25
    %vm4245 = vcmp.le.f32.partialorder %v3595, 2.25
    %vm4246 = vcmp.le.f32.partialorder %v3598, 2.25
    %vm4247 = vcmp.le.f32.partialorder %v3601, 2.25
    %vm4248 = vcmp.le.f32.partialorder %v3604, 2.25
    %vm4249 = vcmp.le.f32.partialorder %v3607, 2.25
    %vm4250 = vcmp.le.f32.partialorder %v3610, 2.25
    %vm4251 = vcmp.le.f32.partialorder %v3613, 2.25
    %vm4252 = vcmp.le.f32.partialorder %v3616, 2.25
    %vm4253 = vcmp.le.f32.partialorder %v3619, 2.25
    %vm4254 = vcmp.le.f32.partialorder %v3622, 2.25
    %vm4255 = vcmp.le.f32.partialorder %v3625, 2.25
    %vm4256 = vcmp.le.f32.partialorder %v3628, 2.25
    %vm4257 = vcmp.le.f32.partialorder %v3631, 2.25
    %vm4258 = vcmp.le.f32.partialorder %v3634, 2.25
    %vm4259 = vcmp.le.f32.partialorder %v3637, 2.25
    %vm4260 = vcmp.le.f32.partialorder %v3640, 2.25
    %vm4261 = vcmp.le.f32.partialorder %v3643, 2.25
    %vm4262 = vcmp.le.f32.partialorder %v3646, 2.25
    %vm4263 = vcmp.le.f32.partialorder %v3649, 2.25
    %vm4264 = vcmp.le.f32.partialorder %v3652, 2.25
    %vm4265 = vcmp.le.f32.partialorder %v3655, 2.25
    %vm4266 = vcmp.le.f32.partialorder %v3658, 2.25
    %vm4267 = vcmp.le.f32.partialorder %v3661, 2.25
    %vm4268 = vcmp.le.f32.partialorder %v3664, 2.25
    %vm4269 = vcmp.le.f32.partialorder %v3667, 2.25
    %vm4270 = vcmp.le.f32.partialorder %v3670, 2.25
    %vm4271 = vcmp.le.f32.partialorder %v3673, 2.25
    %vm4272 = vcmp.le.f32.partialorder %v3676, 2.25
    %vm4273 = vcmp.le.f32.partialorder %v3679, 2.25
    %vm4274 = vcmp.le.f32.partialorder %v3682, 2.25
    %vm4275 = vcmp.le.f32.partialorder %v3685, 2.25
    %vm4276 = vcmp.le.f32.partialorder %v3688, 2.25
    %vm4277 = vcmp.le.f32.partialorder %v3691, 2.25
    %vm4278 = vcmp.le.f32.partialorder %v3694, 2.25
    %vm4279 = vcmp.le.f32.partialorder %v3697, 2.25
    %vm4280 = vcmp.le.f32.partialorder %v3700, 2.25
    %vm4281 = vcmp.le.f32.partialorder %v3703, 2.25
    %vm4282 = vcmp.le.f32.partialorder %v3706, 2.25
    %vm4283 = vcmp.le.f32.partialorder %v3709, 2.25
    %vm4284 = vcmp.le.f32.partialorder %v3712, 2.25
    %vm4285 = vcmp.le.f32.partialorder %v3715, 2.25
    %vm4286 = vcmp.le.f32.partialorder %v3718, 2.25
    %vm4287 = vcmp.le.f32.partialorder %v3721, 2.25
    %vm4288 = vcmp.le.f32.partialorder %v3724, 2.25
    %vm4289 = vcmp.le.f32.partialorder %v3727, 2.25
    %vm4290 = vcmp.le.f32.partialorder %v3730, 2.25
    %vm4291 = vcmp.le.f32.partialorder %v3733, 2.25
    %vm4292 = vcmp.le.f32.partialorder %v3736, 2.25
    %vm4293 = vcmp.le.f32.partialorder %v3739, 2.25
    %v4294 = vsel %vm3782, 1, 0
    %v4295 = vsel %vm3783, 1, 0
    %v4296 = vsel %vm3784, 1, 0
    %v4297 = vsel %vm3785, 1, 0
    %v4298 = vsel %vm3786, 1, 0
    %v4299 = vsel %vm3787, 1, 0
    %v4300 = vsel %vm3788, 1, 0
    %v4301 = vsel %vm3789, 1, 0
    %v4302 = vsel %vm3790, 1, 0
    %v4303 = vsel %vm3791, 1, 0
    %v4304 = vsel %vm3792, 1, 0
    %v4305 = vsel %vm3793, 1, 0
    %v4306 = vsel %vm3794, 1, 0
    %v4307 = vsel %vm3795, 1, 0
    %v4308 = vsel %vm3796, 1, 0
    %v4309 = vsel %vm3797, 1, 0
    %v4310 = vsel %vm3798, 1, 0
    %v4311 = vsel %vm3799, 1, 0
    %v4312 = vsel %vm3800, 1, 0
    %v4313 = vsel %vm3801, 1, 0
    %v4314 = vsel %vm3802, 1, 0
    %v4315 = vsel %vm3803, 1, 0
    %v4316 = vsel %vm3804, 1, 0
    %v4317 = vsel %vm3805, 1, 0
    %v4318 = vsel %vm3806, 1, 0
    %v4319 = vsel %vm3807, 1, 0
    %v4320 = vsel %vm3808, 1, 0
    %v4321 = vsel %vm3809, 1, 0
    %v4322 = vsel %vm3810, 1, 0
    %v4323 = vsel %vm3811, 1, 0
    %v4324 = vsel %vm3812, 1, 0
    %v4325 = vsel %vm3813, 1, 0
    %v4326 = vsel %vm3814, 1, 0
    %v4327 = vsel %vm3815, 1, 0
    %v4328 = vsel %vm3816, 1, 0
    %v4329 = vsel %vm3817, 1, 0
    %v4330 = vsel %vm3818, 1, 0
    %v4331 = vsel %vm3819, 1, 0
    %v4332 = vsel %vm3820, 1, 0
    %v4333 = vsel %vm3821, 1, 0
    %v4334 = vsel %vm3822, 1, 0
    %v4335 = vsel %vm3823, 1, 0
    %v4336 = vsel %vm3824, 1, 0
    %v4337 = vsel %vm3825, 1, 0
    %v4338 = vsel %vm3826, 1, 0
    %v4339 = vsel %vm3827, 1, 0
    %v4340 = vsel %vm3828, 1, 0
    %v4341 = vsel %vm3829, 1, 0
    %v4342 = vsel %vm3830, 1, 0
    %v4343 = vsel %vm3831, 1, 0
    %v4344 = vsel %vm3832, 1, 0
    %v4345 = vsel %vm3833, 1, 0
    %v4346 = vsel %vm3834, 1, 0
    %v4347 = vsel %vm3835, 1, 0
    %v4348 = vsel %vm3836, 1, 0
    %v4349 = vsel %vm3837, 1, 0
    %v4350 = vsel %vm3838, 1, 0
    %v4351 = vsel %vm3839, 1, 0
    %v4352 = vsel %vm3840, 1, 0
    %v4353 = vsel %vm3841, 1, 0
    %v4354 = vsel %vm3842, 1, 0
    %v4355 = vsel %vm3843, 1, 0
    %v4356 = vsel %vm3844, 1, 0
    %v4357 = vsel %vm3845, 1, 0
    %v4358 = vsel %vm3846, 1, 0
    %v4359 = vsel %vm3847, 1, 0
    %v4360 = vsel %vm3848, 1, 0
    %v4361 = vsel %vm3849, 1, 0
    %v4362 = vsel %vm3850, 1, 0
    %v4363 = vsel %vm3851, 1, 0
    %v4364 = vsel %vm3852, 1, 0
    %v4365 = vsel %vm3853, 1, 0
    %v4366 = vsel %vm3854, 1, 0
    %v4367 = vsel %vm3855, 1, 0
    %v4368 = vsel %vm3856, 1, 0
    %v4369 = vsel %vm3857, 1, 0
    %v4370 = vsel %vm3858, 1, 0
    %v4371 = vsel %vm3859, 1, 0
    %v4372 = vsel %vm3860, 1, 0
    %v4373 = vsel %vm3861, 1, 0
    %v4374 = vsel %vm3862, 1, 0
    %v4375 = vsel %vm3863, 1, 0
    %v4376 = vsel %vm3864, 1, 0
    %v4377 = vsel %vm3865, 1, 0
    %v4378 = vsel %vm3866, 1, 0
    %v4379 = vsel %vm3867, 1, 0
    %v4380 = vsel %vm3868, 1, 0
    %v4381 = vsel %vm3869, 1, 0
    %v4382 = vsel %vm3870, 1, 0
    %v4383 = vsel %vm3871, 1, 0
    %v4384 = vsel %vm3872, 1, 0
    %v4385 = vsel %vm3873, 1, 0
    %v4386 = vsel %vm3874, 1, 0
    %v4387 = vsel %vm3875, 1, 0
    %v4388 = vsel %vm3876, 1, 0
    %v4389 = vsel %vm3877, 1, 0
    %v4390 = vsel %vm3878, 1, 0
    %v4391 = vsel %vm3879, 1, 0
    %v4392 = vsel %vm3880, 1, 0
    %v4393 = vsel %vm3881, 1, 0
    %v4394 = vsel %vm3882, 1, 0
    %v4395 = vsel %vm3883, 1, 0
    %v4396 = vsel %vm3884, 1, 0
    %v4397 = vsel %vm3885, 1, 0
    %v4398 = vsel %vm3886, 1, 0
    %v4399 = vsel %vm3887, 1, 0
    %v4400 = vsel %vm3888, 1, 0
    %v4401 = vsel %vm3889, 1, 0
    %v4402 = vsel %vm3890, 1, 0
    %v4403 = vsel %vm3891, 1, 0
    %v4404 = vsel %vm3892, 1, 0
    %v4405 = vsel %vm3893, 1, 0
    %v4406 = vsel %vm3894, 1, 0
    %v4407 = vsel %vm3895, 1, 0
    %v4408 = vsel %vm3896, 1, 0
    %v4409 = vsel %vm3897, 1, 0
    %v4410 = vsel %vm3898, 1, 0
    %v4411 = vsel %vm3899, 1, 0
    %v4412 = vsel %vm3900, 1, 0
    %v4413 = vsel %vm3901, 1, 0
    %v4414 = vsel %vm3902, 1, 0
    %v4415 = vsel %vm3903, 1, 0
    %v4416 = vsel %vm3904, 1, 0
    %v4417 = vsel %vm3905, 1, 0
    %v4418 = vsel %vm3906, 1, 0
    %v4419 = vsel %vm3907, 1, 0
    %v4420 = vsel %vm3908, 1, 0
    %v4421 = vsel %vm3909, 1, 0
    %v4422 = vsel %vm3910, 1, 0
    %v4423 = vsel %vm3911, 1, 0
    %v4424 = vsel %vm3912, 1, 0
    %v4425 = vsel %vm3913, 1, 0
    %v4426 = vsel %vm3914, 1, 0
    %v4427 = vsel %vm3915, 1, 0
    %v4428 = vsel %vm3916, 1, 0
    %v4429 = vsel %vm3917, 1, 0
    %v4430 = vsel %vm3918, 1, 0
    %v4431 = vsel %vm3919, 1, 0
    %v4432 = vsel %vm3920, 1, 0
    %v4433 = vsel %vm3921, 1, 0
    %v4434 = vsel %vm3922, 1, 0
    %v4435 = vsel %vm3923, 1, 0
    %v4436 = vsel %vm3924, 1, 0
    %v4437 = vsel %vm3925, 1, 0
    %v4438 = vsel %vm3926, 1, 0
    %v4439 = vsel %vm3927, 1, 0
    %v4440 = vsel %vm3928, 1, 0
    %v4441 = vsel %vm3929, 1, 0
    %v4442 = vsel %vm3930, 1, 0
    %v4443 = vsel %vm3931, 1, 0
    %v4444 = vsel %vm3932, 1, 0
    %v4445 = vsel %vm3933, 1, 0
    %v4446 = vsel %vm3934, 1, 0
    %v4447 = vsel %vm3935, 1, 0
    %v4448 = vsel %vm3936, 1, 0
    %v4449 = vsel %vm3937, 1, 0
    %v4450 = vsel %vm3938, 1, 0
    %v4451 = vsel %vm3939, 1, 0
    %v4452 = vsel %vm3940, 1, 0
    %v4453 = vsel %vm3941, 1, 0
    %v4454 = vsel %vm3942, 1, 0
    %v4455 = vsel %vm3943, 1, 0
    %v4456 = vsel %vm3944, 1, 0
    %v4457 = vsel %vm3945, 1, 0
    %v4458 = vsel %vm3946, 1, 0
    %v4459 = vsel %vm3947, 1, 0
    %v4460 = vsel %vm3948, 1, 0
    %v4461 = vsel %vm3949, 1, 0
    %v4462 = vsel %vm3950, 1, 0
    %v4463 = vsel %vm3951, 1, 0
    %v4464 = vsel %vm3952, 1, 0
    %v4465 = vsel %vm3953, 1, 0
    %v4466 = vsel %vm3954, 1, 0
    %v4467 = vsel %vm3955, 1, 0
    %v4468 = vsel %vm3956, 1, 0
    %v4469 = vsel %vm3957, 1, 0
    %v4470 = vsel %vm3958, 1, 0
    %v4471 = vsel %vm3959, 1, 0
    %v4472 = vsel %vm3960, 1, 0
    %v4473 = vsel %vm3961, 1, 0
    %v4474 = vsel %vm3962, 1, 0
    %v4475 = vsel %vm3963, 1, 0
    %v4476 = vsel %vm3964, 1, 0
    %v4477 = vsel %vm3965, 1, 0
    %v4478 = vsel %vm3966, 1, 0
    %v4479 = vsel %vm3967, 1, 0
    %v4480 = vsel %vm3968, 1, 0
    %v4481 = vsel %vm3969, 1, 0
    %v4482 = vsel %vm3970, 1, 0
    %v4483 = vsel %vm3971, 1, 0
    %v4484 = vsel %vm3972, 1, 0
    %v4485 = vsel %vm3973, 1, 0
    %v4486 = vsel %vm3974, 1, 0
    %v4487 = vsel %vm3975, 1, 0
    %v4488 = vsel %vm3976, 1, 0
    %v4489 = vsel %vm3977, 1, 0
    %v4490 = vsel %vm3978, 1, 0
    %v4491 = vsel %vm3979, 1, 0
    %v4492 = vsel %vm3980, 1, 0
    %v4493 = vsel %vm3981, 1, 0
    %v4494 = vsel %vm3982, 1, 0
    %v4495 = vsel %vm3983, 1, 0
    %v4496 = vsel %vm3984, 1, 0
    %v4497 = vsel %vm3985, 1, 0
    %v4498 = vsel %vm3986, 1, 0
    %v4499 = vsel %vm3987, 1, 0
    %v4500 = vsel %vm3988, 1, 0
    %v4501 = vsel %vm3989, 1, 0
    %v4502 = vsel %vm3990, 1, 0
    %v4503 = vsel %vm3991, 1, 0
    %v4504 = vsel %vm3992, 1, 0
    %v4505 = vsel %vm3993, 1, 0
    %v4506 = vsel %vm3994, 1, 0
    %v4507 = vsel %vm3995, 1, 0
    %v4508 = vsel %vm3996, 1, 0
    %v4509 = vsel %vm3997, 1, 0
    %v4510 = vsel %vm3998, 1, 0
    %v4511 = vsel %vm3999, 1, 0
    %v4512 = vsel %vm4000, 1, 0
    %v4513 = vsel %vm4001, 1, 0
    %v4514 = vsel %vm4002, 1, 0
    %v4515 = vsel %vm4003, 1, 0
    %v4516 = vsel %vm4004, 1, 0
    %v4517 = vsel %vm4005, 1, 0
    %v4518 = vsel %vm4006, 1, 0
    %v4519 = vsel %vm4007, 1, 0
    %v4520 = vsel %vm4008, 1, 0
    %v4521 = vsel %vm4009, 1, 0
    %v4522 = vsel %vm4010, 1, 0
    %v4523 = vsel %vm4011, 1, 0
    %v4524 = vsel %vm4012, 1, 0
    %v4525 = vsel %vm4013, 1, 0
    %v4526 = vsel %vm4014, 1, 0
    %v4527 = vsel %vm4015, 1, 0
    %v4528 = vsel %vm4016, 1, 0
    %v4529 = vsel %vm4017, 1, 0
    %v4530 = vsel %vm4018, 1, 0
    %v4531 = vsel %vm4019, 1, 0
    %v4532 = vsel %vm4020, 1, 0
    %v4533 = vsel %vm4021, 1, 0
    %v4534 = vsel %vm4022, 1, 0
    %v4535 = vsel %vm4023, 1, 0
    %v4536 = vsel %vm4024, 1, 0
    %v4537 = vsel %vm4025, 1, 0
    %v4538 = vsel %vm4026, 1, 0
    %v4539 = vsel %vm4027, 1, 0
    %v4540 = vsel %vm4028, 1, 0
    %v4541 = vsel %vm4029, 1, 0
    %v4542 = vsel %vm4030, 1, 0
    %v4543 = vsel %vm4031, 1, 0
    %v4544 = vsel %vm4032, 1, 0
    %v4545 = vsel %vm4033, 1, 0
    %v4546 = vsel %vm4034, 1, 0
    %v4547 = vsel %vm4035, 1, 0
    %v4548 = vsel %vm4036, 1, 0
    %v4549 = vsel %vm4037, 1, 0
    %v4550 = vsel %vm4038, 1, 0
    %v4551 = vsel %vm4039, 1, 0
    %v4552 = vsel %vm4040, 1, 0
    %v4553 = vsel %vm4041, 1, 0
    %v4554 = vsel %vm4042, 1, 0
    %v4555 = vsel %vm4043, 1, 0
    %v4556 = vsel %vm4044, 1, 0
    %v4557 = vsel %vm4045, 1, 0
    %v4558 = vsel %vm4046, 1, 0
    %v4559 = vsel %vm4047, 1, 0
    %v4560 = vsel %vm4048, 1, 0
    %v4561 = vsel %vm4049, 1, 0
    %v4562 = vsel %vm4050, 1, 0
    %v4563 = vsel %vm4051, 1, 0
    %v4564 = vsel %vm4052, 1, 0
    %v4565 = vsel %vm4053, 1, 0
    %v4566 = vsel %vm4054, 1, 0
    %v4567 = vsel %vm4055, 1, 0
    %v4568 = vsel %vm4056, 1, 0
    %v4569 = vsel %vm4057, 1, 0
    %v4570 = vsel %vm4058, 1, 0
    %v4571 = vsel %vm4059, 1, 0
    %v4572 = vsel %vm4060, 1, 0
    %v4573 = vsel %vm4061, 1, 0
    %v4574 = vsel %vm4062, 1, 0
    %v4575 = vsel %vm4063, 1, 0
    %v4576 = vsel %vm4064, 1, 0
    %v4577 = vsel %vm4065, 1, 0
    %v4578 = vsel %vm4066, 1, 0
    %v4579 = vsel %vm4067, 1, 0
    %v4580 = vsel %vm4068, 1, 0
    %v4581 = vsel %vm4069, 1, 0
    %v4582 = vsel %vm4070, 1, 0
    %v4583 = vsel %vm4071, 1, 0
    %v4584 = vsel %vm4072, 1, 0
    %v4585 = vsel %vm4073, 1, 0
    %v4586 = vsel %vm4074, 1, 0
    %v4587 = vsel %vm4075, 1, 0
    %v4588 = vsel %vm4076, 1, 0
    %v4589 = vsel %vm4077, 1, 0
    %v4590 = vsel %vm4078, 1, 0
    %v4591 = vsel %vm4079, 1, 0
    %v4592 = vsel %vm4080, 1, 0
    %v4593 = vsel %vm4081, 1, 0
    %v4594 = vsel %vm4082, 1, 0
    %v4595 = vsel %vm4083, 1, 0
    %v4596 = vsel %vm4084, 1, 0
    %v4597 = vsel %vm4085, 1, 0
    %v4598 = vsel %vm4086, 1, 0
    %v4599 = vsel %vm4087, 1, 0
    %v4600 = vsel %vm4088, 1, 0
    %v4601 = vsel %vm4089, 1, 0
    %v4602 = vsel %vm4090, 1, 0
    %v4603 = vsel %vm4091, 1, 0
    %v4604 = vsel %vm4092, 1, 0
    %v4605 = vsel %vm4093, 1, 0
    %v4606 = vsel %vm4094, 1, 0
    %v4607 = vsel %vm4095, 1, 0
    %v4608 = vsel %vm4096, 1, 0
    %v4609 = vsel %vm4097, 1, 0
    %v4610 = vsel %vm4098, 1, 0
    %v4611 = vsel %vm4099, 1, 0
    %v4612 = vsel %vm4100, 1, 0
    %v4613 = vsel %vm4101, 1, 0
    %v4614 = vsel %vm4102, 1, 0
    %v4615 = vsel %vm4103, 1, 0
    %v4616 = vsel %vm4104, 1, 0
    %v4617 = vsel %vm4105, 1, 0
    %v4618 = vsel %vm4106, 1, 0
    %v4619 = vsel %vm4107, 1, 0
    %v4620 = vsel %vm4108, 1, 0
    %v4621 = vsel %vm4109, 1, 0
    %v4622 = vsel %vm4110, 1, 0
    %v4623 = vsel %vm4111, 1, 0
    %v4624 = vsel %vm4112, 1, 0
    %v4625 = vsel %vm4113, 1, 0
    %v4626 = vsel %vm4114, 1, 0
    %v4627 = vsel %vm4115, 1, 0
    %v4628 = vsel %vm4116, 1, 0
    %v4629 = vsel %vm4117, 1, 0
    %v4630 = vsel %vm4118, 1, 0
    %v4631 = vsel %vm4119, 1, 0
    %v4632 = vsel %vm4120, 1, 0
    %v4633 = vsel %vm4121, 1, 0
    %v4634 = vsel %vm4122, 1, 0
    %v4635 = vsel %vm4123, 1, 0
    %v4636 = vsel %vm4124, 1, 0
    %v4637 = vsel %vm4125, 1, 0
    %v4638 = vsel %vm4126, 1, 0
    %v4639 = vsel %vm4127, 1, 0
    %v4640 = vsel %vm4128, 1, 0
    %v4641 = vsel %vm4129, 1, 0
    %v4642 = vsel %vm4130, 1, 0
    %v4643 = vsel %vm4131, 1, 0
    %v4644 = vsel %vm4132, 1, 0
    %v4645 = vsel %vm4133, 1, 0
    %v4646 = vsel %vm4134, 1, 0
    %v4647 = vsel %vm4135, 1, 0
    %v4648 = vsel %vm4136, 1, 0
    %v4649 = vsel %vm4137, 1, 0
    %v4650 = vsel %vm4138, 1, 0
    %v4651 = vsel %vm4139, 1, 0
    %v4652 = vsel %vm4140, 1, 0
    %v4653 = vsel %vm4141, 1, 0
    %v4654 = vsel %vm4142, 1, 0
    %v4655 = vsel %vm4143, 1, 0
    %v4656 = vsel %vm4144, 1, 0
    %v4657 = vsel %vm4145, 1, 0
    %v4658 = vsel %vm4146, 1, 0
    %v4659 = vsel %vm4147, 1, 0
    %v4660 = vsel %vm4148, 1, 0
    %v4661 = vsel %vm4149, 1, 0
    %v4662 = vsel %vm4150, 1, 0
    %v4663 = vsel %vm4151, 1, 0
    %v4664 = vsel %vm4152, 1, 0
    %v4665 = vsel %vm4153, 1, 0
    %v4666 = vsel %vm4154, 1, 0
    %v4667 = vsel %vm4155, 1, 0
    %v4668 = vsel %vm4156, 1, 0
    %v4669 = vsel %vm4157, 1, 0
    %v4670 = vsel %vm4158, 1, 0
    %v4671 = vsel %vm4159, 1, 0
    %v4672 = vsel %vm4160, 1, 0
    %v4673 = vsel %vm4161, 1, 0
    %v4674 = vsel %vm4162, 1, 0
    %v4675 = vsel %vm4163, 1, 0
    %v4676 = vsel %vm4164, 1, 0
    %v4677 = vsel %vm4165, 1, 0
    %v4678 = vsel %vm4166, 1, 0
    %v4679 = vsel %vm4167, 1, 0
    %v4680 = vsel %vm4168, 1, 0
    %v4681 = vsel %vm4169, 1, 0
    %v4682 = vsel %vm4170, 1, 0
    %v4683 = vsel %vm4171, 1, 0
    %v4684 = vsel %vm4172, 1, 0
    %v4685 = vsel %vm4173, 1, 0
    %v4686 = vsel %vm4174, 1, 0
    %v4687 = vsel %vm4175, 1, 0
    %v4688 = vsel %vm4176, 1, 0
    %v4689 = vsel %vm4177, 1, 0
    %v4690 = vsel %vm4178, 1, 0
    %v4691 = vsel %vm4179, 1, 0
    %v4692 = vsel %vm4180, 1, 0
    %v4693 = vsel %vm4181, 1, 0
    %v4694 = vsel %vm4182, 1, 0
    %v4695 = vsel %vm4183, 1, 0
    %v4696 = vsel %vm4184, 1, 0
    %v4697 = vsel %vm4185, 1, 0
    %v4698 = vsel %vm4186, 1, 0
    %v4699 = vsel %vm4187, 1, 0
    %v4700 = vsel %vm4188, 1, 0
    %v4701 = vsel %vm4189, 1, 0
    %v4702 = vsel %vm4190, 1, 0
    %v4703 = vsel %vm4191, 1, 0
    %v4704 = vsel %vm4192, 1, 0
    %v4705 = vsel %vm4193, 1, 0
    %v4706 = vsel %vm4194, 1, 0
    %v4707 = vsel %vm4195, 1, 0
    %v4708 = vsel %vm4196, 1, 0
    %v4709 = vsel %vm4197, 1, 0
    %v4710 = vsel %vm4198, 1, 0
    %v4711 = vsel %vm4199, 1, 0
    %v4712 = vsel %vm4200, 1, 0
    %v4713 = vsel %vm4201, 1, 0
    %v4714 = vsel %vm4202, 1, 0
    %v4715 = vsel %vm4203, 1, 0
    %v4716 = vsel %vm4204, 1, 0
    %v4717 = vsel %vm4205, 1, 0
    %v4718 = vsel %vm4206, 1, 0
    %v4719 = vsel %vm4207, 1, 0
    %v4720 = vsel %vm4208, 1, 0
    %v4721 = vsel %vm4209, 1, 0
    %v4722 = vsel %vm4210, 1, 0
    %v4723 = vsel %vm4211, 1, 0
    %v4724 = vsel %vm4212, 1, 0
    %v4725 = vsel %vm4213, 1, 0
    %v4726 = vsel %vm4214, 1, 0
    %v4727 = vsel %vm4215, 1, 0
    %v4728 = vsel %vm4216, 1, 0
    %v4729 = vsel %vm4217, 1, 0
    %v4730 = vsel %vm4218, 1, 0
    %v4731 = vsel %vm4219, 1, 0
    %v4732 = vsel %vm4220, 1, 0
    %v4733 = vsel %vm4221, 1, 0
    %v4734 = vsel %vm4222, 1, 0
    %v4735 = vsel %vm4223, 1, 0
    %v4736 = vsel %vm4224, 1, 0
    %v4737 = vsel %vm4225, 1, 0
    %v4738 = vsel %vm4226, 1, 0
    %v4739 = vsel %vm4227, 1, 0
    %v4740 = vsel %vm4228, 1, 0
    %v4741 = vsel %vm4229, 1, 0
    %v4742 = vsel %vm4230, 1, 0
    %v4743 = vsel %vm4231, 1, 0
    %v4744 = vsel %vm4232, 1, 0
    %v4745 = vsel %vm4233, 1, 0
    %v4746 = vsel %vm4234, 1, 0
    %v4747 = vsel %vm4235, 1, 0
    %v4748 = vsel %vm4236, 1, 0
    %v4749 = vsel %vm4237, 1, 0
    %v4750 = vsel %vm4238, 1, 0
    %v4751 = vsel %vm4239, 1, 0
    %v4752 = vsel %vm4240, 1, 0
    %v4753 = vsel %vm4241, 1, 0
    %v4754 = vsel %vm4242, 1, 0
    %v4755 = vsel %vm4243, 1, 0
    %v4756 = vsel %vm4244, 1, 0
    %v4757 = vsel %vm4245, 1, 0
    %v4758 = vsel %vm4246, 1, 0
    %v4759 = vsel %vm4247, 1, 0
    %v4760 = vsel %vm4248, 1, 0
    %v4761 = vsel %vm4249, 1, 0
    %v4762 = vsel %vm4250, 1, 0
    %v4763 = vsel %vm4251, 1, 0
    %v4764 = vsel %vm4252, 1, 0
    %v4765 = vsel %vm4253, 1, 0
    %v4766 = vsel %vm4254, 1, 0
    %v4767 = vsel %vm4255, 1, 0
    %v4768 = vsel %vm4256, 1, 0
    %v4769 = vsel %vm4257, 1, 0
    %v4770 = vsel %vm4258, 1, 0
    %v4771 = vsel %vm4259, 1, 0
    %v4772 = vsel %vm4260, 1, 0
    %v4773 = vsel %vm4261, 1, 0
    %v4774 = vsel %vm4262, 1, 0
    %v4775 = vsel %vm4263, 1, 0
    %v4776 = vsel %vm4264, 1, 0
    %v4777 = vsel %vm4265, 1, 0
    %v4778 = vsel %vm4266, 1, 0
    %v4779 = vsel %vm4267, 1, 0
    %v4780 = vsel %vm4268, 1, 0
    %v4781 = vsel %vm4269, 1, 0
    %v4782 = vsel %vm4270, 1, 0
    %v4783 = vsel %vm4271, 1, 0
    %v4784 = vsel %vm4272, 1, 0
    %v4785 = vsel %vm4273, 1, 0
    %v4786 = vsel %vm4274, 1, 0
    %v4787 = vsel %vm4275, 1, 0
    %v4788 = vsel %vm4276, 1, 0
    %v4789 = vsel %vm4277, 1, 0
    %v4790 = vsel %vm4278, 1, 0
    %v4791 = vsel %vm4279, 1, 0
    %v4792 = vsel %vm4280, 1, 0
    %v4793 = vsel %vm4281, 1, 0
    %v4794 = vsel %vm4282, 1, 0
    %v4795 = vsel %vm4283, 1, 0
    %v4796 = vsel %vm4284, 1, 0
    %v4797 = vsel %vm4285, 1, 0
    %v4798 = vsel %vm4286, 1, 0
    %v4799 = vsel %vm4287, 1, 0
    %v4800 = vsel %vm4288, 1, 0
    %v4801 = vsel %vm4289, 1, 0
    %v4802 = vsel %vm4290, 1, 0
    %v4803 = vsel %vm4291, 1, 0
    %v4804 = vsel %vm4292, 1, 0
    %v4805 = vsel %vm4293, 1, 0
    %v4806 = vlaneseq
    %v4807 = vand.u32 %v4806, 127
    %v4808 = vperm.slane %v4294, %v4807
    %v4809 = vadd.s32 %v4807, 4294967288
    %v4810 = vperm.slane %v4295, %v4809
    %vm4811 = vcmask 130112
    %v4812 = vsel %vm4811, %v4810, %v4808
    %v4813 = vadd.s32 %v4807, 4294967280
    %v4814 = vperm.slane %v4296, %v4813
    %vm4815 = vcmask 195712
    %v4816 = vsel %vm4815, %v4814, %v4812
    %v4817 = vadd.s32 %v4807, 4294967272
    %v4818 = vperm.slane %v4297, %v4817
    %vm4819 = vcmask 261312
    %v4820 = vsel %vm4819, %v4818, %v4816
    %v4821 = vadd.s32 %v4807, 4294967264
    %v4822 = vperm.slane %v4298, %v4821
    %vm4823 = vcmask 326912
    %v4824 = vsel %vm4823, %v4822, %v4820
    %v4825 = vadd.s32 %v4807, 4294967256
    %v4826 = vperm.slane %v4299, %v4825
    %vm4827 = vcmask 392512
    %v4828 = vsel %vm4827, %v4826, %v4824
    %v4829 = vadd.s32 %v4807, 4294967248
    %v4830 = vperm.slane %v4300, %v4829
    %vm4831 = vcmask 458112
    %v4832 = vsel %vm4831, %v4830, %v4828
    %v4833 = vadd.s32 %v4807, 4294967240
    %v4834 = vperm.slane %v4301, %v4833
    %vm4835 = vcmask 523712
    %v4836 = vsel %vm4835, %v4834, %v4832
    %v4837 = vperm.slane %v4302, %v4807
    %v4838 = vperm.slane %v4303, %v4809
    %v4839 = vsel %vm4811, %v4838, %v4837
    %v4840 = vperm.slane %v4304, %v4813
    %v4841 = vsel %vm4815, %v4840, %v4839
    %v4842 = vperm.slane %v4305, %v4817
    %v4843 = vsel %vm4819, %v4842, %v4841
    %v4844 = vperm.slane %v4306, %v4821
    %v4845 = vsel %vm4823, %v4844, %v4843
    %v4846 = vperm.slane %v4307, %v4825
    %v4847 = vsel %vm4827, %v4846, %v4845
    %v4848 = vperm.slane %v4308, %v4829
    %v4849 = vsel %vm4831, %v4848, %v4847
    %v4850 = vperm.slane %v4309, %v4833
    %v4851 = vsel %vm4835, %v4850, %v4849
    %v4852 = vperm.slane %v4310, %v4807
    %v4853 = vperm.slane %v4311, %v4809
    %v4854 = vsel %vm4811, %v4853, %v4852
    %v4855 = vperm.slane %v4312, %v4813
    %v4856 = vsel %vm4815, %v4855, %v4854
    %v4857 = vperm.slane %v4313, %v4817
    %v4858 = vsel %vm4819, %v4857, %v4856
    %v4859 = vperm.slane %v4314, %v4821
    %v4860 = vsel %vm4823, %v4859, %v4858
    %v4861 = vperm.slane %v4315, %v4825
    %v4862 = vsel %vm4827, %v4861, %v4860
    %v4863 = vperm.slane %v4316, %v4829
    %v4864 = vsel %vm4831, %v4863, %v4862
    %v4865 = vperm.slane %v4317, %v4833
    %v4866 = vsel %vm4835, %v4865, %v4864
    %v4867 = vperm.slane %v4318, %v4807
    %v4868 = vperm.slane %v4319, %v4809
    %v4869 = vsel %vm4811, %v4868, %v4867
    %v4870 = vperm.slane %v4320, %v4813
    %v4871 = vsel %vm4815, %v4870, %v4869
    %v4872 = vperm.slane %v4321, %v4817
    %v4873 = vsel %vm4819, %v4872, %v4871
    %v4874 = vperm.slane %v4322, %v4821
    %v4875 = vsel %vm4823, %v4874, %v4873
    %v4876 = vperm.slane %v4323, %v4825
    %v4877 = vsel %vm4827, %v4876, %v4875
    %v4878 = vperm.slane %v4324, %v4829
    %v4879 = vsel %vm4831, %v4878, %v4877
    %v4880 = vperm.slane %v4325, %v4833
    %v4881 = vsel %vm4835, %v4880, %v4879
    %v4882 = vperm.slane %v4326, %v4807
    %v4883 = vperm.slane %v4327, %v4809
    %v4884 = vsel %vm4811, %v4883, %v4882
    %v4885 = vperm.slane %v4328, %v4813
    %v4886 = vsel %vm4815, %v4885, %v4884
    %v4887 = vperm.slane %v4329, %v4817
    %v4888 = vsel %vm4819, %v4887, %v4886
    %v4889 = vperm.slane %v4330, %v4821
    %v4890 = vsel %vm4823, %v4889, %v4888
    %v4891 = vperm.slane %v4331, %v4825
    %v4892 = vsel %vm4827, %v4891, %v4890
    %v4893 = vperm.slane %v4332, %v4829
    %v4894 = vsel %vm4831, %v4893, %v4892
    %v4895 = vperm.slane %v4333, %v4833
    %v4896 = vsel %vm4835, %v4895, %v4894
    %v4897 = vperm.slane %v4334, %v4807
    %v4898 = vperm.slane %v4335, %v4809
    %v4899 = vsel %vm4811, %v4898, %v4897
    %v4900 = vperm.slane %v4336, %v4813
    %v4901 = vsel %vm4815, %v4900, %v4899
    %v4902 = vperm.slane %v4337, %v4817
    %v4903 = vsel %vm4819, %v4902, %v4901
    %v4904 = vperm.slane %v4338, %v4821
    %v4905 = vsel %vm4823, %v4904, %v4903
    %v4906 = vperm.slane %v4339, %v4825
    %v4907 = vsel %vm4827, %v4906, %v4905
    %v4908 = vperm.slane %v4340, %v4829
    %v4909 = vsel %vm4831, %v4908, %v4907
    %v4910 = vperm.slane %v4341, %v4833
    %v4911 = vsel %vm4835, %v4910, %v4909
    %v4912 = vperm.slane %v4342, %v4807
    %v4913 = vperm.slane %v4343, %v4809
    %v4914 = vsel %vm4811, %v4913, %v4912
    %v4915 = vperm.slane %v4344, %v4813
    %v4916 = vsel %vm4815, %v4915, %v4914
    %v4917 = vperm.slane %v4345, %v4817
    %v4918 = vsel %vm4819, %v4917, %v4916
    %v4919 = vperm.slane %v4346, %v4821
    %v4920 = vsel %vm4823, %v4919, %v4918
    %v4921 = vperm.slane %v4347, %v4825
    %v4922 = vsel %vm4827, %v4921, %v4920
    %v4923 = vperm.slane %v4348, %v4829
    %v4924 = vsel %vm4831, %v4923, %v4922
    %v4925 = vperm.slane %v4349, %v4833
    %v4926 = vsel %vm4835, %v4925, %v4924
    %v4927 = vperm.slane %v4350, %v4807
    %v4928 = vperm.slane %v4351, %v4809
    %v4929 = vsel %vm4811, %v4928, %v4927
    %v4930 = vperm.slane %v4352, %v4813
    %v4931 = vsel %vm4815, %v4930, %v4929
    %v4932 = vperm.slane %v4353, %v4817
    %v4933 = vsel %vm4819, %v4932, %v4931
    %v4934 = vperm.slane %v4354, %v4821
    %v4935 = vsel %vm4823, %v4934, %v4933
    %v4936 = vperm.slane %v4355, %v4825
    %v4937 = vsel %vm4827, %v4936, %v4935
    %v4938 = vperm.slane %v4356, %v4829
    %v4939 = vsel %vm4831, %v4938, %v4937
    %v4940 = vperm.slane %v4357, %v4833
    %v4941 = vsel %vm4835, %v4940, %v4939
    %v4942 = vperm.slane %v4358, %v4807
    %v4943 = vperm.slane %v4359, %v4809
    %v4944 = vsel %vm4811, %v4943, %v4942
    %v4945 = vperm.slane %v4360, %v4813
    %v4946 = vsel %vm4815, %v4945, %v4944
    %v4947 = vperm.slane %v4361, %v4817
    %v4948 = vsel %vm4819, %v4947, %v4946
    %v4949 = vperm.slane %v4362, %v4821
    %v4950 = vsel %vm4823, %v4949, %v4948
    %v4951 = vperm.slane %v4363, %v4825
    %v4952 = vsel %vm4827, %v4951, %v4950
    %v4953 = vperm.slane %v4364, %v4829
    %v4954 = vsel %vm4831, %v4953, %v4952
    %v4955 = vperm.slane %v4365, %v4833
    %v4956 = vsel %vm4835, %v4955, %v4954
    %v4957 = vperm.slane %v4366, %v4807
    %v4958 = vperm.slane %v4367, %v4809
    %v4959 = vsel %vm4811, %v4958, %v4957
    %v4960 = vperm.slane %v4368, %v4813
    %v4961 = vsel %vm4815, %v4960, %v4959
    %v4962 = vperm.slane %v4369, %v4817
    %v4963 = vsel %vm4819, %v4962, %v4961
    %v4964 = vperm.slane %v4370, %v4821
    %v4965 = vsel %vm4823, %v4964, %v4963
    %v4966 = vperm.slane %v4371, %v4825
    %v4967 = vsel %vm4827, %v4966, %v4965
    %v4968 = vperm.slane %v4372, %v4829
    %v4969 = vsel %vm4831, %v4968, %v4967
    %v4970 = vperm.slane %v4373, %v4833
    %v4971 = vsel %vm4835, %v4970, %v4969
    %v4972 = vperm.slane %v4374, %v4807
    %v4973 = vperm.slane %v4375, %v4809
    %v4974 = vsel %vm4811, %v4973, %v4972
    %v4975 = vperm.slane %v4376, %v4813
    %v4976 = vsel %vm4815, %v4975, %v4974
    %v4977 = vperm.slane %v4377, %v4817
    %v4978 = vsel %vm4819, %v4977, %v4976
    %v4979 = vperm.slane %v4378, %v4821
    %v4980 = vsel %vm4823, %v4979, %v4978
    %v4981 = vperm.slane %v4379, %v4825
    %v4982 = vsel %vm4827, %v4981, %v4980
    %v4983 = vperm.slane %v4380, %v4829
    %v4984 = vsel %vm4831, %v4983, %v4982
    %v4985 = vperm.slane %v4381, %v4833
    %v4986 = vsel %vm4835, %v4985, %v4984
    %v4987 = vperm.slane %v4382, %v4807
    %v4988 = vperm.slane %v4383, %v4809
    %v4989 = vsel %vm4811, %v4988, %v4987
    %v4990 = vperm.slane %v4384, %v4813
    %v4991 = vsel %vm4815, %v4990, %v4989
    %v4992 = vperm.slane %v4385, %v4817
    %v4993 = vsel %vm4819, %v4992, %v4991
    %v4994 = vperm.slane %v4386, %v4821
    %v4995 = vsel %vm4823, %v4994, %v4993
    %v4996 = vperm.slane %v4387, %v4825
    %v4997 = vsel %vm4827, %v4996, %v4995
    %v4998 = vperm.slane %v4388, %v4829
    %v4999 = vsel %vm4831, %v4998, %v4997
    %v5000 = vperm.slane %v4389, %v4833
    %v5001 = vsel %vm4835, %v5000, %v4999
    %v5002 = vperm.slane %v4390, %v4807
    %v5003 = vperm.slane %v4391, %v4809
    %v5004 = vsel %vm4811, %v5003, %v5002
    %v5005 = vperm.slane %v4392, %v4813
    %v5006 = vsel %vm4815, %v5005, %v5004
    %v5007 = vperm.slane %v4393, %v4817
    %v5008 = vsel %vm4819, %v5007, %v5006
    %v5009 = vperm.slane %v4394, %v4821
    %v5010 = vsel %vm4823, %v5009, %v5008
    %v5011 = vperm.slane %v4395, %v4825
    %v5012 = vsel %vm4827, %v5011, %v5010
    %v5013 = vperm.slane %v4396, %v4829
    %v5014 = vsel %vm4831, %v5013, %v5012
    %v5015 = vperm.slane %v4397, %v4833
    %v5016 = vsel %vm4835, %v5015, %v5014
    %v5017 = vperm.slane %v4398, %v4807
    %v5018 = vperm.slane %v4399, %v4809
    %v5019 = vsel %vm4811, %v5018, %v5017
    %v5020 = vperm.slane %v4400, %v4813
    %v5021 = vsel %vm4815, %v5020, %v5019
    %v5022 = vperm.slane %v4401, %v4817
    %v5023 = vsel %vm4819, %v5022, %v5021
    %v5024 = vperm.slane %v4402, %v4821
    %v5025 = vsel %vm4823, %v5024, %v5023
    %v5026 = vperm.slane %v4403, %v4825
    %v5027 = vsel %vm4827, %v5026, %v5025
    %v5028 = vperm.slane %v4404, %v4829
    %v5029 = vsel %vm4831, %v5028, %v5027
    %v5030 = vperm.slane %v4405, %v4833
    %v5031 = vsel %vm4835, %v5030, %v5029
    %v5032 = vperm.slane %v4406, %v4807
    %v5033 = vperm.slane %v4407, %v4809
    %v5034 = vsel %vm4811, %v5033, %v5032
    %v5035 = vperm.slane %v4408, %v4813
    %v5036 = vsel %vm4815, %v5035, %v5034
    %v5037 = vperm.slane %v4409, %v4817
    %v5038 = vsel %vm4819, %v5037, %v5036
    %v5039 = vperm.slane %v4410, %v4821
    %v5040 = vsel %vm4823, %v5039, %v5038
    %v5041 = vperm.slane %v4411, %v4825
    %v5042 = vsel %vm4827, %v5041, %v5040
    %v5043 = vperm.slane %v4412, %v4829
    %v5044 = vsel %vm4831, %v5043, %v5042
    %v5045 = vperm.slane %v4413, %v4833
    %v5046 = vsel %vm4835, %v5045, %v5044
    %v5047 = vperm.slane %v4414, %v4807
    %v5048 = vperm.slane %v4415, %v4809
    %v5049 = vsel %vm4811, %v5048, %v5047
    %v5050 = vperm.slane %v4416, %v4813
    %v5051 = vsel %vm4815, %v5050, %v5049
    %v5052 = vperm.slane %v4417, %v4817
    %v5053 = vsel %vm4819, %v5052, %v5051
    %v5054 = vperm.slane %v4418, %v4821
    %v5055 = vsel %vm4823, %v5054, %v5053
    %v5056 = vperm.slane %v4419, %v4825
    %v5057 = vsel %vm4827, %v5056, %v5055
    %v5058 = vperm.slane %v4420, %v4829
    %v5059 = vsel %vm4831, %v5058, %v5057
    %v5060 = vperm.slane %v4421, %v4833
    %v5061 = vsel %vm4835, %v5060, %v5059
    %v5062 = vperm.slane %v4422, %v4807
    %v5063 = vperm.slane %v4423, %v4809
    %v5064 = vsel %vm4811, %v5063, %v5062
    %v5065 = vperm.slane %v4424, %v4813
    %v5066 = vsel %vm4815, %v5065, %v5064
    %v5067 = vperm.slane %v4425, %v4817
    %v5068 = vsel %vm4819, %v5067, %v5066
    %v5069 = vperm.slane %v4426, %v4821
    %v5070 = vsel %vm4823, %v5069, %v5068
    %v5071 = vperm.slane %v4427, %v4825
    %v5072 = vsel %vm4827, %v5071, %v5070
    %v5073 = vperm.slane %v4428, %v4829
    %v5074 = vsel %vm4831, %v5073, %v5072
    %v5075 = vperm.slane %v4429, %v4833
    %v5076 = vsel %vm4835, %v5075, %v5074
    %v5077 = vperm.slane %v4430, %v4807
    %v5078 = vperm.slane %v4431, %v4809
    %v5079 = vsel %vm4811, %v5078, %v5077
    %v5080 = vperm.slane %v4432, %v4813
    %v5081 = vsel %vm4815, %v5080, %v5079
    %v5082 = vperm.slane %v4433, %v4817
    %v5083 = vsel %vm4819, %v5082, %v5081
    %v5084 = vperm.slane %v4434, %v4821
    %v5085 = vsel %vm4823, %v5084, %v5083
    %v5086 = vperm.slane %v4435, %v4825
    %v5087 = vsel %vm4827, %v5086, %v5085
    %v5088 = vperm.slane %v4436, %v4829
    %v5089 = vsel %vm4831, %v5088, %v5087
    %v5090 = vperm.slane %v4437, %v4833
    %v5091 = vsel %vm4835, %v5090, %v5089
    %v5092 = vperm.slane %v4438, %v4807
    %v5093 = vperm.slane %v4439, %v4809
    %v5094 = vsel %vm4811, %v5093, %v5092
    %v5095 = vperm.slane %v4440, %v4813
    %v5096 = vsel %vm4815, %v5095, %v5094
    %v5097 = vperm.slane %v4441, %v4817
    %v5098 = vsel %vm4819, %v5097, %v5096
    %v5099 = vperm.slane %v4442, %v4821
    %v5100 = vsel %vm4823, %v5099, %v5098
    %v5101 = vperm.slane %v4443, %v4825
    %v5102 = vsel %vm4827, %v5101, %v5100
    %v5103 = vperm.slane %v4444, %v4829
    %v5104 = vsel %vm4831, %v5103, %v5102
    %v5105 = vperm.slane %v4445, %v4833
    %v5106 = vsel %vm4835, %v5105, %v5104
    %v5107 = vperm.slane %v4446, %v4807
    %v5108 = vperm.slane %v4447, %v4809
    %v5109 = vsel %vm4811, %v5108, %v5107
    %v5110 = vperm.slane %v4448, %v4813
    %v5111 = vsel %vm4815, %v5110, %v5109
    %v5112 = vperm.slane %v4449, %v4817
    %v5113 = vsel %vm4819, %v5112, %v5111
    %v5114 = vperm.slane %v4450, %v4821
    %v5115 = vsel %vm4823, %v5114, %v5113
    %v5116 = vperm.slane %v4451, %v4825
    %v5117 = vsel %vm4827, %v5116, %v5115
    %v5118 = vperm.slane %v4452, %v4829
    %v5119 = vsel %vm4831, %v5118, %v5117
    %v5120 = vperm.slane %v4453, %v4833
    %v5121 = vsel %vm4835, %v5120, %v5119
    %v5122 = vperm.slane %v4454, %v4807
    %v5123 = vperm.slane %v4455, %v4809
    %v5124 = vsel %vm4811, %v5123, %v5122
    %v5125 = vperm.slane %v4456, %v4813
    %v5126 = vsel %vm4815, %v5125, %v5124
    %v5127 = vperm.slane %v4457, %v4817
    %v5128 = vsel %vm4819, %v5127, %v5126
    %v5129 = vperm.slane %v4458, %v4821
    %v5130 = vsel %vm4823, %v5129, %v5128
    %v5131 = vperm.slane %v4459, %v4825
    %v5132 = vsel %vm4827, %v5131, %v5130
    %v5133 = vperm.slane %v4460, %v4829
    %v5134 = vsel %vm4831, %v5133, %v5132
    %v5135 = vperm.slane %v4461, %v4833
    %v5136 = vsel %vm4835, %v5135, %v5134
    %v5137 = vperm.slane %v4462, %v4807
    %v5138 = vperm.slane %v4463, %v4809
    %v5139 = vsel %vm4811, %v5138, %v5137
    %v5140 = vperm.slane %v4464, %v4813
    %v5141 = vsel %vm4815, %v5140, %v5139
    %v5142 = vperm.slane %v4465, %v4817
    %v5143 = vsel %vm4819, %v5142, %v5141
    %v5144 = vperm.slane %v4466, %v4821
    %v5145 = vsel %vm4823, %v5144, %v5143
    %v5146 = vperm.slane %v4467, %v4825
    %v5147 = vsel %vm4827, %v5146, %v5145
    %v5148 = vperm.slane %v4468, %v4829
    %v5149 = vsel %vm4831, %v5148, %v5147
    %v5150 = vperm.slane %v4469, %v4833
    %v5151 = vsel %vm4835, %v5150, %v5149
    %v5152 = vperm.slane %v4470, %v4807
    %v5153 = vperm.slane %v4471, %v4809
    %v5154 = vsel %vm4811, %v5153, %v5152
    %v5155 = vperm.slane %v4472, %v4813
    %v5156 = vsel %vm4815, %v5155, %v5154
    %v5157 = vperm.slane %v4473, %v4817
    %v5158 = vsel %vm4819, %v5157, %v5156
    %v5159 = vperm.slane %v4474, %v4821
    %v5160 = vsel %vm4823, %v5159, %v5158
    %v5161 = vperm.slane %v4475, %v4825
    %v5162 = vsel %vm4827, %v5161, %v5160
    %v5163 = vperm.slane %v4476, %v4829
    %v5164 = vsel %vm4831, %v5163, %v5162
    %v5165 = vperm.slane %v4477, %v4833
    %v5166 = vsel %vm4835, %v5165, %v5164
    %v5167 = vperm.slane %v4478, %v4807
    %v5168 = vperm.slane %v4479, %v4809
    %v5169 = vsel %vm4811, %v5168, %v5167
    %v5170 = vperm.slane %v4480, %v4813
    %v5171 = vsel %vm4815, %v5170, %v5169
    %v5172 = vperm.slane %v4481, %v4817
    %v5173 = vsel %vm4819, %v5172, %v5171
    %v5174 = vperm.slane %v4482, %v4821
    %v5175 = vsel %vm4823, %v5174, %v5173
    %v5176 = vperm.slane %v4483, %v4825
    %v5177 = vsel %vm4827, %v5176, %v5175
    %v5178 = vperm.slane %v4484, %v4829
    %v5179 = vsel %vm4831, %v5178, %v5177
    %v5180 = vperm.slane %v4485, %v4833
    %v5181 = vsel %vm4835, %v5180, %v5179
    %v5182 = vperm.slane %v4486, %v4807
    %v5183 = vperm.slane %v4487, %v4809
    %v5184 = vsel %vm4811, %v5183, %v5182
    %v5185 = vperm.slane %v4488, %v4813
    %v5186 = vsel %vm4815, %v5185, %v5184
    %v5187 = vperm.slane %v4489, %v4817
    %v5188 = vsel %vm4819, %v5187, %v5186
    %v5189 = vperm.slane %v4490, %v4821
    %v5190 = vsel %vm4823, %v5189, %v5188
    %v5191 = vperm.slane %v4491, %v4825
    %v5192 = vsel %vm4827, %v5191, %v5190
    %v5193 = vperm.slane %v4492, %v4829
    %v5194 = vsel %vm4831, %v5193, %v5192
    %v5195 = vperm.slane %v4493, %v4833
    %v5196 = vsel %vm4835, %v5195, %v5194
    %v5197 = vperm.slane %v4494, %v4807
    %v5198 = vperm.slane %v4495, %v4809
    %v5199 = vsel %vm4811, %v5198, %v5197
    %v5200 = vperm.slane %v4496, %v4813
    %v5201 = vsel %vm4815, %v5200, %v5199
    %v5202 = vperm.slane %v4497, %v4817
    %v5203 = vsel %vm4819, %v5202, %v5201
    %v5204 = vperm.slane %v4498, %v4821
    %v5205 = vsel %vm4823, %v5204, %v5203
    %v5206 = vperm.slane %v4499, %v4825
    %v5207 = vsel %vm4827, %v5206, %v5205
    %v5208 = vperm.slane %v4500, %v4829
    %v5209 = vsel %vm4831, %v5208, %v5207
    %v5210 = vperm.slane %v4501, %v4833
    %v5211 = vsel %vm4835, %v5210, %v5209
    %v5212 = vperm.slane %v4502, %v4807
    %v5213 = vperm.slane %v4503, %v4809
    %v5214 = vsel %vm4811, %v5213, %v5212
    %v5215 = vperm.slane %v4504, %v4813
    %v5216 = vsel %vm4815, %v5215, %v5214
    %v5217 = vperm.slane %v4505, %v4817
    %v5218 = vsel %vm4819, %v5217, %v5216
    %v5219 = vperm.slane %v4506, %v4821
    %v5220 = vsel %vm4823, %v5219, %v5218
    %v5221 = vperm.slane %v4507, %v4825
    %v5222 = vsel %vm4827, %v5221, %v5220
    %v5223 = vperm.slane %v4508, %v4829
    %v5224 = vsel %vm4831, %v5223, %v5222
    %v5225 = vperm.slane %v4509, %v4833
    %v5226 = vsel %vm4835, %v5225, %v5224
    %v5227 = vperm.slane %v4510, %v4807
    %v5228 = vperm.slane %v4511, %v4809
    %v5229 = vsel %vm4811, %v5228, %v5227
    %v5230 = vperm.slane %v4512, %v4813
    %v5231 = vsel %vm4815, %v5230, %v5229
    %v5232 = vperm.slane %v4513, %v4817
    %v5233 = vsel %vm4819, %v5232, %v5231
    %v5234 = vperm.slane %v4514, %v4821
    %v5235 = vsel %vm4823, %v5234, %v5233
    %v5236 = vperm.slane %v4515, %v4825
    %v5237 = vsel %vm4827, %v5236, %v5235
    %v5238 = vperm.slane %v4516, %v4829
    %v5239 = vsel %vm4831, %v5238, %v5237
    %v5240 = vperm.slane %v4517, %v4833
    %v5241 = vsel %vm4835, %v5240, %v5239
    %v5242 = vperm.slane %v4518, %v4807
    %v5243 = vperm.slane %v4519, %v4809
    %v5244 = vsel %vm4811, %v5243, %v5242
    %v5245 = vperm.slane %v4520, %v4813
    %v5246 = vsel %vm4815, %v5245, %v5244
    %v5247 = vperm.slane %v4521, %v4817
    %v5248 = vsel %vm4819, %v5247, %v5246
    %v5249 = vperm.slane %v4522, %v4821
    %v5250 = vsel %vm4823, %v5249, %v5248
    %v5251 = vperm.slane %v4523, %v4825
    %v5252 = vsel %vm4827, %v5251, %v5250
    %v5253 = vperm.slane %v4524, %v4829
    %v5254 = vsel %vm4831, %v5253, %v5252
    %v5255 = vperm.slane %v4525, %v4833
    %v5256 = vsel %vm4835, %v5255, %v5254
    %v5257 = vperm.slane %v4526, %v4807
    %v5258 = vperm.slane %v4527, %v4809
    %v5259 = vsel %vm4811, %v5258, %v5257
    %v5260 = vperm.slane %v4528, %v4813
    %v5261 = vsel %vm4815, %v5260, %v5259
    %v5262 = vperm.slane %v4529, %v4817
    %v5263 = vsel %vm4819, %v5262, %v5261
    %v5264 = vperm.slane %v4530, %v4821
    %v5265 = vsel %vm4823, %v5264, %v5263
    %v5266 = vperm.slane %v4531, %v4825
    %v5267 = vsel %vm4827, %v5266, %v5265
    %v5268 = vperm.slane %v4532, %v4829
    %v5269 = vsel %vm4831, %v5268, %v5267
    %v5270 = vperm.slane %v4533, %v4833
    %v5271 = vsel %vm4835, %v5270, %v5269
    %v5272 = vperm.slane %v4534, %v4807
    %v5273 = vperm.slane %v4535, %v4809
    %v5274 = vsel %vm4811, %v5273, %v5272
    %v5275 = vperm.slane %v4536, %v4813
    %v5276 = vsel %vm4815, %v5275, %v5274
    %v5277 = vperm.slane %v4537, %v4817
    %v5278 = vsel %vm4819, %v5277, %v5276
    %v5279 = vperm.slane %v4538, %v4821
    %v5280 = vsel %vm4823, %v5279, %v5278
    %v5281 = vperm.slane %v4539, %v4825
    %v5282 = vsel %vm4827, %v5281, %v5280
    %v5283 = vperm.slane %v4540, %v4829
    %v5284 = vsel %vm4831, %v5283, %v5282
    %v5285 = vperm.slane %v4541, %v4833
    %v5286 = vsel %vm4835, %v5285, %v5284
    %v5287 = vperm.slane %v4542, %v4807
    %v5288 = vperm.slane %v4543, %v4809
    %v5289 = vsel %vm4811, %v5288, %v5287
    %v5290 = vperm.slane %v4544, %v4813
    %v5291 = vsel %vm4815, %v5290, %v5289
    %v5292 = vperm.slane %v4545, %v4817
    %v5293 = vsel %vm4819, %v5292, %v5291
    %v5294 = vperm.slane %v4546, %v4821
    %v5295 = vsel %vm4823, %v5294, %v5293
    %v5296 = vperm.slane %v4547, %v4825
    %v5297 = vsel %vm4827, %v5296, %v5295
    %v5298 = vperm.slane %v4548, %v4829
    %v5299 = vsel %vm4831, %v5298, %v5297
    %v5300 = vperm.slane %v4549, %v4833
    %v5301 = vsel %vm4835, %v5300, %v5299
    %v5302 = vperm.slane %v4550, %v4807
    %v5303 = vperm.slane %v4551, %v4809
    %v5304 = vsel %vm4811, %v5303, %v5302
    %v5305 = vperm.slane %v4552, %v4813
    %v5306 = vsel %vm4815, %v5305, %v5304
    %v5307 = vperm.slane %v4553, %v4817
    %v5308 = vsel %vm4819, %v5307, %v5306
    %v5309 = vperm.slane %v4554, %v4821
    %v5310 = vsel %vm4823, %v5309, %v5308
    %v5311 = vperm.slane %v4555, %v4825
    %v5312 = vsel %vm4827, %v5311, %v5310
    %v5313 = vperm.slane %v4556, %v4829
    %v5314 = vsel %vm4831, %v5313, %v5312
    %v5315 = vperm.slane %v4557, %v4833
    %v5316 = vsel %vm4835, %v5315, %v5314
    %v5317 = vperm.slane %v4558, %v4807
    %v5318 = vperm.slane %v4559, %v4809
    %v5319 = vsel %vm4811, %v5318, %v5317
    %v5320 = vperm.slane %v4560, %v4813
    %v5321 = vsel %vm4815, %v5320, %v5319
    %v5322 = vperm.slane %v4561, %v4817
    %v5323 = vsel %vm4819, %v5322, %v5321
    %v5324 = vperm.slane %v4562, %v4821
    %v5325 = vsel %vm4823, %v5324, %v5323
    %v5326 = vperm.slane %v4563, %v4825
    %v5327 = vsel %vm4827, %v5326, %v5325
    %v5328 = vperm.slane %v4564, %v4829
    %v5329 = vsel %vm4831, %v5328, %v5327
    %v5330 = vperm.slane %v4565, %v4833
    %v5331 = vsel %vm4835, %v5330, %v5329
    %v5332 = vperm.slane %v4566, %v4807
    %v5333 = vperm.slane %v4567, %v4809
    %v5334 = vsel %vm4811, %v5333, %v5332
    %v5335 = vperm.slane %v4568, %v4813
    %v5336 = vsel %vm4815, %v5335, %v5334
    %v5337 = vperm.slane %v4569, %v4817
    %v5338 = vsel %vm4819, %v5337, %v5336
    %v5339 = vperm.slane %v4570, %v4821
    %v5340 = vsel %vm4823, %v5339, %v5338
    %v5341 = vperm.slane %v4571, %v4825
    %v5342 = vsel %vm4827, %v5341, %v5340
    %v5343 = vperm.slane %v4572, %v4829
    %v5344 = vsel %vm4831, %v5343, %v5342
    %v5345 = vperm.slane %v4573, %v4833
    %v5346 = vsel %vm4835, %v5345, %v5344
    %v5347 = vperm.slane %v4574, %v4807
    %v5348 = vperm.slane %v4575, %v4809
    %v5349 = vsel %vm4811, %v5348, %v5347
    %v5350 = vperm.slane %v4576, %v4813
    %v5351 = vsel %vm4815, %v5350, %v5349
    %v5352 = vperm.slane %v4577, %v4817
    %v5353 = vsel %vm4819, %v5352, %v5351
    %v5354 = vperm.slane %v4578, %v4821
    %v5355 = vsel %vm4823, %v5354, %v5353
    %v5356 = vperm.slane %v4579, %v4825
    %v5357 = vsel %vm4827, %v5356, %v5355
    %v5358 = vperm.slane %v4580, %v4829
    %v5359 = vsel %vm4831, %v5358, %v5357
    %v5360 = vperm.slane %v4581, %v4833
    %v5361 = vsel %vm4835, %v5360, %v5359
    %v5362 = vperm.slane %v4582, %v4807
    %v5363 = vperm.slane %v4583, %v4809
    %v5364 = vsel %vm4811, %v5363, %v5362
    %v5365 = vperm.slane %v4584, %v4813
    %v5366 = vsel %vm4815, %v5365, %v5364
    %v5367 = vperm.slane %v4585, %v4817
    %v5368 = vsel %vm4819, %v5367, %v5366
    %v5369 = vperm.slane %v4586, %v4821
    %v5370 = vsel %vm4823, %v5369, %v5368
    %v5371 = vperm.slane %v4587, %v4825
    %v5372 = vsel %vm4827, %v5371, %v5370
    %v5373 = vperm.slane %v4588, %v4829
    %v5374 = vsel %vm4831, %v5373, %v5372
    %v5375 = vperm.slane %v4589, %v4833
    %v5376 = vsel %vm4835, %v5375, %v5374
    %v5377 = vperm.slane %v4590, %v4807
    %v5378 = vperm.slane %v4591, %v4809
    %v5379 = vsel %vm4811, %v5378, %v5377
    %v5380 = vperm.slane %v4592, %v4813
    %v5381 = vsel %vm4815, %v5380, %v5379
    %v5382 = vperm.slane %v4593, %v4817
    %v5383 = vsel %vm4819, %v5382, %v5381
    %v5384 = vperm.slane %v4594, %v4821
    %v5385 = vsel %vm4823, %v5384, %v5383
    %v5386 = vperm.slane %v4595, %v4825
    %v5387 = vsel %vm4827, %v5386, %v5385
    %v5388 = vperm.slane %v4596, %v4829
    %v5389 = vsel %vm4831, %v5388, %v5387
    %v5390 = vperm.slane %v4597, %v4833
    %v5391 = vsel %vm4835, %v5390, %v5389
    %v5392 = vperm.slane %v4598, %v4807
    %v5393 = vperm.slane %v4599, %v4809
    %v5394 = vsel %vm4811, %v5393, %v5392
    %v5395 = vperm.slane %v4600, %v4813
    %v5396 = vsel %vm4815, %v5395, %v5394
    %v5397 = vperm.slane %v4601, %v4817
    %v5398 = vsel %vm4819, %v5397, %v5396
    %v5399 = vperm.slane %v4602, %v4821
    %v5400 = vsel %vm4823, %v5399, %v5398
    %v5401 = vperm.slane %v4603, %v4825
    %v5402 = vsel %vm4827, %v5401, %v5400
    %v5403 = vperm.slane %v4604, %v4829
    %v5404 = vsel %vm4831, %v5403, %v5402
    %v5405 = vperm.slane %v4605, %v4833
    %v5406 = vsel %vm4835, %v5405, %v5404
    %v5407 = vperm.slane %v4606, %v4807
    %v5408 = vperm.slane %v4607, %v4809
    %v5409 = vsel %vm4811, %v5408, %v5407
    %v5410 = vperm.slane %v4608, %v4813
    %v5411 = vsel %vm4815, %v5410, %v5409
    %v5412 = vperm.slane %v4609, %v4817
    %v5413 = vsel %vm4819, %v5412, %v5411
    %v5414 = vperm.slane %v4610, %v4821
    %v5415 = vsel %vm4823, %v5414, %v5413
    %v5416 = vperm.slane %v4611, %v4825
    %v5417 = vsel %vm4827, %v5416, %v5415
    %v5418 = vperm.slane %v4612, %v4829
    %v5419 = vsel %vm4831, %v5418, %v5417
    %v5420 = vperm.slane %v4613, %v4833
    %v5421 = vsel %vm4835, %v5420, %v5419
    %v5422 = vperm.slane %v4614, %v4807
    %v5423 = vperm.slane %v4615, %v4809
    %v5424 = vsel %vm4811, %v5423, %v5422
    %v5425 = vperm.slane %v4616, %v4813
    %v5426 = vsel %vm4815, %v5425, %v5424
    %v5427 = vperm.slane %v4617, %v4817
    %v5428 = vsel %vm4819, %v5427, %v5426
    %v5429 = vperm.slane %v4618, %v4821
    %v5430 = vsel %vm4823, %v5429, %v5428
    %v5431 = vperm.slane %v4619, %v4825
    %v5432 = vsel %vm4827, %v5431, %v5430
    %v5433 = vperm.slane %v4620, %v4829
    %v5434 = vsel %vm4831, %v5433, %v5432
    %v5435 = vperm.slane %v4621, %v4833
    %v5436 = vsel %vm4835, %v5435, %v5434
    %v5437 = vperm.slane %v4622, %v4807
    %v5438 = vperm.slane %v4623, %v4809
    %v5439 = vsel %vm4811, %v5438, %v5437
    %v5440 = vperm.slane %v4624, %v4813
    %v5441 = vsel %vm4815, %v5440, %v5439
    %v5442 = vperm.slane %v4625, %v4817
    %v5443 = vsel %vm4819, %v5442, %v5441
    %v5444 = vperm.slane %v4626, %v4821
    %v5445 = vsel %vm4823, %v5444, %v5443
    %v5446 = vperm.slane %v4627, %v4825
    %v5447 = vsel %vm4827, %v5446, %v5445
    %v5448 = vperm.slane %v4628, %v4829
    %v5449 = vsel %vm4831, %v5448, %v5447
    %v5450 = vperm.slane %v4629, %v4833
    %v5451 = vsel %vm4835, %v5450, %v5449
    %v5452 = vperm.slane %v4630, %v4807
    %v5453 = vperm.slane %v4631, %v4809
    %v5454 = vsel %vm4811, %v5453, %v5452
    %v5455 = vperm.slane %v4632, %v4813
    %v5456 = vsel %vm4815, %v5455, %v5454
    %v5457 = vperm.slane %v4633, %v4817
    %v5458 = vsel %vm4819, %v5457, %v5456
    %v5459 = vperm.slane %v4634, %v4821
    %v5460 = vsel %vm4823, %v5459, %v5458
    %v5461 = vperm.slane %v4635, %v4825
    %v5462 = vsel %vm4827, %v5461, %v5460
    %v5463 = vperm.slane %v4636, %v4829
    %v5464 = vsel %vm4831, %v5463, %v5462
    %v5465 = vperm.slane %v4637, %v4833
    %v5466 = vsel %vm4835, %v5465, %v5464
    %v5467 = vperm.slane %v4638, %v4807
    %v5468 = vperm.slane %v4639, %v4809
    %v5469 = vsel %vm4811, %v5468, %v5467
    %v5470 = vperm.slane %v4640, %v4813
    %v5471 = vsel %vm4815, %v5470, %v5469
    %v5472 = vperm.slane %v4641, %v4817
    %v5473 = vsel %vm4819, %v5472, %v5471
    %v5474 = vperm.slane %v4642, %v4821
    %v5475 = vsel %vm4823, %v5474, %v5473
    %v5476 = vperm.slane %v4643, %v4825
    %v5477 = vsel %vm4827, %v5476, %v5475
    %v5478 = vperm.slane %v4644, %v4829
    %v5479 = vsel %vm4831, %v5478, %v5477
    %v5480 = vperm.slane %v4645, %v4833
    %v5481 = vsel %vm4835, %v5480, %v5479
    %v5482 = vperm.slane %v4646, %v4807
    %v5483 = vperm.slane %v4647, %v4809
    %v5484 = vsel %vm4811, %v5483, %v5482
    %v5485 = vperm.slane %v4648, %v4813
    %v5486 = vsel %vm4815, %v5485, %v5484
    %v5487 = vperm.slane %v4649, %v4817
    %v5488 = vsel %vm4819, %v5487, %v5486
    %v5489 = vperm.slane %v4650, %v4821
    %v5490 = vsel %vm4823, %v5489, %v5488
    %v5491 = vperm.slane %v4651, %v4825
    %v5492 = vsel %vm4827, %v5491, %v5490
    %v5493 = vperm.slane %v4652, %v4829
    %v5494 = vsel %vm4831, %v5493, %v5492
    %v5495 = vperm.slane %v4653, %v4833
    %v5496 = vsel %vm4835, %v5495, %v5494
    %v5497 = vperm.slane %v4654, %v4807
    %v5498 = vperm.slane %v4655, %v4809
    %v5499 = vsel %vm4811, %v5498, %v5497
    %v5500 = vperm.slane %v4656, %v4813
    %v5501 = vsel %vm4815, %v5500, %v5499
    %v5502 = vperm.slane %v4657, %v4817
    %v5503 = vsel %vm4819, %v5502, %v5501
    %v5504 = vperm.slane %v4658, %v4821
    %v5505 = vsel %vm4823, %v5504, %v5503
    %v5506 = vperm.slane %v4659, %v4825
    %v5507 = vsel %vm4827, %v5506, %v5505
    %v5508 = vperm.slane %v4660, %v4829
    %v5509 = vsel %vm4831, %v5508, %v5507
    %v5510 = vperm.slane %v4661, %v4833
    %v5511 = vsel %vm4835, %v5510, %v5509
    %v5512 = vperm.slane %v4662, %v4807
    %v5513 = vperm.slane %v4663, %v4809
    %v5514 = vsel %vm4811, %v5513, %v5512
    %v5515 = vperm.slane %v4664, %v4813
    %v5516 = vsel %vm4815, %v5515, %v5514
    %v5517 = vperm.slane %v4665, %v4817
    %v5518 = vsel %vm4819, %v5517, %v5516
    %v5519 = vperm.slane %v4666, %v4821
    %v5520 = vsel %vm4823, %v5519, %v5518
    %v5521 = vperm.slane %v4667, %v4825
    %v5522 = vsel %vm4827, %v5521, %v5520
    %v5523 = vperm.slane %v4668, %v4829
    %v5524 = vsel %vm4831, %v5523, %v5522
    %v5525 = vperm.slane %v4669, %v4833
    %v5526 = vsel %vm4835, %v5525, %v5524
    %v5527 = vperm.slane %v4670, %v4807
    %v5528 = vperm.slane %v4671, %v4809
    %v5529 = vsel %vm4811, %v5528, %v5527
    %v5530 = vperm.slane %v4672, %v4813
    %v5531 = vsel %vm4815, %v5530, %v5529
    %v5532 = vperm.slane %v4673, %v4817
    %v5533 = vsel %vm4819, %v5532, %v5531
    %v5534 = vperm.slane %v4674, %v4821
    %v5535 = vsel %vm4823, %v5534, %v5533
    %v5536 = vperm.slane %v4675, %v4825
    %v5537 = vsel %vm4827, %v5536, %v5535
    %v5538 = vperm.slane %v4676, %v4829
    %v5539 = vsel %vm4831, %v5538, %v5537
    %v5540 = vperm.slane %v4677, %v4833
    %v5541 = vsel %vm4835, %v5540, %v5539
    %v5542 = vperm.slane %v4678, %v4807
    %v5543 = vperm.slane %v4679, %v4809
    %v5544 = vsel %vm4811, %v5543, %v5542
    %v5545 = vperm.slane %v4680, %v4813
    %v5546 = vsel %vm4815, %v5545, %v5544
    %v5547 = vperm.slane %v4681, %v4817
    %v5548 = vsel %vm4819, %v5547, %v5546
    %v5549 = vperm.slane %v4682, %v4821
    %v5550 = vsel %vm4823, %v5549, %v5548
    %v5551 = vperm.slane %v4683, %v4825
    %v5552 = vsel %vm4827, %v5551, %v5550
    %v5553 = vperm.slane %v4684, %v4829
    %v5554 = vsel %vm4831, %v5553, %v5552
    %v5555 = vperm.slane %v4685, %v4833
    %v5556 = vsel %vm4835, %v5555, %v5554
    %v5557 = vperm.slane %v4686, %v4807
    %v5558 = vperm.slane %v4687, %v4809
    %v5559 = vsel %vm4811, %v5558, %v5557
    %v5560 = vperm.slane %v4688, %v4813
    %v5561 = vsel %vm4815, %v5560, %v5559
    %v5562 = vperm.slane %v4689, %v4817
    %v5563 = vsel %vm4819, %v5562, %v5561
    %v5564 = vperm.slane %v4690, %v4821
    %v5565 = vsel %vm4823, %v5564, %v5563
    %v5566 = vperm.slane %v4691, %v4825
    %v5567 = vsel %vm4827, %v5566, %v5565
    %v5568 = vperm.slane %v4692, %v4829
    %v5569 = vsel %vm4831, %v5568, %v5567
    %v5570 = vperm.slane %v4693, %v4833
    %v5571 = vsel %vm4835, %v5570, %v5569
    %v5572 = vperm.slane %v4694, %v4807
    %v5573 = vperm.slane %v4695, %v4809
    %v5574 = vsel %vm4811, %v5573, %v5572
    %v5575 = vperm.slane %v4696, %v4813
    %v5576 = vsel %vm4815, %v5575, %v5574
    %v5577 = vperm.slane %v4697, %v4817
    %v5578 = vsel %vm4819, %v5577, %v5576
    %v5579 = vperm.slane %v4698, %v4821
    %v5580 = vsel %vm4823, %v5579, %v5578
    %v5581 = vperm.slane %v4699, %v4825
    %v5582 = vsel %vm4827, %v5581, %v5580
    %v5583 = vperm.slane %v4700, %v4829
    %v5584 = vsel %vm4831, %v5583, %v5582
    %v5585 = vperm.slane %v4701, %v4833
    %v5586 = vsel %vm4835, %v5585, %v5584
    %v5587 = vperm.slane %v4702, %v4807
    %v5588 = vperm.slane %v4703, %v4809
    %v5589 = vsel %vm4811, %v5588, %v5587
    %v5590 = vperm.slane %v4704, %v4813
    %v5591 = vsel %vm4815, %v5590, %v5589
    %v5592 = vperm.slane %v4705, %v4817
    %v5593 = vsel %vm4819, %v5592, %v5591
    %v5594 = vperm.slane %v4706, %v4821
    %v5595 = vsel %vm4823, %v5594, %v5593
    %v5596 = vperm.slane %v4707, %v4825
    %v5597 = vsel %vm4827, %v5596, %v5595
    %v5598 = vperm.slane %v4708, %v4829
    %v5599 = vsel %vm4831, %v5598, %v5597
    %v5600 = vperm.slane %v4709, %v4833
    %v5601 = vsel %vm4835, %v5600, %v5599
    %v5602 = vperm.slane %v4710, %v4807
    %v5603 = vperm.slane %v4711, %v4809
    %v5604 = vsel %vm4811, %v5603, %v5602
    %v5605 = vperm.slane %v4712, %v4813
    %v5606 = vsel %vm4815, %v5605, %v5604
    %v5607 = vperm.slane %v4713, %v4817
    %v5608 = vsel %vm4819, %v5607, %v5606
    %v5609 = vperm.slane %v4714, %v4821
    %v5610 = vsel %vm4823, %v5609, %v5608
    %v5611 = vperm.slane %v4715, %v4825
    %v5612 = vsel %vm4827, %v5611, %v5610
    %v5613 = vperm.slane %v4716, %v4829
    %v5614 = vsel %vm4831, %v5613, %v5612
    %v5615 = vperm.slane %v4717, %v4833
    %v5616 = vsel %vm4835, %v5615, %v5614
    %v5617 = vperm.slane %v4718, %v4807
    %v5618 = vperm.slane %v4719, %v4809
    %v5619 = vsel %vm4811, %v5618, %v5617
    %v5620 = vperm.slane %v4720, %v4813
    %v5621 = vsel %vm4815, %v5620, %v5619
    %v5622 = vperm.slane %v4721, %v4817
    %v5623 = vsel %vm4819, %v5622, %v5621
    %v5624 = vperm.slane %v4722, %v4821
    %v5625 = vsel %vm4823, %v5624, %v5623
    %v5626 = vperm.slane %v4723, %v4825
    %v5627 = vsel %vm4827, %v5626, %v5625
    %v5628 = vperm.slane %v4724, %v4829
    %v5629 = vsel %vm4831, %v5628, %v5627
    %v5630 = vperm.slane %v4725, %v4833
    %v5631 = vsel %vm4835, %v5630, %v5629
    %v5632 = vperm.slane %v4726, %v4807
    %v5633 = vperm.slane %v4727, %v4809
    %v5634 = vsel %vm4811, %v5633, %v5632
    %v5635 = vperm.slane %v4728, %v4813
    %v5636 = vsel %vm4815, %v5635, %v5634
    %v5637 = vperm.slane %v4729, %v4817
    %v5638 = vsel %vm4819, %v5637, %v5636
    %v5639 = vperm.slane %v4730, %v4821
    %v5640 = vsel %vm4823, %v5639, %v5638
    %v5641 = vperm.slane %v4731, %v4825
    %v5642 = vsel %vm4827, %v5641, %v5640
    %v5643 = vperm.slane %v4732, %v4829
    %v5644 = vsel %vm4831, %v5643, %v5642
    %v5645 = vperm.slane %v4733, %v4833
    %v5646 = vsel %vm4835, %v5645, %v5644
    %v5647 = vperm.slane %v4734, %v4807
    %v5648 = vperm.slane %v4735, %v4809
    %v5649 = vsel %vm4811, %v5648, %v5647
    %v5650 = vperm.slane %v4736, %v4813
    %v5651 = vsel %vm4815, %v5650, %v5649
    %v5652 = vperm.slane %v4737, %v4817
    %v5653 = vsel %vm4819, %v5652, %v5651
    %v5654 = vperm.slane %v4738, %v4821
    %v5655 = vsel %vm4823, %v5654, %v5653
    %v5656 = vperm.slane %v4739, %v4825
    %v5657 = vsel %vm4827, %v5656, %v5655
    %v5658 = vperm.slane %v4740, %v4829
    %v5659 = vsel %vm4831, %v5658, %v5657
    %v5660 = vperm.slane %v4741, %v4833
    %v5661 = vsel %vm4835, %v5660, %v5659
    %v5662 = vperm.slane %v4742, %v4807
    %v5663 = vperm.slane %v4743, %v4809
    %v5664 = vsel %vm4811, %v5663, %v5662
    %v5665 = vperm.slane %v4744, %v4813
    %v5666 = vsel %vm4815, %v5665, %v5664
    %v5667 = vperm.slane %v4745, %v4817
    %v5668 = vsel %vm4819, %v5667, %v5666
    %v5669 = vperm.slane %v4746, %v4821
    %v5670 = vsel %vm4823, %v5669, %v5668
    %v5671 = vperm.slane %v4747, %v4825
    %v5672 = vsel %vm4827, %v5671, %v5670
    %v5673 = vperm.slane %v4748, %v4829
    %v5674 = vsel %vm4831, %v5673, %v5672
    %v5675 = vperm.slane %v4749, %v4833
    %v5676 = vsel %vm4835, %v5675, %v5674
    %v5677 = vperm.slane %v4750, %v4807
    %v5678 = vperm.slane %v4751, %v4809
    %v5679 = vsel %vm4811, %v5678, %v5677
    %v5680 = vperm.slane %v4752, %v4813
    %v5681 = vsel %vm4815, %v5680, %v5679
    %v5682 = vperm.slane %v4753, %v4817
    %v5683 = vsel %vm4819, %v5682, %v5681
    %v5684 = vperm.slane %v4754, %v4821
    %v5685 = vsel %vm4823, %v5684, %v5683
    %v5686 = vperm.slane %v4755, %v4825
    %v5687 = vsel %vm4827, %v5686, %v5685
    %v5688 = vperm.slane %v4756, %v4829
    %v5689 = vsel %vm4831, %v5688, %v5687
    %v5690 = vperm.slane %v4757, %v4833
    %v5691 = vsel %vm4835, %v5690, %v5689
    %v5692 = vperm.slane %v4758, %v4807
    %v5693 = vperm.slane %v4759, %v4809
    %v5694 = vsel %vm4811, %v5693, %v5692
    %v5695 = vperm.slane %v4760, %v4813
    %v5696 = vsel %vm4815, %v5695, %v5694
    %v5697 = vperm.slane %v4761, %v4817
    %v5698 = vsel %vm4819, %v5697, %v5696
    %v5699 = vperm.slane %v4762, %v4821
    %v5700 = vsel %vm4823, %v5699, %v5698
    %v5701 = vperm.slane %v4763, %v4825
    %v5702 = vsel %vm4827, %v5701, %v5700
    %v5703 = vperm.slane %v4764, %v4829
    %v5704 = vsel %vm4831, %v5703, %v5702
    %v5705 = vperm.slane %v4765, %v4833
    %v5706 = vsel %vm4835, %v5705, %v5704
    %v5707 = vperm.slane %v4766, %v4807
    %v5708 = vperm.slane %v4767, %v4809
    %v5709 = vsel %vm4811, %v5708, %v5707
    %v5710 = vperm.slane %v4768, %v4813
    %v5711 = vsel %vm4815, %v5710, %v5709
    %v5712 = vperm.slane %v4769, %v4817
    %v5713 = vsel %vm4819, %v5712, %v5711
    %v5714 = vperm.slane %v4770, %v4821
    %v5715 = vsel %vm4823, %v5714, %v5713
    %v5716 = vperm.slane %v4771, %v4825
    %v5717 = vsel %vm4827, %v5716, %v5715
    %v5718 = vperm.slane %v4772, %v4829
    %v5719 = vsel %vm4831, %v5718, %v5717
    %v5720 = vperm.slane %v4773, %v4833
    %v5721 = vsel %vm4835, %v5720, %v5719
    %v5722 = vperm.slane %v4774, %v4807
    %v5723 = vperm.slane %v4775, %v4809
    %v5724 = vsel %vm4811, %v5723, %v5722
    %v5725 = vperm.slane %v4776, %v4813
    %v5726 = vsel %vm4815, %v5725, %v5724
    %v5727 = vperm.slane %v4777, %v4817
    %v5728 = vsel %vm4819, %v5727, %v5726
    %v5729 = vperm.slane %v4778, %v4821
    %v5730 = vsel %vm4823, %v5729, %v5728
    %v5731 = vperm.slane %v4779, %v4825
    %v5732 = vsel %vm4827, %v5731, %v5730
    %v5733 = vperm.slane %v4780, %v4829
    %v5734 = vsel %vm4831, %v5733, %v5732
    %v5735 = vperm.slane %v4781, %v4833
    %v5736 = vsel %vm4835, %v5735, %v5734
    %v5737 = vperm.slane %v4782, %v4807
    %v5738 = vperm.slane %v4783, %v4809
    %v5739 = vsel %vm4811, %v5738, %v5737
    %v5740 = vperm.slane %v4784, %v4813
    %v5741 = vsel %vm4815, %v5740, %v5739
    %v5742 = vperm.slane %v4785, %v4817
    %v5743 = vsel %vm4819, %v5742, %v5741
    %v5744 = vperm.slane %v4786, %v4821
    %v5745 = vsel %vm4823, %v5744, %v5743
    %v5746 = vperm.slane %v4787, %v4825
    %v5747 = vsel %vm4827, %v5746, %v5745
    %v5748 = vperm.slane %v4788, %v4829
    %v5749 = vsel %vm4831, %v5748, %v5747
    %v5750 = vperm.slane %v4789, %v4833
    %v5751 = vsel %vm4835, %v5750, %v5749
    %v5752 = vperm.slane %v4790, %v4807
    %v5753 = vperm.slane %v4791, %v4809
    %v5754 = vsel %vm4811, %v5753, %v5752
    %v5755 = vperm.slane %v4792, %v4813
    %v5756 = vsel %vm4815, %v5755, %v5754
    %v5757 = vperm.slane %v4793, %v4817
    %v5758 = vsel %vm4819, %v5757, %v5756
    %v5759 = vperm.slane %v4794, %v4821
    %v5760 = vsel %vm4823, %v5759, %v5758
    %v5761 = vperm.slane %v4795, %v4825
    %v5762 = vsel %vm4827, %v5761, %v5760
    %v5763 = vperm.slane %v4796, %v4829
    %v5764 = vsel %vm4831, %v5763, %v5762
    %v5765 = vperm.slane %v4797, %v4833
    %v5766 = vsel %vm4835, %v5765, %v5764
    %v5767 = vperm.slane %v4798, %v4807
    %v5768 = vperm.slane %v4799, %v4809
    %v5769 = vsel %vm4811, %v5768, %v5767
    %v5770 = vperm.slane %v4800, %v4813
    %v5771 = vsel %vm4815, %v5770, %v5769
    %v5772 = vperm.slane %v4801, %v4817
    %v5773 = vsel %vm4819, %v5772, %v5771
    %v5774 = vperm.slane %v4802, %v4821
    %v5775 = vsel %vm4823, %v5774, %v5773
    %v5776 = vperm.slane %v4803, %v4825
    %v5777 = vsel %vm4827, %v5776, %v5775
    %v5778 = vperm.slane %v4804, %v4829
    %v5779 = vsel %vm4831, %v5778, %v5777
    %v5780 = vperm.slane %v4805, %v4833
    %v5781 = vsel %vm4835, %v5780, %v5779
    %vm5782 = vcmask 1041409
    %v5783 = vsel %vm5782, %v4851, %v4836
    %vm5784 = vcmask 1042434
    %v5785 = vsel %vm5784, %v4866, %v5783
    %vm5786 = vcmask 1043459
    %v5787 = vsel %vm5786, %v4881, %v5785
    %vm5788 = vcmask 1044484
    %v5789 = vsel %vm5788, %v4896, %v5787
    %vm5790 = vcmask 1045509
    %v5791 = vsel %vm5790, %v4911, %v5789
    %vm5792 = vcmask 1046534
    %v5793 = vsel %vm5792, %v4926, %v5791
    %vm5794 = vcmask 1047559
    %v5795 = vsel %vm5794, %v4941, %v5793
    %v5796 = vsel %vm5782, %v4971, %v4956
    %v5797 = vsel %vm5784, %v4986, %v5796
    %v5798 = vsel %vm5786, %v5001, %v5797
    %v5799 = vsel %vm5788, %v5016, %v5798
    %v5800 = vsel %vm5790, %v5031, %v5799
    %v5801 = vsel %vm5792, %v5046, %v5800
    %v5802 = vsel %vm5794, %v5061, %v5801
    %v5803 = vsel %vm5782, %v5091, %v5076
    %v5804 = vsel %vm5784, %v5106, %v5803
    %v5805 = vsel %vm5786, %v5121, %v5804
    %v5806 = vsel %vm5788, %v5136, %v5805
    %v5807 = vsel %vm5790, %v5151, %v5806
    %v5808 = vsel %vm5792, %v5166, %v5807
    %v5809 = vsel %vm5794, %v5181, %v5808
    %v5810 = vsel %vm5782, %v5211, %v5196
    %v5811 = vsel %vm5784, %v5226, %v5810
    %v5812 = vsel %vm5786, %v5241, %v5811
    %v5813 = vsel %vm5788, %v5256, %v5812
    %v5814 = vsel %vm5790, %v5271, %v5813
    %v5815 = vsel %vm5792, %v5286, %v5814
    %v5816 = vsel %vm5794, %v5301, %v5815
    %v5817 = vsel %vm5782, %v5331, %v5316
    %v5818 = vsel %vm5784, %v5346, %v5817
    %v5819 = vsel %vm5786, %v5361, %v5818
    %v5820 = vsel %vm5788, %v5376, %v5819
    %v5821 = vsel %vm5790, %v5391, %v5820
    %v5822 = vsel %vm5792, %v5406, %v5821
    %v5823 = vsel %vm5794, %v5421, %v5822
    %v5824 = vsel %vm5782, %v5451, %v5436
    %v5825 = vsel %vm5784, %v5466, %v5824
    %v5826 = vsel %vm5786, %v5481, %v5825
    %v5827 = vsel %vm5788, %v5496, %v5826
    %v5828 = vsel %vm5790, %v5511, %v5827
    %v5829 = vsel %vm5792, %v5526, %v5828
    %v5830 = vsel %vm5794, %v5541, %v5829
    %v5831 = vsel %vm5782, %v5571, %v5556
    %v5832 = vsel %vm5784, %v5586, %v5831
    %v5833 = vsel %vm5786, %v5601, %v5832
    %v5834 = vsel %vm5788, %v5616, %v5833
    %v5835 = vsel %vm5790, %v5631, %v5834
    %v5836 = vsel %vm5792, %v5646, %v5835
    %v5837 = vsel %vm5794, %v5661, %v5836
    %v5838 = vsel %vm5782, %v5691, %v5676
    %v5839 = vsel %vm5784, %v5706, %v5838
    %v5840 = vsel %vm5786, %v5721, %v5839
    %v5841 = vsel %vm5788, %v5736, %v5840
    %v5842 = vsel %vm5790, %v5751, %v5841
    %v5843 = vsel %vm5792, %v5766, %v5842
    %v5844 = vsel %vm5794, %v5781, %v5843
    %vm5845 = vcmp.ne.s32.totalorder %v5795, 0
    %vm5846 = vcmp.ne.s32.totalorder %v5802, 0
    %vm5847 = vcmp.ne.s32.totalorder %v5809, 0
    %vm5848 = vcmp.ne.s32.totalorder %v5816, 0
    %vm5849 = vcmp.ne.s32.totalorder %v5823, 0
    %vm5850 = vcmp.ne.s32.totalorder %v5830, 0
    %vm5851 = vcmp.ne.s32.totalorder %v5837, 0
    %vm5852 = vcmp.ne.s32.totalorder %v5844, 0
    %vm5853 = vmand %vm3774, %vm5845
    %vm5854 = vmand %vm3775, %vm5846
    %vm5855 = vmand %vm3776, %vm5847
    %vm5856 = vmand %vm3777, %vm5848
    %vm5857 = vmand %vm3778, %vm5849
    %vm5858 = vmand %vm3779, %vm5850
    %vm5859 = vmand %vm3780, %vm5851
    %vm5860 = vmand %vm3781, %vm5852
    %v5861 = vmul.f32 %v2206, -1.0
    %v5862 = vmul.f32 %v2209, -1.0
    %v5863 = vmul.f32 %v2212, -1.0
    %v5864 = vmul.f32 %v2215, -1.0
    %v5865 = vmul.f32 %v2218, -1.0
    %v5866 = vmul.f32 %v2221, -1.0
    %v5867 = vmul.f32 %v2224, -1.0
    %v5868 = vmul.f32 %v2227, -1.0
    %v5869 = vmul.f32 %v2230, -1.0
    %v5870 = vmul.f32 %v2233, -1.0
    %v5871 = vmul.f32 %v2236, -1.0
    %v5872 = vmul.f32 %v2239, -1.0
    %v5873 = vmul.f32 %v2242, -1.0
    %v5874 = vmul.f32 %v2245, -1.0
    %v5875 = vmul.f32 %v2248, -1.0
    %v5876 = vmul.f32 %v2251, -1.0
    %v5877 = vmul.f32 %v2254, -1.0
    %v5878 = vmul.f32 %v2257, -1.0
    %v5879 = vmul.f32 %v2260, -1.0
    %v5880 = vmul.f32 %v2263, -1.0
    %v5881 = vmul.f32 %v2266, -1.0
    %v5882 = vmul.f32 %v2269, -1.0
    %v5883 = vmul.f32 %v2272, -1.0
    %v5884 = vmul.f32 %v2275, -1.0
    %v5885 = vmul.f32 %v2278, -1.0
    %v5886 = vmul.f32 %v2281, -1.0
    %v5887 = vmul.f32 %v2284, -1.0
    %v5888 = vmul.f32 %v2287, -1.0
    %v5889 = vmul.f32 %v2290, -1.0
    %v5890 = vmul.f32 %v2293, -1.0
    %v5891 = vmul.f32 %v2296, -1.0
    %v5892 = vmul.f32 %v2299, -1.0
    %v5893 = vmul.f32 %v2302, -1.0
    %v5894 = vmul.f32 %v2305, -1.0
    %v5895 = vmul.f32 %v2308, -1.0
    %v5896 = vmul.f32 %v2311, -1.0
    %v5897 = vmul.f32 %v2314, -1.0
    %v5898 = vmul.f32 %v2317, -1.0
    %v5899 = vmul.f32 %v2320, -1.0
    %v5900 = vmul.f32 %v2323, -1.0
    %v5901 = vmul.f32 %v2326, -1.0
    %v5902 = vmul.f32 %v2329, -1.0
    %v5903 = vmul.f32 %v2332, -1.0
    %v5904 = vmul.f32 %v2335, -1.0
    %v5905 = vmul.f32 %v2338, -1.0
    %v5906 = vmul.f32 %v2341, -1.0
    %v5907 = vmul.f32 %v2344, -1.0
    %v5908 = vmul.f32 %v2347, -1.0
    %v5909 = vmul.f32 %v2350, -1.0
    %v5910 = vmul.f32 %v2353, -1.0
    %v5911 = vmul.f32 %v2356, -1.0
    %v5912 = vmul.f32 %v2359, -1.0
    %v5913 = vmul.f32 %v2362, -1.0
    %v5914 = vmul.f32 %v2365, -1.0
    %v5915 = vmul.f32 %v2368, -1.0
    %v5916 = vmul.f32 %v2371, -1.0
    %v5917 = vmul.f32 %v2374, -1.0
    %v5918 = vmul.f32 %v2377, -1.0
    %v5919 = vmul.f32 %v2380, -1.0
    %v5920 = vmul.f32 %v2383, -1.0
    %v5921 = vmul.f32 %v2386, -1.0
    %v5922 = vmul.f32 %v2389, -1.0
    %v5923 = vmul.f32 %v2392, -1.0
    %v5924 = vmul.f32 %v2395, -1.0
    %v5925 = vmul.f32 %v2398, -1.0
    %v5926 = vmul.f32 %v2401, -1.0
    %v5927 = vmul.f32 %v2404, -1.0
    %v5928 = vmul.f32 %v2407, -1.0
    %v5929 = vmul.f32 %v2410, -1.0
    %v5930 = vmul.f32 %v2413, -1.0
    %v5931 = vmul.f32 %v2416, -1.0
    %v5932 = vmul.f32 %v2419, -1.0
    %v5933 = vmul.f32 %v2422, -1.0
    %v5934 = vmul.f32 %v2425, -1.0
    %v5935 = vmul.f32 %v2428, -1.0
    %v5936 = vmul.f32 %v2431, -1.0
    %v5937 = vmul.f32 %v2434, -1.0
    %v5938 = vmul.f32 %v2437, -1.0
    %v5939 = vmul.f32 %v2440, -1.0
    %v5940 = vmul.f32 %v2443, -1.0
    %v5941 = vmul.f32 %v2446, -1.0
    %v5942 = vmul.f32 %v2449, -1.0
    %v5943 = vmul.f32 %v2452, -1.0
    %v5944 = vmul.f32 %v2455, -1.0
    %v5945 = vmul.f32 %v2458, -1.0
    %v5946 = vmul.f32 %v2461, -1.0
    %v5947 = vmul.f32 %v2464, -1.0
    %v5948 = vmul.f32 %v2467, -1.0
    %v5949 = vmul.f32 %v2470, -1.0
    %v5950 = vmul.f32 %v2473, -1.0
    %v5951 = vmul.f32 %v2476, -1.0
    %v5952 = vmul.f32 %v2479, -1.0
    %v5953 = vmul.f32 %v2482, -1.0
    %v5954 = vmul.f32 %v2485, -1.0
    %v5955 = vmul.f32 %v2488, -1.0
    %v5956 = vmul.f32 %v2491, -1.0
    %v5957 = vmul.f32 %v2494, -1.0
    %v5958 = vmul.f32 %v2497, -1.0
    %v5959 = vmul.f32 %v2500, -1.0
    %v5960 = vmul.f32 %v2503, -1.0
    %v5961 = vmul.f32 %v2506, -1.0
    %v5962 = vmul.f32 %v2509, -1.0
    %v5963 = vmul.f32 %v2512, -1.0
    %v5964 = vmul.f32 %v2515, -1.0
    %v5965 = vmul.f32 %v2518, -1.0
    %v5966 = vmul.f32 %v2521, -1.0
    %v5967 = vmul.f32 %v2524, -1.0
    %v5968 = vmul.f32 %v2527, -1.0
    %v5969 = vmul.f32 %v2530, -1.0
    %v5970 = vmul.f32 %v2533, -1.0
    %v5971 = vmul.f32 %v2536, -1.0
    %v5972 = vmul.f32 %v2539, -1.0
    %v5973 = vmul.f32 %v2542, -1.0
    %v5974 = vmul.f32 %v2545, -1.0
    %v5975 = vmul.f32 %v2548, -1.0
    %v5976 = vmul.f32 %v2551, -1.0
    %v5977 = vmul.f32 %v2554, -1.0
    %v5978 = vmul.f32 %v2557, -1.0
    %v5979 = vmul.f32 %v2560, -1.0
    %v5980 = vmul.f32 %v2563, -1.0
    %v5981 = vmul.f32 %v2566, -1.0
    %v5982 = vmul.f32 %v2569, -1.0
    %v5983 = vmul.f32 %v2572, -1.0
    %v5984 = vmul.f32 %v2575, -1.0
    %v5985 = vmul.f32 %v2578, -1.0
    %v5986 = vmul.f32 %v2581, -1.0
    %v5987 = vmul.f32 %v2584, -1.0
    %v5988 = vmul.f32 %v2587, -1.0
    %v5989 = vmul.f32 %v2590, -1.0
    %v5990 = vmul.f32 %v2593, -1.0
    %v5991 = vmul.f32 %v2596, -1.0
    %v5992 = vmul.f32 %v2599, -1.0
    %v5993 = vmul.f32 %v2602, -1.0
    %v5994 = vmul.f32 %v2605, -1.0
    %v5995 = vmul.f32 %v2608, -1.0
    %v5996 = vmul.f32 %v2611, -1.0
    %v5997 = vmul.f32 %v2614, -1.0
    %v5998 = vmul.f32 %v2617, -1.0
    %v5999 = vmul.f32 %v2620, -1.0
    %v6000 = vmul.f32 %v2623, -1.0
    %v6001 = vmul.f32 %v2626, -1.0
    %v6002 = vmul.f32 %v2629, -1.0
    %v6003 = vmul.f32 %v2632, -1.0
    %v6004 = vmul.f32 %v2635, -1.0
    %v6005 = vmul.f32 %v2638, -1.0
    %v6006 = vmul.f32 %v2641, -1.0
    %v6007 = vmul.f32 %v2644, -1.0
    %v6008 = vmul.f32 %v2647, -1.0
    %v6009 = vmul.f32 %v2650, -1.0
    %v6010 = vmul.f32 %v2653, -1.0
    %v6011 = vmul.f32 %v2656, -1.0
    %v6012 = vmul.f32 %v2659, -1.0
    %v6013 = vmul.f32 %v2662, -1.0
    %v6014 = vmul.f32 %v2665, -1.0
    %v6015 = vmul.f32 %v2668, -1.0
    %v6016 = vmul.f32 %v2671, -1.0
    %v6017 = vmul.f32 %v2674, -1.0
    %v6018 = vmul.f32 %v2677, -1.0
    %v6019 = vmul.f32 %v2680, -1.0
    %v6020 = vmul.f32 %v2683, -1.0
    %v6021 = vmul.f32 %v2686, -1.0
    %v6022 = vmul.f32 %v2689, -1.0
    %v6023 = vmul.f32 %v2692, -1.0
    %v6024 = vmul.f32 %v2695, -1.0
    %v6025 = vmul.f32 %v2698, -1.0
    %v6026 = vmul.f32 %v2701, -1.0
    %v6027 = vmul.f32 %v2704, -1.0
    %v6028 = vmul.f32 %v2707, -1.0
    %v6029 = vmul.f32 %v2710, -1.0
    %v6030 = vmul.f32 %v2713, -1.0
    %v6031 = vmul.f32 %v2716, -1.0
    %v6032 = vmul.f32 %v2719, -1.0
    %v6033 = vmul.f32 %v2722, -1.0
    %v6034 = vmul.f32 %v2725, -1.0
    %v6035 = vmul.f32 %v2728, -1.0
    %v6036 = vmul.f32 %v2731, -1.0
    %v6037 = vmul.f32 %v2734, -1.0
    %v6038 = vmul.f32 %v2737, -1.0
    %v6039 = vmul.f32 %v2740, -1.0
    %v6040 = vmul.f32 %v2743, -1.0
    %v6041 = vmul.f32 %v2746, -1.0
    %v6042 = vmul.f32 %v2749, -1.0
    %v6043 = vmul.f32 %v2752, -1.0
    %v6044 = vmul.f32 %v2755, -1.0
    %v6045 = vmul.f32 %v2758, -1.0
    %v6046 = vmul.f32 %v2761, -1.0
    %v6047 = vmul.f32 %v2764, -1.0
    %v6048 = vmul.f32 %v2767, -1.0
    %v6049 = vmul.f32 %v2770, -1.0
    %v6050 = vmul.f32 %v2773, -1.0
    %v6051 = vmul.f32 %v2776, -1.0
    %v6052 = vmul.f32 %v2779, -1.0
    %v6053 = vmul.f32 %v2782, -1.0
    %v6054 = vmul.f32 %v2785, -1.0
    %v6055 = vmul.f32 %v2788, -1.0
    %v6056 = vmul.f32 %v2791, -1.0
    %v6057 = vmul.f32 %v2794, -1.0
    %v6058 = vmul.f32 %v2797, -1.0
    %v6059 = vmul.f32 %v2800, -1.0
    %v6060 = vmul.f32 %v2803, -1.0
    %v6061 = vmul.f32 %v2806, -1.0
    %v6062 = vmul.f32 %v2809, -1.0
    %v6063 = vmul.f32 %v2812, -1.0
    %v6064 = vmul.f32 %v2815, -1.0
    %v6065 = vmul.f32 %v2818, -1.0
    %v6066 = vmul.f32 %v2821, -1.0
    %v6067 = vmul.f32 %v2824, -1.0
    %v6068 = vmul.f32 %v2827, -1.0
    %v6069 = vmul.f32 %v2830, -1.0
    %v6070 = vmul.f32 %v2833, -1.0
    %v6071 = vmul.f32 %v2836, -1.0
    %v6072 = vmul.f32 %v2839, -1.0
    %v6073 = vmul.f32 %v2842, -1.0
    %v6074 = vmul.f32 %v2845, -1.0
    %v6075 = vmul.f32 %v2848, -1.0
    %v6076 = vmul.f32 %v2851, -1.0
    %v6077 = vmul.f32 %v2854, -1.0
    %v6078 = vmul.f32 %v2857, -1.0
    %v6079 = vmul.f32 %v2860, -1.0
    %v6080 = vmul.f32 %v2863, -1.0
    %v6081 = vmul.f32 %v2866, -1.0
    %v6082 = vmul.f32 %v2869, -1.0
    %v6083 = vmul.f32 %v2872, -1.0
    %v6084 = vmul.f32 %v2875, -1.0
    %v6085 = vmul.f32 %v2878, -1.0
    %v6086 = vmul.f32 %v2881, -1.0
    %v6087 = vmul.f32 %v2884, -1.0
    %v6088 = vmul.f32 %v2887, -1.0
    %v6089 = vmul.f32 %v2890, -1.0
    %v6090 = vmul.f32 %v2893, -1.0
    %v6091 = vmul.f32 %v2896, -1.0
    %v6092 = vmul.f32 %v2899, -1.0
    %v6093 = vmul.f32 %v2902, -1.0
    %v6094 = vmul.f32 %v2905, -1.0
    %v6095 = vmul.f32 %v2908, -1.0
    %v6096 = vmul.f32 %v2911, -1.0
    %v6097 = vmul.f32 %v2914, -1.0
    %v6098 = vmul.f32 %v2917, -1.0
    %v6099 = vmul.f32 %v2920, -1.0
    %v6100 = vmul.f32 %v2923, -1.0
    %v6101 = vmul.f32 %v2926, -1.0
    %v6102 = vmul.f32 %v2929, -1.0
    %v6103 = vmul.f32 %v2932, -1.0
    %v6104 = vmul.f32 %v2935, -1.0
    %v6105 = vmul.f32 %v2938, -1.0
    %v6106 = vmul.f32 %v2941, -1.0
    %v6107 = vmul.f32 %v2944, -1.0
    %v6108 = vmul.f32 %v2947, -1.0
    %v6109 = vmul.f32 %v2950, -1.0
    %v6110 = vmul.f32 %v2953, -1.0
    %v6111 = vmul.f32 %v2956, -1.0
    %v6112 = vmul.f32 %v2959, -1.0
    %v6113 = vmul.f32 %v2962, -1.0
    %v6114 = vmul.f32 %v2965, -1.0
    %v6115 = vmul.f32 %v2968, -1.0
    %v6116 = vmul.f32 %v2971, -1.0
    %v6117 = vmul.f32 %v2974, -1.0
    %v6118 = vmul.f32 %v2977, -1.0
    %v6119 = vmul.f32 %v2980, -1.0
    %v6120 = vmul.f32 %v2983, -1.0
    %v6121 = vmul.f32 %v2986, -1.0
    %v6122 = vmul.f32 %v2989, -1.0
    %v6123 = vmul.f32 %v2992, -1.0
    %v6124 = vmul.f32 %v2995, -1.0
    %v6125 = vmul.f32 %v2998, -1.0
    %v6126 = vmul.f32 %v3001, -1.0
    %v6127 = vmul.f32 %v3004, -1.0
    %v6128 = vmul.f32 %v3007, -1.0
    %v6129 = vmul.f32 %v3010, -1.0
    %v6130 = vmul.f32 %v3013, -1.0
    %v6131 = vmul.f32 %v3016, -1.0
    %v6132 = vmul.f32 %v3019, -1.0
    %v6133 = vmul.f32 %v3022, -1.0
    %v6134 = vmul.f32 %v3025, -1.0
    %v6135 = vmul.f32 %v3028, -1.0
    %v6136 = vmul.f32 %v3031, -1.0
    %v6137 = vmul.f32 %v3034, -1.0
    %v6138 = vmul.f32 %v3037, -1.0
    %v6139 = vmul.f32 %v3040, -1.0
    %v6140 = vmul.f32 %v3043, -1.0
    %v6141 = vmul.f32 %v3046, -1.0
    %v6142 = vmul.f32 %v3049, -1.0
    %v6143 = vmul.f32 %v3052, -1.0
    %v6144 = vmul.f32 %v3055, -1.0
    %v6145 = vmul.f32 %v3058, -1.0
    %v6146 = vmul.f32 %v3061, -1.0
    %v6147 = vmul.f32 %v3064, -1.0
    %v6148 = vmul.f32 %v3067, -1.0
    %v6149 = vmul.f32 %v3070, -1.0
    %v6150 = vmul.f32 %v3073, -1.0
    %v6151 = vmul.f32 %v3076, -1.0
    %v6152 = vmul.f32 %v3079, -1.0
    %v6153 = vmul.f32 %v3082, -1.0
    %v6154 = vmul.f32 %v3085, -1.0
    %v6155 = vmul.f32 %v3088, -1.0
    %v6156 = vmul.f32 %v3091, -1.0
    %v6157 = vmul.f32 %v3094, -1.0
    %v6158 = vmul.f32 %v3097, -1.0
    %v6159 = vmul.f32 %v3100, -1.0
    %v6160 = vmul.f32 %v3103, -1.0
    %v6161 = vmul.f32 %v3106, -1.0
    %v6162 = vmul.f32 %v3109, -1.0
    %v6163 = vmul.f32 %v3112, -1.0
    %v6164 = vmul.f32 %v3115, -1.0
    %v6165 = vmul.f32 %v3118, -1.0
    %v6166 = vmul.f32 %v3121, -1.0
    %v6167 = vmul.f32 %v3124, -1.0
    %v6168 = vmul.f32 %v3127, -1.0
    %v6169 = vmul.f32 %v3130, -1.0
    %v6170 = vmul.f32 %v3133, -1.0
    %v6171 = vmul.f32 %v3136, -1.0
    %v6172 = vmul.f32 %v3139, -1.0
    %v6173 = vmul.f32 %v3142, -1.0
    %v6174 = vmul.f32 %v3145, -1.0
    %v6175 = vmul.f32 %v3148, -1.0
    %v6176 = vmul.f32 %v3151, -1.0
    %v6177 = vmul.f32 %v3154, -1.0
    %v6178 = vmul.f32 %v3157, -1.0
    %v6179 = vmul.f32 %v3160, -1.0
    %v6180 = vmul.f32 %v3163, -1.0
    %v6181 = vmul.f32 %v3166, -1.0
    %v6182 = vmul.f32 %v3169, -1.0
    %v6183 = vmul.f32 %v3172, -1.0
    %v6184 = vmul.f32 %v3175, -1.0
    %v6185 = vmul.f32 %v3178, -1.0
    %v6186 = vmul.f32 %v3181, -1.0
    %v6187 = vmul.f32 %v3184, -1.0
    %v6188 = vmul.f32 %v3187, -1.0
    %v6189 = vmul.f32 %v3190, -1.0
    %v6190 = vmul.f32 %v3193, -1.0
    %v6191 = vmul.f32 %v3196, -1.0
    %v6192 = vmul.f32 %v3199, -1.0
    %v6193 = vmul.f32 %v3202, -1.0
    %v6194 = vmul.f32 %v3205, -1.0
    %v6195 = vmul.f32 %v3208, -1.0
    %v6196 = vmul.f32 %v3211, -1.0
    %v6197 = vmul.f32 %v3214, -1.0
    %v6198 = vmul.f32 %v3217, -1.0
    %v6199 = vmul.f32 %v3220, -1.0
    %v6200 = vmul.f32 %v3223, -1.0
    %v6201 = vmul.f32 %v3226, -1.0
    %v6202 = vmul.f32 %v3229, -1.0
    %v6203 = vmul.f32 %v3232, -1.0
    %v6204 = vmul.f32 %v3235, -1.0
    %v6205 = vmul.f32 %v3238, -1.0
    %v6206 = vmul.f32 %v3241, -1.0
    %v6207 = vmul.f32 %v3244, -1.0
    %v6208 = vmul.f32 %v3247, -1.0
    %v6209 = vmul.f32 %v3250, -1.0
    %v6210 = vmul.f32 %v3253, -1.0
    %v6211 = vmul.f32 %v3256, -1.0
    %v6212 = vmul.f32 %v3259, -1.0
    %v6213 = vmul.f32 %v3262, -1.0
    %v6214 = vmul.f32 %v3265, -1.0
    %v6215 = vmul.f32 %v3268, -1.0
    %v6216 = vmul.f32 %v3271, -1.0
    %v6217 = vmul.f32 %v3274, -1.0
    %v6218 = vmul.f32 %v3277, -1.0
    %v6219 = vmul.f32 %v3280, -1.0
    %v6220 = vmul.f32 %v3283, -1.0
    %v6221 = vmul.f32 %v3286, -1.0
    %v6222 = vmul.f32 %v3289, -1.0
    %v6223 = vmul.f32 %v3292, -1.0
    %v6224 = vmul.f32 %v3295, -1.0
    %v6225 = vmul.f32 %v3298, -1.0
    %v6226 = vmul.f32 %v3301, -1.0
    %v6227 = vmul.f32 %v3304, -1.0
    %v6228 = vmul.f32 %v3307, -1.0
    %v6229 = vmul.f32 %v3310, -1.0
    %v6230 = vmul.f32 %v3313, -1.0
    %v6231 = vmul.f32 %v3316, -1.0
    %v6232 = vmul.f32 %v3319, -1.0
    %v6233 = vmul.f32 %v3322, -1.0
    %v6234 = vmul.f32 %v3325, -1.0
    %v6235 = vmul.f32 %v3328, -1.0
    %v6236 = vmul.f32 %v3331, -1.0
    %v6237 = vmul.f32 %v3334, -1.0
    %v6238 = vmul.f32 %v3337, -1.0
    %v6239 = vmul.f32 %v3340, -1.0
    %v6240 = vmul.f32 %v3343, -1.0
    %v6241 = vmul.f32 %v3346, -1.0
    %v6242 = vmul.f32 %v3349, -1.0
    %v6243 = vmul.f32 %v3352, -1.0
    %v6244 = vmul.f32 %v3355, -1.0
    %v6245 = vmul.f32 %v3358, -1.0
    %v6246 = vmul.f32 %v3361, -1.0
    %v6247 = vmul.f32 %v3364, -1.0
    %v6248 = vmul.f32 %v3367, -1.0
    %v6249 = vmul.f32 %v3370, -1.0
    %v6250 = vmul.f32 %v3373, -1.0
    %v6251 = vmul.f32 %v3376, -1.0
    %v6252 = vmul.f32 %v3379, -1.0
    %v6253 = vmul.f32 %v3382, -1.0
    %v6254 = vmul.f32 %v3385, -1.0
    %v6255 = vmul.f32 %v3388, -1.0
    %v6256 = vmul.f32 %v3391, -1.0
    %v6257 = vmul.f32 %v3394, -1.0
    %v6258 = vmul.f32 %v3397, -1.0
    %v6259 = vmul.f32 %v3400, -1.0
    %v6260 = vmul.f32 %v3403, -1.0
    %v6261 = vmul.f32 %v3406, -1.0
    %v6262 = vmul.f32 %v3409, -1.0
    %v6263 = vmul.f32 %v3412, -1.0
    %v6264 = vmul.f32 %v3415, -1.0
    %v6265 = vmul.f32 %v3418, -1.0
    %v6266 = vmul.f32 %v3421, -1.0
    %v6267 = vmul.f32 %v3424, -1.0
    %v6268 = vmul.f32 %v3427, -1.0
    %v6269 = vmul.f32 %v3430, -1.0
    %v6270 = vmul.f32 %v3433, -1.0
    %v6271 = vmul.f32 %v3436, -1.0
    %v6272 = vmul.f32 %v3439, -1.0
    %v6273 = vmul.f32 %v3442, -1.0
    %v6274 = vmul.f32 %v3445, -1.0
    %v6275 = vmul.f32 %v3448, -1.0
    %v6276 = vmul.f32 %v3451, -1.0
    %v6277 = vmul.f32 %v3454, -1.0
    %v6278 = vmul.f32 %v3457, -1.0
    %v6279 = vmul.f32 %v3460, -1.0
    %v6280 = vmul.f32 %v3463, -1.0
    %v6281 = vmul.f32 %v3466, -1.0
    %v6282 = vmul.f32 %v3469, -1.0
    %v6283 = vmul.f32 %v3472, -1.0
    %v6284 = vmul.f32 %v3475, -1.0
    %v6285 = vmul.f32 %v3478, -1.0
    %v6286 = vmul.f32 %v3481, -1.0
    %v6287 = vmul.f32 %v3484, -1.0
    %v6288 = vmul.f32 %v3487, -1.0
    %v6289 = vmul.f32 %v3490, -1.0
    %v6290 = vmul.f32 %v3493, -1.0
    %v6291 = vmul.f32 %v3496, -1.0
    %v6292 = vmul.f32 %v3499, -1.0
    %v6293 = vmul.f32 %v3502, -1.0
    %v6294 = vmul.f32 %v3505, -1.0
    %v6295 = vmul.f32 %v3508, -1.0
    %v6296 = vmul.f32 %v3511, -1.0
    %v6297 = vmul.f32 %v3514, -1.0
    %v6298 = vmul.f32 %v3517, -1.0
    %v6299 = vmul.f32 %v3520, -1.0
    %v6300 = vmul.f32 %v3523, -1.0
    %v6301 = vmul.f32 %v3526, -1.0
    %v6302 = vmul.f32 %v3529, -1.0
    %v6303 = vmul.f32 %v3532, -1.0
    %v6304 = vmul.f32 %v3535, -1.0
    %v6305 = vmul.f32 %v3538, -1.0
    %v6306 = vmul.f32 %v3541, -1.0
    %v6307 = vmul.f32 %v3544, -1.0
    %v6308 = vmul.f32 %v3547, -1.0
    %v6309 = vmul.f32 %v3550, -1.0
    %v6310 = vmul.f32 %v3553, -1.0
    %v6311 = vmul.f32 %v3556, -1.0
    %v6312 = vmul.f32 %v3559, -1.0
    %v6313 = vmul.f32 %v3562, -1.0
    %v6314 = vmul.f32 %v3565, -1.0
    %v6315 = vmul.f32 %v3568, -1.0
    %v6316 = vmul.f32 %v3571, -1.0
    %v6317 = vmul.f32 %v3574, -1.0
    %v6318 = vmul.f32 %v3577, -1.0
    %v6319 = vmul.f32 %v3580, -1.0
    %v6320 = vmul.f32 %v3583, -1.0
    %v6321 = vmul.f32 %v3586, -1.0
    %v6322 = vmul.f32 %v3589, -1.0
    %v6323 = vmul.f32 %v3592, -1.0
    %v6324 = vmul.f32 %v3595, -1.0
    %v6325 = vmul.f32 %v3598, -1.0
    %v6326 = vmul.f32 %v3601, -1.0
    %v6327 = vmul.f32 %v3604, -1.0
    %v6328 = vmul.f32 %v3607, -1.0
    %v6329 = vmul.f32 %v3610, -1.0
    %v6330 = vmul.f32 %v3613, -1.0
    %v6331 = vmul.f32 %v3616, -1.0
    %v6332 = vmul.f32 %v3619, -1.0
    %v6333 = vmul.f32 %v3622, -1.0
    %v6334 = vmul.f32 %v3625, -1.0
    %v6335 = vmul.f32 %v3628, -1.0
    %v6336 = vmul.f32 %v3631, -1.0
    %v6337 = vmul.f32 %v3634, -1.0
    %v6338 = vmul.f32 %v3637, -1.0
    %v6339 = vmul.f32 %v3640, -1.0
    %v6340 = vmul.f32 %v3643, -1.0
    %v6341 = vmul.f32 %v3646, -1.0
    %v6342 = vmul.f32 %v3649, -1.0
    %v6343 = vmul.f32 %v3652, -1.0
    %v6344 = vmul.f32 %v3655, -1.0
    %v6345 = vmul.f32 %v3658, -1.0
    %v6346 = vmul.f32 %v3661, -1.0
    %v6347 = vmul.f32 %v3664, -1.0
    %v6348 = vmul.f32 %v3667, -1.0
    %v6349 = vmul.f32 %v3670, -1.0
    %v6350 = vmul.f32 %v3673, -1.0
    %v6351 = vmul.f32 %v3676, -1.0
    %v6352 = vmul.f32 %v3679, -1.0
    %v6353 = vmul.f32 %v3682, -1.0
    %v6354 = vmul.f32 %v3685, -1.0
    %v6355 = vmul.f32 %v3688, -1.0
    %v6356 = vmul.f32 %v3691, -1.0
    %v6357 = vmul.f32 %v3694, -1.0
    %v6358 = vmul.f32 %v3697, -1.0
    %v6359 = vmul.f32 %v3700, -1.0
    %v6360 = vmul.f32 %v3703, -1.0
    %v6361 = vmul.f32 %v3706, -1.0
    %v6362 = vmul.f32 %v3709, -1.0
    %v6363 = vmul.f32 %v3712, -1.0
    %v6364 = vmul.f32 %v3715, -1.0
    %v6365 = vmul.f32 %v3718, -1.0
    %v6366 = vmul.f32 %v3721, -1.0
    %v6367 = vmul.f32 %v3724, -1.0
    %v6368 = vmul.f32 %v3727, -1.0
    %v6369 = vmul.f32 %v3730, -1.0
    %v6370 = vmul.f32 %v3733, -1.0
    %v6371 = vmul.f32 %v3736, -1.0
    %v6372 = vmul.f32 %v3739, -1.0
    %v6373 = vrcp.pop 2.25
    %v6374 = vmul.f32 2.25, %v6373
    %v6375 = vsub.f32 1.0, %v6374
    %v6376 = vmul.f32 %v6373, %v6375
    %v6377 = vadd.f32 %v6373, %v6376
    %vm6378 = vweird.f32 %v6373
    %v6379 = vsel %vm6378, %v6373, %v6377
    %v6380 = vmul.f32 %v5861, %v6379
    %v6381 = vmul.f32 %v5862, %v6379
    %v6382 = vmul.f32 %v5863, %v6379
    %v6383 = vmul.f32 %v5864, %v6379
    %v6384 = vmul.f32 %v5865, %v6379
    %v6385 = vmul.f32 %v5866, %v6379
    %v6386 = vmul.f32 %v5867, %v6379
    %v6387 = vmul.f32 %v5868, %v6379
    %v6388 = vmul.f32 %v5869, %v6379
    %v6389 = vmul.f32 %v5870, %v6379
    %v6390 = vmul.f32 %v5871, %v6379
    %v6391 = vmul.f32 %v5872, %v6379
    %v6392 = vmul.f32 %v5873, %v6379
    %v6393 = vmul.f32 %v5874, %v6379
    %v6394 = vmul.f32 %v5875, %v6379
    %v6395 = vmul.f32 %v5876, %v6379
    %v6396 = vmul.f32 %v5877, %v6379
    %v6397 = vmul.f32 %v5878, %v6379
    %v6398 = vmul.f32 %v5879, %v6379
    %v6399 = vmul.f32 %v5880, %v6379
    %v6400 = vmul.f32 %v5881, %v6379
    %v6401 = vmul.f32 %v5882, %v6379
    %v6402 = vmul.f32 %v5883, %v6379
    %v6403 = vmul.f32 %v5884, %v6379
    %v6404 = vmul.f32 %v5885, %v6379
    %v6405 = vmul.f32 %v5886, %v6379
    %v6406 = vmul.f32 %v5887, %v6379
    %v6407 = vmul.f32 %v5888, %v6379
    %v6408 = vmul.f32 %v5889, %v6379
    %v6409 = vmul.f32 %v5890, %v6379
    %v6410 = vmul.f32 %v5891, %v6379
    %v6411 = vmul.f32 %v5892, %v6379
    %v6412 = vmul.f32 %v5893, %v6379
    %v6413 = vmul.f32 %v5894, %v6379
    %v6414 = vmul.f32 %v5895, %v6379
    %v6415 = vmul.f32 %v5896, %v6379
    %v6416 = vmul.f32 %v5897, %v6379
    %v6417 = vmul.f32 %v5898, %v6379
    %v6418 = vmul.f32 %v5899, %v6379
    %v6419 = vmul.f32 %v5900, %v6379
    %v6420 = vmul.f32 %v5901, %v6379
    %v6421 = vmul.f32 %v5902, %v6379
    %v6422 = vmul.f32 %v5903, %v6379
    %v6423 = vmul.f32 %v5904, %v6379
    %v6424 = vmul.f32 %v5905, %v6379
    %v6425 = vmul.f32 %v5906, %v6379
    %v6426 = vmul.f32 %v5907, %v6379
    %v6427 = vmul.f32 %v5908, %v6379
    %v6428 = vmul.f32 %v5909, %v6379
    %v6429 = vmul.f32 %v5910, %v6379
    %v6430 = vmul.f32 %v5911, %v6379
    %v6431 = vmul.f32 %v5912, %v6379
    %v6432 = vmul.f32 %v5913, %v6379
    %v6433 = vmul.f32 %v5914, %v6379
    %v6434 = vmul.f32 %v5915, %v6379
    %v6435 = vmul.f32 %v5916, %v6379
    %v6436 = vmul.f32 %v5917, %v6379
    %v6437 = vmul.f32 %v5918, %v6379
    %v6438 = vmul.f32 %v5919, %v6379
    %v6439 = vmul.f32 %v5920, %v6379
    %v6440 = vmul.f32 %v5921, %v6379
    %v6441 = vmul.f32 %v5922, %v6379
    %v6442 = vmul.f32 %v5923, %v6379
    %v6443 = vmul.f32 %v5924, %v6379
    %v6444 = vmul.f32 %v5925, %v6379
    %v6445 = vmul.f32 %v5926, %v6379
    %v6446 = vmul.f32 %v5927, %v6379
    %v6447 = vmul.f32 %v5928, %v6379
    %v6448 = vmul.f32 %v5929, %v6379
    %v6449 = vmul.f32 %v5930, %v6379
    %v6450 = vmul.f32 %v5931, %v6379
    %v6451 = vmul.f32 %v5932, %v6379
    %v6452 = vmul.f32 %v5933, %v6379
    %v6453 = vmul.f32 %v5934, %v6379
    %v6454 = vmul.f32 %v5935, %v6379
    %v6455 = vmul.f32 %v5936, %v6379
    %v6456 = vmul.f32 %v5937, %v6379
    %v6457 = vmul.f32 %v5938, %v6379
    %v6458 = vmul.f32 %v5939, %v6379
    %v6459 = vmul.f32 %v5940, %v6379
    %v6460 = vmul.f32 %v5941, %v6379
    %v6461 = vmul.f32 %v5942, %v6379
    %v6462 = vmul.f32 %v5943, %v6379
    %v6463 = vmul.f32 %v5944, %v6379
    %v6464 = vmul.f32 %v5945, %v6379
    %v6465 = vmul.f32 %v5946, %v6379
    %v6466 = vmul.f32 %v5947, %v6379
    %v6467 = vmul.f32 %v5948, %v6379
    %v6468 = vmul.f32 %v5949, %v6379
    %v6469 = vmul.f32 %v5950, %v6379
    %v6470 = vmul.f32 %v5951, %v6379
    %v6471 = vmul.f32 %v5952, %v6379
    %v6472 = vmul.f32 %v5953, %v6379
    %v6473 = vmul.f32 %v5954, %v6379
    %v6474 = vmul.f32 %v5955, %v6379
    %v6475 = vmul.f32 %v5956, %v6379
    %v6476 = vmul.f32 %v5957, %v6379
    %v6477 = vmul.f32 %v5958, %v6379
    %v6478 = vmul.f32 %v5959, %v6379
    %v6479 = vmul.f32 %v5960, %v6379
    %v6480 = vmul.f32 %v5961, %v6379
    %v6481 = vmul.f32 %v5962, %v6379
    %v6482 = vmul.f32 %v5963, %v6379
    %v6483 = vmul.f32 %v5964, %v6379
    %v6484 = vmul.f32 %v5965, %v6379
    %v6485 = vmul.f32 %v5966, %v6379
    %v6486 = vmul.f32 %v5967, %v6379
    %v6487 = vmul.f32 %v5968, %v6379
    %v6488 = vmul.f32 %v5969, %v6379
    %v6489 = vmul.f32 %v5970, %v6379
    %v6490 = vmul.f32 %v5971, %v6379
    %v6491 = vmul.f32 %v5972, %v6379
    %v6492 = vmul.f32 %v5973, %v6379
    %v6493 = vmul.f32 %v5974, %v6379
    %v6494 = vmul.f32 %v5975, %v6379
    %v6495 = vmul.f32 %v5976, %v6379
    %v6496 = vmul.f32 %v5977, %v6379
    %v6497 = vmul.f32 %v5978, %v6379
    %v6498 = vmul.f32 %v5979, %v6379
    %v6499 = vmul.f32 %v5980, %v6379
    %v6500 = vmul.f32 %v5981, %v6379
    %v6501 = vmul.f32 %v5982, %v6379
    %v6502 = vmul.f32 %v5983, %v6379
    %v6503 = vmul.f32 %v5984, %v6379
    %v6504 = vmul.f32 %v5985, %v6379
    %v6505 = vmul.f32 %v5986, %v6379
    %v6506 = vmul.f32 %v5987, %v6379
    %v6507 = vmul.f32 %v5988, %v6379
    %v6508 = vmul.f32 %v5989, %v6379
    %v6509 = vmul.f32 %v5990, %v6379
    %v6510 = vmul.f32 %v5991, %v6379
    %v6511 = vmul.f32 %v5992, %v6379
    %v6512 = vmul.f32 %v5993, %v6379
    %v6513 = vmul.f32 %v5994, %v6379
    %v6514 = vmul.f32 %v5995, %v6379
    %v6515 = vmul.f32 %v5996, %v6379
    %v6516 = vmul.f32 %v5997, %v6379
    %v6517 = vmul.f32 %v5998, %v6379
    %v6518 = vmul.f32 %v5999, %v6379
    %v6519 = vmul.f32 %v6000, %v6379
    %v6520 = vmul.f32 %v6001, %v6379
    %v6521 = vmul.f32 %v6002, %v6379
    %v6522 = vmul.f32 %v6003, %v6379
    %v6523 = vmul.f32 %v6004, %v6379
    %v6524 = vmul.f32 %v6005, %v6379
    %v6525 = vmul.f32 %v6006, %v6379
    %v6526 = vmul.f32 %v6007, %v6379
    %v6527 = vmul.f32 %v6008, %v6379
    %v6528 = vmul.f32 %v6009, %v6379
    %v6529 = vmul.f32 %v6010, %v6379
    %v6530 = vmul.f32 %v6011, %v6379
    %v6531 = vmul.f32 %v6012, %v6379
    %v6532 = vmul.f32 %v6013, %v6379
    %v6533 = vmul.f32 %v6014, %v6379
    %v6534 = vmul.f32 %v6015, %v6379
    %v6535 = vmul.f32 %v6016, %v6379
    %v6536 = vmul.f32 %v6017, %v6379
    %v6537 = vmul.f32 %v6018, %v6379
    %v6538 = vmul.f32 %v6019, %v6379
    %v6539 = vmul.f32 %v6020, %v6379
    %v6540 = vmul.f32 %v6021, %v6379
    %v6541 = vmul.f32 %v6022, %v6379
    %v6542 = vmul.f32 %v6023, %v6379
    %v6543 = vmul.f32 %v6024, %v6379
    %v6544 = vmul.f32 %v6025, %v6379
    %v6545 = vmul.f32 %v6026, %v6379
    %v6546 = vmul.f32 %v6027, %v6379
    %v6547 = vmul.f32 %v6028, %v6379
    %v6548 = vmul.f32 %v6029, %v6379
    %v6549 = vmul.f32 %v6030, %v6379
    %v6550 = vmul.f32 %v6031, %v6379
    %v6551 = vmul.f32 %v6032, %v6379
    %v6552 = vmul.f32 %v6033, %v6379
    %v6553 = vmul.f32 %v6034, %v6379
    %v6554 = vmul.f32 %v6035, %v6379
    %v6555 = vmul.f32 %v6036, %v6379
    %v6556 = vmul.f32 %v6037, %v6379
    %v6557 = vmul.f32 %v6038, %v6379
    %v6558 = vmul.f32 %v6039, %v6379
    %v6559 = vmul.f32 %v6040, %v6379
    %v6560 = vmul.f32 %v6041, %v6379
    %v6561 = vmul.f32 %v6042, %v6379
    %v6562 = vmul.f32 %v6043, %v6379
    %v6563 = vmul.f32 %v6044, %v6379
    %v6564 = vmul.f32 %v6045, %v6379
    %v6565 = vmul.f32 %v6046, %v6379
    %v6566 = vmul.f32 %v6047, %v6379
    %v6567 = vmul.f32 %v6048, %v6379
    %v6568 = vmul.f32 %v6049, %v6379
    %v6569 = vmul.f32 %v6050, %v6379
    %v6570 = vmul.f32 %v6051, %v6379
    %v6571 = vmul.f32 %v6052, %v6379
    %v6572 = vmul.f32 %v6053, %v6379
    %v6573 = vmul.f32 %v6054, %v6379
    %v6574 = vmul.f32 %v6055, %v6379
    %v6575 = vmul.f32 %v6056, %v6379
    %v6576 = vmul.f32 %v6057, %v6379
    %v6577 = vmul.f32 %v6058, %v6379
    %v6578 = vmul.f32 %v6059, %v6379
    %v6579 = vmul.f32 %v6060, %v6379
    %v6580 = vmul.f32 %v6061, %v6379
    %v6581 = vmul.f32 %v6062, %v6379
    %v6582 = vmul.f32 %v6063, %v6379
    %v6583 = vmul.f32 %v6064, %v6379
    %v6584 = vmul.f32 %v6065, %v6379
    %v6585 = vmul.f32 %v6066, %v6379
    %v6586 = vmul.f32 %v6067, %v6379
    %v6587 = vmul.f32 %v6068, %v6379
    %v6588 = vmul.f32 %v6069, %v6379
    %v6589 = vmul.f32 %v6070, %v6379
    %v6590 = vmul.f32 %v6071, %v6379
    %v6591 = vmul.f32 %v6072, %v6379
    %v6592 = vmul.f32 %v6073, %v6379
    %v6593 = vmul.f32 %v6074, %v6379
    %v6594 = vmul.f32 %v6075, %v6379
    %v6595 = vmul.f32 %v6076, %v6379
    %v6596 = vmul.f32 %v6077, %v6379
    %v6597 = vmul.f32 %v6078, %v6379
    %v6598 = vmul.f32 %v6079, %v6379
    %v6599 = vmul.f32 %v6080, %v6379
    %v6600 = vmul.f32 %v6081, %v6379
    %v6601 = vmul.f32 %v6082, %v6379
    %v6602 = vmul.f32 %v6083, %v6379
    %v6603 = vmul.f32 %v6084, %v6379
    %v6604 = vmul.f32 %v6085, %v6379
    %v6605 = vmul.f32 %v6086, %v6379
    %v6606 = vmul.f32 %v6087, %v6379
    %v6607 = vmul.f32 %v6088, %v6379
    %v6608 = vmul.f32 %v6089, %v6379
    %v6609 = vmul.f32 %v6090, %v6379
    %v6610 = vmul.f32 %v6091, %v6379
    %v6611 = vmul.f32 %v6092, %v6379
    %v6612 = vmul.f32 %v6093, %v6379
    %v6613 = vmul.f32 %v6094, %v6379
    %v6614 = vmul.f32 %v6095, %v6379
    %v6615 = vmul.f32 %v6096, %v6379
    %v6616 = vmul.f32 %v6097, %v6379
    %v6617 = vmul.f32 %v6098, %v6379
    %v6618 = vmul.f32 %v6099, %v6379
    %v6619 = vmul.f32 %v6100, %v6379
    %v6620 = vmul.f32 %v6101, %v6379
    %v6621 = vmul.f32 %v6102, %v6379
    %v6622 = vmul.f32 %v6103, %v6379
    %v6623 = vmul.f32 %v6104, %v6379
    %v6624 = vmul.f32 %v6105, %v6379
    %v6625 = vmul.f32 %v6106, %v6379
    %v6626 = vmul.f32 %v6107, %v6379
    %v6627 = vmul.f32 %v6108, %v6379
    %v6628 = vmul.f32 %v6109, %v6379
    %v6629 = vmul.f32 %v6110, %v6379
    %v6630 = vmul.f32 %v6111, %v6379
    %v6631 = vmul.f32 %v6112, %v6379
    %v6632 = vmul.f32 %v6113, %v6379
    %v6633 = vmul.f32 %v6114, %v6379
    %v6634 = vmul.f32 %v6115, %v6379
    %v6635 = vmul.f32 %v6116, %v6379
    %v6636 = vmul.f32 %v6117, %v6379
    %v6637 = vmul.f32 %v6118, %v6379
    %v6638 = vmul.f32 %v6119, %v6379
    %v6639 = vmul.f32 %v6120, %v6379
    %v6640 = vmul.f32 %v6121, %v6379
    %v6641 = vmul.f32 %v6122, %v6379
    %v6642 = vmul.f32 %v6123, %v6379
    %v6643 = vmul.f32 %v6124, %v6379
    %v6644 = vmul.f32 %v6125, %v6379
    %v6645 = vmul.f32 %v6126, %v6379
    %v6646 = vmul.f32 %v6127, %v6379
    %v6647 = vmul.f32 %v6128, %v6379
    %v6648 = vmul.f32 %v6129, %v6379
    %v6649 = vmul.f32 %v6130, %v6379
    %v6650 = vmul.f32 %v6131, %v6379
    %v6651 = vmul.f32 %v6132, %v6379
    %v6652 = vmul.f32 %v6133, %v6379
    %v6653 = vmul.f32 %v6134, %v6379
    %v6654 = vmul.f32 %v6135, %v6379
    %v6655 = vmul.f32 %v6136, %v6379
    %v6656 = vmul.f32 %v6137, %v6379
    %v6657 = vmul.f32 %v6138, %v6379
    %v6658 = vmul.f32 %v6139, %v6379
    %v6659 = vmul.f32 %v6140, %v6379
    %v6660 = vmul.f32 %v6141, %v6379
    %v6661 = vmul.f32 %v6142, %v6379
    %v6662 = vmul.f32 %v6143, %v6379
    %v6663 = vmul.f32 %v6144, %v6379
    %v6664 = vmul.f32 %v6145, %v6379
    %v6665 = vmul.f32 %v6146, %v6379
    %v6666 = vmul.f32 %v6147, %v6379
    %v6667 = vmul.f32 %v6148, %v6379
    %v6668 = vmul.f32 %v6149, %v6379
    %v6669 = vmul.f32 %v6150, %v6379
    %v6670 = vmul.f32 %v6151, %v6379
    %v6671 = vmul.f32 %v6152, %v6379
    %v6672 = vmul.f32 %v6153, %v6379
    %v6673 = vmul.f32 %v6154, %v6379
    %v6674 = vmul.f32 %v6155, %v6379
    %v6675 = vmul.f32 %v6156, %v6379
    %v6676 = vmul.f32 %v6157, %v6379
    %v6677 = vmul.f32 %v6158, %v6379
    %v6678 = vmul.f32 %v6159, %v6379
    %v6679 = vmul.f32 %v6160, %v6379
    %v6680 = vmul.f32 %v6161, %v6379
    %v6681 = vmul.f32 %v6162, %v6379
    %v6682 = vmul.f32 %v6163, %v6379
    %v6683 = vmul.f32 %v6164, %v6379
    %v6684 = vmul.f32 %v6165, %v6379
    %v6685 = vmul.f32 %v6166, %v6379
    %v6686 = vmul.f32 %v6167, %v6379
    %v6687 = vmul.f32 %v6168, %v6379
    %v6688 = vmul.f32 %v6169, %v6379
    %v6689 = vmul.f32 %v6170, %v6379
    %v6690 = vmul.f32 %v6171, %v6379
    %v6691 = vmul.f32 %v6172, %v6379
    %v6692 = vmul.f32 %v6173, %v6379
    %v6693 = vmul.f32 %v6174, %v6379
    %v6694 = vmul.f32 %v6175, %v6379
    %v6695 = vmul.f32 %v6176, %v6379
    %v6696 = vmul.f32 %v6177, %v6379
    %v6697 = vmul.f32 %v6178, %v6379
    %v6698 = vmul.f32 %v6179, %v6379
    %v6699 = vmul.f32 %v6180, %v6379
    %v6700 = vmul.f32 %v6181, %v6379
    %v6701 = vmul.f32 %v6182, %v6379
    %v6702 = vmul.f32 %v6183, %v6379
    %v6703 = vmul.f32 %v6184, %v6379
    %v6704 = vmul.f32 %v6185, %v6379
    %v6705 = vmul.f32 %v6186, %v6379
    %v6706 = vmul.f32 %v6187, %v6379
    %v6707 = vmul.f32 %v6188, %v6379
    %v6708 = vmul.f32 %v6189, %v6379
    %v6709 = vmul.f32 %v6190, %v6379
    %v6710 = vmul.f32 %v6191, %v6379
    %v6711 = vmul.f32 %v6192, %v6379
    %v6712 = vmul.f32 %v6193, %v6379
    %v6713 = vmul.f32 %v6194, %v6379
    %v6714 = vmul.f32 %v6195, %v6379
    %v6715 = vmul.f32 %v6196, %v6379
    %v6716 = vmul.f32 %v6197, %v6379
    %v6717 = vmul.f32 %v6198, %v6379
    %v6718 = vmul.f32 %v6199, %v6379
    %v6719 = vmul.f32 %v6200, %v6379
    %v6720 = vmul.f32 %v6201, %v6379
    %v6721 = vmul.f32 %v6202, %v6379
    %v6722 = vmul.f32 %v6203, %v6379
    %v6723 = vmul.f32 %v6204, %v6379
    %v6724 = vmul.f32 %v6205, %v6379
    %v6725 = vmul.f32 %v6206, %v6379
    %v6726 = vmul.f32 %v6207, %v6379
    %v6727 = vmul.f32 %v6208, %v6379
    %v6728 = vmul.f32 %v6209, %v6379
    %v6729 = vmul.f32 %v6210, %v6379
    %v6730 = vmul.f32 %v6211, %v6379
    %v6731 = vmul.f32 %v6212, %v6379
    %v6732 = vmul.f32 %v6213, %v6379
    %v6733 = vmul.f32 %v6214, %v6379
    %v6734 = vmul.f32 %v6215, %v6379
    %v6735 = vmul.f32 %v6216, %v6379
    %v6736 = vmul.f32 %v6217, %v6379
    %v6737 = vmul.f32 %v6218, %v6379
    %v6738 = vmul.f32 %v6219, %v6379
    %v6739 = vmul.f32 %v6220, %v6379
    %v6740 = vmul.f32 %v6221, %v6379
    %v6741 = vmul.f32 %v6222, %v6379
    %v6742 = vmul.f32 %v6223, %v6379
    %v6743 = vmul.f32 %v6224, %v6379
    %v6744 = vmul.f32 %v6225, %v6379
    %v6745 = vmul.f32 %v6226, %v6379
    %v6746 = vmul.f32 %v6227, %v6379
    %v6747 = vmul.f32 %v6228, %v6379
    %v6748 = vmul.f32 %v6229, %v6379
    %v6749 = vmul.f32 %v6230, %v6379
    %v6750 = vmul.f32 %v6231, %v6379
    %v6751 = vmul.f32 %v6232, %v6379
    %v6752 = vmul.f32 %v6233, %v6379
    %v6753 = vmul.f32 %v6234, %v6379
    %v6754 = vmul.f32 %v6235, %v6379
    %v6755 = vmul.f32 %v6236, %v6379
    %v6756 = vmul.f32 %v6237, %v6379
    %v6757 = vmul.f32 %v6238, %v6379
    %v6758 = vmul.f32 %v6239, %v6379
    %v6759 = vmul.f32 %v6240, %v6379
    %v6760 = vmul.f32 %v6241, %v6379
    %v6761 = vmul.f32 %v6242, %v6379
    %v6762 = vmul.f32 %v6243, %v6379
    %v6763 = vmul.f32 %v6244, %v6379
    %v6764 = vmul.f32 %v6245, %v6379
    %v6765 = vmul.f32 %v6246, %v6379
    %v6766 = vmul.f32 %v6247, %v6379
    %v6767 = vmul.f32 %v6248, %v6379
    %v6768 = vmul.f32 %v6249, %v6379
    %v6769 = vmul.f32 %v6250, %v6379
    %v6770 = vmul.f32 %v6251, %v6379
    %v6771 = vmul.f32 %v6252, %v6379
    %v6772 = vmul.f32 %v6253, %v6379
    %v6773 = vmul.f32 %v6254, %v6379
    %v6774 = vmul.f32 %v6255, %v6379
    %v6775 = vmul.f32 %v6256, %v6379
    %v6776 = vmul.f32 %v6257, %v6379
    %v6777 = vmul.f32 %v6258, %v6379
    %v6778 = vmul.f32 %v6259, %v6379
    %v6779 = vmul.f32 %v6260, %v6379
    %v6780 = vmul.f32 %v6261, %v6379
    %v6781 = vmul.f32 %v6262, %v6379
    %v6782 = vmul.f32 %v6263, %v6379
    %v6783 = vmul.f32 %v6264, %v6379
    %v6784 = vmul.f32 %v6265, %v6379
    %v6785 = vmul.f32 %v6266, %v6379
    %v6786 = vmul.f32 %v6267, %v6379
    %v6787 = vmul.f32 %v6268, %v6379
    %v6788 = vmul.f32 %v6269, %v6379
    %v6789 = vmul.f32 %v6270, %v6379
    %v6790 = vmul.f32 %v6271, %v6379
    %v6791 = vmul.f32 %v6272, %v6379
    %v6792 = vmul.f32 %v6273, %v6379
    %v6793 = vmul.f32 %v6274, %v6379
    %v6794 = vmul.f32 %v6275, %v6379
    %v6795 = vmul.f32 %v6276, %v6379
    %v6796 = vmul.f32 %v6277, %v6379
    %v6797 = vmul.f32 %v6278, %v6379
    %v6798 = vmul.f32 %v6279, %v6379
    %v6799 = vmul.f32 %v6280, %v6379
    %v6800 = vmul.f32 %v6281, %v6379
    %v6801 = vmul.f32 %v6282, %v6379
    %v6802 = vmul.f32 %v6283, %v6379
    %v6803 = vmul.f32 %v6284, %v6379
    %v6804 = vmul.f32 %v6285, %v6379
    %v6805 = vmul.f32 %v6286, %v6379
    %v6806 = vmul.f32 %v6287, %v6379
    %v6807 = vmul.f32 %v6288, %v6379
    %v6808 = vmul.f32 %v6289, %v6379
    %v6809 = vmul.f32 %v6290, %v6379
    %v6810 = vmul.f32 %v6291, %v6379
    %v6811 = vmul.f32 %v6292, %v6379
    %v6812 = vmul.f32 %v6293, %v6379
    %v6813 = vmul.f32 %v6294, %v6379
    %v6814 = vmul.f32 %v6295, %v6379
    %v6815 = vmul.f32 %v6296, %v6379
    %v6816 = vmul.f32 %v6297, %v6379
    %v6817 = vmul.f32 %v6298, %v6379
    %v6818 = vmul.f32 %v6299, %v6379
    %v6819 = vmul.f32 %v6300, %v6379
    %v6820 = vmul.f32 %v6301, %v6379
    %v6821 = vmul.f32 %v6302, %v6379
    %v6822 = vmul.f32 %v6303, %v6379
    %v6823 = vmul.f32 %v6304, %v6379
    %v6824 = vmul.f32 %v6305, %v6379
    %v6825 = vmul.f32 %v6306, %v6379
    %v6826 = vmul.f32 %v6307, %v6379
    %v6827 = vmul.f32 %v6308, %v6379
    %v6828 = vmul.f32 %v6309, %v6379
    %v6829 = vmul.f32 %v6310, %v6379
    %v6830 = vmul.f32 %v6311, %v6379
    %v6831 = vmul.f32 %v6312, %v6379
    %v6832 = vmul.f32 %v6313, %v6379
    %v6833 = vmul.f32 %v6314, %v6379
    %v6834 = vmul.f32 %v6315, %v6379
    %v6835 = vmul.f32 %v6316, %v6379
    %v6836 = vmul.f32 %v6317, %v6379
    %v6837 = vmul.f32 %v6318, %v6379
    %v6838 = vmul.f32 %v6319, %v6379
    %v6839 = vmul.f32 %v6320, %v6379
    %v6840 = vmul.f32 %v6321, %v6379
    %v6841 = vmul.f32 %v6322, %v6379
    %v6842 = vmul.f32 %v6323, %v6379
    %v6843 = vmul.f32 %v6324, %v6379
    %v6844 = vmul.f32 %v6325, %v6379
    %v6845 = vmul.f32 %v6326, %v6379
    %v6846 = vmul.f32 %v6327, %v6379
    %v6847 = vmul.f32 %v6328, %v6379
    %v6848 = vmul.f32 %v6329, %v6379
    %v6849 = vmul.f32 %v6330, %v6379
    %v6850 = vmul.f32 %v6331, %v6379
    %v6851 = vmul.f32 %v6332, %v6379
    %v6852 = vmul.f32 %v6333, %v6379
    %v6853 = vmul.f32 %v6334, %v6379
    %v6854 = vmul.f32 %v6335, %v6379
    %v6855 = vmul.f32 %v6336, %v6379
    %v6856 = vmul.f32 %v6337, %v6379
    %v6857 = vmul.f32 %v6338, %v6379
    %v6858 = vmul.f32 %v6339, %v6379
    %v6859 = vmul.f32 %v6340, %v6379
    %v6860 = vmul.f32 %v6341, %v6379
    %v6861 = vmul.f32 %v6342, %v6379
    %v6862 = vmul.f32 %v6343, %v6379
    %v6863 = vmul.f32 %v6344, %v6379
    %v6864 = vmul.f32 %v6345, %v6379
    %v6865 = vmul.f32 %v6346, %v6379
    %v6866 = vmul.f32 %v6347, %v6379
    %v6867 = vmul.f32 %v6348, %v6379
    %v6868 = vmul.f32 %v6349, %v6379
    %v6869 = vmul.f32 %v6350, %v6379
    %v6870 = vmul.f32 %v6351, %v6379
    %v6871 = vmul.f32 %v6352, %v6379
    %v6872 = vmul.f32 %v6353, %v6379
    %v6873 = vmul.f32 %v6354, %v6379
    %v6874 = vmul.f32 %v6355, %v6379
    %v6875 = vmul.f32 %v6356, %v6379
    %v6876 = vmul.f32 %v6357, %v6379
    %v6877 = vmul.f32 %v6358, %v6379
    %v6878 = vmul.f32 %v6359, %v6379
    %v6879 = vmul.f32 %v6360, %v6379
    %v6880 = vmul.f32 %v6361, %v6379
    %v6881 = vmul.f32 %v6362, %v6379
    %v6882 = vmul.f32 %v6363, %v6379
    %v6883 = vmul.f32 %v6364, %v6379
    %v6884 = vmul.f32 %v6365, %v6379
    %v6885 = vmul.f32 %v6366, %v6379
    %v6886 = vmul.f32 %v6367, %v6379
    %v6887 = vmul.f32 %v6368, %v6379
    %v6888 = vmul.f32 %v6369, %v6379
    %v6889 = vmul.f32 %v6370, %v6379
    %v6890 = vmul.f32 %v6371, %v6379
    %v6891 = vmul.f32 %v6372, %v6379
    %v6892 = vmul.f32 %v6380, 1.442695
    %v6893 = vpow.pop %v6892
    %v6894 = vmul.f32 %v6381, 1.442695
    %v6895 = vpow.pop %v6894
    %v6896 = vmul.f32 %v6382, 1.442695
    %v6897 = vpow.pop %v6896
    %v6898 = vmul.f32 %v6383, 1.442695
    %v6899 = vpow.pop %v6898
    %v6900 = vmul.f32 %v6384, 1.442695
    %v6901 = vpow.pop %v6900
    %v6902 = vmul.f32 %v6385, 1.442695
    %v6903 = vpow.pop %v6902
    %v6904 = vmul.f32 %v6386, 1.442695
    %v6905 = vpow.pop %v6904
    %v6906 = vmul.f32 %v6387, 1.442695
    %v6907 = vpow.pop %v6906
    %v6908 = vmul.f32 %v6388, 1.442695
    %v6909 = vpow.pop %v6908
    %v6910 = vmul.f32 %v6389, 1.442695
    %v6911 = vpow.pop %v6910
    %v6912 = vmul.f32 %v6390, 1.442695
    %v6913 = vpow.pop %v6912
    %v6914 = vmul.f32 %v6391, 1.442695
    %v6915 = vpow.pop %v6914
    %v6916 = vmul.f32 %v6392, 1.442695
    %v6917 = vpow.pop %v6916
    %v6918 = vmul.f32 %v6393, 1.442695
    %v6919 = vpow.pop %v6918
    %v6920 = vmul.f32 %v6394, 1.442695
    %v6921 = vpow.pop %v6920
    %v6922 = vmul.f32 %v6395, 1.442695
    %v6923 = vpow.pop %v6922
    %v6924 = vmul.f32 %v6396, 1.442695
    %v6925 = vpow.pop %v6924
    %v6926 = vmul.f32 %v6397, 1.442695
    %v6927 = vpow.pop %v6926
    %v6928 = vmul.f32 %v6398, 1.442695
    %v6929 = vpow.pop %v6928
    %v6930 = vmul.f32 %v6399, 1.442695
    %v6931 = vpow.pop %v6930
    %v6932 = vmul.f32 %v6400, 1.442695
    %v6933 = vpow.pop %v6932
    %v6934 = vmul.f32 %v6401, 1.442695
    %v6935 = vpow.pop %v6934
    %v6936 = vmul.f32 %v6402, 1.442695
    %v6937 = vpow.pop %v6936
    %v6938 = vmul.f32 %v6403, 1.442695
    %v6939 = vpow.pop %v6938
    %v6940 = vmul.f32 %v6404, 1.442695
    %v6941 = vpow.pop %v6940
    %v6942 = vmul.f32 %v6405, 1.442695
    %v6943 = vpow.pop %v6942
    %v6944 = vmul.f32 %v6406, 1.442695
    %v6945 = vpow.pop %v6944
    %v6946 = vmul.f32 %v6407, 1.442695
    %v6947 = vpow.pop %v6946
    %v6948 = vmul.f32 %v6408, 1.442695
    %v6949 = vpow.pop %v6948
    %v6950 = vmul.f32 %v6409, 1.442695
    %v6951 = vpow.pop %v6950
    %v6952 = vmul.f32 %v6410, 1.442695
    %v6953 = vpow.pop %v6952
    %v6954 = vmul.f32 %v6411, 1.442695
    %v6955 = vpow.pop %v6954
    %v6956 = vmul.f32 %v6412, 1.442695
    %v6957 = vpow.pop %v6956
    %v6958 = vmul.f32 %v6413, 1.442695
    %v6959 = vpow.pop %v6958
    %v6960 = vmul.f32 %v6414, 1.442695
    %v6961 = vpow.pop %v6960
    %v6962 = vmul.f32 %v6415, 1.442695
    %v6963 = vpow.pop %v6962
    %v6964 = vmul.f32 %v6416, 1.442695
    %v6965 = vpow.pop %v6964
    %v6966 = vmul.f32 %v6417, 1.442695
    %v6967 = vpow.pop %v6966
    %v6968 = vmul.f32 %v6418, 1.442695
    %v6969 = vpow.pop %v6968
    %v6970 = vmul.f32 %v6419, 1.442695
    %v6971 = vpow.pop %v6970
    %v6972 = vmul.f32 %v6420, 1.442695
    %v6973 = vpow.pop %v6972
    %v6974 = vmul.f32 %v6421, 1.442695
    %v6975 = vpow.pop %v6974
    %v6976 = vmul.f32 %v6422, 1.442695
    %v6977 = vpow.pop %v6976
    %v6978 = vmul.f32 %v6423, 1.442695
    %v6979 = vpow.pop %v6978
    %v6980 = vmul.f32 %v6424, 1.442695
    %v6981 = vpow.pop %v6980
    %v6982 = vmul.f32 %v6425, 1.442695
    %v6983 = vpow.pop %v6982
    %v6984 = vmul.f32 %v6426, 1.442695
    %v6985 = vpow.pop %v6984
    %v6986 = vmul.f32 %v6427, 1.442695
    %v6987 = vpow.pop %v6986
    %v6988 = vmul.f32 %v6428, 1.442695
    %v6989 = vpow.pop %v6988
    %v6990 = vmul.f32 %v6429, 1.442695
    %v6991 = vpow.pop %v6990
    %v6992 = vmul.f32 %v6430, 1.442695
    %v6993 = vpow.pop %v6992
    %v6994 = vmul.f32 %v6431, 1.442695
    %v6995 = vpow.pop %v6994
    %v6996 = vmul.f32 %v6432, 1.442695
    %v6997 = vpow.pop %v6996
    %v6998 = vmul.f32 %v6433, 1.442695
    %v6999 = vpow.pop %v6998
    %v7000 = vmul.f32 %v6434, 1.442695
    %v7001 = vpow.pop %v7000
    %v7002 = vmul.f32 %v6435, 1.442695
    %v7003 = vpow.pop %v7002
    %v7004 = vmul.f32 %v6436, 1.442695
    %v7005 = vpow.pop %v7004
    %v7006 = vmul.f32 %v6437, 1.442695
    %v7007 = vpow.pop %v7006
    %v7008 = vmul.f32 %v6438, 1.442695
    %v7009 = vpow.pop %v7008
    %v7010 = vmul.f32 %v6439, 1.442695
    %v7011 = vpow.pop %v7010
    %v7012 = vmul.f32 %v6440, 1.442695
    %v7013 = vpow.pop %v7012
    %v7014 = vmul.f32 %v6441, 1.442695
    %v7015 = vpow.pop %v7014
    %v7016 = vmul.f32 %v6442, 1.442695
    %v7017 = vpow.pop %v7016
    %v7018 = vmul.f32 %v6443, 1.442695
    %v7019 = vpow.pop %v7018
    %v7020 = vmul.f32 %v6444, 1.442695
    %v7021 = vpow.pop %v7020
    %v7022 = vmul.f32 %v6445, 1.442695
    %v7023 = vpow.pop %v7022
    %v7024 = vmul.f32 %v6446, 1.442695
    %v7025 = vpow.pop %v7024
    %v7026 = vmul.f32 %v6447, 1.442695
    %v7027 = vpow.pop %v7026
    %v7028 = vmul.f32 %v6448, 1.442695
    %v7029 = vpow.pop %v7028
    %v7030 = vmul.f32 %v6449, 1.442695
    %v7031 = vpow.pop %v7030
    %v7032 = vmul.f32 %v6450, 1.442695
    %v7033 = vpow.pop %v7032
    %v7034 = vmul.f32 %v6451, 1.442695
    %v7035 = vpow.pop %v7034
    %v7036 = vmul.f32 %v6452, 1.442695
    %v7037 = vpow.pop %v7036
    %v7038 = vmul.f32 %v6453, 1.442695
    %v7039 = vpow.pop %v7038
    %v7040 = vmul.f32 %v6454, 1.442695
    %v7041 = vpow.pop %v7040
    %v7042 = vmul.f32 %v6455, 1.442695
    %v7043 = vpow.pop %v7042
    %v7044 = vmul.f32 %v6456, 1.442695
    %v7045 = vpow.pop %v7044
    %v7046 = vmul.f32 %v6457, 1.442695
    %v7047 = vpow.pop %v7046
    %v7048 = vmul.f32 %v6458, 1.442695
    %v7049 = vpow.pop %v7048
    %v7050 = vmul.f32 %v6459, 1.442695
    %v7051 = vpow.pop %v7050
    %v7052 = vmul.f32 %v6460, 1.442695
    %v7053 = vpow.pop %v7052
    %v7054 = vmul.f32 %v6461, 1.442695
    %v7055 = vpow.pop %v7054
    %v7056 = vmul.f32 %v6462, 1.442695
    %v7057 = vpow.pop %v7056
    %v7058 = vmul.f32 %v6463, 1.442695
    %v7059 = vpow.pop %v7058
    %v7060 = vmul.f32 %v6464, 1.442695
    %v7061 = vpow.pop %v7060
    %v7062 = vmul.f32 %v6465, 1.442695
    %v7063 = vpow.pop %v7062
    %v7064 = vmul.f32 %v6466, 1.442695
    %v7065 = vpow.pop %v7064
    %v7066 = vmul.f32 %v6467, 1.442695
    %v7067 = vpow.pop %v7066
    %v7068 = vmul.f32 %v6468, 1.442695
    %v7069 = vpow.pop %v7068
    %v7070 = vmul.f32 %v6469, 1.442695
    %v7071 = vpow.pop %v7070
    %v7072 = vmul.f32 %v6470, 1.442695
    %v7073 = vpow.pop %v7072
    %v7074 = vmul.f32 %v6471, 1.442695
    %v7075 = vpow.pop %v7074
    %v7076 = vmul.f32 %v6472, 1.442695
    %v7077 = vpow.pop %v7076
    %v7078 = vmul.f32 %v6473, 1.442695
    %v7079 = vpow.pop %v7078
    %v7080 = vmul.f32 %v6474, 1.442695
    %v7081 = vpow.pop %v7080
    %v7082 = vmul.f32 %v6475, 1.442695
    %v7083 = vpow.pop %v7082
    %v7084 = vmul.f32 %v6476, 1.442695
    %v7085 = vpow.pop %v7084
    %v7086 = vmul.f32 %v6477, 1.442695
    %v7087 = vpow.pop %v7086
    %v7088 = vmul.f32 %v6478, 1.442695
    %v7089 = vpow.pop %v7088
    %v7090 = vmul.f32 %v6479, 1.442695
    %v7091 = vpow.pop %v7090
    %v7092 = vmul.f32 %v6480, 1.442695
    %v7093 = vpow.pop %v7092
    %v7094 = vmul.f32 %v6481, 1.442695
    %v7095 = vpow.pop %v7094
    %v7096 = vmul.f32 %v6482, 1.442695
    %v7097 = vpow.pop %v7096
    %v7098 = vmul.f32 %v6483, 1.442695
    %v7099 = vpow.pop %v7098
    %v7100 = vmul.f32 %v6484, 1.442695
    %v7101 = vpow.pop %v7100
    %v7102 = vmul.f32 %v6485, 1.442695
    %v7103 = vpow.pop %v7102
    %v7104 = vmul.f32 %v6486, 1.442695
    %v7105 = vpow.pop %v7104
    %v7106 = vmul.f32 %v6487, 1.442695
    %v7107 = vpow.pop %v7106
    %v7108 = vmul.f32 %v6488, 1.442695
    %v7109 = vpow.pop %v7108
    %v7110 = vmul.f32 %v6489, 1.442695
    %v7111 = vpow.pop %v7110
    %v7112 = vmul.f32 %v6490, 1.442695
    %v7113 = vpow.pop %v7112
    %v7114 = vmul.f32 %v6491, 1.442695
    %v7115 = vpow.pop %v7114
    %v7116 = vmul.f32 %v6492, 1.442695
    %v7117 = vpow.pop %v7116
    %v7118 = vmul.f32 %v6493, 1.442695
    %v7119 = vpow.pop %v7118
    %v7120 = vmul.f32 %v6494, 1.442695
    %v7121 = vpow.pop %v7120
    %v7122 = vmul.f32 %v6495, 1.442695
    %v7123 = vpow.pop %v7122
    %v7124 = vmul.f32 %v6496, 1.442695
    %v7125 = vpow.pop %v7124
    %v7126 = vmul.f32 %v6497, 1.442695
    %v7127 = vpow.pop %v7126
    %v7128 = vmul.f32 %v6498, 1.442695
    %v7129 = vpow.pop %v7128
    %v7130 = vmul.f32 %v6499, 1.442695
    %v7131 = vpow.pop %v7130
    %v7132 = vmul.f32 %v6500, 1.442695
    %v7133 = vpow.pop %v7132
    %v7134 = vmul.f32 %v6501, 1.442695
    %v7135 = vpow.pop %v7134
    %v7136 = vmul.f32 %v6502, 1.442695
    %v7137 = vpow.pop %v7136
    %v7138 = vmul.f32 %v6503, 1.442695
    %v7139 = vpow.pop %v7138
    %v7140 = vmul.f32 %v6504, 1.442695
    %v7141 = vpow.pop %v7140
    %v7142 = vmul.f32 %v6505, 1.442695
    %v7143 = vpow.pop %v7142
    %v7144 = vmul.f32 %v6506, 1.442695
    %v7145 = vpow.pop %v7144
    %v7146 = vmul.f32 %v6507, 1.442695
    %v7147 = vpow.pop %v7146
    %v7148 = vmul.f32 %v6508, 1.442695
    %v7149 = vpow.pop %v7148
    %v7150 = vmul.f32 %v6509, 1.442695
    %v7151 = vpow.pop %v7150
    %v7152 = vmul.f32 %v6510, 1.442695
    %v7153 = vpow.pop %v7152
    %v7154 = vmul.f32 %v6511, 1.442695
    %v7155 = vpow.pop %v7154
    %v7156 = vmul.f32 %v6512, 1.442695
    %v7157 = vpow.pop %v7156
    %v7158 = vmul.f32 %v6513, 1.442695
    %v7159 = vpow.pop %v7158
    %v7160 = vmul.f32 %v6514, 1.442695
    %v7161 = vpow.pop %v7160
    %v7162 = vmul.f32 %v6515, 1.442695
    %v7163 = vpow.pop %v7162
    %v7164 = vmul.f32 %v6516, 1.442695
    %v7165 = vpow.pop %v7164
    %v7166 = vmul.f32 %v6517, 1.442695
    %v7167 = vpow.pop %v7166
    %v7168 = vmul.f32 %v6518, 1.442695
    %v7169 = vpow.pop %v7168
    %v7170 = vmul.f32 %v6519, 1.442695
    %v7171 = vpow.pop %v7170
    %v7172 = vmul.f32 %v6520, 1.442695
    %v7173 = vpow.pop %v7172
    %v7174 = vmul.f32 %v6521, 1.442695
    %v7175 = vpow.pop %v7174
    %v7176 = vmul.f32 %v6522, 1.442695
    %v7177 = vpow.pop %v7176
    %v7178 = vmul.f32 %v6523, 1.442695
    %v7179 = vpow.pop %v7178
    %v7180 = vmul.f32 %v6524, 1.442695
    %v7181 = vpow.pop %v7180
    %v7182 = vmul.f32 %v6525, 1.442695
    %v7183 = vpow.pop %v7182
    %v7184 = vmul.f32 %v6526, 1.442695
    %v7185 = vpow.pop %v7184
    %v7186 = vmul.f32 %v6527, 1.442695
    %v7187 = vpow.pop %v7186
    %v7188 = vmul.f32 %v6528, 1.442695
    %v7189 = vpow.pop %v7188
    %v7190 = vmul.f32 %v6529, 1.442695
    %v7191 = vpow.pop %v7190
    %v7192 = vmul.f32 %v6530, 1.442695
    %v7193 = vpow.pop %v7192
    %v7194 = vmul.f32 %v6531, 1.442695
    %v7195 = vpow.pop %v7194
    %v7196 = vmul.f32 %v6532, 1.442695
    %v7197 = vpow.pop %v7196
    %v7198 = vmul.f32 %v6533, 1.442695
    %v7199 = vpow.pop %v7198
    %v7200 = vmul.f32 %v6534, 1.442695
    %v7201 = vpow.pop %v7200
    %v7202 = vmul.f32 %v6535, 1.442695
    %v7203 = vpow.pop %v7202
    %v7204 = vmul.f32 %v6536, 1.442695
    %v7205 = vpow.pop %v7204
    %v7206 = vmul.f32 %v6537, 1.442695
    %v7207 = vpow.pop %v7206
    %v7208 = vmul.f32 %v6538, 1.442695
    %v7209 = vpow.pop %v7208
    %v7210 = vmul.f32 %v6539, 1.442695
    %v7211 = vpow.pop %v7210
    %v7212 = vmul.f32 %v6540, 1.442695
    %v7213 = vpow.pop %v7212
    %v7214 = vmul.f32 %v6541, 1.442695
    %v7215 = vpow.pop %v7214
    %v7216 = vmul.f32 %v6542, 1.442695
    %v7217 = vpow.pop %v7216
    %v7218 = vmul.f32 %v6543, 1.442695
    %v7219 = vpow.pop %v7218
    %v7220 = vmul.f32 %v6544, 1.442695
    %v7221 = vpow.pop %v7220
    %v7222 = vmul.f32 %v6545, 1.442695
    %v7223 = vpow.pop %v7222
    %v7224 = vmul.f32 %v6546, 1.442695
    %v7225 = vpow.pop %v7224
    %v7226 = vmul.f32 %v6547, 1.442695
    %v7227 = vpow.pop %v7226
    %v7228 = vmul.f32 %v6548, 1.442695
    %v7229 = vpow.pop %v7228
    %v7230 = vmul.f32 %v6549, 1.442695
    %v7231 = vpow.pop %v7230
    %v7232 = vmul.f32 %v6550, 1.442695
    %v7233 = vpow.pop %v7232
    %v7234 = vmul.f32 %v6551, 1.442695
    %v7235 = vpow.pop %v7234
    %v7236 = vmul.f32 %v6552, 1.442695
    %v7237 = vpow.pop %v7236
    %v7238 = vmul.f32 %v6553, 1.442695
    %v7239 = vpow.pop %v7238
    %v7240 = vmul.f32 %v6554, 1.442695
    %v7241 = vpow.pop %v7240
    %v7242 = vmul.f32 %v6555, 1.442695
    %v7243 = vpow.pop %v7242
    %v7244 = vmul.f32 %v6556, 1.442695
    %v7245 = vpow.pop %v7244
    %v7246 = vmul.f32 %v6557, 1.442695
    %v7247 = vpow.pop %v7246
    %v7248 = vmul.f32 %v6558, 1.442695
    %v7249 = vpow.pop %v7248
    %v7250 = vmul.f32 %v6559, 1.442695
    %v7251 = vpow.pop %v7250
    %v7252 = vmul.f32 %v6560, 1.442695
    %v7253 = vpow.pop %v7252
    %v7254 = vmul.f32 %v6561, 1.442695
    %v7255 = vpow.pop %v7254
    %v7256 = vmul.f32 %v6562, 1.442695
    %v7257 = vpow.pop %v7256
    %v7258 = vmul.f32 %v6563, 1.442695
    %v7259 = vpow.pop %v7258
    %v7260 = vmul.f32 %v6564, 1.442695
    %v7261 = vpow.pop %v7260
    %v7262 = vmul.f32 %v6565, 1.442695
    %v7263 = vpow.pop %v7262
    %v7264 = vmul.f32 %v6566, 1.442695
    %v7265 = vpow.pop %v7264
    %v7266 = vmul.f32 %v6567, 1.442695
    %v7267 = vpow.pop %v7266
    %v7268 = vmul.f32 %v6568, 1.442695
    %v7269 = vpow.pop %v7268
    %v7270 = vmul.f32 %v6569, 1.442695
    %v7271 = vpow.pop %v7270
    %v7272 = vmul.f32 %v6570, 1.442695
    %v7273 = vpow.pop %v7272
    %v7274 = vmul.f32 %v6571, 1.442695
    %v7275 = vpow.pop %v7274
    %v7276 = vmul.f32 %v6572, 1.442695
    %v7277 = vpow.pop %v7276
    %v7278 = vmul.f32 %v6573, 1.442695
    %v7279 = vpow.pop %v7278
    %v7280 = vmul.f32 %v6574, 1.442695
    %v7281 = vpow.pop %v7280
    %v7282 = vmul.f32 %v6575, 1.442695
    %v7283 = vpow.pop %v7282
    %v7284 = vmul.f32 %v6576, 1.442695
    %v7285 = vpow.pop %v7284
    %v7286 = vmul.f32 %v6577, 1.442695
    %v7287 = vpow.pop %v7286
    %v7288 = vmul.f32 %v6578, 1.442695
    %v7289 = vpow.pop %v7288
    %v7290 = vmul.f32 %v6579, 1.442695
    %v7291 = vpow.pop %v7290
    %v7292 = vmul.f32 %v6580, 1.442695
    %v7293 = vpow.pop %v7292
    %v7294 = vmul.f32 %v6581, 1.442695
    %v7295 = vpow.pop %v7294
    %v7296 = vmul.f32 %v6582, 1.442695
    %v7297 = vpow.pop %v7296
    %v7298 = vmul.f32 %v6583, 1.442695
    %v7299 = vpow.pop %v7298
    %v7300 = vmul.f32 %v6584, 1.442695
    %v7301 = vpow.pop %v7300
    %v7302 = vmul.f32 %v6585, 1.442695
    %v7303 = vpow.pop %v7302
    %v7304 = vmul.f32 %v6586, 1.442695
    %v7305 = vpow.pop %v7304
    %v7306 = vmul.f32 %v6587, 1.442695
    %v7307 = vpow.pop %v7306
    %v7308 = vmul.f32 %v6588, 1.442695
    %v7309 = vpow.pop %v7308
    %v7310 = vmul.f32 %v6589, 1.442695
    %v7311 = vpow.pop %v7310
    %v7312 = vmul.f32 %v6590, 1.442695
    %v7313 = vpow.pop %v7312
    %v7314 = vmul.f32 %v6591, 1.442695
    %v7315 = vpow.pop %v7314
    %v7316 = vmul.f32 %v6592, 1.442695
    %v7317 = vpow.pop %v7316
    %v7318 = vmul.f32 %v6593, 1.442695
    %v7319 = vpow.pop %v7318
    %v7320 = vmul.f32 %v6594, 1.442695
    %v7321 = vpow.pop %v7320
    %v7322 = vmul.f32 %v6595, 1.442695
    %v7323 = vpow.pop %v7322
    %v7324 = vmul.f32 %v6596, 1.442695
    %v7325 = vpow.pop %v7324
    %v7326 = vmul.f32 %v6597, 1.442695
    %v7327 = vpow.pop %v7326
    %v7328 = vmul.f32 %v6598, 1.442695
    %v7329 = vpow.pop %v7328
    %v7330 = vmul.f32 %v6599, 1.442695
    %v7331 = vpow.pop %v7330
    %v7332 = vmul.f32 %v6600, 1.442695
    %v7333 = vpow.pop %v7332
    %v7334 = vmul.f32 %v6601, 1.442695
    %v7335 = vpow.pop %v7334
    %v7336 = vmul.f32 %v6602, 1.442695
    %v7337 = vpow.pop %v7336
    %v7338 = vmul.f32 %v6603, 1.442695
    %v7339 = vpow.pop %v7338
    %v7340 = vmul.f32 %v6604, 1.442695
    %v7341 = vpow.pop %v7340
    %v7342 = vmul.f32 %v6605, 1.442695
    %v7343 = vpow.pop %v7342
    %v7344 = vmul.f32 %v6606, 1.442695
    %v7345 = vpow.pop %v7344
    %v7346 = vmul.f32 %v6607, 1.442695
    %v7347 = vpow.pop %v7346
    %v7348 = vmul.f32 %v6608, 1.442695
    %v7349 = vpow.pop %v7348
    %v7350 = vmul.f32 %v6609, 1.442695
    %v7351 = vpow.pop %v7350
    %v7352 = vmul.f32 %v6610, 1.442695
    %v7353 = vpow.pop %v7352
    %v7354 = vmul.f32 %v6611, 1.442695
    %v7355 = vpow.pop %v7354
    %v7356 = vmul.f32 %v6612, 1.442695
    %v7357 = vpow.pop %v7356
    %v7358 = vmul.f32 %v6613, 1.442695
    %v7359 = vpow.pop %v7358
    %v7360 = vmul.f32 %v6614, 1.442695
    %v7361 = vpow.pop %v7360
    %v7362 = vmul.f32 %v6615, 1.442695
    %v7363 = vpow.pop %v7362
    %v7364 = vmul.f32 %v6616, 1.442695
    %v7365 = vpow.pop %v7364
    %v7366 = vmul.f32 %v6617, 1.442695
    %v7367 = vpow.pop %v7366
    %v7368 = vmul.f32 %v6618, 1.442695
    %v7369 = vpow.pop %v7368
    %v7370 = vmul.f32 %v6619, 1.442695
    %v7371 = vpow.pop %v7370
    %v7372 = vmul.f32 %v6620, 1.442695
    %v7373 = vpow.pop %v7372
    %v7374 = vmul.f32 %v6621, 1.442695
    %v7375 = vpow.pop %v7374
    %v7376 = vmul.f32 %v6622, 1.442695
    %v7377 = vpow.pop %v7376
    %v7378 = vmul.f32 %v6623, 1.442695
    %v7379 = vpow.pop %v7378
    %v7380 = vmul.f32 %v6624, 1.442695
    %v7381 = vpow.pop %v7380
    %v7382 = vmul.f32 %v6625, 1.442695
    %v7383 = vpow.pop %v7382
    %v7384 = vmul.f32 %v6626, 1.442695
    %v7385 = vpow.pop %v7384
    %v7386 = vmul.f32 %v6627, 1.442695
    %v7387 = vpow.pop %v7386
    %v7388 = vmul.f32 %v6628, 1.442695
    %v7389 = vpow.pop %v7388
    %v7390 = vmul.f32 %v6629, 1.442695
    %v7391 = vpow.pop %v7390
    %v7392 = vmul.f32 %v6630, 1.442695
    %v7393 = vpow.pop %v7392
    %v7394 = vmul.f32 %v6631, 1.442695
    %v7395 = vpow.pop %v7394
    %v7396 = vmul.f32 %v6632, 1.442695
    %v7397 = vpow.pop %v7396
    %v7398 = vmul.f32 %v6633, 1.442695
    %v7399 = vpow.pop %v7398
    %v7400 = vmul.f32 %v6634, 1.442695
    %v7401 = vpow.pop %v7400
    %v7402 = vmul.f32 %v6635, 1.442695
    %v7403 = vpow.pop %v7402
    %v7404 = vmul.f32 %v6636, 1.442695
    %v7405 = vpow.pop %v7404
    %v7406 = vmul.f32 %v6637, 1.442695
    %v7407 = vpow.pop %v7406
    %v7408 = vmul.f32 %v6638, 1.442695
    %v7409 = vpow.pop %v7408
    %v7410 = vmul.f32 %v6639, 1.442695
    %v7411 = vpow.pop %v7410
    %v7412 = vmul.f32 %v6640, 1.442695
    %v7413 = vpow.pop %v7412
    %v7414 = vmul.f32 %v6641, 1.442695
    %v7415 = vpow.pop %v7414
    %v7416 = vmul.f32 %v6642, 1.442695
    %v7417 = vpow.pop %v7416
    %v7418 = vmul.f32 %v6643, 1.442695
    %v7419 = vpow.pop %v7418
    %v7420 = vmul.f32 %v6644, 1.442695
    %v7421 = vpow.pop %v7420
    %v7422 = vmul.f32 %v6645, 1.442695
    %v7423 = vpow.pop %v7422
    %v7424 = vmul.f32 %v6646, 1.442695
    %v7425 = vpow.pop %v7424
    %v7426 = vmul.f32 %v6647, 1.442695
    %v7427 = vpow.pop %v7426
    %v7428 = vmul.f32 %v6648, 1.442695
    %v7429 = vpow.pop %v7428
    %v7430 = vmul.f32 %v6649, 1.442695
    %v7431 = vpow.pop %v7430
    %v7432 = vmul.f32 %v6650, 1.442695
    %v7433 = vpow.pop %v7432
    %v7434 = vmul.f32 %v6651, 1.442695
    %v7435 = vpow.pop %v7434
    %v7436 = vmul.f32 %v6652, 1.442695
    %v7437 = vpow.pop %v7436
    %v7438 = vmul.f32 %v6653, 1.442695
    %v7439 = vpow.pop %v7438
    %v7440 = vmul.f32 %v6654, 1.442695
    %v7441 = vpow.pop %v7440
    %v7442 = vmul.f32 %v6655, 1.442695
    %v7443 = vpow.pop %v7442
    %v7444 = vmul.f32 %v6656, 1.442695
    %v7445 = vpow.pop %v7444
    %v7446 = vmul.f32 %v6657, 1.442695
    %v7447 = vpow.pop %v7446
    %v7448 = vmul.f32 %v6658, 1.442695
    %v7449 = vpow.pop %v7448
    %v7450 = vmul.f32 %v6659, 1.442695
    %v7451 = vpow.pop %v7450
    %v7452 = vmul.f32 %v6660, 1.442695
    %v7453 = vpow.pop %v7452
    %v7454 = vmul.f32 %v6661, 1.442695
    %v7455 = vpow.pop %v7454
    %v7456 = vmul.f32 %v6662, 1.442695
    %v7457 = vpow.pop %v7456
    %v7458 = vmul.f32 %v6663, 1.442695
    %v7459 = vpow.pop %v7458
    %v7460 = vmul.f32 %v6664, 1.442695
    %v7461 = vpow.pop %v7460
    %v7462 = vmul.f32 %v6665, 1.442695
    %v7463 = vpow.pop %v7462
    %v7464 = vmul.f32 %v6666, 1.442695
    %v7465 = vpow.pop %v7464
    %v7466 = vmul.f32 %v6667, 1.442695
    %v7467 = vpow.pop %v7466
    %v7468 = vmul.f32 %v6668, 1.442695
    %v7469 = vpow.pop %v7468
    %v7470 = vmul.f32 %v6669, 1.442695
    %v7471 = vpow.pop %v7470
    %v7472 = vmul.f32 %v6670, 1.442695
    %v7473 = vpow.pop %v7472
    %v7474 = vmul.f32 %v6671, 1.442695
    %v7475 = vpow.pop %v7474
    %v7476 = vmul.f32 %v6672, 1.442695
    %v7477 = vpow.pop %v7476
    %v7478 = vmul.f32 %v6673, 1.442695
    %v7479 = vpow.pop %v7478
    %v7480 = vmul.f32 %v6674, 1.442695
    %v7481 = vpow.pop %v7480
    %v7482 = vmul.f32 %v6675, 1.442695
    %v7483 = vpow.pop %v7482
    %v7484 = vmul.f32 %v6676, 1.442695
    %v7485 = vpow.pop %v7484
    %v7486 = vmul.f32 %v6677, 1.442695
    %v7487 = vpow.pop %v7486
    %v7488 = vmul.f32 %v6678, 1.442695
    %v7489 = vpow.pop %v7488
    %v7490 = vmul.f32 %v6679, 1.442695
    %v7491 = vpow.pop %v7490
    %v7492 = vmul.f32 %v6680, 1.442695
    %v7493 = vpow.pop %v7492
    %v7494 = vmul.f32 %v6681, 1.442695
    %v7495 = vpow.pop %v7494
    %v7496 = vmul.f32 %v6682, 1.442695
    %v7497 = vpow.pop %v7496
    %v7498 = vmul.f32 %v6683, 1.442695
    %v7499 = vpow.pop %v7498
    %v7500 = vmul.f32 %v6684, 1.442695
    %v7501 = vpow.pop %v7500
    %v7502 = vmul.f32 %v6685, 1.442695
    %v7503 = vpow.pop %v7502
    %v7504 = vmul.f32 %v6686, 1.442695
    %v7505 = vpow.pop %v7504
    %v7506 = vmul.f32 %v6687, 1.442695
    %v7507 = vpow.pop %v7506
    %v7508 = vmul.f32 %v6688, 1.442695
    %v7509 = vpow.pop %v7508
    %v7510 = vmul.f32 %v6689, 1.442695
    %v7511 = vpow.pop %v7510
    %v7512 = vmul.f32 %v6690, 1.442695
    %v7513 = vpow.pop %v7512
    %v7514 = vmul.f32 %v6691, 1.442695
    %v7515 = vpow.pop %v7514
    %v7516 = vmul.f32 %v6692, 1.442695
    %v7517 = vpow.pop %v7516
    %v7518 = vmul.f32 %v6693, 1.442695
    %v7519 = vpow.pop %v7518
    %v7520 = vmul.f32 %v6694, 1.442695
    %v7521 = vpow.pop %v7520
    %v7522 = vmul.f32 %v6695, 1.442695
    %v7523 = vpow.pop %v7522
    %v7524 = vmul.f32 %v6696, 1.442695
    %v7525 = vpow.pop %v7524
    %v7526 = vmul.f32 %v6697, 1.442695
    %v7527 = vpow.pop %v7526
    %v7528 = vmul.f32 %v6698, 1.442695
    %v7529 = vpow.pop %v7528
    %v7530 = vmul.f32 %v6699, 1.442695
    %v7531 = vpow.pop %v7530
    %v7532 = vmul.f32 %v6700, 1.442695
    %v7533 = vpow.pop %v7532
    %v7534 = vmul.f32 %v6701, 1.442695
    %v7535 = vpow.pop %v7534
    %v7536 = vmul.f32 %v6702, 1.442695
    %v7537 = vpow.pop %v7536
    %v7538 = vmul.f32 %v6703, 1.442695
    %v7539 = vpow.pop %v7538
    %v7540 = vmul.f32 %v6704, 1.442695
    %v7541 = vpow.pop %v7540
    %v7542 = vmul.f32 %v6705, 1.442695
    %v7543 = vpow.pop %v7542
    %v7544 = vmul.f32 %v6706, 1.442695
    %v7545 = vpow.pop %v7544
    %v7546 = vmul.f32 %v6707, 1.442695
    %v7547 = vpow.pop %v7546
    %v7548 = vmul.f32 %v6708, 1.442695
    %v7549 = vpow.pop %v7548
    %v7550 = vmul.f32 %v6709, 1.442695
    %v7551 = vpow.pop %v7550
    %v7552 = vmul.f32 %v6710, 1.442695
    %v7553 = vpow.pop %v7552
    %v7554 = vmul.f32 %v6711, 1.442695
    %v7555 = vpow.pop %v7554
    %v7556 = vmul.f32 %v6712, 1.442695
    %v7557 = vpow.pop %v7556
    %v7558 = vmul.f32 %v6713, 1.442695
    %v7559 = vpow.pop %v7558
    %v7560 = vmul.f32 %v6714, 1.442695
    %v7561 = vpow.pop %v7560
    %v7562 = vmul.f32 %v6715, 1.442695
    %v7563 = vpow.pop %v7562
    %v7564 = vmul.f32 %v6716, 1.442695
    %v7565 = vpow.pop %v7564
    %v7566 = vmul.f32 %v6717, 1.442695
    %v7567 = vpow.pop %v7566
    %v7568 = vmul.f32 %v6718, 1.442695
    %v7569 = vpow.pop %v7568
    %v7570 = vmul.f32 %v6719, 1.442695
    %v7571 = vpow.pop %v7570
    %v7572 = vmul.f32 %v6720, 1.442695
    %v7573 = vpow.pop %v7572
    %v7574 = vmul.f32 %v6721, 1.442695
    %v7575 = vpow.pop %v7574
    %v7576 = vmul.f32 %v6722, 1.442695
    %v7577 = vpow.pop %v7576
    %v7578 = vmul.f32 %v6723, 1.442695
    %v7579 = vpow.pop %v7578
    %v7580 = vmul.f32 %v6724, 1.442695
    %v7581 = vpow.pop %v7580
    %v7582 = vmul.f32 %v6725, 1.442695
    %v7583 = vpow.pop %v7582
    %v7584 = vmul.f32 %v6726, 1.442695
    %v7585 = vpow.pop %v7584
    %v7586 = vmul.f32 %v6727, 1.442695
    %v7587 = vpow.pop %v7586
    %v7588 = vmul.f32 %v6728, 1.442695
    %v7589 = vpow.pop %v7588
    %v7590 = vmul.f32 %v6729, 1.442695
    %v7591 = vpow.pop %v7590
    %v7592 = vmul.f32 %v6730, 1.442695
    %v7593 = vpow.pop %v7592
    %v7594 = vmul.f32 %v6731, 1.442695
    %v7595 = vpow.pop %v7594
    %v7596 = vmul.f32 %v6732, 1.442695
    %v7597 = vpow.pop %v7596
    %v7598 = vmul.f32 %v6733, 1.442695
    %v7599 = vpow.pop %v7598
    %v7600 = vmul.f32 %v6734, 1.442695
    %v7601 = vpow.pop %v7600
    %v7602 = vmul.f32 %v6735, 1.442695
    %v7603 = vpow.pop %v7602
    %v7604 = vmul.f32 %v6736, 1.442695
    %v7605 = vpow.pop %v7604
    %v7606 = vmul.f32 %v6737, 1.442695
    %v7607 = vpow.pop %v7606
    %v7608 = vmul.f32 %v6738, 1.442695
    %v7609 = vpow.pop %v7608
    %v7610 = vmul.f32 %v6739, 1.442695
    %v7611 = vpow.pop %v7610
    %v7612 = vmul.f32 %v6740, 1.442695
    %v7613 = vpow.pop %v7612
    %v7614 = vmul.f32 %v6741, 1.442695
    %v7615 = vpow.pop %v7614
    %v7616 = vmul.f32 %v6742, 1.442695
    %v7617 = vpow.pop %v7616
    %v7618 = vmul.f32 %v6743, 1.442695
    %v7619 = vpow.pop %v7618
    %v7620 = vmul.f32 %v6744, 1.442695
    %v7621 = vpow.pop %v7620
    %v7622 = vmul.f32 %v6745, 1.442695
    %v7623 = vpow.pop %v7622
    %v7624 = vmul.f32 %v6746, 1.442695
    %v7625 = vpow.pop %v7624
    %v7626 = vmul.f32 %v6747, 1.442695
    %v7627 = vpow.pop %v7626
    %v7628 = vmul.f32 %v6748, 1.442695
    %v7629 = vpow.pop %v7628
    %v7630 = vmul.f32 %v6749, 1.442695
    %v7631 = vpow.pop %v7630
    %v7632 = vmul.f32 %v6750, 1.442695
    %v7633 = vpow.pop %v7632
    %v7634 = vmul.f32 %v6751, 1.442695
    %v7635 = vpow.pop %v7634
    %v7636 = vmul.f32 %v6752, 1.442695
    %v7637 = vpow.pop %v7636
    %v7638 = vmul.f32 %v6753, 1.442695
    %v7639 = vpow.pop %v7638
    %v7640 = vmul.f32 %v6754, 1.442695
    %v7641 = vpow.pop %v7640
    %v7642 = vmul.f32 %v6755, 1.442695
    %v7643 = vpow.pop %v7642
    %v7644 = vmul.f32 %v6756, 1.442695
    %v7645 = vpow.pop %v7644
    %v7646 = vmul.f32 %v6757, 1.442695
    %v7647 = vpow.pop %v7646
    %v7648 = vmul.f32 %v6758, 1.442695
    %v7649 = vpow.pop %v7648
    %v7650 = vmul.f32 %v6759, 1.442695
    %v7651 = vpow.pop %v7650
    %v7652 = vmul.f32 %v6760, 1.442695
    %v7653 = vpow.pop %v7652
    %v7654 = vmul.f32 %v6761, 1.442695
    %v7655 = vpow.pop %v7654
    %v7656 = vmul.f32 %v6762, 1.442695
    %v7657 = vpow.pop %v7656
    %v7658 = vmul.f32 %v6763, 1.442695
    %v7659 = vpow.pop %v7658
    %v7660 = vmul.f32 %v6764, 1.442695
    %v7661 = vpow.pop %v7660
    %v7662 = vmul.f32 %v6765, 1.442695
    %v7663 = vpow.pop %v7662
    %v7664 = vmul.f32 %v6766, 1.442695
    %v7665 = vpow.pop %v7664
    %v7666 = vmul.f32 %v6767, 1.442695
    %v7667 = vpow.pop %v7666
    %v7668 = vmul.f32 %v6768, 1.442695
    %v7669 = vpow.pop %v7668
    %v7670 = vmul.f32 %v6769, 1.442695
    %v7671 = vpow.pop %v7670
    %v7672 = vmul.f32 %v6770, 1.442695
    %v7673 = vpow.pop %v7672
    %v7674 = vmul.f32 %v6771, 1.442695
    %v7675 = vpow.pop %v7674
    %v7676 = vmul.f32 %v6772, 1.442695
    %v7677 = vpow.pop %v7676
    %v7678 = vmul.f32 %v6773, 1.442695
    %v7679 = vpow.pop %v7678
    %v7680 = vmul.f32 %v6774, 1.442695
    %v7681 = vpow.pop %v7680
    %v7682 = vmul.f32 %v6775, 1.442695
    %v7683 = vpow.pop %v7682
    %v7684 = vmul.f32 %v6776, 1.442695
    %v7685 = vpow.pop %v7684
    %v7686 = vmul.f32 %v6777, 1.442695
    %v7687 = vpow.pop %v7686
    %v7688 = vmul.f32 %v6778, 1.442695
    %v7689 = vpow.pop %v7688
    %v7690 = vmul.f32 %v6779, 1.442695
    %v7691 = vpow.pop %v7690
    %v7692 = vmul.f32 %v6780, 1.442695
    %v7693 = vpow.pop %v7692
    %v7694 = vmul.f32 %v6781, 1.442695
    %v7695 = vpow.pop %v7694
    %v7696 = vmul.f32 %v6782, 1.442695
    %v7697 = vpow.pop %v7696
    %v7698 = vmul.f32 %v6783, 1.442695
    %v7699 = vpow.pop %v7698
    %v7700 = vmul.f32 %v6784, 1.442695
    %v7701 = vpow.pop %v7700
    %v7702 = vmul.f32 %v6785, 1.442695
    %v7703 = vpow.pop %v7702
    %v7704 = vmul.f32 %v6786, 1.442695
    %v7705 = vpow.pop %v7704
    %v7706 = vmul.f32 %v6787, 1.442695
    %v7707 = vpow.pop %v7706
    %v7708 = vmul.f32 %v6788, 1.442695
    %v7709 = vpow.pop %v7708
    %v7710 = vmul.f32 %v6789, 1.442695
    %v7711 = vpow.pop %v7710
    %v7712 = vmul.f32 %v6790, 1.442695
    %v7713 = vpow.pop %v7712
    %v7714 = vmul.f32 %v6791, 1.442695
    %v7715 = vpow.pop %v7714
    %v7716 = vmul.f32 %v6792, 1.442695
    %v7717 = vpow.pop %v7716
    %v7718 = vmul.f32 %v6793, 1.442695
    %v7719 = vpow.pop %v7718
    %v7720 = vmul.f32 %v6794, 1.442695
    %v7721 = vpow.pop %v7720
    %v7722 = vmul.f32 %v6795, 1.442695
    %v7723 = vpow.pop %v7722
    %v7724 = vmul.f32 %v6796, 1.442695
    %v7725 = vpow.pop %v7724
    %v7726 = vmul.f32 %v6797, 1.442695
    %v7727 = vpow.pop %v7726
    %v7728 = vmul.f32 %v6798, 1.442695
    %v7729 = vpow.pop %v7728
    %v7730 = vmul.f32 %v6799, 1.442695
    %v7731 = vpow.pop %v7730
    %v7732 = vmul.f32 %v6800, 1.442695
    %v7733 = vpow.pop %v7732
    %v7734 = vmul.f32 %v6801, 1.442695
    %v7735 = vpow.pop %v7734
    %v7736 = vmul.f32 %v6802, 1.442695
    %v7737 = vpow.pop %v7736
    %v7738 = vmul.f32 %v6803, 1.442695
    %v7739 = vpow.pop %v7738
    %v7740 = vmul.f32 %v6804, 1.442695
    %v7741 = vpow.pop %v7740
    %v7742 = vmul.f32 %v6805, 1.442695
    %v7743 = vpow.pop %v7742
    %v7744 = vmul.f32 %v6806, 1.442695
    %v7745 = vpow.pop %v7744
    %v7746 = vmul.f32 %v6807, 1.442695
    %v7747 = vpow.pop %v7746
    %v7748 = vmul.f32 %v6808, 1.442695
    %v7749 = vpow.pop %v7748
    %v7750 = vmul.f32 %v6809, 1.442695
    %v7751 = vpow.pop %v7750
    %v7752 = vmul.f32 %v6810, 1.442695
    %v7753 = vpow.pop %v7752
    %v7754 = vmul.f32 %v6811, 1.442695
    %v7755 = vpow.pop %v7754
    %v7756 = vmul.f32 %v6812, 1.442695
    %v7757 = vpow.pop %v7756
    %v7758 = vmul.f32 %v6813, 1.442695
    %v7759 = vpow.pop %v7758
    %v7760 = vmul.f32 %v6814, 1.442695
    %v7761 = vpow.pop %v7760
    %v7762 = vmul.f32 %v6815, 1.442695
    %v7763 = vpow.pop %v7762
    %v7764 = vmul.f32 %v6816, 1.442695
    %v7765 = vpow.pop %v7764
    %v7766 = vmul.f32 %v6817, 1.442695
    %v7767 = vpow.pop %v7766
    %v7768 = vmul.f32 %v6818, 1.442695
    %v7769 = vpow.pop %v7768
    %v7770 = vmul.f32 %v6819, 1.442695
    %v7771 = vpow.pop %v7770
    %v7772 = vmul.f32 %v6820, 1.442695
    %v7773 = vpow.pop %v7772
    %v7774 = vmul.f32 %v6821, 1.442695
    %v7775 = vpow.pop %v7774
    %v7776 = vmul.f32 %v6822, 1.442695
    %v7777 = vpow.pop %v7776
    %v7778 = vmul.f32 %v6823, 1.442695
    %v7779 = vpow.pop %v7778
    %v7780 = vmul.f32 %v6824, 1.442695
    %v7781 = vpow.pop %v7780
    %v7782 = vmul.f32 %v6825, 1.442695
    %v7783 = vpow.pop %v7782
    %v7784 = vmul.f32 %v6826, 1.442695
    %v7785 = vpow.pop %v7784
    %v7786 = vmul.f32 %v6827, 1.442695
    %v7787 = vpow.pop %v7786
    %v7788 = vmul.f32 %v6828, 1.442695
    %v7789 = vpow.pop %v7788
    %v7790 = vmul.f32 %v6829, 1.442695
    %v7791 = vpow.pop %v7790
    %v7792 = vmul.f32 %v6830, 1.442695
    %v7793 = vpow.pop %v7792
    %v7794 = vmul.f32 %v6831, 1.442695
    %v7795 = vpow.pop %v7794
    %v7796 = vmul.f32 %v6832, 1.442695
    %v7797 = vpow.pop %v7796
    %v7798 = vmul.f32 %v6833, 1.442695
    %v7799 = vpow.pop %v7798
    %v7800 = vmul.f32 %v6834, 1.442695
    %v7801 = vpow.pop %v7800
    %v7802 = vmul.f32 %v6835, 1.442695
    %v7803 = vpow.pop %v7802
    %v7804 = vmul.f32 %v6836, 1.442695
    %v7805 = vpow.pop %v7804
    %v7806 = vmul.f32 %v6837, 1.442695
    %v7807 = vpow.pop %v7806
    %v7808 = vmul.f32 %v6838, 1.442695
    %v7809 = vpow.pop %v7808
    %v7810 = vmul.f32 %v6839, 1.442695
    %v7811 = vpow.pop %v7810
    %v7812 = vmul.f32 %v6840, 1.442695
    %v7813 = vpow.pop %v7812
    %v7814 = vmul.f32 %v6841, 1.442695
    %v7815 = vpow.pop %v7814
    %v7816 = vmul.f32 %v6842, 1.442695
    %v7817 = vpow.pop %v7816
    %v7818 = vmul.f32 %v6843, 1.442695
    %v7819 = vpow.pop %v7818
    %v7820 = vmul.f32 %v6844, 1.442695
    %v7821 = vpow.pop %v7820
    %v7822 = vmul.f32 %v6845, 1.442695
    %v7823 = vpow.pop %v7822
    %v7824 = vmul.f32 %v6846, 1.442695
    %v7825 = vpow.pop %v7824
    %v7826 = vmul.f32 %v6847, 1.442695
    %v7827 = vpow.pop %v7826
    %v7828 = vmul.f32 %v6848, 1.442695
    %v7829 = vpow.pop %v7828
    %v7830 = vmul.f32 %v6849, 1.442695
    %v7831 = vpow.pop %v7830
    %v7832 = vmul.f32 %v6850, 1.442695
    %v7833 = vpow.pop %v7832
    %v7834 = vmul.f32 %v6851, 1.442695
    %v7835 = vpow.pop %v7834
    %v7836 = vmul.f32 %v6852, 1.442695
    %v7837 = vpow.pop %v7836
    %v7838 = vmul.f32 %v6853, 1.442695
    %v7839 = vpow.pop %v7838
    %v7840 = vmul.f32 %v6854, 1.442695
    %v7841 = vpow.pop %v7840
    %v7842 = vmul.f32 %v6855, 1.442695
    %v7843 = vpow.pop %v7842
    %v7844 = vmul.f32 %v6856, 1.442695
    %v7845 = vpow.pop %v7844
    %v7846 = vmul.f32 %v6857, 1.442695
    %v7847 = vpow.pop %v7846
    %v7848 = vmul.f32 %v6858, 1.442695
    %v7849 = vpow.pop %v7848
    %v7850 = vmul.f32 %v6859, 1.442695
    %v7851 = vpow.pop %v7850
    %v7852 = vmul.f32 %v6860, 1.442695
    %v7853 = vpow.pop %v7852
    %v7854 = vmul.f32 %v6861, 1.442695
    %v7855 = vpow.pop %v7854
    %v7856 = vmul.f32 %v6862, 1.442695
    %v7857 = vpow.pop %v7856
    %v7858 = vmul.f32 %v6863, 1.442695
    %v7859 = vpow.pop %v7858
    %v7860 = vmul.f32 %v6864, 1.442695
    %v7861 = vpow.pop %v7860
    %v7862 = vmul.f32 %v6865, 1.442695
    %v7863 = vpow.pop %v7862
    %v7864 = vmul.f32 %v6866, 1.442695
    %v7865 = vpow.pop %v7864
    %v7866 = vmul.f32 %v6867, 1.442695
    %v7867 = vpow.pop %v7866
    %v7868 = vmul.f32 %v6868, 1.442695
    %v7869 = vpow.pop %v7868
    %v7870 = vmul.f32 %v6869, 1.442695
    %v7871 = vpow.pop %v7870
    %v7872 = vmul.f32 %v6870, 1.442695
    %v7873 = vpow.pop %v7872
    %v7874 = vmul.f32 %v6871, 1.442695
    %v7875 = vpow.pop %v7874
    %v7876 = vmul.f32 %v6872, 1.442695
    %v7877 = vpow.pop %v7876
    %v7878 = vmul.f32 %v6873, 1.442695
    %v7879 = vpow.pop %v7878
    %v7880 = vmul.f32 %v6874, 1.442695
    %v7881 = vpow.pop %v7880
    %v7882 = vmul.f32 %v6875, 1.442695
    %v7883 = vpow.pop %v7882
    %v7884 = vmul.f32 %v6876, 1.442695
    %v7885 = vpow.pop %v7884
    %v7886 = vmul.f32 %v6877, 1.442695
    %v7887 = vpow.pop %v7886
    %v7888 = vmul.f32 %v6878, 1.442695
    %v7889 = vpow.pop %v7888
    %v7890 = vmul.f32 %v6879, 1.442695
    %v7891 = vpow.pop %v7890
    %v7892 = vmul.f32 %v6880, 1.442695
    %v7893 = vpow.pop %v7892
    %v7894 = vmul.f32 %v6881, 1.442695
    %v7895 = vpow.pop %v7894
    %v7896 = vmul.f32 %v6882, 1.442695
    %v7897 = vpow.pop %v7896
    %v7898 = vmul.f32 %v6883, 1.442695
    %v7899 = vpow.pop %v7898
    %v7900 = vmul.f32 %v6884, 1.442695
    %v7901 = vpow.pop %v7900
    %v7902 = vmul.f32 %v6885, 1.442695
    %v7903 = vpow.pop %v7902
    %v7904 = vmul.f32 %v6886, 1.442695
    %v7905 = vpow.pop %v7904
    %v7906 = vmul.f32 %v6887, 1.442695
    %v7907 = vpow.pop %v7906
    %v7908 = vmul.f32 %v6888, 1.442695
    %v7909 = vpow.pop %v7908
    %v7910 = vmul.f32 %v6889, 1.442695
    %v7911 = vpow.pop %v7910
    %v7912 = vmul.f32 %v6890, 1.442695
    %v7913 = vpow.pop %v7912
    %v7914 = vmul.f32 %v6891, 1.442695
    %v7915 = vpow.pop %v7914
    %v7916 = vsel %vm5853, 1, 0
    %v7917 = vsel %vm5854, 1, 0
    %v7918 = vsel %vm5855, 1, 0
    %v7919 = vsel %vm5856, 1, 0
    %v7920 = vsel %vm5857, 1, 0
    %v7921 = vsel %vm5858, 1, 0
    %v7922 = vsel %vm5859, 1, 0
    %v7923 = vsel %vm5860, 1, 0
    %v7924 = vcvt.s32.f32 %v7916
    %v7925 = vcvt.s32.f32 %v7917
    %v7926 = vcvt.s32.f32 %v7918
    %v7927 = vcvt.s32.f32 %v7919
    %v7928 = vcvt.s32.f32 %v7920
    %v7929 = vcvt.s32.f32 %v7921
    %v7930 = vcvt.s32.f32 %v7922
    %v7931 = vcvt.s32.f32 %v7923
    %v8444 = vperm.slane %v6893, %v4807
    %v8445 = vperm.slane %v6895, %v4809
    %v8446 = vsel %vm4811, %v8445, %v8444
    %v8447 = vperm.slane %v6897, %v4813
    %v8448 = vsel %vm4815, %v8447, %v8446
    %v8449 = vperm.slane %v6899, %v4817
    %v8450 = vsel %vm4819, %v8449, %v8448
    %v8451 = vperm.slane %v6901, %v4821
    %v8452 = vsel %vm4823, %v8451, %v8450
    %v8453 = vperm.slane %v6903, %v4825
    %v8454 = vsel %vm4827, %v8453, %v8452
    %v8455 = vperm.slane %v6905, %v4829
    %v8456 = vsel %vm4831, %v8455, %v8454
    %v8457 = vperm.slane %v6907, %v4833
    %v8458 = vsel %vm4835, %v8457, %v8456
    %v8459 = vperm.slane %v6909, %v4807
    %v8460 = vperm.slane %v6911, %v4809
    %v8461 = vsel %vm4811, %v8460, %v8459
    %v8462 = vperm.slane %v6913, %v4813
    %v8463 = vsel %vm4815, %v8462, %v8461
    %v8464 = vperm.slane %v6915, %v4817
    %v8465 = vsel %vm4819, %v8464, %v8463
    %v8466 = vperm.slane %v6917, %v4821
    %v8467 = vsel %vm4823, %v8466, %v8465
    %v8468 = vperm.slane %v6919, %v4825
    %v8469 = vsel %vm4827, %v8468, %v8467
    %v8470 = vperm.slane %v6921, %v4829
    %v8471 = vsel %vm4831, %v8470, %v8469
    %v8472 = vperm.slane %v6923, %v4833
    %v8473 = vsel %vm4835, %v8472, %v8471
    %v8474 = vperm.slane %v6925, %v4807
    %v8475 = vperm.slane %v6927, %v4809
    %v8476 = vsel %vm4811, %v8475, %v8474
    %v8477 = vperm.slane %v6929, %v4813
    %v8478 = vsel %vm4815, %v8477, %v8476
    %v8479 = vperm.slane %v6931, %v4817
    %v8480 = vsel %vm4819, %v8479, %v8478
    %v8481 = vperm.slane %v6933, %v4821
    %v8482 = vsel %vm4823, %v8481, %v8480
    %v8483 = vperm.slane %v6935, %v4825
    %v8484 = vsel %vm4827, %v8483, %v8482
    %v8485 = vperm.slane %v6937, %v4829
    %v8486 = vsel %vm4831, %v8485, %v8484
    %v8487 = vperm.slane %v6939, %v4833
    %v8488 = vsel %vm4835, %v8487, %v8486
    %v8489 = vperm.slane %v6941, %v4807
    %v8490 = vperm.slane %v6943, %v4809
    %v8491 = vsel %vm4811, %v8490, %v8489
    %v8492 = vperm.slane %v6945, %v4813
    %v8493 = vsel %vm4815, %v8492, %v8491
    %v8494 = vperm.slane %v6947, %v4817
    %v8495 = vsel %vm4819, %v8494, %v8493
    %v8496 = vperm.slane %v6949, %v4821
    %v8497 = vsel %vm4823, %v8496, %v8495
    %v8498 = vperm.slane %v6951, %v4825
    %v8499 = vsel %vm4827, %v8498, %v8497
    %v8500 = vperm.slane %v6953, %v4829
    %v8501 = vsel %vm4831, %v8500, %v8499
    %v8502 = vperm.slane %v6955, %v4833
    %v8503 = vsel %vm4835, %v8502, %v8501
    %v8504 = vperm.slane %v6957, %v4807
    %v8505 = vperm.slane %v6959, %v4809
    %v8506 = vsel %vm4811, %v8505, %v8504
    %v8507 = vperm.slane %v6961, %v4813
    %v8508 = vsel %vm4815, %v8507, %v8506
    %v8509 = vperm.slane %v6963, %v4817
    %v8510 = vsel %vm4819, %v8509, %v8508
    %v8511 = vperm.slane %v6965, %v4821
    %v8512 = vsel %vm4823, %v8511, %v8510
    %v8513 = vperm.slane %v6967, %v4825
    %v8514 = vsel %vm4827, %v8513, %v8512
    %v8515 = vperm.slane %v6969, %v4829
    %v8516 = vsel %vm4831, %v8515, %v8514
    %v8517 = vperm.slane %v6971, %v4833
    %v8518 = vsel %vm4835, %v8517, %v8516
    %v8519 = vperm.slane %v6973, %v4807
    %v8520 = vperm.slane %v6975, %v4809
    %v8521 = vsel %vm4811, %v8520, %v8519
    %v8522 = vperm.slane %v6977, %v4813
    %v8523 = vsel %vm4815, %v8522, %v8521
    %v8524 = vperm.slane %v6979, %v4817
    %v8525 = vsel %vm4819, %v8524, %v8523
    %v8526 = vperm.slane %v6981, %v4821
    %v8527 = vsel %vm4823, %v8526, %v8525
    %v8528 = vperm.slane %v6983, %v4825
    %v8529 = vsel %vm4827, %v8528, %v8527
    %v8530 = vperm.slane %v6985, %v4829
    %v8531 = vsel %vm4831, %v8530, %v8529
    %v8532 = vperm.slane %v6987, %v4833
    %v8533 = vsel %vm4835, %v8532, %v8531
    %v8534 = vperm.slane %v6989, %v4807
    %v8535 = vperm.slane %v6991, %v4809
    %v8536 = vsel %vm4811, %v8535, %v8534
    %v8537 = vperm.slane %v6993, %v4813
    %v8538 = vsel %vm4815, %v8537, %v8536
    %v8539 = vperm.slane %v6995, %v4817
    %v8540 = vsel %vm4819, %v8539, %v8538
    %v8541 = vperm.slane %v6997, %v4821
    %v8542 = vsel %vm4823, %v8541, %v8540
    %v8543 = vperm.slane %v6999, %v4825
    %v8544 = vsel %vm4827, %v8543, %v8542
    %v8545 = vperm.slane %v7001, %v4829
    %v8546 = vsel %vm4831, %v8545, %v8544
    %v8547 = vperm.slane %v7003, %v4833
    %v8548 = vsel %vm4835, %v8547, %v8546
    %v8549 = vperm.slane %v7005, %v4807
    %v8550 = vperm.slane %v7007, %v4809
    %v8551 = vsel %vm4811, %v8550, %v8549
    %v8552 = vperm.slane %v7009, %v4813
    %v8553 = vsel %vm4815, %v8552, %v8551
    %v8554 = vperm.slane %v7011, %v4817
    %v8555 = vsel %vm4819, %v8554, %v8553
    %v8556 = vperm.slane %v7013, %v4821
    %v8557 = vsel %vm4823, %v8556, %v8555
    %v8558 = vperm.slane %v7015, %v4825
    %v8559 = vsel %vm4827, %v8558, %v8557
    %v8560 = vperm.slane %v7017, %v4829
    %v8561 = vsel %vm4831, %v8560, %v8559
    %v8562 = vperm.slane %v7019, %v4833
    %v8563 = vsel %vm4835, %v8562, %v8561
    %v8564 = vperm.slane %v7021, %v4807
    %v8565 = vperm.slane %v7023, %v4809
    %v8566 = vsel %vm4811, %v8565, %v8564
    %v8567 = vperm.slane %v7025, %v4813
    %v8568 = vsel %vm4815, %v8567, %v8566
    %v8569 = vperm.slane %v7027, %v4817
    %v8570 = vsel %vm4819, %v8569, %v8568
    %v8571 = vperm.slane %v7029, %v4821
    %v8572 = vsel %vm4823, %v8571, %v8570
    %v8573 = vperm.slane %v7031, %v4825
    %v8574 = vsel %vm4827, %v8573, %v8572
    %v8575 = vperm.slane %v7033, %v4829
    %v8576 = vsel %vm4831, %v8575, %v8574
    %v8577 = vperm.slane %v7035, %v4833
    %v8578 = vsel %vm4835, %v8577, %v8576
    %v8579 = vperm.slane %v7037, %v4807
    %v8580 = vperm.slane %v7039, %v4809
    %v8581 = vsel %vm4811, %v8580, %v8579
    %v8582 = vperm.slane %v7041, %v4813
    %v8583 = vsel %vm4815, %v8582, %v8581
    %v8584 = vperm.slane %v7043, %v4817
    %v8585 = vsel %vm4819, %v8584, %v8583
    %v8586 = vperm.slane %v7045, %v4821
    %v8587 = vsel %vm4823, %v8586, %v8585
    %v8588 = vperm.slane %v7047, %v4825
    %v8589 = vsel %vm4827, %v8588, %v8587
    %v8590 = vperm.slane %v7049, %v4829
    %v8591 = vsel %vm4831, %v8590, %v8589
    %v8592 = vperm.slane %v7051, %v4833
    %v8593 = vsel %vm4835, %v8592, %v8591
    %v8594 = vperm.slane %v7053, %v4807
    %v8595 = vperm.slane %v7055, %v4809
    %v8596 = vsel %vm4811, %v8595, %v8594
    %v8597 = vperm.slane %v7057, %v4813
    %v8598 = vsel %vm4815, %v8597, %v8596
    %v8599 = vperm.slane %v7059, %v4817
    %v8600 = vsel %vm4819, %v8599, %v8598
    %v8601 = vperm.slane %v7061, %v4821
    %v8602 = vsel %vm4823, %v8601, %v8600
    %v8603 = vperm.slane %v7063, %v4825
    %v8604 = vsel %vm4827, %v8603, %v8602
    %v8605 = vperm.slane %v7065, %v4829
    %v8606 = vsel %vm4831, %v8605, %v8604
    %v8607 = vperm.slane %v7067, %v4833
    %v8608 = vsel %vm4835, %v8607, %v8606
    %v8609 = vperm.slane %v7069, %v4807
    %v8610 = vperm.slane %v7071, %v4809
    %v8611 = vsel %vm4811, %v8610, %v8609
    %v8612 = vperm.slane %v7073, %v4813
    %v8613 = vsel %vm4815, %v8612, %v8611
    %v8614 = vperm.slane %v7075, %v4817
    %v8615 = vsel %vm4819, %v8614, %v8613
    %v8616 = vperm.slane %v7077, %v4821
    %v8617 = vsel %vm4823, %v8616, %v8615
    %v8618 = vperm.slane %v7079, %v4825
    %v8619 = vsel %vm4827, %v8618, %v8617
    %v8620 = vperm.slane %v7081, %v4829
    %v8621 = vsel %vm4831, %v8620, %v8619
    %v8622 = vperm.slane %v7083, %v4833
    %v8623 = vsel %vm4835, %v8622, %v8621
    %v8624 = vperm.slane %v7085, %v4807
    %v8625 = vperm.slane %v7087, %v4809
    %v8626 = vsel %vm4811, %v8625, %v8624
    %v8627 = vperm.slane %v7089, %v4813
    %v8628 = vsel %vm4815, %v8627, %v8626
    %v8629 = vperm.slane %v7091, %v4817
    %v8630 = vsel %vm4819, %v8629, %v8628
    %v8631 = vperm.slane %v7093, %v4821
    %v8632 = vsel %vm4823, %v8631, %v8630
    %v8633 = vperm.slane %v7095, %v4825
    %v8634 = vsel %vm4827, %v8633, %v8632
    %v8635 = vperm.slane %v7097, %v4829
    %v8636 = vsel %vm4831, %v8635, %v8634
    %v8637 = vperm.slane %v7099, %v4833
    %v8638 = vsel %vm4835, %v8637, %v8636
    %v8639 = vperm.slane %v7101, %v4807
    %v8640 = vperm.slane %v7103, %v4809
    %v8641 = vsel %vm4811, %v8640, %v8639
    %v8642 = vperm.slane %v7105, %v4813
    %v8643 = vsel %vm4815, %v8642, %v8641
    %v8644 = vperm.slane %v7107, %v4817
    %v8645 = vsel %vm4819, %v8644, %v8643
    %v8646 = vperm.slane %v7109, %v4821
    %v8647 = vsel %vm4823, %v8646, %v8645
    %v8648 = vperm.slane %v7111, %v4825
    %v8649 = vsel %vm4827, %v8648, %v8647
    %v8650 = vperm.slane %v7113, %v4829
    %v8651 = vsel %vm4831, %v8650, %v8649
    %v8652 = vperm.slane %v7115, %v4833
    %v8653 = vsel %vm4835, %v8652, %v8651
    %v8654 = vperm.slane %v7117, %v4807
    %v8655 = vperm.slane %v7119, %v4809
    %v8656 = vsel %vm4811, %v8655, %v8654
    %v8657 = vperm.slane %v7121, %v4813
    %v8658 = vsel %vm4815, %v8657, %v8656
    %v8659 = vperm.slane %v7123, %v4817
    %v8660 = vsel %vm4819, %v8659, %v8658
    %v8661 = vperm.slane %v7125, %v4821
    %v8662 = vsel %vm4823, %v8661, %v8660
    %v8663 = vperm.slane %v7127, %v4825
    %v8664 = vsel %vm4827, %v8663, %v8662
    %v8665 = vperm.slane %v7129, %v4829
    %v8666 = vsel %vm4831, %v8665, %v8664
    %v8667 = vperm.slane %v7131, %v4833
    %v8668 = vsel %vm4835, %v8667, %v8666
    %v8669 = vperm.slane %v7133, %v4807
    %v8670 = vperm.slane %v7135, %v4809
    %v8671 = vsel %vm4811, %v8670, %v8669
    %v8672 = vperm.slane %v7137, %v4813
    %v8673 = vsel %vm4815, %v8672, %v8671
    %v8674 = vperm.slane %v7139, %v4817
    %v8675 = vsel %vm4819, %v8674, %v8673
    %v8676 = vperm.slane %v7141, %v4821
    %v8677 = vsel %vm4823, %v8676, %v8675
    %v8678 = vperm.slane %v7143, %v4825
    %v8679 = vsel %vm4827, %v8678, %v8677
    %v8680 = vperm.slane %v7145, %v4829
    %v8681 = vsel %vm4831, %v8680, %v8679
    %v8682 = vperm.slane %v7147, %v4833
    %v8683 = vsel %vm4835, %v8682, %v8681
    %v8684 = vperm.slane %v7149, %v4807
    %v8685 = vperm.slane %v7151, %v4809
    %v8686 = vsel %vm4811, %v8685, %v8684
    %v8687 = vperm.slane %v7153, %v4813
    %v8688 = vsel %vm4815, %v8687, %v8686
    %v8689 = vperm.slane %v7155, %v4817
    %v8690 = vsel %vm4819, %v8689, %v8688
    %v8691 = vperm.slane %v7157, %v4821
    %v8692 = vsel %vm4823, %v8691, %v8690
    %v8693 = vperm.slane %v7159, %v4825
    %v8694 = vsel %vm4827, %v8693, %v8692
    %v8695 = vperm.slane %v7161, %v4829
    %v8696 = vsel %vm4831, %v8695, %v8694
    %v8697 = vperm.slane %v7163, %v4833
    %v8698 = vsel %vm4835, %v8697, %v8696
    %v8699 = vperm.slane %v7165, %v4807
    %v8700 = vperm.slane %v7167, %v4809
    %v8701 = vsel %vm4811, %v8700, %v8699
    %v8702 = vperm.slane %v7169, %v4813
    %v8703 = vsel %vm4815, %v8702, %v8701
    %v8704 = vperm.slane %v7171, %v4817
    %v8705 = vsel %vm4819, %v8704, %v8703
    %v8706 = vperm.slane %v7173, %v4821
    %v8707 = vsel %vm4823, %v8706, %v8705
    %v8708 = vperm.slane %v7175, %v4825
    %v8709 = vsel %vm4827, %v8708, %v8707
    %v8710 = vperm.slane %v7177, %v4829
    %v8711 = vsel %vm4831, %v8710, %v8709
    %v8712 = vperm.slane %v7179, %v4833
    %v8713 = vsel %vm4835, %v8712, %v8711
    %v8714 = vperm.slane %v7181, %v4807
    %v8715 = vperm.slane %v7183, %v4809
    %v8716 = vsel %vm4811, %v8715, %v8714
    %v8717 = vperm.slane %v7185, %v4813
    %v8718 = vsel %vm4815, %v8717, %v8716
    %v8719 = vperm.slane %v7187, %v4817
    %v8720 = vsel %vm4819, %v8719, %v8718
    %v8721 = vperm.slane %v7189, %v4821
    %v8722 = vsel %vm4823, %v8721, %v8720
    %v8723 = vperm.slane %v7191, %v4825
    %v8724 = vsel %vm4827, %v8723, %v8722
    %v8725 = vperm.slane %v7193, %v4829
    %v8726 = vsel %vm4831, %v8725, %v8724
    %v8727 = vperm.slane %v7195, %v4833
    %v8728 = vsel %vm4835, %v8727, %v8726
    %v8729 = vperm.slane %v7197, %v4807
    %v8730 = vperm.slane %v7199, %v4809
    %v8731 = vsel %vm4811, %v8730, %v8729
    %v8732 = vperm.slane %v7201, %v4813
    %v8733 = vsel %vm4815, %v8732, %v8731
    %v8734 = vperm.slane %v7203, %v4817
    %v8735 = vsel %vm4819, %v8734, %v8733
    %v8736 = vperm.slane %v7205, %v4821
    %v8737 = vsel %vm4823, %v8736, %v8735
    %v8738 = vperm.slane %v7207, %v4825
    %v8739 = vsel %vm4827, %v8738, %v8737
    %v8740 = vperm.slane %v7209, %v4829
    %v8741 = vsel %vm4831, %v8740, %v8739
    %v8742 = vperm.slane %v7211, %v4833
    %v8743 = vsel %vm4835, %v8742, %v8741
    %v8744 = vperm.slane %v7213, %v4807
    %v8745 = vperm.slane %v7215, %v4809
    %v8746 = vsel %vm4811, %v8745, %v8744
    %v8747 = vperm.slane %v7217, %v4813
    %v8748 = vsel %vm4815, %v8747, %v8746
    %v8749 = vperm.slane %v7219, %v4817
    %v8750 = vsel %vm4819, %v8749, %v8748
    %v8751 = vperm.slane %v7221, %v4821
    %v8752 = vsel %vm4823, %v8751, %v8750
    %v8753 = vperm.slane %v7223, %v4825
    %v8754 = vsel %vm4827, %v8753, %v8752
    %v8755 = vperm.slane %v7225, %v4829
    %v8756 = vsel %vm4831, %v8755, %v8754
    %v8757 = vperm.slane %v7227, %v4833
    %v8758 = vsel %vm4835, %v8757, %v8756
    %v8759 = vperm.slane %v7229, %v4807
    %v8760 = vperm.slane %v7231, %v4809
    %v8761 = vsel %vm4811, %v8760, %v8759
    %v8762 = vperm.slane %v7233, %v4813
    %v8763 = vsel %vm4815, %v8762, %v8761
    %v8764 = vperm.slane %v7235, %v4817
    %v8765 = vsel %vm4819, %v8764, %v8763
    %v8766 = vperm.slane %v7237, %v4821
    %v8767 = vsel %vm4823, %v8766, %v8765
    %v8768 = vperm.slane %v7239, %v4825
    %v8769 = vsel %vm4827, %v8768, %v8767
    %v8770 = vperm.slane %v7241, %v4829
    %v8771 = vsel %vm4831, %v8770, %v8769
    %v8772 = vperm.slane %v7243, %v4833
    %v8773 = vsel %vm4835, %v8772, %v8771
    %v8774 = vperm.slane %v7245, %v4807
    %v8775 = vperm.slane %v7247, %v4809
    %v8776 = vsel %vm4811, %v8775, %v8774
    %v8777 = vperm.slane %v7249, %v4813
    %v8778 = vsel %vm4815, %v8777, %v8776
    %v8779 = vperm.slane %v7251, %v4817
    %v8780 = vsel %vm4819, %v8779, %v8778
    %v8781 = vperm.slane %v7253, %v4821
    %v8782 = vsel %vm4823, %v8781, %v8780
    %v8783 = vperm.slane %v7255, %v4825
    %v8784 = vsel %vm4827, %v8783, %v8782
    %v8785 = vperm.slane %v7257, %v4829
    %v8786 = vsel %vm4831, %v8785, %v8784
    %v8787 = vperm.slane %v7259, %v4833
    %v8788 = vsel %vm4835, %v8787, %v8786
    %v8789 = vperm.slane %v7261, %v4807
    %v8790 = vperm.slane %v7263, %v4809
    %v8791 = vsel %vm4811, %v8790, %v8789
    %v8792 = vperm.slane %v7265, %v4813
    %v8793 = vsel %vm4815, %v8792, %v8791
    %v8794 = vperm.slane %v7267, %v4817
    %v8795 = vsel %vm4819, %v8794, %v8793
    %v8796 = vperm.slane %v7269, %v4821
    %v8797 = vsel %vm4823, %v8796, %v8795
    %v8798 = vperm.slane %v7271, %v4825
    %v8799 = vsel %vm4827, %v8798, %v8797
    %v8800 = vperm.slane %v7273, %v4829
    %v8801 = vsel %vm4831, %v8800, %v8799
    %v8802 = vperm.slane %v7275, %v4833
    %v8803 = vsel %vm4835, %v8802, %v8801
    %v8804 = vperm.slane %v7277, %v4807
    %v8805 = vperm.slane %v7279, %v4809
    %v8806 = vsel %vm4811, %v8805, %v8804
    %v8807 = vperm.slane %v7281, %v4813
    %v8808 = vsel %vm4815, %v8807, %v8806
    %v8809 = vperm.slane %v7283, %v4817
    %v8810 = vsel %vm4819, %v8809, %v8808
    %v8811 = vperm.slane %v7285, %v4821
    %v8812 = vsel %vm4823, %v8811, %v8810
    %v8813 = vperm.slane %v7287, %v4825
    %v8814 = vsel %vm4827, %v8813, %v8812
    %v8815 = vperm.slane %v7289, %v4829
    %v8816 = vsel %vm4831, %v8815, %v8814
    %v8817 = vperm.slane %v7291, %v4833
    %v8818 = vsel %vm4835, %v8817, %v8816
    %v8819 = vperm.slane %v7293, %v4807
    %v8820 = vperm.slane %v7295, %v4809
    %v8821 = vsel %vm4811, %v8820, %v8819
    %v8822 = vperm.slane %v7297, %v4813
    %v8823 = vsel %vm4815, %v8822, %v8821
    %v8824 = vperm.slane %v7299, %v4817
    %v8825 = vsel %vm4819, %v8824, %v8823
    %v8826 = vperm.slane %v7301, %v4821
    %v8827 = vsel %vm4823, %v8826, %v8825
    %v8828 = vperm.slane %v7303, %v4825
    %v8829 = vsel %vm4827, %v8828, %v8827
    %v8830 = vperm.slane %v7305, %v4829
    %v8831 = vsel %vm4831, %v8830, %v8829
    %v8832 = vperm.slane %v7307, %v4833
    %v8833 = vsel %vm4835, %v8832, %v8831
    %v8834 = vperm.slane %v7309, %v4807
    %v8835 = vperm.slane %v7311, %v4809
    %v8836 = vsel %vm4811, %v8835, %v8834
    %v8837 = vperm.slane %v7313, %v4813
    %v8838 = vsel %vm4815, %v8837, %v8836
    %v8839 = vperm.slane %v7315, %v4817
    %v8840 = vsel %vm4819, %v8839, %v8838
    %v8841 = vperm.slane %v7317, %v4821
    %v8842 = vsel %vm4823, %v8841, %v8840
    %v8843 = vperm.slane %v7319, %v4825
    %v8844 = vsel %vm4827, %v8843, %v8842
    %v8845 = vperm.slane %v7321, %v4829
    %v8846 = vsel %vm4831, %v8845, %v8844
    %v8847 = vperm.slane %v7323, %v4833
    %v8848 = vsel %vm4835, %v8847, %v8846
    %v8849 = vperm.slane %v7325, %v4807
    %v8850 = vperm.slane %v7327, %v4809
    %v8851 = vsel %vm4811, %v8850, %v8849
    %v8852 = vperm.slane %v7329, %v4813
    %v8853 = vsel %vm4815, %v8852, %v8851
    %v8854 = vperm.slane %v7331, %v4817
    %v8855 = vsel %vm4819, %v8854, %v8853
    %v8856 = vperm.slane %v7333, %v4821
    %v8857 = vsel %vm4823, %v8856, %v8855
    %v8858 = vperm.slane %v7335, %v4825
    %v8859 = vsel %vm4827, %v8858, %v8857
    %v8860 = vperm.slane %v7337, %v4829
    %v8861 = vsel %vm4831, %v8860, %v8859
    %v8862 = vperm.slane %v7339, %v4833
    %v8863 = vsel %vm4835, %v8862, %v8861
    %v8864 = vperm.slane %v7341, %v4807
    %v8865 = vperm.slane %v7343, %v4809
    %v8866 = vsel %vm4811, %v8865, %v8864
    %v8867 = vperm.slane %v7345, %v4813
    %v8868 = vsel %vm4815, %v8867, %v8866
    %v8869 = vperm.slane %v7347, %v4817
    %v8870 = vsel %vm4819, %v8869, %v8868
    %v8871 = vperm.slane %v7349, %v4821
    %v8872 = vsel %vm4823, %v8871, %v8870
    %v8873 = vperm.slane %v7351, %v4825
    %v8874 = vsel %vm4827, %v8873, %v8872
    %v8875 = vperm.slane %v7353, %v4829
    %v8876 = vsel %vm4831, %v8875, %v8874
    %v8877 = vperm.slane %v7355, %v4833
    %v8878 = vsel %vm4835, %v8877, %v8876
    %v8879 = vperm.slane %v7357, %v4807
    %v8880 = vperm.slane %v7359, %v4809
    %v8881 = vsel %vm4811, %v8880, %v8879
    %v8882 = vperm.slane %v7361, %v4813
    %v8883 = vsel %vm4815, %v8882, %v8881
    %v8884 = vperm.slane %v7363, %v4817
    %v8885 = vsel %vm4819, %v8884, %v8883
    %v8886 = vperm.slane %v7365, %v4821
    %v8887 = vsel %vm4823, %v8886, %v8885
    %v8888 = vperm.slane %v7367, %v4825
    %v8889 = vsel %vm4827, %v8888, %v8887
    %v8890 = vperm.slane %v7369, %v4829
    %v8891 = vsel %vm4831, %v8890, %v8889
    %v8892 = vperm.slane %v7371, %v4833
    %v8893 = vsel %vm4835, %v8892, %v8891
    %v8894 = vperm.slane %v7373, %v4807
    %v8895 = vperm.slane %v7375, %v4809
    %v8896 = vsel %vm4811, %v8895, %v8894
    %v8897 = vperm.slane %v7377, %v4813
    %v8898 = vsel %vm4815, %v8897, %v8896
    %v8899 = vperm.slane %v7379, %v4817
    %v8900 = vsel %vm4819, %v8899, %v8898
    %v8901 = vperm.slane %v7381, %v4821
    %v8902 = vsel %vm4823, %v8901, %v8900
    %v8903 = vperm.slane %v7383, %v4825
    %v8904 = vsel %vm4827, %v8903, %v8902
    %v8905 = vperm.slane %v7385, %v4829
    %v8906 = vsel %vm4831, %v8905, %v8904
    %v8907 = vperm.slane %v7387, %v4833
    %v8908 = vsel %vm4835, %v8907, %v8906
    %v8909 = vperm.slane %v7389, %v4807
    %v8910 = vperm.slane %v7391, %v4809
    %v8911 = vsel %vm4811, %v8910, %v8909
    %v8912 = vperm.slane %v7393, %v4813
    %v8913 = vsel %vm4815, %v8912, %v8911
    %v8914 = vperm.slane %v7395, %v4817
    %v8915 = vsel %vm4819, %v8914, %v8913
    %v8916 = vperm.slane %v7397, %v4821
    %v8917 = vsel %vm4823, %v8916, %v8915
    %v8918 = vperm.slane %v7399, %v4825
    %v8919 = vsel %vm4827, %v8918, %v8917
    %v8920 = vperm.slane %v7401, %v4829
    %v8921 = vsel %vm4831, %v8920, %v8919
    %v8922 = vperm.slane %v7403, %v4833
    %v8923 = vsel %vm4835, %v8922, %v8921
    %v8924 = vperm.slane %v7405, %v4807
    %v8925 = vperm.slane %v7407, %v4809
    %v8926 = vsel %vm4811, %v8925, %v8924
    %v8927 = vperm.slane %v7409, %v4813
    %v8928 = vsel %vm4815, %v8927, %v8926
    %v8929 = vperm.slane %v7411, %v4817
    %v8930 = vsel %vm4819, %v8929, %v8928
    %v8931 = vperm.slane %v7413, %v4821
    %v8932 = vsel %vm4823, %v8931, %v8930
    %v8933 = vperm.slane %v7415, %v4825
    %v8934 = vsel %vm4827, %v8933, %v8932
    %v8935 = vperm.slane %v7417, %v4829
    %v8936 = vsel %vm4831, %v8935, %v8934
    %v8937 = vperm.slane %v7419, %v4833
    %v8938 = vsel %vm4835, %v8937, %v8936
    %v8939 = vperm.slane %v7421, %v4807
    %v8940 = vperm.slane %v7423, %v4809
    %v8941 = vsel %vm4811, %v8940, %v8939
    %v8942 = vperm.slane %v7425, %v4813
    %v8943 = vsel %vm4815, %v8942, %v8941
    %v8944 = vperm.slane %v7427, %v4817
    %v8945 = vsel %vm4819, %v8944, %v8943
    %v8946 = vperm.slane %v7429, %v4821
    %v8947 = vsel %vm4823, %v8946, %v8945
    %v8948 = vperm.slane %v7431, %v4825
    %v8949 = vsel %vm4827, %v8948, %v8947
    %v8950 = vperm.slane %v7433, %v4829
    %v8951 = vsel %vm4831, %v8950, %v8949
    %v8952 = vperm.slane %v7435, %v4833
    %v8953 = vsel %vm4835, %v8952, %v8951
    %v8954 = vperm.slane %v7437, %v4807
    %v8955 = vperm.slane %v7439, %v4809
    %v8956 = vsel %vm4811, %v8955, %v8954
    %v8957 = vperm.slane %v7441, %v4813
    %v8958 = vsel %vm4815, %v8957, %v8956
    %v8959 = vperm.slane %v7443, %v4817
    %v8960 = vsel %vm4819, %v8959, %v8958
    %v8961 = vperm.slane %v7445, %v4821
    %v8962 = vsel %vm4823, %v8961, %v8960
    %v8963 = vperm.slane %v7447, %v4825
    %v8964 = vsel %vm4827, %v8963, %v8962
    %v8965 = vperm.slane %v7449, %v4829
    %v8966 = vsel %vm4831, %v8965, %v8964
    %v8967 = vperm.slane %v7451, %v4833
    %v8968 = vsel %vm4835, %v8967, %v8966
    %v8969 = vperm.slane %v7453, %v4807
    %v8970 = vperm.slane %v7455, %v4809
    %v8971 = vsel %vm4811, %v8970, %v8969
    %v8972 = vperm.slane %v7457, %v4813
    %v8973 = vsel %vm4815, %v8972, %v8971
    %v8974 = vperm.slane %v7459, %v4817
    %v8975 = vsel %vm4819, %v8974, %v8973
    %v8976 = vperm.slane %v7461, %v4821
    %v8977 = vsel %vm4823, %v8976, %v8975
    %v8978 = vperm.slane %v7463, %v4825
    %v8979 = vsel %vm4827, %v8978, %v8977
    %v8980 = vperm.slane %v7465, %v4829
    %v8981 = vsel %vm4831, %v8980, %v8979
    %v8982 = vperm.slane %v7467, %v4833
    %v8983 = vsel %vm4835, %v8982, %v8981
    %v8984 = vperm.slane %v7469, %v4807
    %v8985 = vperm.slane %v7471, %v4809
    %v8986 = vsel %vm4811, %v8985, %v8984
    %v8987 = vperm.slane %v7473, %v4813
    %v8988 = vsel %vm4815, %v8987, %v8986
    %v8989 = vperm.slane %v7475, %v4817
    %v8990 = vsel %vm4819, %v8989, %v8988
    %v8991 = vperm.slane %v7477, %v4821
    %v8992 = vsel %vm4823, %v8991, %v8990
    %v8993 = vperm.slane %v7479, %v4825
    %v8994 = vsel %vm4827, %v8993, %v8992
    %v8995 = vperm.slane %v7481, %v4829
    %v8996 = vsel %vm4831, %v8995, %v8994
    %v8997 = vperm.slane %v7483, %v4833
    %v8998 = vsel %vm4835, %v8997, %v8996
    %v8999 = vperm.slane %v7485, %v4807
    %v9000 = vperm.slane %v7487, %v4809
    %v9001 = vsel %vm4811, %v9000, %v8999
    %v9002 = vperm.slane %v7489, %v4813
    %v9003 = vsel %vm4815, %v9002, %v9001
    %v9004 = vperm.slane %v7491, %v4817
    %v9005 = vsel %vm4819, %v9004, %v9003
    %v9006 = vperm.slane %v7493, %v4821
    %v9007 = vsel %vm4823, %v9006, %v9005
    %v9008 = vperm.slane %v7495, %v4825
    %v9009 = vsel %vm4827, %v9008, %v9007
    %v9010 = vperm.slane %v7497, %v4829
    %v9011 = vsel %vm4831, %v9010, %v9009
    %v9012 = vperm.slane %v7499, %v4833
    %v9013 = vsel %vm4835, %v9012, %v9011
    %v9014 = vperm.slane %v7501, %v4807
    %v9015 = vperm.slane %v7503, %v4809
    %v9016 = vsel %vm4811, %v9015, %v9014
    %v9017 = vperm.slane %v7505, %v4813
    %v9018 = vsel %vm4815, %v9017, %v9016
    %v9019 = vperm.slane %v7507, %v4817
    %v9020 = vsel %vm4819, %v9019, %v9018
    %v9021 = vperm.slane %v7509, %v4821
    %v9022 = vsel %vm4823, %v9021, %v9020
    %v9023 = vperm.slane %v7511, %v4825
    %v9024 = vsel %vm4827, %v9023, %v9022
    %v9025 = vperm.slane %v7513, %v4829
    %v9026 = vsel %vm4831, %v9025, %v9024
    %v9027 = vperm.slane %v7515, %v4833
    %v9028 = vsel %vm4835, %v9027, %v9026
    %v9029 = vperm.slane %v7517, %v4807
    %v9030 = vperm.slane %v7519, %v4809
    %v9031 = vsel %vm4811, %v9030, %v9029
    %v9032 = vperm.slane %v7521, %v4813
    %v9033 = vsel %vm4815, %v9032, %v9031
    %v9034 = vperm.slane %v7523, %v4817
    %v9035 = vsel %vm4819, %v9034, %v9033
    %v9036 = vperm.slane %v7525, %v4821
    %v9037 = vsel %vm4823, %v9036, %v9035
    %v9038 = vperm.slane %v7527, %v4825
    %v9039 = vsel %vm4827, %v9038, %v9037
    %v9040 = vperm.slane %v7529, %v4829
    %v9041 = vsel %vm4831, %v9040, %v9039
    %v9042 = vperm.slane %v7531, %v4833
    %v9043 = vsel %vm4835, %v9042, %v9041
    %v9044 = vperm.slane %v7533, %v4807
    %v9045 = vperm.slane %v7535, %v4809
    %v9046 = vsel %vm4811, %v9045, %v9044
    %v9047 = vperm.slane %v7537, %v4813
    %v9048 = vsel %vm4815, %v9047, %v9046
    %v9049 = vperm.slane %v7539, %v4817
    %v9050 = vsel %vm4819, %v9049, %v9048
    %v9051 = vperm.slane %v7541, %v4821
    %v9052 = vsel %vm4823, %v9051, %v9050
    %v9053 = vperm.slane %v7543, %v4825
    %v9054 = vsel %vm4827, %v9053, %v9052
    %v9055 = vperm.slane %v7545, %v4829
    %v9056 = vsel %vm4831, %v9055, %v9054
    %v9057 = vperm.slane %v7547, %v4833
    %v9058 = vsel %vm4835, %v9057, %v9056
    %v9059 = vperm.slane %v7549, %v4807
    %v9060 = vperm.slane %v7551, %v4809
    %v9061 = vsel %vm4811, %v9060, %v9059
    %v9062 = vperm.slane %v7553, %v4813
    %v9063 = vsel %vm4815, %v9062, %v9061
    %v9064 = vperm.slane %v7555, %v4817
    %v9065 = vsel %vm4819, %v9064, %v9063
    %v9066 = vperm.slane %v7557, %v4821
    %v9067 = vsel %vm4823, %v9066, %v9065
    %v9068 = vperm.slane %v7559, %v4825
    %v9069 = vsel %vm4827, %v9068, %v9067
    %v9070 = vperm.slane %v7561, %v4829
    %v9071 = vsel %vm4831, %v9070, %v9069
    %v9072 = vperm.slane %v7563, %v4833
    %v9073 = vsel %vm4835, %v9072, %v9071
    %v9074 = vperm.slane %v7565, %v4807
    %v9075 = vperm.slane %v7567, %v4809
    %v9076 = vsel %vm4811, %v9075, %v9074
    %v9077 = vperm.slane %v7569, %v4813
    %v9078 = vsel %vm4815, %v9077, %v9076
    %v9079 = vperm.slane %v7571, %v4817
    %v9080 = vsel %vm4819, %v9079, %v9078
    %v9081 = vperm.slane %v7573, %v4821
    %v9082 = vsel %vm4823, %v9081, %v9080
    %v9083 = vperm.slane %v7575, %v4825
    %v9084 = vsel %vm4827, %v9083, %v9082
    %v9085 = vperm.slane %v7577, %v4829
    %v9086 = vsel %vm4831, %v9085, %v9084
    %v9087 = vperm.slane %v7579, %v4833
    %v9088 = vsel %vm4835, %v9087, %v9086
    %v9089 = vperm.slane %v7581, %v4807
    %v9090 = vperm.slane %v7583, %v4809
    %v9091 = vsel %vm4811, %v9090, %v9089
    %v9092 = vperm.slane %v7585, %v4813
    %v9093 = vsel %vm4815, %v9092, %v9091
    %v9094 = vperm.slane %v7587, %v4817
    %v9095 = vsel %vm4819, %v9094, %v9093
    %v9096 = vperm.slane %v7589, %v4821
    %v9097 = vsel %vm4823, %v9096, %v9095
    %v9098 = vperm.slane %v7591, %v4825
    %v9099 = vsel %vm4827, %v9098, %v9097
    %v9100 = vperm.slane %v7593, %v4829
    %v9101 = vsel %vm4831, %v9100, %v9099
    %v9102 = vperm.slane %v7595, %v4833
    %v9103 = vsel %vm4835, %v9102, %v9101
    %v9104 = vperm.slane %v7597, %v4807
    %v9105 = vperm.slane %v7599, %v4809
    %v9106 = vsel %vm4811, %v9105, %v9104
    %v9107 = vperm.slane %v7601, %v4813
    %v9108 = vsel %vm4815, %v9107, %v9106
    %v9109 = vperm.slane %v7603, %v4817
    %v9110 = vsel %vm4819, %v9109, %v9108
    %v9111 = vperm.slane %v7605, %v4821
    %v9112 = vsel %vm4823, %v9111, %v9110
    %v9113 = vperm.slane %v7607, %v4825
    %v9114 = vsel %vm4827, %v9113, %v9112
    %v9115 = vperm.slane %v7609, %v4829
    %v9116 = vsel %vm4831, %v9115, %v9114
    %v9117 = vperm.slane %v7611, %v4833
    %v9118 = vsel %vm4835, %v9117, %v9116
    %v9119 = vperm.slane %v7613, %v4807
    %v9120 = vperm.slane %v7615, %v4809
    %v9121 = vsel %vm4811, %v9120, %v9119
    %v9122 = vperm.slane %v7617, %v4813
    %v9123 = vsel %vm4815, %v9122, %v9121
    %v9124 = vperm.slane %v7619, %v4817
    %v9125 = vsel %vm4819, %v9124, %v9123
    %v9126 = vperm.slane %v7621, %v4821
    %v9127 = vsel %vm4823, %v9126, %v9125
    %v9128 = vperm.slane %v7623, %v4825
    %v9129 = vsel %vm4827, %v9128, %v9127
    %v9130 = vperm.slane %v7625, %v4829
    %v9131 = vsel %vm4831, %v9130, %v9129
    %v9132 = vperm.slane %v7627, %v4833
    %v9133 = vsel %vm4835, %v9132, %v9131
    %v9134 = vperm.slane %v7629, %v4807
    %v9135 = vperm.slane %v7631, %v4809
    %v9136 = vsel %vm4811, %v9135, %v9134
    %v9137 = vperm.slane %v7633, %v4813
    %v9138 = vsel %vm4815, %v9137, %v9136
    %v9139 = vperm.slane %v7635, %v4817
    %v9140 = vsel %vm4819, %v9139, %v9138
    %v9141 = vperm.slane %v7637, %v4821
    %v9142 = vsel %vm4823, %v9141, %v9140
    %v9143 = vperm.slane %v7639, %v4825
    %v9144 = vsel %vm4827, %v9143, %v9142
    %v9145 = vperm.slane %v7641, %v4829
    %v9146 = vsel %vm4831, %v9145, %v9144
    %v9147 = vperm.slane %v7643, %v4833
    %v9148 = vsel %vm4835, %v9147, %v9146
    %v9149 = vperm.slane %v7645, %v4807
    %v9150 = vperm.slane %v7647, %v4809
    %v9151 = vsel %vm4811, %v9150, %v9149
    %v9152 = vperm.slane %v7649, %v4813
    %v9153 = vsel %vm4815, %v9152, %v9151
    %v9154 = vperm.slane %v7651, %v4817
    %v9155 = vsel %vm4819, %v9154, %v9153
    %v9156 = vperm.slane %v7653, %v4821
    %v9157 = vsel %vm4823, %v9156, %v9155
    %v9158 = vperm.slane %v7655, %v4825
    %v9159 = vsel %vm4827, %v9158, %v9157
    %v9160 = vperm.slane %v7657, %v4829
    %v9161 = vsel %vm4831, %v9160, %v9159
    %v9162 = vperm.slane %v7659, %v4833
    %v9163 = vsel %vm4835, %v9162, %v9161
    %v9164 = vperm.slane %v7661, %v4807
    %v9165 = vperm.slane %v7663, %v4809
    %v9166 = vsel %vm4811, %v9165, %v9164
    %v9167 = vperm.slane %v7665, %v4813
    %v9168 = vsel %vm4815, %v9167, %v9166
    %v9169 = vperm.slane %v7667, %v4817
    %v9170 = vsel %vm4819, %v9169, %v9168
    %v9171 = vperm.slane %v7669, %v4821
    %v9172 = vsel %vm4823, %v9171, %v9170
    %v9173 = vperm.slane %v7671, %v4825
    %v9174 = vsel %vm4827, %v9173, %v9172
    %v9175 = vperm.slane %v7673, %v4829
    %v9176 = vsel %vm4831, %v9175, %v9174
    %v9177 = vperm.slane %v7675, %v4833
    %v9178 = vsel %vm4835, %v9177, %v9176
    %v9179 = vperm.slane %v7677, %v4807
    %v9180 = vperm.slane %v7679, %v4809
    %v9181 = vsel %vm4811, %v9180, %v9179
    %v9182 = vperm.slane %v7681, %v4813
    %v9183 = vsel %vm4815, %v9182, %v9181
    %v9184 = vperm.slane %v7683, %v4817
    %v9185 = vsel %vm4819, %v9184, %v9183
    %v9186 = vperm.slane %v7685, %v4821
    %v9187 = vsel %vm4823, %v9186, %v9185
    %v9188 = vperm.slane %v7687, %v4825
    %v9189 = vsel %vm4827, %v9188, %v9187
    %v9190 = vperm.slane %v7689, %v4829
    %v9191 = vsel %vm4831, %v9190, %v9189
    %v9192 = vperm.slane %v7691, %v4833
    %v9193 = vsel %vm4835, %v9192, %v9191
    %v9194 = vperm.slane %v7693, %v4807
    %v9195 = vperm.slane %v7695, %v4809
    %v9196 = vsel %vm4811, %v9195, %v9194
    %v9197 = vperm.slane %v7697, %v4813
    %v9198 = vsel %vm4815, %v9197, %v9196
    %v9199 = vperm.slane %v7699, %v4817
    %v9200 = vsel %vm4819, %v9199, %v9198
    %v9201 = vperm.slane %v7701, %v4821
    %v9202 = vsel %vm4823, %v9201, %v9200
    %v9203 = vperm.slane %v7703, %v4825
    %v9204 = vsel %vm4827, %v9203, %v9202
    %v9205 = vperm.slane %v7705, %v4829
    %v9206 = vsel %vm4831, %v9205, %v9204
    %v9207 = vperm.slane %v7707, %v4833
    %v9208 = vsel %vm4835, %v9207, %v9206
    %v9209 = vperm.slane %v7709, %v4807
    %v9210 = vperm.slane %v7711, %v4809
    %v9211 = vsel %vm4811, %v9210, %v9209
    %v9212 = vperm.slane %v7713, %v4813
    %v9213 = vsel %vm4815, %v9212, %v9211
    %v9214 = vperm.slane %v7715, %v4817
    %v9215 = vsel %vm4819, %v9214, %v9213
    %v9216 = vperm.slane %v7717, %v4821
    %v9217 = vsel %vm4823, %v9216, %v9215
    %v9218 = vperm.slane %v7719, %v4825
    %v9219 = vsel %vm4827, %v9218, %v9217
    %v9220 = vperm.slane %v7721, %v4829
    %v9221 = vsel %vm4831, %v9220, %v9219
    %v9222 = vperm.slane %v7723, %v4833
    %v9223 = vsel %vm4835, %v9222, %v9221
    %v9224 = vperm.slane %v7725, %v4807
    %v9225 = vperm.slane %v7727, %v4809
    %v9226 = vsel %vm4811, %v9225, %v9224
    %v9227 = vperm.slane %v7729, %v4813
    %v9228 = vsel %vm4815, %v9227, %v9226
    %v9229 = vperm.slane %v7731, %v4817
    %v9230 = vsel %vm4819, %v9229, %v9228
    %v9231 = vperm.slane %v7733, %v4821
    %v9232 = vsel %vm4823, %v9231, %v9230
    %v9233 = vperm.slane %v7735, %v4825
    %v9234 = vsel %vm4827, %v9233, %v9232
    %v9235 = vperm.slane %v7737, %v4829
    %v9236 = vsel %vm4831, %v9235, %v9234
    %v9237 = vperm.slane %v7739, %v4833
    %v9238 = vsel %vm4835, %v9237, %v9236
    %v9239 = vperm.slane %v7741, %v4807
    %v9240 = vperm.slane %v7743, %v4809
    %v9241 = vsel %vm4811, %v9240, %v9239
    %v9242 = vperm.slane %v7745, %v4813
    %v9243 = vsel %vm4815, %v9242, %v9241
    %v9244 = vperm.slane %v7747, %v4817
    %v9245 = vsel %vm4819, %v9244, %v9243
    %v9246 = vperm.slane %v7749, %v4821
    %v9247 = vsel %vm4823, %v9246, %v9245
    %v9248 = vperm.slane %v7751, %v4825
    %v9249 = vsel %vm4827, %v9248, %v9247
    %v9250 = vperm.slane %v7753, %v4829
    %v9251 = vsel %vm4831, %v9250, %v9249
    %v9252 = vperm.slane %v7755, %v4833
    %v9253 = vsel %vm4835, %v9252, %v9251
    %v9254 = vperm.slane %v7757, %v4807
    %v9255 = vperm.slane %v7759, %v4809
    %v9256 = vsel %vm4811, %v9255, %v9254
    %v9257 = vperm.slane %v7761, %v4813
    %v9258 = vsel %vm4815, %v9257, %v9256
    %v9259 = vperm.slane %v7763, %v4817
    %v9260 = vsel %vm4819, %v9259, %v9258
    %v9261 = vperm.slane %v7765, %v4821
    %v9262 = vsel %vm4823, %v9261, %v9260
    %v9263 = vperm.slane %v7767, %v4825
    %v9264 = vsel %vm4827, %v9263, %v9262
    %v9265 = vperm.slane %v7769, %v4829
    %v9266 = vsel %vm4831, %v9265, %v9264
    %v9267 = vperm.slane %v7771, %v4833
    %v9268 = vsel %vm4835, %v9267, %v9266
    %v9269 = vperm.slane %v7773, %v4807
    %v9270 = vperm.slane %v7775, %v4809
    %v9271 = vsel %vm4811, %v9270, %v9269
    %v9272 = vperm.slane %v7777, %v4813
    %v9273 = vsel %vm4815, %v9272, %v9271
    %v9274 = vperm.slane %v7779, %v4817
    %v9275 = vsel %vm4819, %v9274, %v9273
    %v9276 = vperm.slane %v7781, %v4821
    %v9277 = vsel %vm4823, %v9276, %v9275
    %v9278 = vperm.slane %v7783, %v4825
    %v9279 = vsel %vm4827, %v9278, %v9277
    %v9280 = vperm.slane %v7785, %v4829
    %v9281 = vsel %vm4831, %v9280, %v9279
    %v9282 = vperm.slane %v7787, %v4833
    %v9283 = vsel %vm4835, %v9282, %v9281
    %v9284 = vperm.slane %v7789, %v4807
    %v9285 = vperm.slane %v7791, %v4809
    %v9286 = vsel %vm4811, %v9285, %v9284
    %v9287 = vperm.slane %v7793, %v4813
    %v9288 = vsel %vm4815, %v9287, %v9286
    %v9289 = vperm.slane %v7795, %v4817
    %v9290 = vsel %vm4819, %v9289, %v9288
    %v9291 = vperm.slane %v7797, %v4821
    %v9292 = vsel %vm4823, %v9291, %v9290
    %v9293 = vperm.slane %v7799, %v4825
    %v9294 = vsel %vm4827, %v9293, %v9292
    %v9295 = vperm.slane %v7801, %v4829
    %v9296 = vsel %vm4831, %v9295, %v9294
    %v9297 = vperm.slane %v7803, %v4833
    %v9298 = vsel %vm4835, %v9297, %v9296
    %v9299 = vperm.slane %v7805, %v4807
    %v9300 = vperm.slane %v7807, %v4809
    %v9301 = vsel %vm4811, %v9300, %v9299
    %v9302 = vperm.slane %v7809, %v4813
    %v9303 = vsel %vm4815, %v9302, %v9301
    %v9304 = vperm.slane %v7811, %v4817
    %v9305 = vsel %vm4819, %v9304, %v9303
    %v9306 = vperm.slane %v7813, %v4821
    %v9307 = vsel %vm4823, %v9306, %v9305
    %v9308 = vperm.slane %v7815, %v4825
    %v9309 = vsel %vm4827, %v9308, %v9307
    %v9310 = vperm.slane %v7817, %v4829
    %v9311 = vsel %vm4831, %v9310, %v9309
    %v9312 = vperm.slane %v7819, %v4833
    %v9313 = vsel %vm4835, %v9312, %v9311
    %v9314 = vperm.slane %v7821, %v4807
    %v9315 = vperm.slane %v7823, %v4809
    %v9316 = vsel %vm4811, %v9315, %v9314
    %v9317 = vperm.slane %v7825, %v4813
    %v9318 = vsel %vm4815, %v9317, %v9316
    %v9319 = vperm.slane %v7827, %v4817
    %v9320 = vsel %vm4819, %v9319, %v9318
    %v9321 = vperm.slane %v7829, %v4821
    %v9322 = vsel %vm4823, %v9321, %v9320
    %v9323 = vperm.slane %v7831, %v4825
    %v9324 = vsel %vm4827, %v9323, %v9322
    %v9325 = vperm.slane %v7833, %v4829
    %v9326 = vsel %vm4831, %v9325, %v9324
    %v9327 = vperm.slane %v7835, %v4833
    %v9328 = vsel %vm4835, %v9327, %v9326
    %v9329 = vperm.slane %v7837, %v4807
    %v9330 = vperm.slane %v7839, %v4809
    %v9331 = vsel %vm4811, %v9330, %v9329
    %v9332 = vperm.slane %v7841, %v4813
    %v9333 = vsel %vm4815, %v9332, %v9331
    %v9334 = vperm.slane %v7843, %v4817
    %v9335 = vsel %vm4819, %v9334, %v9333
    %v9336 = vperm.slane %v7845, %v4821
    %v9337 = vsel %vm4823, %v9336, %v9335
    %v9338 = vperm.slane %v7847, %v4825
    %v9339 = vsel %vm4827, %v9338, %v9337
    %v9340 = vperm.slane %v7849, %v4829
    %v9341 = vsel %vm4831, %v9340, %v9339
    %v9342 = vperm.slane %v7851, %v4833
    %v9343 = vsel %vm4835, %v9342, %v9341
    %v9344 = vperm.slane %v7853, %v4807
    %v9345 = vperm.slane %v7855, %v4809
    %v9346 = vsel %vm4811, %v9345, %v9344
    %v9347 = vperm.slane %v7857, %v4813
    %v9348 = vsel %vm4815, %v9347, %v9346
    %v9349 = vperm.slane %v7859, %v4817
    %v9350 = vsel %vm4819, %v9349, %v9348
    %v9351 = vperm.slane %v7861, %v4821
    %v9352 = vsel %vm4823, %v9351, %v9350
    %v9353 = vperm.slane %v7863, %v4825
    %v9354 = vsel %vm4827, %v9353, %v9352
    %v9355 = vperm.slane %v7865, %v4829
    %v9356 = vsel %vm4831, %v9355, %v9354
    %v9357 = vperm.slane %v7867, %v4833
    %v9358 = vsel %vm4835, %v9357, %v9356
    %v9359 = vperm.slane %v7869, %v4807
    %v9360 = vperm.slane %v7871, %v4809
    %v9361 = vsel %vm4811, %v9360, %v9359
    %v9362 = vperm.slane %v7873, %v4813
    %v9363 = vsel %vm4815, %v9362, %v9361
    %v9364 = vperm.slane %v7875, %v4817
    %v9365 = vsel %vm4819, %v9364, %v9363
    %v9366 = vperm.slane %v7877, %v4821
    %v9367 = vsel %vm4823, %v9366, %v9365
    %v9368 = vperm.slane %v7879, %v4825
    %v9369 = vsel %vm4827, %v9368, %v9367
    %v9370 = vperm.slane %v7881, %v4829
    %v9371 = vsel %vm4831, %v9370, %v9369
    %v9372 = vperm.slane %v7883, %v4833
    %v9373 = vsel %vm4835, %v9372, %v9371
    %v9374 = vperm.slane %v7885, %v4807
    %v9375 = vperm.slane %v7887, %v4809
    %v9376 = vsel %vm4811, %v9375, %v9374
    %v9377 = vperm.slane %v7889, %v4813
    %v9378 = vsel %vm4815, %v9377, %v9376
    %v9379 = vperm.slane %v7891, %v4817
    %v9380 = vsel %vm4819, %v9379, %v9378
    %v9381 = vperm.slane %v7893, %v4821
    %v9382 = vsel %vm4823, %v9381, %v9380
    %v9383 = vperm.slane %v7895, %v4825
    %v9384 = vsel %vm4827, %v9383, %v9382
    %v9385 = vperm.slane %v7897, %v4829
    %v9386 = vsel %vm4831, %v9385, %v9384
    %v9387 = vperm.slane %v7899, %v4833
    %v9388 = vsel %vm4835, %v9387, %v9386
    %v9389 = vperm.slane %v7901, %v4807
    %v9390 = vperm.slane %v7903, %v4809
    %v9391 = vsel %vm4811, %v9390, %v9389
    %v9392 = vperm.slane %v7905, %v4813
    %v9393 = vsel %vm4815, %v9392, %v9391
    %v9394 = vperm.slane %v7907, %v4817
    %v9395 = vsel %vm4819, %v9394, %v9393
    %v9396 = vperm.slane %v7909, %v4821
    %v9397 = vsel %vm4823, %v9396, %v9395
    %v9398 = vperm.slane %v7911, %v4825
    %v9399 = vsel %vm4827, %v9398, %v9397
    %v9400 = vperm.slane %v7913, %v4829
    %v9401 = vsel %vm4831, %v9400, %v9399
    %v9402 = vperm.slane %v7915, %v4833
    %v9403 = vsel %vm4835, %v9402, %v9401
    %v9404 = vsel %vm5782, %v8473, %v8458
    %v9405 = vsel %vm5784, %v8488, %v9404
    %v9406 = vsel %vm5786, %v8503, %v9405
    %v9407 = vsel %vm5788, %v8518, %v9406
    %v9408 = vsel %vm5790, %v8533, %v9407
    %v9409 = vsel %vm5792, %v8548, %v9408
    %v9410 = vsel %vm5794, %v8563, %v9409
    %v9411 = vsel %vm5782, %v8593, %v8578
    %v9412 = vsel %vm5784, %v8608, %v9411
    %v9413 = vsel %vm5786, %v8623, %v9412
    %v9414 = vsel %vm5788, %v8638, %v9413
    %v9415 = vsel %vm5790, %v8653, %v9414
    %v9416 = vsel %vm5792, %v8668, %v9415
    %v9417 = vsel %vm5794, %v8683, %v9416
    %v9418 = vsel %vm5782, %v8713, %v8698
    %v9419 = vsel %vm5784, %v8728, %v9418
    %v9420 = vsel %vm5786, %v8743, %v9419
    %v9421 = vsel %vm5788, %v8758, %v9420
    %v9422 = vsel %vm5790, %v8773, %v9421
    %v9423 = vsel %vm5792, %v8788, %v9422
    %v9424 = vsel %vm5794, %v8803, %v9423
    %v9425 = vsel %vm5782, %v8833, %v8818
    %v9426 = vsel %vm5784, %v8848, %v9425
    %v9427 = vsel %vm5786, %v8863, %v9426
    %v9428 = vsel %vm5788, %v8878, %v9427
    %v9429 = vsel %vm5790, %v8893, %v9428
    %v9430 = vsel %vm5792, %v8908, %v9429
    %v9431 = vsel %vm5794, %v8923, %v9430
    %v9432 = vsel %vm5782, %v8953, %v8938
    %v9433 = vsel %vm5784, %v8968, %v9432
    %v9434 = vsel %vm5786, %v8983, %v9433
    %v9435 = vsel %vm5788, %v8998, %v9434
    %v9436 = vsel %vm5790, %v9013, %v9435
    %v9437 = vsel %vm5792, %v9028, %v9436
    %v9438 = vsel %vm5794, %v9043, %v9437
    %v9439 = vsel %vm5782, %v9073, %v9058
    %v9440 = vsel %vm5784, %v9088, %v9439
    %v9441 = vsel %vm5786, %v9103, %v9440
    %v9442 = vsel %vm5788, %v9118, %v9441
    %v9443 = vsel %vm5790, %v9133, %v9442
    %v9444 = vsel %vm5792, %v9148, %v9443
    %v9445 = vsel %vm5794, %v9163, %v9444
    %v9446 = vsel %vm5782, %v9193, %v9178
    %v9447 = vsel %vm5784, %v9208, %v9446
    %v9448 = vsel %vm5786, %v9223, %v9447
    %v9449 = vsel %vm5788, %v9238, %v9448
    %v9450 = vsel %vm5790, %v9253, %v9449
    %v9451 = vsel %vm5792, %v9268, %v9450
    %v9452 = vsel %vm5794, %v9283, %v9451
    %v9453 = vsel %vm5782, %v9313, %v9298
    %v9454 = vsel %vm5784, %v9328, %v9453
    %v9455 = vsel %vm5786, %v9343, %v9454
    %v9456 = vsel %vm5788, %v9358, %v9455
    %v9457 = vsel %vm5790, %v9373, %v9456
    %v9458 = vsel %vm5792, %v9388, %v9457
    %v9459 = vsel %vm5794, %v9403, %v9458
    %v9468 = vmul.f32 %v7924, %v9410
    %v9469 = vmul.f32 %v7925, %v9417
    %v9470 = vmul.f32 %v7926, %v9424
    %v9471 = vmul.f32 %v7927, %v9431
    %v9472 = vmul.f32 %v7928, %v9438
    %v9473 = vmul.f32 %v7929, %v9445
    %v9474 = vmul.f32 %v7930, %v9452
    %v9475 = vmul.f32 %v7931, %v9459
    %vm9476 = vcmask 523264
    %v9477 = vsel %vm9476, %v9468, 0.0
    %9478 = vadd.xlane.f32.xlu0 %v9477
    %v9479 = vpop.xlane.xlu0 %9478
    %v9480 = vsel %vm9476, %v9469, 0.0
    %9481 = vadd.xlane.f32.xlu0 %v9480
    %v9482 = vpop.xlane.xlu0 %9481
    %v9483 = vsel %vm9476, %v9470, 0.0
    %9484 = vadd.xlane.f32.xlu0 %v9483
    %v9485 = vpop.xlane.xlu0 %9484
    %v9486 = vsel %vm9476, %v9471, 0.0
    %9487 = vadd.xlane.f32.xlu0 %v9486
    %v9488 = vpop.xlane.xlu0 %9487
    %v9489 = vsel %vm9476, %v9472, 0.0
    %9490 = vadd.xlane.f32.xlu0 %v9489
    %v9491 = vpop.xlane.xlu0 %9490
    %v9492 = vsel %vm9476, %v9473, 0.0
    %9493 = vadd.xlane.f32.xlu0 %v9492
    %v9494 = vpop.xlane.xlu0 %9493
    %v9495 = vsel %vm9476, %v9474, 0.0
    %9496 = vadd.xlane.f32.xlu0 %v9495
    %v9497 = vpop.xlane.xlu0 %9496
    %v9498 = vsel %vm9476, %v9475, 0.0
    %9499 = vadd.xlane.f32.xlu0 %v9498
    %v9500 = vpop.xlane.xlu0 %9499
    %9501 = vst.msk [vmem:[#allocation5] sm:$0xff] %vm9476, %v7916
    %9502 = vst.msk [vmem:[#allocation5 + $0x8] sm:$0xff] %vm9476, %v7917
    %9503 = vst.msk [vmem:[#allocation5 + $0x10] sm:$0xff] %vm9476, %v7918
    %9504 = vst.msk [vmem:[#allocation5 + $0x18] sm:$0xff] %vm9476, %v7919
    %9505 = vst.msk [vmem:[#allocation5 + $0x20] sm:$0xff] %vm9476, %v7920
    %9506 = vst.msk [vmem:[#allocation5 + $0x28] sm:$0xff] %vm9476, %v7921
    %9507 = vst.msk [vmem:[#allocation5 + $0x30] sm:$0xff] %vm9476, %v7922
    %9508 = vst.msk [vmem:[#allocation5 + $0x38] sm:$0xff] %vm9476, %v7923
    %v9509 = vld [vmem:[%s6] sm:$0xff]
    %v9510 = vld [vmem:[%s6 + $0x8] sm:$0xff]
    %v9511 = vld [vmem:[%s6 + $0x10] sm:$0xff]
    %v9512 = vld [vmem:[%s6 + $0x18] sm:$0xff]
    %v9513 = vld [vmem:[%s6 + $0x20] sm:$0x1]
    %v9515 = vsel %vm143, %v9513, 0
    %9517 = vmatpush.msra.mxu0 0.0
    %9518 = vmatpush.msra.mxu0 0.0
    %9519 = vmatpush.msra.mxu0 0.0
    %9520 = vmatpush.msra.mxu0 0.0
    %9521 = vmatpush.msra.mxu0 0.0
    %9522 = vmatpush.msra.mxu0 0.0
    %9523 = vmatpush.msra.mxu0 0.0
    %9524 = vmatpush.msra.mxu0 0.0
    %9525 = vmatpush.msra.mxu0 0.0
    %9526 = vmatpush.msra.mxu0 0.0
    %9527 = vmatpush.msra.mxu0 0.0
    %9528 = vmatpush.msra.mxu0 %v9515
    %9529 = vmatpush.msra.mxu0 %v9512
    %9530 = vmatpush.msra.mxu0 %v9511
    %9531 = vmatpush.msra.mxu0 %v9510
    %9532 = vmatpush.msra.mxu0 %v9509
    %9533 = vmatmul.f32.gmra.mxu0 %v120
    %v9534 = vpop.f32.mrf.mxu0
    %v9535 = vadd.f32 0.0, %v9534
    %9536 = vmatmul.f32.gmra.mxu0 %v123
    %v9537 = vpop.f32.mrf.mxu0
    %v9538 = vadd.f32 0.0, %v9537
    %9539 = vmatmul.f32.gmra.mxu0 %v126
    %v9540 = vpop.f32.mrf.mxu0
    %v9541 = vadd.f32 0.0, %v9540
    %9542 = vmatmul.f32.gmra.mxu0 %v129
    %v9543 = vpop.f32.mrf.mxu0
    %v9544 = vadd.f32 0.0, %v9543
    %9545 = vmatmul.f32.gmra.mxu0 %v132
    %v9546 = vpop.f32.mrf.mxu0
    %v9547 = vadd.f32 0.0, %v9546
    %9548 = vmatmul.f32.gmra.mxu0 %v135
    %v9549 = vpop.f32.mrf.mxu0
    %v9550 = vadd.f32 0.0, %v9549
    %9551 = vmatmul.f32.gmra.mxu0 %v138
    %v9552 = vpop.f32.mrf.mxu0
    %v9553 = vadd.f32 0.0, %v9552
    %9554 = vmatmul.f32.gmra.mxu0 %v141
    %v9555 = vpop.f32.mrf.mxu0
    %v9556 = vadd.f32 0.0, %v9555
    %9557 = vdwg.mxu0
    %v9558 = vperm.slane %v94, 6
    %v9559 = vadd.f32 %v9535, %v9558
    %v9560 = vadd.f32 %v9538, %v9558
    %v9561 = vadd.f32 %v9541, %v9558
    %v9562 = vadd.f32 %v9544, %v9558
    %v9563 = vadd.f32 %v9547, %v9558
    %v9564 = vadd.f32 %v9550, %v9558
    %v9565 = vadd.f32 %v9553, %v9558
    %v9566 = vadd.f32 %v9556, %v9558
    %v9567 = vsel %vm46, %v9559, 0.0
    %9568 = vadd.xlane.f32.xlu0 %v9567
    %v9569 = vpop.xlane.xlu0 %9568
    %v9570 = vsel %vm46, %v9560, 0.0
    %9571 = vadd.xlane.f32.xlu0 %v9570
    %v9572 = vpop.xlane.xlu0 %9571
    %v9573 = vsel %vm46, %v9561, 0.0
    %9574 = vadd.xlane.f32.xlu0 %v9573
    %v9575 = vpop.xlane.xlu0 %9574
    %v9576 = vsel %vm46, %v9562, 0.0
    %9577 = vadd.xlane.f32.xlu0 %v9576
    %v9578 = vpop.xlane.xlu0 %9577
    %v9579 = vsel %vm46, %v9563, 0.0
    %9580 = vadd.xlane.f32.xlu0 %v9579
    %v9581 = vpop.xlane.xlu0 %9580
    %v9582 = vsel %vm46, %v9564, 0.0
    %9583 = vadd.xlane.f32.xlu0 %v9582
    %v9584 = vpop.xlane.xlu0 %9583
    %v9585 = vsel %vm46, %v9565, 0.0
    %9586 = vadd.xlane.f32.xlu0 %v9585
    %v9587 = vpop.xlane.xlu0 %9586
    %v9588 = vsel %vm46, %v9566, 0.0
    %9589 = vadd.xlane.f32.xlu0 %v9588
    %v9590 = vpop.xlane.xlu0 %9589
    %v9591 = vmul.f32 %v9569, %v77
    %v9592 = vmul.f32 %v9572, %v77
    %v9593 = vmul.f32 %v9575, %v77
    %v9594 = vmul.f32 %v9578, %v77
    %v9595 = vmul.f32 %v9581, %v77
    %v9596 = vmul.f32 %v9584, %v77
    %v9597 = vmul.f32 %v9587, %v77
    %v9598 = vmul.f32 %v9590, %v77
    %v9599 = vsub.f32 %v9559, %v9591
    %v9600 = vsub.f32 %v9560, %v9592
    %v9601 = vsub.f32 %v9561, %v9593
    %v9602 = vsub.f32 %v9562, %v9594
    %v9603 = vsub.f32 %v9563, %v9595
    %v9604 = vsub.f32 %v9564, %v9596
    %v9605 = vsub.f32 %v9565, %v9597
    %v9606 = vsub.f32 %v9566, %v9598
    %v9607 = vmul.f32 %v9599, %v9599
    %v9608 = vmul.f32 %v9600, %v9600
    %v9609 = vmul.f32 %v9601, %v9601
    %v9610 = vmul.f32 %v9602, %v9602
    %v9611 = vmul.f32 %v9603, %v9603
    %v9612 = vmul.f32 %v9604, %v9604
    %v9613 = vmul.f32 %v9605, %v9605
    %v9614 = vmul.f32 %v9606, %v9606
    %v9615 = vsel %vm46, %v9607, 0.0
    %9616 = vadd.xlane.f32.xlu0 %v9615
    %v9617 = vpop.xlane.xlu0 %9616
    %v9618 = vsel %vm46, %v9608, 0.0
    %9619 = vadd.xlane.f32.xlu0 %v9618
    %v9620 = vpop.xlane.xlu0 %9619
    %v9621 = vsel %vm46, %v9609, 0.0
    %9622 = vadd.xlane.f32.xlu0 %v9621
    %v9623 = vpop.xlane.xlu0 %9622
    %v9624 = vsel %vm46, %v9610, 0.0
    %9625 = vadd.xlane.f32.xlu0 %v9624
    %v9626 = vpop.xlane.xlu0 %9625
    %v9627 = vsel %vm46, %v9611, 0.0
    %9628 = vadd.xlane.f32.xlu0 %v9627
    %v9629 = vpop.xlane.xlu0 %9628
    %v9630 = vsel %vm46, %v9612, 0.0
    %9631 = vadd.xlane.f32.xlu0 %v9630
    %v9632 = vpop.xlane.xlu0 %9631
    %v9633 = vsel %vm46, %v9613, 0.0
    %9634 = vadd.xlane.f32.xlu0 %v9633
    %v9635 = vpop.xlane.xlu0 %9634
    %v9636 = vsel %vm46, %v9614, 0.0
    %9637 = vadd.xlane.f32.xlu0 %v9636
    %v9638 = vpop.xlane.xlu0 %9637
    %v9639 = vmul.f32 %v9617, %v77
    %v9640 = vmul.f32 %v9620, %v77
    %v9641 = vmul.f32 %v9623, %v77
    %v9642 = vmul.f32 %v9626, %v77
    %v9643 = vmul.f32 %v9629, %v77
    %v9644 = vmul.f32 %v9632, %v77
    %v9645 = vmul.f32 %v9635, %v77
    %v9646 = vmul.f32 %v9638, %v77
    %9655 = vrot.lane.b32.xlu0 %v9535, 96
    %v9656 = vpop.permute.xlu0 %9655
    %9657 = vrot.lane.b32.xlu0 %v9538, 96
    %v9658 = vpop.permute.xlu0 %9657
    %9659 = vrot.lane.b32.xlu0 %v9541, 96
    %v9660 = vpop.permute.xlu0 %9659
    %9661 = vrot.lane.b32.xlu0 %v9544, 96
    %v9662 = vpop.permute.xlu0 %9661
    %9663 = vrot.lane.b32.xlu0 %v9547, 96
    %v9664 = vpop.permute.xlu0 %9663
    %9665 = vrot.lane.b32.xlu0 %v9550, 96
    %v9666 = vpop.permute.xlu0 %9665
    %9667 = vrot.lane.b32.xlu0 %v9553, 96
    %v9668 = vpop.permute.xlu0 %9667
    %9669 = vrot.lane.b32.xlu0 %v9556, 96
    %v9670 = vpop.permute.xlu0 %9669
    %v9679 = vsel %vm46, %v9656, 0.0
    %9680 = vadd.xlane.f32.xlu0 %v9679
    %v9681 = vpop.xlane.xlu0 %9680
    %v9682 = vsel %vm46, %v9658, 0.0
    %9683 = vadd.xlane.f32.xlu0 %v9682
    %v9684 = vpop.xlane.xlu0 %9683
    %v9685 = vsel %vm46, %v9660, 0.0
    %9686 = vadd.xlane.f32.xlu0 %v9685
    %v9687 = vpop.xlane.xlu0 %9686
    %v9688 = vsel %vm46, %v9662, 0.0
    %9689 = vadd.xlane.f32.xlu0 %v9688
    %v9690 = vpop.xlane.xlu0 %9689
    %v9691 = vsel %vm46, %v9664, 0.0
    %9692 = vadd.xlane.f32.xlu0 %v9691
    %v9693 = vpop.xlane.xlu0 %9692
    %v9694 = vsel %vm46, %v9666, 0.0
    %9695 = vadd.xlane.f32.xlu0 %v9694
    %v9696 = vpop.xlane.xlu0 %9695
    %v9697 = vsel %vm46, %v9668, 0.0
    %9698 = vadd.xlane.f32.xlu0 %v9697
    %v9699 = vpop.xlane.xlu0 %9698
    %v9700 = vsel %vm46, %v9670, 0.0
    %9701 = vadd.xlane.f32.xlu0 %v9700
    %v9702 = vpop.xlane.xlu0 %9701
    %v9703 = vmul.f32 %v9681, %v77
    %v9704 = vmul.f32 %v9684, %v77
    %v9705 = vmul.f32 %v9687, %v77
    %v9706 = vmul.f32 %v9690, %v77
    %v9707 = vmul.f32 %v9693, %v77
    %v9708 = vmul.f32 %v9696, %v77
    %v9709 = vmul.f32 %v9699, %v77
    %v9710 = vmul.f32 %v9702, %v77
    %v9711 = vsub.f32 %v9535, %v9703
    %v9712 = vsub.f32 %v9538, %v9704
    %v9713 = vsub.f32 %v9541, %v9705
    %v9714 = vsub.f32 %v9544, %v9706
    %v9715 = vsub.f32 %v9547, %v9707
    %v9716 = vsub.f32 %v9550, %v9708
    %v9717 = vsub.f32 %v9553, %v9709
    %v9718 = vsub.f32 %v9556, %v9710
    %v9719 = vmul.f32 %v9711, %v9711
    %v9720 = vmul.f32 %v9712, %v9712
    %v9721 = vmul.f32 %v9713, %v9713
    %v9722 = vmul.f32 %v9714, %v9714
    %v9723 = vmul.f32 %v9715, %v9715
    %v9724 = vmul.f32 %v9716, %v9716
    %v9725 = vmul.f32 %v9717, %v9717
    %v9726 = vmul.f32 %v9718, %v9718
    %9735 = vrot.lane.b32.xlu0 %v9719, 96
    %v9736 = vpop.permute.xlu0 %9735
    %9737 = vrot.lane.b32.xlu0 %v9720, 96
    %v9738 = vpop.permute.xlu0 %9737
    %9739 = vrot.lane.b32.xlu0 %v9721, 96
    %v9740 = vpop.permute.xlu0 %9739
    %9741 = vrot.lane.b32.xlu0 %v9722, 96
    %v9742 = vpop.permute.xlu0 %9741
    %9743 = vrot.lane.b32.xlu0 %v9723, 96
    %v9744 = vpop.permute.xlu0 %9743
    %9745 = vrot.lane.b32.xlu0 %v9724, 96
    %v9746 = vpop.permute.xlu0 %9745
    %9747 = vrot.lane.b32.xlu0 %v9725, 96
    %v9748 = vpop.permute.xlu0 %9747
    %9749 = vrot.lane.b32.xlu0 %v9726, 96
    %v9750 = vpop.permute.xlu0 %9749
    %v9759 = vsel %vm46, %v9736, 0.0
    %9760 = vadd.xlane.f32.xlu0 %v9759
    %v9761 = vpop.xlane.xlu0 %9760
    %v9762 = vsel %vm46, %v9738, 0.0
    %9763 = vadd.xlane.f32.xlu0 %v9762
    %v9764 = vpop.xlane.xlu0 %9763
    %v9765 = vsel %vm46, %v9740, 0.0
    %9766 = vadd.xlane.f32.xlu0 %v9765
    %v9767 = vpop.xlane.xlu0 %9766
    %v9768 = vsel %vm46, %v9742, 0.0
    %9769 = vadd.xlane.f32.xlu0 %v9768
    %v9770 = vpop.xlane.xlu0 %9769
    %v9771 = vsel %vm46, %v9744, 0.0
    %9772 = vadd.xlane.f32.xlu0 %v9771
    %v9773 = vpop.xlane.xlu0 %9772
    %v9774 = vsel %vm46, %v9746, 0.0
    %9775 = vadd.xlane.f32.xlu0 %v9774
    %v9776 = vpop.xlane.xlu0 %9775
    %v9777 = vsel %vm46, %v9748, 0.0
    %9778 = vadd.xlane.f32.xlu0 %v9777
    %v9779 = vpop.xlane.xlu0 %9778
    %v9780 = vsel %vm46, %v9750, 0.0
    %9781 = vadd.xlane.f32.xlu0 %v9780
    %v9782 = vpop.xlane.xlu0 %9781
    %v9783 = vmul.f32 %v9761, %v77
    %v9784 = vmul.f32 %v9764, %v77
    %v9785 = vmul.f32 %v9767, %v77
    %v9786 = vmul.f32 %v9770, %v77
    %v9787 = vmul.f32 %v9773, %v77
    %v9788 = vmul.f32 %v9776, %v77
    %v9789 = vmul.f32 %v9779, %v77
    %v9790 = vmul.f32 %v9782, %v77
    %v9791 = vmul.f32 %v9599, -0.0625
    %v9792 = vmul.f32 %v9600, -0.0625
    %v9793 = vmul.f32 %v9601, -0.0625
    %v9794 = vmul.f32 %v9602, -0.0625
    %v9795 = vmul.f32 %v9603, -0.0625
    %v9796 = vmul.f32 %v9604, -0.0625
    %v9797 = vmul.f32 %v9605, -0.0625
    %v9798 = vmul.f32 %v9606, -0.0625
    %v9799 = vsel %vm46, %v9791, %v9639
    %v9800 = vsel %vm46, %v9792, %v9640
    %v9801 = vsel %vm46, %v9793, %v9641
    %v9802 = vsel %vm46, %v9794, %v9642
    %v9803 = vsel %vm46, %v9795, %v9643
    %v9804 = vsel %vm46, %v9796, %v9644
    %v9805 = vsel %vm46, %v9797, %v9645
    %v9806 = vsel %vm46, %v9798, %v9646
    %v9807 = vsel %vm118, %v9799, 1.0
    %v9808 = vsel %vm118, %v9800, 1.0
    %v9809 = vsel %vm118, %v9801, 1.0
    %v9810 = vsel %vm118, %v9802, 1.0
    %v9811 = vsel %vm118, %v9803, 1.0
    %v9812 = vsel %vm118, %v9804, 1.0
    %v9813 = vsel %vm118, %v9805, 1.0
    %v9814 = vsel %vm118, %v9806, 1.0
    %9823 = vrot.lane.b32.xlu0 %v9711, 96
    %v9824 = vpop.permute.xlu0 %9823
    %9825 = vrot.lane.b32.xlu0 %v9712, 96
    %v9826 = vpop.permute.xlu0 %9825
    %9827 = vrot.lane.b32.xlu0 %v9713, 96
    %v9828 = vpop.permute.xlu0 %9827
    %9829 = vrot.lane.b32.xlu0 %v9714, 96
    %v9830 = vpop.permute.xlu0 %9829
    %9831 = vrot.lane.b32.xlu0 %v9715, 96
    %v9832 = vpop.permute.xlu0 %9831
    %9833 = vrot.lane.b32.xlu0 %v9716, 96
    %v9834 = vpop.permute.xlu0 %9833
    %9835 = vrot.lane.b32.xlu0 %v9717, 96
    %v9836 = vpop.permute.xlu0 %9835
    %9837 = vrot.lane.b32.xlu0 %v9718, 96
    %v9838 = vpop.permute.xlu0 %9837
    %v9847 = vsel %vm46, %v9824, 1.0
    %v9848 = vsel %vm46, %v9826, 1.0
    %v9849 = vsel %vm46, %v9828, 1.0
    %v9850 = vsel %vm46, %v9830, 1.0
    %v9851 = vsel %vm46, %v9832, 1.0
    %v9852 = vsel %vm46, %v9834, 1.0
    %v9853 = vsel %vm46, %v9836, 1.0
    %v9854 = vsel %vm46, %v9838, 1.0
    %v9855 = vsel %vm118, %v9847, %v9783
    %v9856 = vsel %vm118, %v9848, %v9784
    %v9857 = vsel %vm118, %v9849, %v9785
    %v9858 = vsel %vm118, %v9850, %v9786
    %v9859 = vsel %vm118, %v9851, %v9787
    %v9860 = vsel %vm118, %v9852, %v9788
    %v9861 = vsel %vm118, %v9853, %v9789
    %v9862 = vsel %vm118, %v9854, %v9790
    %vm9863 = vcmask 277504
    %v9865 = vsel %vm9863, %v9807, 0
    %v9868 = vsel %vm9863, %v9808, 0
    %v9871 = vsel %vm9863, %v9809, 0
    %v9874 = vsel %vm9863, %v9810, 0
    %v9877 = vsel %vm9863, %v9811, 0
    %v9880 = vsel %vm9863, %v9812, 0
    %v9883 = vsel %vm9863, %v9813, 0
    %v9886 = vsel %vm9863, %v9814, 0
    %v9889 = vsel %vm9863, %v9855, 0
    %v9892 = vsel %vm9863, %v9856, 0
    %v9895 = vsel %vm9863, %v9857, 0
    %v9898 = vsel %vm9863, %v9858, 0
    %v9901 = vsel %vm9863, %v9859, 0
    %v9904 = vsel %vm9863, %v9860, 0
    %v9907 = vsel %vm9863, %v9861, 0
    %v9910 = vsel %vm9863, %v9862, 0
    %9912 = vmatpush.xpose.msra.mxu0 0.0
    %9913 = vmatpush.xpose.msra.mxu0 0.0
    %9914 = vmatpush.xpose.msra.mxu0 0.0
    %9915 = vmatpush.xpose.msra.mxu0 0.0
    %9916 = vmatpush.xpose.msra.mxu0 0.0
    %9917 = vmatpush.xpose.msra.mxu0 0.0
    %9918 = vmatpush.xpose.msra.mxu0 0.0
    %9919 = vmatpush.xpose.msra.mxu0 0.0
    %9920 = vmatpush.xpose.msra.mxu0 %v9910
    %9921 = vmatpush.xpose.msra.mxu0 %v9907
    %9922 = vmatpush.xpose.msra.mxu0 %v9904
    %9923 = vmatpush.xpose.msra.mxu0 %v9901
    %9924 = vmatpush.xpose.msra.mxu0 %v9898
    %9925 = vmatpush.xpose.msra.mxu0 %v9895
    %9926 = vmatpush.xpose.msra.mxu0 %v9892
    %9927 = vmatpush.xpose.msra.mxu0 %v9889
    %9928 = vmatmul.f32.gmra.mxu0 %v9865
    %v9929 = vpop.f32.mrf.mxu0
    %v9930 = vadd.f32 0.0, %v9929
    %9931 = vmatmul.f32.gmra.mxu0 %v9868
    %v9932 = vpop.f32.mrf.mxu0
    %v9933 = vadd.f32 0.0, %v9932
    %9934 = vmatmul.f32.gmra.mxu0 %v9871
    %v9935 = vpop.f32.mrf.mxu0
    %v9936 = vadd.f32 0.0, %v9935
    %9937 = vmatmul.f32.gmra.mxu0 %v9874
    %v9938 = vpop.f32.mrf.mxu0
    %v9939 = vadd.f32 0.0, %v9938
    %9940 = vmatmul.f32.gmra.mxu0 %v9877
    %v9941 = vpop.f32.mrf.mxu0
    %v9942 = vadd.f32 0.0, %v9941
    %9943 = vmatmul.f32.gmra.mxu0 %v9880
    %v9944 = vpop.f32.mrf.mxu0
    %v9945 = vadd.f32 0.0, %v9944
    %9946 = vmatmul.f32.gmra.mxu0 %v9883
    %v9947 = vpop.f32.mrf.mxu0
    %v9948 = vadd.f32 0.0, %v9947
    %9949 = vmatmul.f32.gmra.mxu0 %v9886
    %v9950 = vpop.f32.mrf.mxu0
    %v9951 = vadd.f32 0.0, %v9950
    %9952 = vdwg.mxu0
    %v9953 = vmax.f32 %v9930, 0.0
    %v9954 = vmax.f32 %v9933, 0.0
    %v9955 = vmax.f32 %v9936, 0.0
    %v9956 = vmax.f32 %v9939, 0.0
    %v9957 = vmax.f32 %v9942, 0.0
    %v9958 = vmax.f32 %v9945, 0.0
    %v9959 = vmax.f32 %v9948, 0.0
    %v9960 = vmax.f32 %v9951, 0.0
    %v9961 = vadd.f32 %v9953, 1e-05
    %v9962 = vadd.f32 %v9954, 1e-05
    %v9963 = vadd.f32 %v9955, 1e-05
    %v9964 = vadd.f32 %v9956, 1e-05
    %v9965 = vadd.f32 %v9957, 1e-05
    %v9966 = vadd.f32 %v9958, 1e-05
    %v9967 = vadd.f32 %v9959, 1e-05
    %v9968 = vadd.f32 %v9960, 1e-05
    %v9969 = vrsqrt.pop %v9961
    %v9970 = vmul.f32 %v9969, %v9961
    %v9971 = vmul.f32 %v9970, %v9969
    %v9972 = vmul.f32 0.5, %v9971
    %v9973 = vsub.f32 1.5, %v9972
    %v9974 = vmul.f32 %v9969, %v9973
    %vm9975 = vweird.f32 %v9961
    %vm9976 = vweird.f32 %v9969
    %vm9977 = vmor %vm9975, %vm9976
    %v9978 = vsel %vm9977, %v9969, %v9974
    %v9979 = vrsqrt.pop %v9962
    %v9980 = vmul.f32 %v9979, %v9962
    %v9981 = vmul.f32 %v9980, %v9979
    %v9982 = vmul.f32 0.5, %v9981
    %v9983 = vsub.f32 1.5, %v9982
    %v9984 = vmul.f32 %v9979, %v9983
    %vm9985 = vweird.f32 %v9962
    %vm9986 = vweird.f32 %v9979
    %vm9987 = vmor %vm9985, %vm9986
    %v9988 = vsel %vm9987, %v9979, %v9984
    %v9989 = vrsqrt.pop %v9963
    %v9990 = vmul.f32 %v9989, %v9963
    %v9991 = vmul.f32 %v9990, %v9989
    %v9992 = vmul.f32 0.5, %v9991
    %v9993 = vsub.f32 1.5, %v9992
    %v9994 = vmul.f32 %v9989, %v9993
    %vm9995 = vweird.f32 %v9963
    %vm9996 = vweird.f32 %v9989
    %vm9997 = vmor %vm9995, %vm9996
    %v9998 = vsel %vm9997, %v9989, %v9994
    %v9999 = vrsqrt.pop %v9964
    %v10000 = vmul.f32 %v9999, %v9964
    %v10001 = vmul.f32 %v10000, %v9999
    %v10002 = vmul.f32 0.5, %v10001
    %v10003 = vsub.f32 1.5, %v10002
    %v10004 = vmul.f32 %v9999, %v10003
    %vm10005 = vweird.f32 %v9964
    %vm10006 = vweird.f32 %v9999
    %vm10007 = vmor %vm10005, %vm10006
    %v10008 = vsel %vm10007, %v9999, %v10004
    %v10009 = vrsqrt.pop %v9965
    %v10010 = vmul.f32 %v10009, %v9965
    %v10011 = vmul.f32 %v10010, %v10009
    %v10012 = vmul.f32 0.5, %v10011
    %v10013 = vsub.f32 1.5, %v10012
    %v10014 = vmul.f32 %v10009, %v10013
    %vm10015 = vweird.f32 %v9965
    %vm10016 = vweird.f32 %v10009
    %vm10017 = vmor %vm10015, %vm10016
    %v10018 = vsel %vm10017, %v10009, %v10014
    %v10019 = vrsqrt.pop %v9966
    %v10020 = vmul.f32 %v10019, %v9966
    %v10021 = vmul.f32 %v10020, %v10019
    %v10022 = vmul.f32 0.5, %v10021
    %v10023 = vsub.f32 1.5, %v10022
    %v10024 = vmul.f32 %v10019, %v10023
    %vm10025 = vweird.f32 %v9966
    %vm10026 = vweird.f32 %v10019
    %vm10027 = vmor %vm10025, %vm10026
    %v10028 = vsel %vm10027, %v10019, %v10024
    %v10029 = vrsqrt.pop %v9967
    %v10030 = vmul.f32 %v10029, %v9967
    %v10031 = vmul.f32 %v10030, %v10029
    %v10032 = vmul.f32 0.5, %v10031
    %v10033 = vsub.f32 1.5, %v10032
    %v10034 = vmul.f32 %v10029, %v10033
    %vm10035 = vweird.f32 %v9967
    %vm10036 = vweird.f32 %v10029
    %vm10037 = vmor %vm10035, %vm10036
    %v10038 = vsel %vm10037, %v10029, %v10034
    %v10039 = vrsqrt.pop %v9968
    %v10040 = vmul.f32 %v10039, %v9968
    %v10041 = vmul.f32 %v10040, %v10039
    %v10042 = vmul.f32 0.5, %v10041
    %v10043 = vsub.f32 1.5, %v10042
    %v10044 = vmul.f32 %v10039, %v10043
    %vm10045 = vweird.f32 %v9968
    %vm10046 = vweird.f32 %v10039
    %vm10047 = vmor %vm10045, %vm10046
    %v10048 = vsel %vm10047, %v10039, %v10044
    %v10049 = vperm.slane %v94, 7
    %v10050 = vmul.f32 %v9599, %v10049
    %v10051 = vmul.f32 %v9600, %v10049
    %v10052 = vmul.f32 %v9601, %v10049
    %v10053 = vmul.f32 %v9602, %v10049
    %v10054 = vmul.f32 %v9603, %v10049
    %v10055 = vmul.f32 %v9604, %v10049
    %v10056 = vmul.f32 %v9605, %v10049
    %v10057 = vmul.f32 %v9606, %v10049
    %10058 = vst.msk [vmem:[#allocation2] sm:$0xff] %vm46, %v10050
    %10059 = vst.msk [vmem:[#allocation2 + $0x8] sm:$0xff] %vm46, %v10051
    %10060 = vst.msk [vmem:[#allocation2 + $0x10] sm:$0xff] %vm46, %v10052
    %10061 = vst.msk [vmem:[#allocation2 + $0x18] sm:$0xff] %vm46, %v10053
    %10062 = vst.msk [vmem:[#allocation2 + $0x20] sm:$0xff] %vm46, %v10054
    %10063 = vst.msk [vmem:[#allocation2 + $0x28] sm:$0xff] %vm46, %v10055
    %10064 = vst.msk [vmem:[#allocation2 + $0x30] sm:$0xff] %vm46, %v10056
    %10065 = vst.msk [vmem:[#allocation2 + $0x38] sm:$0xff] %vm46, %v10057
    %10066 = vst.msk [vmem:[#allocation3] sm:$0xff] %vm9476, %v9978
    %10067 = vst.msk [vmem:[#allocation3 + $0x8] sm:$0xff] %vm9476, %v9988
    %10068 = vst.msk [vmem:[#allocation3 + $0x10] sm:$0xff] %vm9476, %v9998
    %10069 = vst.msk [vmem:[#allocation3 + $0x18] sm:$0xff] %vm9476, %v10008
    %10070 = vst.msk [vmem:[#allocation3 + $0x20] sm:$0xff] %vm9476, %v10018
    %10071 = vst.msk [vmem:[#allocation3 + $0x28] sm:$0xff] %vm9476, %v10028
    %10072 = vst.msk [vmem:[#allocation3 + $0x30] sm:$0xff] %vm9476, %v10038
    %10073 = vst.msk [vmem:[#allocation3 + $0x38] sm:$0xff] %vm9476, %v10048
    %10074 = vst.msk [vmem:[#allocation4] sm:$0xff] %vm9476, %v9468
    %10075 = vst.msk [vmem:[#allocation4 + $0x8] sm:$0xff] %vm9476, %v9469
    %10076 = vst.msk [vmem:[#allocation4 + $0x10] sm:$0xff] %vm9476, %v9470
    %10077 = vst.msk [vmem:[#allocation4 + $0x18] sm:$0xff] %vm9476, %v9471
    %10078 = vst.msk [vmem:[#allocation4 + $0x20] sm:$0xff] %vm9476, %v9472
    %10079 = vst.msk [vmem:[#allocation4 + $0x28] sm:$0xff] %vm9476, %v9473
    %10080 = vst.msk [vmem:[#allocation4 + $0x30] sm:$0xff] %vm9476, %v9474
    %10081 = vst.msk [vmem:[#allocation4 + $0x38] sm:$0xff] %vm9476, %v9475
    %10083 = vrot.lane.b32.xlu0 %v10049, 32
    %v10084 = vpop.permute.xlu0 %10083
    %v10086 = vmul.f32 %v9711, %v10084
    %v10087 = vmul.f32 %v9712, %v10084
    %v10088 = vmul.f32 %v9713, %v10084
    %v10089 = vmul.f32 %v9714, %v10084
    %v10090 = vmul.f32 %v9715, %v10084
    %v10091 = vmul.f32 %v9716, %v10084
    %v10092 = vmul.f32 %v9717, %v10084
    %v10093 = vmul.f32 %v9718, %v10084
    loop: start=0, step=1, limit=8
    $region42: #{fancy_conv_forward.1} parent=1 // loop_pre_header
      _
    $region43: #{fancy_conv_forward.1} parent=1 // loop_header
      %s10095 = sphi 0, %s10099
      %p10096 = scmp.ge.s32.totalorder %s10095, 8
      %v10100 = vphi 0.0, %v11396
      %v10101 = vphi 0.0, %v11397
      %v10102 = vphi 0.0, %v11398
      %v10103 = vphi 0.0, %v11399
      %v10104 = vphi 0.0, %v11400
      %v10105 = vphi 0.0, %v11401
      %v10106 = vphi 0.0, %v11402
      %v10107 = vphi 0.0, %v11403
    $region44: #{fancy_conv_forward.1} parent=1 // loop_header_branch
      %10098 = sbr.rel (%p10096) target = $region48
    $region45: #{fancy_conv_forward.1} parent=1 // loop_body
      %s10108 = smul.u32 %s10095, 8
      %s10109 = scalar_lea.vmem [#allocation2], %s10108
      %v10110 = vld [vmem:[%s10109] sm:$0xff]
      %s10111 = scalar_lea.vmem [#allocation3], %s10108
      %v10112 = vld [vmem:[%s10111] sm:$0xff]
      %s10113 = scalar_lea.vmem [#allocation4], %s10108
      %v10114 = vld [vmem:[%s10113] sm:$0xff]
      %v10116 = vrot.slane %v10110, 1
      %v10117 = vrot.slane %v10110, 2
      %v10118 = vrot.slane %v10110, 3
      %v10119 = vrot.slane %v10110, 4
      %v10120 = vrot.slane %v10110, 5
      %v10121 = vrot.slane %v10110, 6
      %v10122 = vrot.slane %v10110, 7
      %v10123 = vperm.slane %v10110, 0
      %v10124 = vperm.slane %v10116, 0
      %v10125 = vperm.slane %v10117, 0
      %v10126 = vperm.slane %v10118, 0
      %v10127 = vperm.slane %v10119, 0
      %v10128 = vperm.slane %v10120, 0
      %v10129 = vperm.slane %v10121, 0
      %v10130 = vperm.slane %v10122, 0
      %10147 = vrot.lane.b32.xlu0 %v10086, 96
      %v10148 = vpop.permute.xlu0 %10147
      %10149 = vrot.lane.b32.xlu0 %v10087, 96
      %v10150 = vpop.permute.xlu0 %10149
      %10151 = vrot.lane.b32.xlu0 %v10088, 96
      %v10152 = vpop.permute.xlu0 %10151
      %10153 = vrot.lane.b32.xlu0 %v10089, 96
      %v10154 = vpop.permute.xlu0 %10153
      %10155 = vrot.lane.b32.xlu0 %v10090, 96
      %v10156 = vpop.permute.xlu0 %10155
      %10157 = vrot.lane.b32.xlu0 %v10091, 96
      %v10158 = vpop.permute.xlu0 %10157
      %10159 = vrot.lane.b32.xlu0 %v10092, 96
      %v10160 = vpop.permute.xlu0 %10159
      %10161 = vrot.lane.b32.xlu0 %v10093, 96
      %v10162 = vpop.permute.xlu0 %10161
      %v10171 = vsub.f32 %v10123, %v10148
      %v10172 = vsub.f32 %v10123, %v10150
      %v10173 = vsub.f32 %v10123, %v10152
      %v10174 = vsub.f32 %v10123, %v10154
      %v10175 = vsub.f32 %v10123, %v10156
      %v10176 = vsub.f32 %v10123, %v10158
      %v10177 = vsub.f32 %v10123, %v10160
      %v10178 = vsub.f32 %v10123, %v10162
      %v10179 = vsub.f32 %v10124, %v10148
      %v10180 = vsub.f32 %v10124, %v10150
      %v10181 = vsub.f32 %v10124, %v10152
      %v10182 = vsub.f32 %v10124, %v10154
      %v10183 = vsub.f32 %v10124, %v10156
      %v10184 = vsub.f32 %v10124, %v10158
      %v10185 = vsub.f32 %v10124, %v10160
      %v10186 = vsub.f32 %v10124, %v10162
      %v10187 = vsub.f32 %v10125, %v10148
      %v10188 = vsub.f32 %v10125, %v10150
      %v10189 = vsub.f32 %v10125, %v10152
      %v10190 = vsub.f32 %v10125, %v10154
      %v10191 = vsub.f32 %v10125, %v10156
      %v10192 = vsub.f32 %v10125, %v10158
      %v10193 = vsub.f32 %v10125, %v10160
      %v10194 = vsub.f32 %v10125, %v10162
      %v10195 = vsub.f32 %v10126, %v10148
      %v10196 = vsub.f32 %v10126, %v10150
      %v10197 = vsub.f32 %v10126, %v10152
      %v10198 = vsub.f32 %v10126, %v10154
      %v10199 = vsub.f32 %v10126, %v10156
      %v10200 = vsub.f32 %v10126, %v10158
      %v10201 = vsub.f32 %v10126, %v10160
      %v10202 = vsub.f32 %v10126, %v10162
      %v10203 = vsub.f32 %v10127, %v10148
      %v10204 = vsub.f32 %v10127, %v10150
      %v10205 = vsub.f32 %v10127, %v10152
      %v10206 = vsub.f32 %v10127, %v10154
      %v10207 = vsub.f32 %v10127, %v10156
      %v10208 = vsub.f32 %v10127, %v10158
      %v10209 = vsub.f32 %v10127, %v10160
      %v10210 = vsub.f32 %v10127, %v10162
      %v10211 = vsub.f32 %v10128, %v10148
      %v10212 = vsub.f32 %v10128, %v10150
      %v10213 = vsub.f32 %v10128, %v10152
      %v10214 = vsub.f32 %v10128, %v10154
      %v10215 = vsub.f32 %v10128, %v10156
      %v10216 = vsub.f32 %v10128, %v10158
      %v10217 = vsub.f32 %v10128, %v10160
      %v10218 = vsub.f32 %v10128, %v10162
      %v10219 = vsub.f32 %v10129, %v10148
      %v10220 = vsub.f32 %v10129, %v10150
      %v10221 = vsub.f32 %v10129, %v10152
      %v10222 = vsub.f32 %v10129, %v10154
      %v10223 = vsub.f32 %v10129, %v10156
      %v10224 = vsub.f32 %v10129, %v10158
      %v10225 = vsub.f32 %v10129, %v10160
      %v10226 = vsub.f32 %v10129, %v10162
      %v10227 = vsub.f32 %v10130, %v10148
      %v10228 = vsub.f32 %v10130, %v10150
      %v10229 = vsub.f32 %v10130, %v10152
      %v10230 = vsub.f32 %v10130, %v10154
      %v10231 = vsub.f32 %v10130, %v10156
      %v10232 = vsub.f32 %v10130, %v10158
      %v10233 = vsub.f32 %v10130, %v10160
      %v10234 = vsub.f32 %v10130, %v10162
      %v10235 = vperm.slane %v10112, 0
      %v10236 = vlaneseq
      %v10237 = vshrl.u32 %v10236, 7
      %10239 = vset.pattern.permute.xlu0 %v10237
      %10240 = vperm.xlu0 %10239, %v10235
      %v10241 = vpop.permute.xlu0 %10240
      %v10242 = vlaneseq
      %v10243 = vshrl.u32 %v10242, 7
      %v10244 = vadd.s32 %v10243, 8
      %10245 = vset.pattern.permute.xlu0 %v10244
      %10246 = vperm.xlu0 %10245, %v10235
      %v10247 = vpop.permute.xlu0 %10246
      %v10248 = vlaneseq
      %v10249 = vshrl.u32 %v10248, 7
      %v10250 = vadd.s32 %v10249, 16
      %10251 = vset.pattern.permute.xlu0 %v10250
      %10252 = vperm.xlu0 %10251, %v10235
      %v10253 = vpop.permute.xlu0 %10252
      %v10254 = vlaneseq
      %v10255 = vshrl.u32 %v10254, 7
      %v10256 = vadd.s32 %v10255, 24
      %10257 = vset.pattern.permute.xlu0 %v10256
      %10258 = vperm.xlu0 %10257, %v10235
      %v10259 = vpop.permute.xlu0 %10258
      %v10260 = vlaneseq
      %v10261 = vshrl.u32 %v10260, 7
      %v10262 = vadd.s32 %v10261, 32
      %10263 = vset.pattern.permute.xlu0 %v10262
      %10264 = vperm.xlu0 %10263, %v10235
      %v10265 = vpop.permute.xlu0 %10264
      %v10266 = vlaneseq
      %v10267 = vshrl.u32 %v10266, 7
      %v10268 = vadd.s32 %v10267, 40
      %10269 = vset.pattern.permute.xlu0 %v10268
      %10270 = vperm.xlu0 %10269, %v10235
      %v10271 = vpop.permute.xlu0 %10270
      %v10272 = vlaneseq
      %v10273 = vshrl.u32 %v10272, 7
      %v10274 = vadd.s32 %v10273, 48
      %10275 = vset.pattern.permute.xlu0 %v10274
      %10276 = vperm.xlu0 %10275, %v10235
      %v10277 = vpop.permute.xlu0 %10276
      %v10278 = vlaneseq
      %v10279 = vshrl.u32 %v10278, 7
      %v10280 = vadd.s32 %v10279, 56
      %10281 = vset.pattern.permute.xlu0 %v10280
      %10282 = vperm.xlu0 %10281, %v10235
      %v10283 = vpop.permute.xlu0 %10282
      %v10284 = vperm.slane %v10112, 1
      %v10285 = vlaneseq
      %v10286 = vshrl.u32 %v10285, 7
      %10288 = vset.pattern.permute.xlu0 %v10286
      %10289 = vperm.xlu0 %10288, %v10284
      %v10290 = vpop.permute.xlu0 %10289
      %v10291 = vlaneseq
      %v10292 = vshrl.u32 %v10291, 7
      %v10293 = vadd.s32 %v10292, 8
      %10294 = vset.pattern.permute.xlu0 %v10293
      %10295 = vperm.xlu0 %10294, %v10284
      %v10296 = vpop.permute.xlu0 %10295
      %v10297 = vlaneseq
      %v10298 = vshrl.u32 %v10297, 7
      %v10299 = vadd.s32 %v10298, 16
      %10300 = vset.pattern.permute.xlu0 %v10299
      %10301 = vperm.xlu0 %10300, %v10284
      %v10302 = vpop.permute.xlu0 %10301
      %v10303 = vlaneseq
      %v10304 = vshrl.u32 %v10303, 7
      %v10305 = vadd.s32 %v10304, 24
      %10306 = vset.pattern.permute.xlu0 %v10305
      %10307 = vperm.xlu0 %10306, %v10284
      %v10308 = vpop.permute.xlu0 %10307
      %v10309 = vlaneseq
      %v10310 = vshrl.u32 %v10309, 7
      %v10311 = vadd.s32 %v10310, 32
      %10312 = vset.pattern.permute.xlu0 %v10311
      %10313 = vperm.xlu0 %10312, %v10284
      %v10314 = vpop.permute.xlu0 %10313
      %v10315 = vlaneseq
      %v10316 = vshrl.u32 %v10315, 7
      %v10317 = vadd.s32 %v10316, 40
      %10318 = vset.pattern.permute.xlu0 %v10317
      %10319 = vperm.xlu0 %10318, %v10284
      %v10320 = vpop.permute.xlu0 %10319
      %v10321 = vlaneseq
      %v10322 = vshrl.u32 %v10321, 7
      %v10323 = vadd.s32 %v10322, 48
      %10324 = vset.pattern.permute.xlu0 %v10323
      %10325 = vperm.xlu0 %10324, %v10284
      %v10326 = vpop.permute.xlu0 %10325
      %v10327 = vlaneseq
      %v10328 = vshrl.u32 %v10327, 7
      %v10329 = vadd.s32 %v10328, 56
      %10330 = vset.pattern.permute.xlu0 %v10329
      %10331 = vperm.xlu0 %10330, %v10284
      %v10332 = vpop.permute.xlu0 %10331
      %v10333 = vperm.slane %v10112, 2
      %v10334 = vlaneseq
      %v10335 = vshrl.u32 %v10334, 7
      %10337 = vset.pattern.permute.xlu0 %v10335
      %10338 = vperm.xlu0 %10337, %v10333
      %v10339 = vpop.permute.xlu0 %10338
      %v10340 = vlaneseq
      %v10341 = vshrl.u32 %v10340, 7
      %v10342 = vadd.s32 %v10341, 8
      %10343 = vset.pattern.permute.xlu0 %v10342
      %10344 = vperm.xlu0 %10343, %v10333
      %v10345 = vpop.permute.xlu0 %10344
      %v10346 = vlaneseq
      %v10347 = vshrl.u32 %v10346, 7
      %v10348 = vadd.s32 %v10347, 16
      %10349 = vset.pattern.permute.xlu0 %v10348
      %10350 = vperm.xlu0 %10349, %v10333
      %v10351 = vpop.permute.xlu0 %10350
      %v10352 = vlaneseq
      %v10353 = vshrl.u32 %v10352, 7
      %v10354 = vadd.s32 %v10353, 24
      %10355 = vset.pattern.permute.xlu0 %v10354
      %10356 = vperm.xlu0 %10355, %v10333
      %v10357 = vpop.permute.xlu0 %10356
      %v10358 = vlaneseq
      %v10359 = vshrl.u32 %v10358, 7
      %v10360 = vadd.s32 %v10359, 32
      %10361 = vset.pattern.permute.xlu0 %v10360
      %10362 = vperm.xlu0 %10361, %v10333
      %v10363 = vpop.permute.xlu0 %10362
      %v10364 = vlaneseq
      %v10365 = vshrl.u32 %v10364, 7
      %v10366 = vadd.s32 %v10365, 40
      %10367 = vset.pattern.permute.xlu0 %v10366
      %10368 = vperm.xlu0 %10367, %v10333
      %v10369 = vpop.permute.xlu0 %10368
      %v10370 = vlaneseq
      %v10371 = vshrl.u32 %v10370, 7
      %v10372 = vadd.s32 %v10371, 48
      %10373 = vset.pattern.permute.xlu0 %v10372
      %10374 = vperm.xlu0 %10373, %v10333
      %v10375 = vpop.permute.xlu0 %10374
      %v10376 = vlaneseq
      %v10377 = vshrl.u32 %v10376, 7
      %v10378 = vadd.s32 %v10377, 56
      %10379 = vset.pattern.permute.xlu0 %v10378
      %10380 = vperm.xlu0 %10379, %v10333
      %v10381 = vpop.permute.xlu0 %10380
      %v10382 = vperm.slane %v10112, 3
      %v10383 = vlaneseq
      %v10384 = vshrl.u32 %v10383, 7
      %10386 = vset.pattern.permute.xlu0 %v10384
      %10387 = vperm.xlu0 %10386, %v10382
      %v10388 = vpop.permute.xlu0 %10387
      %v10389 = vlaneseq
      %v10390 = vshrl.u32 %v10389, 7
      %v10391 = vadd.s32 %v10390, 8
      %10392 = vset.pattern.permute.xlu0 %v10391
      %10393 = vperm.xlu0 %10392, %v10382
      %v10394 = vpop.permute.xlu0 %10393
      %v10395 = vlaneseq
      %v10396 = vshrl.u32 %v10395, 7
      %v10397 = vadd.s32 %v10396, 16
      %10398 = vset.pattern.permute.xlu0 %v10397
      %10399 = vperm.xlu0 %10398, %v10382
      %v10400 = vpop.permute.xlu0 %10399
      %v10401 = vlaneseq
      %v10402 = vshrl.u32 %v10401, 7
      %v10403 = vadd.s32 %v10402, 24
      %10404 = vset.pattern.permute.xlu0 %v10403
      %10405 = vperm.xlu0 %10404, %v10382
      %v10406 = vpop.permute.xlu0 %10405
      %v10407 = vlaneseq
      %v10408 = vshrl.u32 %v10407, 7
      %v10409 = vadd.s32 %v10408, 32
      %10410 = vset.pattern.permute.xlu0 %v10409
      %10411 = vperm.xlu0 %10410, %v10382
      %v10412 = vpop.permute.xlu0 %10411
      %v10413 = vlaneseq
      %v10414 = vshrl.u32 %v10413, 7
      %v10415 = vadd.s32 %v10414, 40
      %10416 = vset.pattern.permute.xlu0 %v10415
      %10417 = vperm.xlu0 %10416, %v10382
      %v10418 = vpop.permute.xlu0 %10417
      %v10419 = vlaneseq
      %v10420 = vshrl.u32 %v10419, 7
      %v10421 = vadd.s32 %v10420, 48
      %10422 = vset.pattern.permute.xlu0 %v10421
      %10423 = vperm.xlu0 %10422, %v10382
      %v10424 = vpop.permute.xlu0 %10423
      %v10425 = vlaneseq
      %v10426 = vshrl.u32 %v10425, 7
      %v10427 = vadd.s32 %v10426, 56
      %10428 = vset.pattern.permute.xlu0 %v10427
      %10429 = vperm.xlu0 %10428, %v10382
      %v10430 = vpop.permute.xlu0 %10429
      %v10431 = vperm.slane %v10112, 4
      %v10432 = vlaneseq
      %v10433 = vshrl.u32 %v10432, 7
      %10435 = vset.pattern.permute.xlu0 %v10433
      %10436 = vperm.xlu0 %10435, %v10431
      %v10437 = vpop.permute.xlu0 %10436
      %v10438 = vlaneseq
      %v10439 = vshrl.u32 %v10438, 7
      %v10440 = vadd.s32 %v10439, 8
      %10441 = vset.pattern.permute.xlu0 %v10440
      %10442 = vperm.xlu0 %10441, %v10431
      %v10443 = vpop.permute.xlu0 %10442
      %v10444 = vlaneseq
      %v10445 = vshrl.u32 %v10444, 7
      %v10446 = vadd.s32 %v10445, 16
      %10447 = vset.pattern.permute.xlu0 %v10446
      %10448 = vperm.xlu0 %10447, %v10431
      %v10449 = vpop.permute.xlu0 %10448
      %v10450 = vlaneseq
      %v10451 = vshrl.u32 %v10450, 7
      %v10452 = vadd.s32 %v10451, 24
      %10453 = vset.pattern.permute.xlu0 %v10452
      %10454 = vperm.xlu0 %10453, %v10431
      %v10455 = vpop.permute.xlu0 %10454
      %v10456 = vlaneseq
      %v10457 = vshrl.u32 %v10456, 7
      %v10458 = vadd.s32 %v10457, 32
      %10459 = vset.pattern.permute.xlu0 %v10458
      %10460 = vperm.xlu0 %10459, %v10431
      %v10461 = vpop.permute.xlu0 %10460
      %v10462 = vlaneseq
      %v10463 = vshrl.u32 %v10462, 7
      %v10464 = vadd.s32 %v10463, 40
      %10465 = vset.pattern.permute.xlu0 %v10464
      %10466 = vperm.xlu0 %10465, %v10431
      %v10467 = vpop.permute.xlu0 %10466
      %v10468 = vlaneseq
      %v10469 = vshrl.u32 %v10468, 7
      %v10470 = vadd.s32 %v10469, 48
      %10471 = vset.pattern.permute.xlu0 %v10470
      %10472 = vperm.xlu0 %10471, %v10431
      %v10473 = vpop.permute.xlu0 %10472
      %v10474 = vlaneseq
      %v10475 = vshrl.u32 %v10474, 7
      %v10476 = vadd.s32 %v10475, 56
      %10477 = vset.pattern.permute.xlu0 %v10476
      %10478 = vperm.xlu0 %10477, %v10431
      %v10479 = vpop.permute.xlu0 %10478
      %v10480 = vperm.slane %v10112, 5
      %v10481 = vlaneseq
      %v10482 = vshrl.u32 %v10481, 7
      %10484 = vset.pattern.permute.xlu0 %v10482
      %10485 = vperm.xlu0 %10484, %v10480
      %v10486 = vpop.permute.xlu0 %10485
      %v10487 = vlaneseq
      %v10488 = vshrl.u32 %v10487, 7
      %v10489 = vadd.s32 %v10488, 8
      %10490 = vset.pattern.permute.xlu0 %v10489
      %10491 = vperm.xlu0 %10490, %v10480
      %v10492 = vpop.permute.xlu0 %10491
      %v10493 = vlaneseq
      %v10494 = vshrl.u32 %v10493, 7
      %v10495 = vadd.s32 %v10494, 16
      %10496 = vset.pattern.permute.xlu0 %v10495
      %10497 = vperm.xlu0 %10496, %v10480
      %v10498 = vpop.permute.xlu0 %10497
      %v10499 = vlaneseq
      %v10500 = vshrl.u32 %v10499, 7
      %v10501 = vadd.s32 %v10500, 24
      %10502 = vset.pattern.permute.xlu0 %v10501
      %10503 = vperm.xlu0 %10502, %v10480
      %v10504 = vpop.permute.xlu0 %10503
      %v10505 = vlaneseq
      %v10506 = vshrl.u32 %v10505, 7
      %v10507 = vadd.s32 %v10506, 32
      %10508 = vset.pattern.permute.xlu0 %v10507
      %10509 = vperm.xlu0 %10508, %v10480
      %v10510 = vpop.permute.xlu0 %10509
      %v10511 = vlaneseq
      %v10512 = vshrl.u32 %v10511, 7
      %v10513 = vadd.s32 %v10512, 40
      %10514 = vset.pattern.permute.xlu0 %v10513
      %10515 = vperm.xlu0 %10514, %v10480
      %v10516 = vpop.permute.xlu0 %10515
      %v10517 = vlaneseq
      %v10518 = vshrl.u32 %v10517, 7
      %v10519 = vadd.s32 %v10518, 48
      %10520 = vset.pattern.permute.xlu0 %v10519
      %10521 = vperm.xlu0 %10520, %v10480
      %v10522 = vpop.permute.xlu0 %10521
      %v10523 = vlaneseq
      %v10524 = vshrl.u32 %v10523, 7
      %v10525 = vadd.s32 %v10524, 56
      %10526 = vset.pattern.permute.xlu0 %v10525
      %10527 = vperm.xlu0 %10526, %v10480
      %v10528 = vpop.permute.xlu0 %10527
      %v10529 = vperm.slane %v10112, 6
      %v10530 = vlaneseq
      %v10531 = vshrl.u32 %v10530, 7
      %10533 = vset.pattern.permute.xlu0 %v10531
      %10534 = vperm.xlu0 %10533, %v10529
      %v10535 = vpop.permute.xlu0 %10534
      %v10536 = vlaneseq
      %v10537 = vshrl.u32 %v10536, 7
      %v10538 = vadd.s32 %v10537, 8
      %10539 = vset.pattern.permute.xlu0 %v10538
      %10540 = vperm.xlu0 %10539, %v10529
      %v10541 = vpop.permute.xlu0 %10540
      %v10542 = vlaneseq
      %v10543 = vshrl.u32 %v10542, 7
      %v10544 = vadd.s32 %v10543, 16
      %10545 = vset.pattern.permute.xlu0 %v10544
      %10546 = vperm.xlu0 %10545, %v10529
      %v10547 = vpop.permute.xlu0 %10546
      %v10548 = vlaneseq
      %v10549 = vshrl.u32 %v10548, 7
      %v10550 = vadd.s32 %v10549, 24
      %10551 = vset.pattern.permute.xlu0 %v10550
      %10552 = vperm.xlu0 %10551, %v10529
      %v10553 = vpop.permute.xlu0 %10552
      %v10554 = vlaneseq
      %v10555 = vshrl.u32 %v10554, 7
      %v10556 = vadd.s32 %v10555, 32
      %10557 = vset.pattern.permute.xlu0 %v10556
      %10558 = vperm.xlu0 %10557, %v10529
      %v10559 = vpop.permute.xlu0 %10558
      %v10560 = vlaneseq
      %v10561 = vshrl.u32 %v10560, 7
      %v10562 = vadd.s32 %v10561, 40
      %10563 = vset.pattern.permute.xlu0 %v10562
      %10564 = vperm.xlu0 %10563, %v10529
      %v10565 = vpop.permute.xlu0 %10564
      %v10566 = vlaneseq
      %v10567 = vshrl.u32 %v10566, 7
      %v10568 = vadd.s32 %v10567, 48
      %10569 = vset.pattern.permute.xlu0 %v10568
      %10570 = vperm.xlu0 %10569, %v10529
      %v10571 = vpop.permute.xlu0 %10570
      %v10572 = vlaneseq
      %v10573 = vshrl.u32 %v10572, 7
      %v10574 = vadd.s32 %v10573, 56
      %10575 = vset.pattern.permute.xlu0 %v10574
      %10576 = vperm.xlu0 %10575, %v10529
      %v10577 = vpop.permute.xlu0 %10576
      %v10578 = vperm.slane %v10112, 7
      %v10579 = vlaneseq
      %v10580 = vshrl.u32 %v10579, 7
      %10582 = vset.pattern.permute.xlu0 %v10580
      %10583 = vperm.xlu0 %10582, %v10578
      %v10584 = vpop.permute.xlu0 %10583
      %v10585 = vlaneseq
      %v10586 = vshrl.u32 %v10585, 7
      %v10587 = vadd.s32 %v10586, 8
      %10588 = vset.pattern.permute.xlu0 %v10587
      %10589 = vperm.xlu0 %10588, %v10578
      %v10590 = vpop.permute.xlu0 %10589
      %v10591 = vlaneseq
      %v10592 = vshrl.u32 %v10591, 7
      %v10593 = vadd.s32 %v10592, 16
      %10594 = vset.pattern.permute.xlu0 %v10593
      %10595 = vperm.xlu0 %10594, %v10578
      %v10596 = vpop.permute.xlu0 %10595
      %v10597 = vlaneseq
      %v10598 = vshrl.u32 %v10597, 7
      %v10599 = vadd.s32 %v10598, 24
      %10600 = vset.pattern.permute.xlu0 %v10599
      %10601 = vperm.xlu0 %10600, %v10578
      %v10602 = vpop.permute.xlu0 %10601
      %v10603 = vlaneseq
      %v10604 = vshrl.u32 %v10603, 7
      %v10605 = vadd.s32 %v10604, 32
      %10606 = vset.pattern.permute.xlu0 %v10605
      %10607 = vperm.xlu0 %10606, %v10578
      %v10608 = vpop.permute.xlu0 %10607
      %v10609 = vlaneseq
      %v10610 = vshrl.u32 %v10609, 7
      %v10611 = vadd.s32 %v10610, 40
      %10612 = vset.pattern.permute.xlu0 %v10611
      %10613 = vperm.xlu0 %10612, %v10578
      %v10614 = vpop.permute.xlu0 %10613
      %v10615 = vlaneseq
      %v10616 = vshrl.u32 %v10615, 7
      %v10617 = vadd.s32 %v10616, 48
      %10618 = vset.pattern.permute.xlu0 %v10617
      %10619 = vperm.xlu0 %10618, %v10578
      %v10620 = vpop.permute.xlu0 %10619
      %v10621 = vlaneseq
      %v10622 = vshrl.u32 %v10621, 7
      %v10623 = vadd.s32 %v10622, 56
      %10624 = vset.pattern.permute.xlu0 %v10623
      %10625 = vperm.xlu0 %10624, %v10578
      %v10626 = vpop.permute.xlu0 %10625
      %v10627 = vmul.f32 %v10171, %v10241
      %v10628 = vmul.f32 %v10172, %v10247
      %v10629 = vmul.f32 %v10173, %v10253
      %v10630 = vmul.f32 %v10174, %v10259
      %v10631 = vmul.f32 %v10175, %v10265
      %v10632 = vmul.f32 %v10176, %v10271
      %v10633 = vmul.f32 %v10177, %v10277
      %v10634 = vmul.f32 %v10178, %v10283
      %v10635 = vmul.f32 %v10179, %v10290
      %v10636 = vmul.f32 %v10180, %v10296
      %v10637 = vmul.f32 %v10181, %v10302
      %v10638 = vmul.f32 %v10182, %v10308
      %v10639 = vmul.f32 %v10183, %v10314
      %v10640 = vmul.f32 %v10184, %v10320
      %v10641 = vmul.f32 %v10185, %v10326
      %v10642 = vmul.f32 %v10186, %v10332
      %v10643 = vmul.f32 %v10187, %v10339
      %v10644 = vmul.f32 %v10188, %v10345
      %v10645 = vmul.f32 %v10189, %v10351
      %v10646 = vmul.f32 %v10190, %v10357
      %v10647 = vmul.f32 %v10191, %v10363
      %v10648 = vmul.f32 %v10192, %v10369
      %v10649 = vmul.f32 %v10193, %v10375
      %v10650 = vmul.f32 %v10194, %v10381
      %v10651 = vmul.f32 %v10195, %v10388
      %v10652 = vmul.f32 %v10196, %v10394
      %v10653 = vmul.f32 %v10197, %v10400
      %v10654 = vmul.f32 %v10198, %v10406
      %v10655 = vmul.f32 %v10199, %v10412
      %v10656 = vmul.f32 %v10200, %v10418
      %v10657 = vmul.f32 %v10201, %v10424
      %v10658 = vmul.f32 %v10202, %v10430
      %v10659 = vmul.f32 %v10203, %v10437
      %v10660 = vmul.f32 %v10204, %v10443
      %v10661 = vmul.f32 %v10205, %v10449
      %v10662 = vmul.f32 %v10206, %v10455
      %v10663 = vmul.f32 %v10207, %v10461
      %v10664 = vmul.f32 %v10208, %v10467
      %v10665 = vmul.f32 %v10209, %v10473
      %v10666 = vmul.f32 %v10210, %v10479
      %v10667 = vmul.f32 %v10211, %v10486
      %v10668 = vmul.f32 %v10212, %v10492
      %v10669 = vmul.f32 %v10213, %v10498
      %v10670 = vmul.f32 %v10214, %v10504
      %v10671 = vmul.f32 %v10215, %v10510
      %v10672 = vmul.f32 %v10216, %v10516
      %v10673 = vmul.f32 %v10217, %v10522
      %v10674 = vmul.f32 %v10218, %v10528
      %v10675 = vmul.f32 %v10219, %v10535
      %v10676 = vmul.f32 %v10220, %v10541
      %v10677 = vmul.f32 %v10221, %v10547
      %v10678 = vmul.f32 %v10222, %v10553
      %v10679 = vmul.f32 %v10223, %v10559
      %v10680 = vmul.f32 %v10224, %v10565
      %v10681 = vmul.f32 %v10225, %v10571
      %v10682 = vmul.f32 %v10226, %v10577
      %v10683 = vmul.f32 %v10227, %v10584
      %v10684 = vmul.f32 %v10228, %v10590
      %v10685 = vmul.f32 %v10229, %v10596
      %v10686 = vmul.f32 %v10230, %v10602
      %v10687 = vmul.f32 %v10231, %v10608
      %v10688 = vmul.f32 %v10232, %v10614
      %v10689 = vmul.f32 %v10233, %v10620
      %v10690 = vmul.f32 %v10234, %v10626
      %v10691 = vperm.slane %v95, 0
      %v10692 = vadd.f32 %v10627, %v10691
      %v10693 = vadd.f32 %v10628, %v10691
      %v10694 = vadd.f32 %v10629, %v10691
      %v10695 = vadd.f32 %v10630, %v10691
      %v10696 = vadd.f32 %v10631, %v10691
      %v10697 = vadd.f32 %v10632, %v10691
      %v10698 = vadd.f32 %v10633, %v10691
      %v10699 = vadd.f32 %v10634, %v10691
      %v10700 = vadd.f32 %v10635, %v10691
      %v10701 = vadd.f32 %v10636, %v10691
      %v10702 = vadd.f32 %v10637, %v10691
      %v10703 = vadd.f32 %v10638, %v10691
      %v10704 = vadd.f32 %v10639, %v10691
      %v10705 = vadd.f32 %v10640, %v10691
      %v10706 = vadd.f32 %v10641, %v10691
      %v10707 = vadd.f32 %v10642, %v10691
      %v10708 = vadd.f32 %v10643, %v10691
      %v10709 = vadd.f32 %v10644, %v10691
      %v10710 = vadd.f32 %v10645, %v10691
      %v10711 = vadd.f32 %v10646, %v10691
      %v10712 = vadd.f32 %v10647, %v10691
      %v10713 = vadd.f32 %v10648, %v10691
      %v10714 = vadd.f32 %v10649, %v10691
      %v10715 = vadd.f32 %v10650, %v10691
      %v10716 = vadd.f32 %v10651, %v10691
      %v10717 = vadd.f32 %v10652, %v10691
      %v10718 = vadd.f32 %v10653, %v10691
      %v10719 = vadd.f32 %v10654, %v10691
      %v10720 = vadd.f32 %v10655, %v10691
      %v10721 = vadd.f32 %v10656, %v10691
      %v10722 = vadd.f32 %v10657, %v10691
      %v10723 = vadd.f32 %v10658, %v10691
      %v10724 = vadd.f32 %v10659, %v10691
      %v10725 = vadd.f32 %v10660, %v10691
      %v10726 = vadd.f32 %v10661, %v10691
      %v10727 = vadd.f32 %v10662, %v10691
      %v10728 = vadd.f32 %v10663, %v10691
      %v10729 = vadd.f32 %v10664, %v10691
      %v10730 = vadd.f32 %v10665, %v10691
      %v10731 = vadd.f32 %v10666, %v10691
      %v10732 = vadd.f32 %v10667, %v10691
      %v10733 = vadd.f32 %v10668, %v10691
      %v10734 = vadd.f32 %v10669, %v10691
      %v10735 = vadd.f32 %v10670, %v10691
      %v10736 = vadd.f32 %v10671, %v10691
      %v10737 = vadd.f32 %v10672, %v10691
      %v10738 = vadd.f32 %v10673, %v10691
      %v10739 = vadd.f32 %v10674, %v10691
      %v10740 = vadd.f32 %v10675, %v10691
      %v10741 = vadd.f32 %v10676, %v10691
      %v10742 = vadd.f32 %v10677, %v10691
      %v10743 = vadd.f32 %v10678, %v10691
      %v10744 = vadd.f32 %v10679, %v10691
      %v10745 = vadd.f32 %v10680, %v10691
      %v10746 = vadd.f32 %v10681, %v10691
      %v10747 = vadd.f32 %v10682, %v10691
      %v10748 = vadd.f32 %v10683, %v10691
      %v10749 = vadd.f32 %v10684, %v10691
      %v10750 = vadd.f32 %v10685, %v10691
      %v10751 = vadd.f32 %v10686, %v10691
      %v10752 = vadd.f32 %v10687, %v10691
      %v10753 = vadd.f32 %v10688, %v10691
      %v10754 = vadd.f32 %v10689, %v10691
      %v10755 = vadd.f32 %v10690, %v10691
      %v10756 = vmax.f32 %v10692, 0.0
      %v10757 = vmax.f32 %v10693, 0.0
      %v10758 = vmax.f32 %v10694, 0.0
      %v10759 = vmax.f32 %v10695, 0.0
      %v10760 = vmax.f32 %v10696, 0.0
      %v10761 = vmax.f32 %v10697, 0.0
      %v10762 = vmax.f32 %v10698, 0.0
      %v10763 = vmax.f32 %v10699, 0.0
      %v10764 = vmax.f32 %v10700, 0.0
      %v10765 = vmax.f32 %v10701, 0.0
      %v10766 = vmax.f32 %v10702, 0.0
      %v10767 = vmax.f32 %v10703, 0.0
      %v10768 = vmax.f32 %v10704, 0.0
      %v10769 = vmax.f32 %v10705, 0.0
      %v10770 = vmax.f32 %v10706, 0.0
      %v10771 = vmax.f32 %v10707, 0.0
      %v10772 = vmax.f32 %v10708, 0.0
      %v10773 = vmax.f32 %v10709, 0.0
      %v10774 = vmax.f32 %v10710, 0.0
      %v10775 = vmax.f32 %v10711, 0.0
      %v10776 = vmax.f32 %v10712, 0.0
      %v10777 = vmax.f32 %v10713, 0.0
      %v10778 = vmax.f32 %v10714, 0.0
      %v10779 = vmax.f32 %v10715, 0.0
      %v10780 = vmax.f32 %v10716, 0.0
      %v10781 = vmax.f32 %v10717, 0.0
      %v10782 = vmax.f32 %v10718, 0.0
      %v10783 = vmax.f32 %v10719, 0.0
      %v10784 = vmax.f32 %v10720, 0.0
      %v10785 = vmax.f32 %v10721, 0.0
      %v10786 = vmax.f32 %v10722, 0.0
      %v10787 = vmax.f32 %v10723, 0.0
      %v10788 = vmax.f32 %v10724, 0.0
      %v10789 = vmax.f32 %v10725, 0.0
      %v10790 = vmax.f32 %v10726, 0.0
      %v10791 = vmax.f32 %v10727, 0.0
      %v10792 = vmax.f32 %v10728, 0.0
      %v10793 = vmax.f32 %v10729, 0.0
      %v10794 = vmax.f32 %v10730, 0.0
      %v10795 = vmax.f32 %v10731, 0.0
      %v10796 = vmax.f32 %v10732, 0.0
      %v10797 = vmax.f32 %v10733, 0.0
      %v10798 = vmax.f32 %v10734, 0.0
      %v10799 = vmax.f32 %v10735, 0.0
      %v10800 = vmax.f32 %v10736, 0.0
      %v10801 = vmax.f32 %v10737, 0.0
      %v10802 = vmax.f32 %v10738, 0.0
      %v10803 = vmax.f32 %v10739, 0.0
      %v10804 = vmax.f32 %v10740, 0.0
      %v10805 = vmax.f32 %v10741, 0.0
      %v10806 = vmax.f32 %v10742, 0.0
      %v10807 = vmax.f32 %v10743, 0.0
      %v10808 = vmax.f32 %v10744, 0.0
      %v10809 = vmax.f32 %v10745, 0.0
      %v10810 = vmax.f32 %v10746, 0.0
      %v10811 = vmax.f32 %v10747, 0.0
      %v10812 = vmax.f32 %v10748, 0.0
      %v10813 = vmax.f32 %v10749, 0.0
      %v10814 = vmax.f32 %v10750, 0.0
      %v10815 = vmax.f32 %v10751, 0.0
      %v10816 = vmax.f32 %v10752, 0.0
      %v10817 = vmax.f32 %v10753, 0.0
      %v10818 = vmax.f32 %v10754, 0.0
      %v10819 = vmax.f32 %v10755, 0.0
      %v10820 = vperm.slane %v10114, 0
      %v10821 = vlaneseq
      %v10822 = vshrl.u32 %v10821, 7
      %10824 = vset.pattern.permute.xlu0 %v10822
      %10825 = vperm.xlu0 %10824, %v10820
      %v10826 = vpop.permute.xlu0 %10825
      %v10827 = vlaneseq
      %v10828 = vshrl.u32 %v10827, 7
      %v10829 = vadd.s32 %v10828, 8
      %10830 = vset.pattern.permute.xlu0 %v10829
      %10831 = vperm.xlu0 %10830, %v10820
      %v10832 = vpop.permute.xlu0 %10831
      %v10833 = vlaneseq
      %v10834 = vshrl.u32 %v10833, 7
      %v10835 = vadd.s32 %v10834, 16
      %10836 = vset.pattern.permute.xlu0 %v10835
      %10837 = vperm.xlu0 %10836, %v10820
      %v10838 = vpop.permute.xlu0 %10837
      %v10839 = vlaneseq
      %v10840 = vshrl.u32 %v10839, 7
      %v10841 = vadd.s32 %v10840, 24
      %10842 = vset.pattern.permute.xlu0 %v10841
      %10843 = vperm.xlu0 %10842, %v10820
      %v10844 = vpop.permute.xlu0 %10843
      %v10845 = vlaneseq
      %v10846 = vshrl.u32 %v10845, 7
      %v10847 = vadd.s32 %v10846, 32
      %10848 = vset.pattern.permute.xlu0 %v10847
      %10849 = vperm.xlu0 %10848, %v10820
      %v10850 = vpop.permute.xlu0 %10849
      %v10851 = vlaneseq
      %v10852 = vshrl.u32 %v10851, 7
      %v10853 = vadd.s32 %v10852, 40
      %10854 = vset.pattern.permute.xlu0 %v10853
      %10855 = vperm.xlu0 %10854, %v10820
      %v10856 = vpop.permute.xlu0 %10855
      %v10857 = vlaneseq
      %v10858 = vshrl.u32 %v10857, 7
      %v10859 = vadd.s32 %v10858, 48
      %10860 = vset.pattern.permute.xlu0 %v10859
      %10861 = vperm.xlu0 %10860, %v10820
      %v10862 = vpop.permute.xlu0 %10861
      %v10863 = vlaneseq
      %v10864 = vshrl.u32 %v10863, 7
      %v10865 = vadd.s32 %v10864, 56
      %10866 = vset.pattern.permute.xlu0 %v10865
      %10867 = vperm.xlu0 %10866, %v10820
      %v10868 = vpop.permute.xlu0 %10867
      %v10869 = vperm.slane %v10114, 1
      %v10870 = vlaneseq
      %v10871 = vshrl.u32 %v10870, 7
      %10873 = vset.pattern.permute.xlu0 %v10871
      %10874 = vperm.xlu0 %10873, %v10869
      %v10875 = vpop.permute.xlu0 %10874
      %v10876 = vlaneseq
      %v10877 = vshrl.u32 %v10876, 7
      %v10878 = vadd.s32 %v10877, 8
      %10879 = vset.pattern.permute.xlu0 %v10878
      %10880 = vperm.xlu0 %10879, %v10869
      %v10881 = vpop.permute.xlu0 %10880
      %v10882 = vlaneseq
      %v10883 = vshrl.u32 %v10882, 7
      %v10884 = vadd.s32 %v10883, 16
      %10885 = vset.pattern.permute.xlu0 %v10884
      %10886 = vperm.xlu0 %10885, %v10869
      %v10887 = vpop.permute.xlu0 %10886
      %v10888 = vlaneseq
      %v10889 = vshrl.u32 %v10888, 7
      %v10890 = vadd.s32 %v10889, 24
      %10891 = vset.pattern.permute.xlu0 %v10890
      %10892 = vperm.xlu0 %10891, %v10869
      %v10893 = vpop.permute.xlu0 %10892
      %v10894 = vlaneseq
      %v10895 = vshrl.u32 %v10894, 7
      %v10896 = vadd.s32 %v10895, 32
      %10897 = vset.pattern.permute.xlu0 %v10896
      %10898 = vperm.xlu0 %10897, %v10869
      %v10899 = vpop.permute.xlu0 %10898
      %v10900 = vlaneseq
      %v10901 = vshrl.u32 %v10900, 7
      %v10902 = vadd.s32 %v10901, 40
      %10903 = vset.pattern.permute.xlu0 %v10902
      %10904 = vperm.xlu0 %10903, %v10869
      %v10905 = vpop.permute.xlu0 %10904
      %v10906 = vlaneseq
      %v10907 = vshrl.u32 %v10906, 7
      %v10908 = vadd.s32 %v10907, 48
      %10909 = vset.pattern.permute.xlu0 %v10908
      %10910 = vperm.xlu0 %10909, %v10869
      %v10911 = vpop.permute.xlu0 %10910
      %v10912 = vlaneseq
      %v10913 = vshrl.u32 %v10912, 7
      %v10914 = vadd.s32 %v10913, 56
      %10915 = vset.pattern.permute.xlu0 %v10914
      %10916 = vperm.xlu0 %10915, %v10869
      %v10917 = vpop.permute.xlu0 %10916
      %v10918 = vperm.slane %v10114, 2
      %v10919 = vlaneseq
      %v10920 = vshrl.u32 %v10919, 7
      %10922 = vset.pattern.permute.xlu0 %v10920
      %10923 = vperm.xlu0 %10922, %v10918
      %v10924 = vpop.permute.xlu0 %10923
      %v10925 = vlaneseq
      %v10926 = vshrl.u32 %v10925, 7
      %v10927 = vadd.s32 %v10926, 8
      %10928 = vset.pattern.permute.xlu0 %v10927
      %10929 = vperm.xlu0 %10928, %v10918
      %v10930 = vpop.permute.xlu0 %10929
      %v10931 = vlaneseq
      %v10932 = vshrl.u32 %v10931, 7
      %v10933 = vadd.s32 %v10932, 16
      %10934 = vset.pattern.permute.xlu0 %v10933
      %10935 = vperm.xlu0 %10934, %v10918
      %v10936 = vpop.permute.xlu0 %10935
      %v10937 = vlaneseq
      %v10938 = vshrl.u32 %v10937, 7
      %v10939 = vadd.s32 %v10938, 24
      %10940 = vset.pattern.permute.xlu0 %v10939
      %10941 = vperm.xlu0 %10940, %v10918
      %v10942 = vpop.permute.xlu0 %10941
      %v10943 = vlaneseq
      %v10944 = vshrl.u32 %v10943, 7
      %v10945 = vadd.s32 %v10944, 32
      %10946 = vset.pattern.permute.xlu0 %v10945
      %10947 = vperm.xlu0 %10946, %v10918
      %v10948 = vpop.permute.xlu0 %10947
      %v10949 = vlaneseq
      %v10950 = vshrl.u32 %v10949, 7
      %v10951 = vadd.s32 %v10950, 40
      %10952 = vset.pattern.permute.xlu0 %v10951
      %10953 = vperm.xlu0 %10952, %v10918
      %v10954 = vpop.permute.xlu0 %10953
      %v10955 = vlaneseq
      %v10956 = vshrl.u32 %v10955, 7
      %v10957 = vadd.s32 %v10956, 48
      %10958 = vset.pattern.permute.xlu0 %v10957
      %10959 = vperm.xlu0 %10958, %v10918
      %v10960 = vpop.permute.xlu0 %10959
      %v10961 = vlaneseq
      %v10962 = vshrl.u32 %v10961, 7
      %v10963 = vadd.s32 %v10962, 56
      %10964 = vset.pattern.permute.xlu0 %v10963
      %10965 = vperm.xlu0 %10964, %v10918
      %v10966 = vpop.permute.xlu0 %10965
      %v10967 = vperm.slane %v10114, 3
      %v10968 = vlaneseq
      %v10969 = vshrl.u32 %v10968, 7
      %10971 = vset.pattern.permute.xlu0 %v10969
      %10972 = vperm.xlu0 %10971, %v10967
      %v10973 = vpop.permute.xlu0 %10972
      %v10974 = vlaneseq
      %v10975 = vshrl.u32 %v10974, 7
      %v10976 = vadd.s32 %v10975, 8
      %10977 = vset.pattern.permute.xlu0 %v10976
      %10978 = vperm.xlu0 %10977, %v10967
      %v10979 = vpop.permute.xlu0 %10978
      %v10980 = vlaneseq
      %v10981 = vshrl.u32 %v10980, 7
      %v10982 = vadd.s32 %v10981, 16
      %10983 = vset.pattern.permute.xlu0 %v10982
      %10984 = vperm.xlu0 %10983, %v10967
      %v10985 = vpop.permute.xlu0 %10984
      %v10986 = vlaneseq
      %v10987 = vshrl.u32 %v10986, 7
      %v10988 = vadd.s32 %v10987, 24
      %10989 = vset.pattern.permute.xlu0 %v10988
      %10990 = vperm.xlu0 %10989, %v10967
      %v10991 = vpop.permute.xlu0 %10990
      %v10992 = vlaneseq
      %v10993 = vshrl.u32 %v10992, 7
      %v10994 = vadd.s32 %v10993, 32
      %10995 = vset.pattern.permute.xlu0 %v10994
      %10996 = vperm.xlu0 %10995, %v10967
      %v10997 = vpop.permute.xlu0 %10996
      %v10998 = vlaneseq
      %v10999 = vshrl.u32 %v10998, 7
      %v11000 = vadd.s32 %v10999, 40
      %11001 = vset.pattern.permute.xlu0 %v11000
      %11002 = vperm.xlu0 %11001, %v10967
      %v11003 = vpop.permute.xlu0 %11002
      %v11004 = vlaneseq
      %v11005 = vshrl.u32 %v11004, 7
      %v11006 = vadd.s32 %v11005, 48
      %11007 = vset.pattern.permute.xlu0 %v11006
      %11008 = vperm.xlu0 %11007, %v10967
      %v11009 = vpop.permute.xlu0 %11008
      %v11010 = vlaneseq
      %v11011 = vshrl.u32 %v11010, 7
      %v11012 = vadd.s32 %v11011, 56
      %11013 = vset.pattern.permute.xlu0 %v11012
      %11014 = vperm.xlu0 %11013, %v10967
      %v11015 = vpop.permute.xlu0 %11014
      %v11016 = vperm.slane %v10114, 4
      %v11017 = vlaneseq
      %v11018 = vshrl.u32 %v11017, 7
      %11020 = vset.pattern.permute.xlu0 %v11018
      %11021 = vperm.xlu0 %11020, %v11016
      %v11022 = vpop.permute.xlu0 %11021
      %v11023 = vlaneseq
      %v11024 = vshrl.u32 %v11023, 7
      %v11025 = vadd.s32 %v11024, 8
      %11026 = vset.pattern.permute.xlu0 %v11025
      %11027 = vperm.xlu0 %11026, %v11016
      %v11028 = vpop.permute.xlu0 %11027
      %v11029 = vlaneseq
      %v11030 = vshrl.u32 %v11029, 7
      %v11031 = vadd.s32 %v11030, 16
      %11032 = vset.pattern.permute.xlu0 %v11031
      %11033 = vperm.xlu0 %11032, %v11016
      %v11034 = vpop.permute.xlu0 %11033
      %v11035 = vlaneseq
      %v11036 = vshrl.u32 %v11035, 7
      %v11037 = vadd.s32 %v11036, 24
      %11038 = vset.pattern.permute.xlu0 %v11037
      %11039 = vperm.xlu0 %11038, %v11016
      %v11040 = vpop.permute.xlu0 %11039
      %v11041 = vlaneseq
      %v11042 = vshrl.u32 %v11041, 7
      %v11043 = vadd.s32 %v11042, 32
      %11044 = vset.pattern.permute.xlu0 %v11043
      %11045 = vperm.xlu0 %11044, %v11016
      %v11046 = vpop.permute.xlu0 %11045
      %v11047 = vlaneseq
      %v11048 = vshrl.u32 %v11047, 7
      %v11049 = vadd.s32 %v11048, 40
      %11050 = vset.pattern.permute.xlu0 %v11049
      %11051 = vperm.xlu0 %11050, %v11016
      %v11052 = vpop.permute.xlu0 %11051
      %v11053 = vlaneseq
      %v11054 = vshrl.u32 %v11053, 7
      %v11055 = vadd.s32 %v11054, 48
      %11056 = vset.pattern.permute.xlu0 %v11055
      %11057 = vperm.xlu0 %11056, %v11016
      %v11058 = vpop.permute.xlu0 %11057
      %v11059 = vlaneseq
      %v11060 = vshrl.u32 %v11059, 7
      %v11061 = vadd.s32 %v11060, 56
      %11062 = vset.pattern.permute.xlu0 %v11061
      %11063 = vperm.xlu0 %11062, %v11016
      %v11064 = vpop.permute.xlu0 %11063
      %v11065 = vperm.slane %v10114, 5
      %v11066 = vlaneseq
      %v11067 = vshrl.u32 %v11066, 7
      %11069 = vset.pattern.permute.xlu0 %v11067
      %11070 = vperm.xlu0 %11069, %v11065
      %v11071 = vpop.permute.xlu0 %11070
      %v11072 = vlaneseq
      %v11073 = vshrl.u32 %v11072, 7
      %v11074 = vadd.s32 %v11073, 8
      %11075 = vset.pattern.permute.xlu0 %v11074
      %11076 = vperm.xlu0 %11075, %v11065
      %v11077 = vpop.permute.xlu0 %11076
      %v11078 = vlaneseq
      %v11079 = vshrl.u32 %v11078, 7
      %v11080 = vadd.s32 %v11079, 16
      %11081 = vset.pattern.permute.xlu0 %v11080
      %11082 = vperm.xlu0 %11081, %v11065
      %v11083 = vpop.permute.xlu0 %11082
      %v11084 = vlaneseq
      %v11085 = vshrl.u32 %v11084, 7
      %v11086 = vadd.s32 %v11085, 24
      %11087 = vset.pattern.permute.xlu0 %v11086
      %11088 = vperm.xlu0 %11087, %v11065
      %v11089 = vpop.permute.xlu0 %11088
      %v11090 = vlaneseq
      %v11091 = vshrl.u32 %v11090, 7
      %v11092 = vadd.s32 %v11091, 32
      %11093 = vset.pattern.permute.xlu0 %v11092
      %11094 = vperm.xlu0 %11093, %v11065
      %v11095 = vpop.permute.xlu0 %11094
      %v11096 = vlaneseq
      %v11097 = vshrl.u32 %v11096, 7
      %v11098 = vadd.s32 %v11097, 40
      %11099 = vset.pattern.permute.xlu0 %v11098
      %11100 = vperm.xlu0 %11099, %v11065
      %v11101 = vpop.permute.xlu0 %11100
      %v11102 = vlaneseq
      %v11103 = vshrl.u32 %v11102, 7
      %v11104 = vadd.s32 %v11103, 48
      %11105 = vset.pattern.permute.xlu0 %v11104
      %11106 = vperm.xlu0 %11105, %v11065
      %v11107 = vpop.permute.xlu0 %11106
      %v11108 = vlaneseq
      %v11109 = vshrl.u32 %v11108, 7
      %v11110 = vadd.s32 %v11109, 56
      %11111 = vset.pattern.permute.xlu0 %v11110
      %11112 = vperm.xlu0 %11111, %v11065
      %v11113 = vpop.permute.xlu0 %11112
      %v11114 = vperm.slane %v10114, 6
      %v11115 = vlaneseq
      %v11116 = vshrl.u32 %v11115, 7
      %11118 = vset.pattern.permute.xlu0 %v11116
      %11119 = vperm.xlu0 %11118, %v11114
      %v11120 = vpop.permute.xlu0 %11119
      %v11121 = vlaneseq
      %v11122 = vshrl.u32 %v11121, 7
      %v11123 = vadd.s32 %v11122, 8
      %11124 = vset.pattern.permute.xlu0 %v11123
      %11125 = vperm.xlu0 %11124, %v11114
      %v11126 = vpop.permute.xlu0 %11125
      %v11127 = vlaneseq
      %v11128 = vshrl.u32 %v11127, 7
      %v11129 = vadd.s32 %v11128, 16
      %11130 = vset.pattern.permute.xlu0 %v11129
      %11131 = vperm.xlu0 %11130, %v11114
      %v11132 = vpop.permute.xlu0 %11131
      %v11133 = vlaneseq
      %v11134 = vshrl.u32 %v11133, 7
      %v11135 = vadd.s32 %v11134, 24
      %11136 = vset.pattern.permute.xlu0 %v11135
      %11137 = vperm.xlu0 %11136, %v11114
      %v11138 = vpop.permute.xlu0 %11137
      %v11139 = vlaneseq
      %v11140 = vshrl.u32 %v11139, 7
      %v11141 = vadd.s32 %v11140, 32
      %11142 = vset.pattern.permute.xlu0 %v11141
      %11143 = vperm.xlu0 %11142, %v11114
      %v11144 = vpop.permute.xlu0 %11143
      %v11145 = vlaneseq
      %v11146 = vshrl.u32 %v11145, 7
      %v11147 = vadd.s32 %v11146, 40
      %11148 = vset.pattern.permute.xlu0 %v11147
      %11149 = vperm.xlu0 %11148, %v11114
      %v11150 = vpop.permute.xlu0 %11149
      %v11151 = vlaneseq
      %v11152 = vshrl.u32 %v11151, 7
      %v11153 = vadd.s32 %v11152, 48
      %11154 = vset.pattern.permute.xlu0 %v11153
      %11155 = vperm.xlu0 %11154, %v11114
      %v11156 = vpop.permute.xlu0 %11155
      %v11157 = vlaneseq
      %v11158 = vshrl.u32 %v11157, 7
      %v11159 = vadd.s32 %v11158, 56
      %11160 = vset.pattern.permute.xlu0 %v11159
      %11161 = vperm.xlu0 %11160, %v11114
      %v11162 = vpop.permute.xlu0 %11161
      %v11163 = vperm.slane %v10114, 7
      %v11164 = vlaneseq
      %v11165 = vshrl.u32 %v11164, 7
      %11167 = vset.pattern.permute.xlu0 %v11165
      %11168 = vperm.xlu0 %11167, %v11163
      %v11169 = vpop.permute.xlu0 %11168
      %v11170 = vlaneseq
      %v11171 = vshrl.u32 %v11170, 7
      %v11172 = vadd.s32 %v11171, 8
      %11173 = vset.pattern.permute.xlu0 %v11172
      %11174 = vperm.xlu0 %11173, %v11163
      %v11175 = vpop.permute.xlu0 %11174
      %v11176 = vlaneseq
      %v11177 = vshrl.u32 %v11176, 7
      %v11178 = vadd.s32 %v11177, 16
      %11179 = vset.pattern.permute.xlu0 %v11178
      %11180 = vperm.xlu0 %11179, %v11163
      %v11181 = vpop.permute.xlu0 %11180
      %v11182 = vlaneseq
      %v11183 = vshrl.u32 %v11182, 7
      %v11184 = vadd.s32 %v11183, 24
      %11185 = vset.pattern.permute.xlu0 %v11184
      %11186 = vperm.xlu0 %11185, %v11163
      %v11187 = vpop.permute.xlu0 %11186
      %v11188 = vlaneseq
      %v11189 = vshrl.u32 %v11188, 7
      %v11190 = vadd.s32 %v11189, 32
      %11191 = vset.pattern.permute.xlu0 %v11190
      %11192 = vperm.xlu0 %11191, %v11163
      %v11193 = vpop.permute.xlu0 %11192
      %v11194 = vlaneseq
      %v11195 = vshrl.u32 %v11194, 7
      %v11196 = vadd.s32 %v11195, 40
      %11197 = vset.pattern.permute.xlu0 %v11196
      %11198 = vperm.xlu0 %11197, %v11163
      %v11199 = vpop.permute.xlu0 %11198
      %v11200 = vlaneseq
      %v11201 = vshrl.u32 %v11200, 7
      %v11202 = vadd.s32 %v11201, 48
      %11203 = vset.pattern.permute.xlu0 %v11202
      %11204 = vperm.xlu0 %11203, %v11163
      %v11205 = vpop.permute.xlu0 %11204
      %v11206 = vlaneseq
      %v11207 = vshrl.u32 %v11206, 7
      %v11208 = vadd.s32 %v11207, 56
      %11209 = vset.pattern.permute.xlu0 %v11208
      %11210 = vperm.xlu0 %11209, %v11163
      %v11211 = vpop.permute.xlu0 %11210
      %v11212 = vmul.f32 %v10756, %v10826
      %v11213 = vmul.f32 %v10757, %v10832
      %v11214 = vmul.f32 %v10758, %v10838
      %v11215 = vmul.f32 %v10759, %v10844
      %v11216 = vmul.f32 %v10760, %v10850
      %v11217 = vmul.f32 %v10761, %v10856
      %v11218 = vmul.f32 %v10762, %v10862
      %v11219 = vmul.f32 %v10763, %v10868
      %v11220 = vmul.f32 %v10764, %v10875
      %v11221 = vmul.f32 %v10765, %v10881
      %v11222 = vmul.f32 %v10766, %v10887
      %v11223 = vmul.f32 %v10767, %v10893
      %v11224 = vmul.f32 %v10768, %v10899
      %v11225 = vmul.f32 %v10769, %v10905
      %v11226 = vmul.f32 %v10770, %v10911
      %v11227 = vmul.f32 %v10771, %v10917
      %v11228 = vmul.f32 %v10772, %v10924
      %v11229 = vmul.f32 %v10773, %v10930
      %v11230 = vmul.f32 %v10774, %v10936
      %v11231 = vmul.f32 %v10775, %v10942
      %v11232 = vmul.f32 %v10776, %v10948
      %v11233 = vmul.f32 %v10777, %v10954
      %v11234 = vmul.f32 %v10778, %v10960
      %v11235 = vmul.f32 %v10779, %v10966
      %v11236 = vmul.f32 %v10780, %v10973
      %v11237 = vmul.f32 %v10781, %v10979
      %v11238 = vmul.f32 %v10782, %v10985
      %v11239 = vmul.f32 %v10783, %v10991
      %v11240 = vmul.f32 %v10784, %v10997
      %v11241 = vmul.f32 %v10785, %v11003
      %v11242 = vmul.f32 %v10786, %v11009
      %v11243 = vmul.f32 %v10787, %v11015
      %v11244 = vmul.f32 %v10788, %v11022
      %v11245 = vmul.f32 %v10789, %v11028
      %v11246 = vmul.f32 %v10790, %v11034
      %v11247 = vmul.f32 %v10791, %v11040
      %v11248 = vmul.f32 %v10792, %v11046
      %v11249 = vmul.f32 %v10793, %v11052
      %v11250 = vmul.f32 %v10794, %v11058
      %v11251 = vmul.f32 %v10795, %v11064
      %v11252 = vmul.f32 %v10796, %v11071
      %v11253 = vmul.f32 %v10797, %v11077
      %v11254 = vmul.f32 %v10798, %v11083
      %v11255 = vmul.f32 %v10799, %v11089
      %v11256 = vmul.f32 %v10800, %v11095
      %v11257 = vmul.f32 %v10801, %v11101
      %v11258 = vmul.f32 %v10802, %v11107
      %v11259 = vmul.f32 %v10803, %v11113
      %v11260 = vmul.f32 %v10804, %v11120
      %v11261 = vmul.f32 %v10805, %v11126
      %v11262 = vmul.f32 %v10806, %v11132
      %v11263 = vmul.f32 %v10807, %v11138
      %v11264 = vmul.f32 %v10808, %v11144
      %v11265 = vmul.f32 %v10809, %v11150
      %v11266 = vmul.f32 %v10810, %v11156
      %v11267 = vmul.f32 %v10811, %v11162
      %v11268 = vmul.f32 %v10812, %v11169
      %v11269 = vmul.f32 %v10813, %v11175
      %v11270 = vmul.f32 %v10814, %v11181
      %v11271 = vmul.f32 %v10815, %v11187
      %v11272 = vmul.f32 %v10816, %v11193
      %v11273 = vmul.f32 %v10817, %v11199
      %v11274 = vmul.f32 %v10818, %v11205
      %v11275 = vmul.f32 %v10819, %v11211
      %v11276 = vsel %vm46, %v11212, 0.0
      %v11277 = vsel %vm46, %v11220, 0.0
      %v11278 = vadd.f32 %v11276, %v11277
      %v11279 = vsel %vm46, %v11228, 0.0
      %v11280 = vadd.f32 %v11278, %v11279
      %v11281 = vsel %vm46, %v11236, 0.0
      %v11282 = vadd.f32 %v11280, %v11281
      %v11283 = vsel %vm46, %v11244, 0.0
      %v11284 = vadd.f32 %v11282, %v11283
      %v11285 = vsel %vm46, %v11252, 0.0
      %v11286 = vadd.f32 %v11284, %v11285
      %v11287 = vsel %vm46, %v11260, 0.0
      %v11288 = vadd.f32 %v11286, %v11287
      %v11289 = vsel %vm46, %v11268, 0.0
      %v11290 = vadd.f32 %v11288, %v11289
      %v11291 = vsel %vm46, %v11213, 0.0
      %v11292 = vsel %vm46, %v11221, 0.0
      %v11293 = vadd.f32 %v11291, %v11292
      %v11294 = vsel %vm46, %v11229, 0.0
      %v11295 = vadd.f32 %v11293, %v11294
      %v11296 = vsel %vm46, %v11237, 0.0
      %v11297 = vadd.f32 %v11295, %v11296
      %v11298 = vsel %vm46, %v11245, 0.0
      %v11299 = vadd.f32 %v11297, %v11298
      %v11300 = vsel %vm46, %v11253, 0.0
      %v11301 = vadd.f32 %v11299, %v11300
      %v11302 = vsel %vm46, %v11261, 0.0
      %v11303 = vadd.f32 %v11301, %v11302
      %v11304 = vsel %vm46, %v11269, 0.0
      %v11305 = vadd.f32 %v11303, %v11304
      %v11306 = vsel %vm46, %v11214, 0.0
      %v11307 = vsel %vm46, %v11222, 0.0
      %v11308 = vadd.f32 %v11306, %v11307
      %v11309 = vsel %vm46, %v11230, 0.0
      %v11310 = vadd.f32 %v11308, %v11309
      %v11311 = vsel %vm46, %v11238, 0.0
      %v11312 = vadd.f32 %v11310, %v11311
      %v11313 = vsel %vm46, %v11246, 0.0
      %v11314 = vadd.f32 %v11312, %v11313
      %v11315 = vsel %vm46, %v11254, 0.0
      %v11316 = vadd.f32 %v11314, %v11315
      %v11317 = vsel %vm46, %v11262, 0.0
      %v11318 = vadd.f32 %v11316, %v11317
      %v11319 = vsel %vm46, %v11270, 0.0
      %v11320 = vadd.f32 %v11318, %v11319
      %v11321 = vsel %vm46, %v11215, 0.0
      %v11322 = vsel %vm46, %v11223, 0.0
      %v11323 = vadd.f32 %v11321, %v11322
      %v11324 = vsel %vm46, %v11231, 0.0
      %v11325 = vadd.f32 %v11323, %v11324
      %v11326 = vsel %vm46, %v11239, 0.0
      %v11327 = vadd.f32 %v11325, %v11326
      %v11328 = vsel %vm46, %v11247, 0.0
      %v11329 = vadd.f32 %v11327, %v11328
      %v11330 = vsel %vm46, %v11255, 0.0
      %v11331 = vadd.f32 %v11329, %v11330
      %v11332 = vsel %vm46, %v11263, 0.0
      %v11333 = vadd.f32 %v11331, %v11332
      %v11334 = vsel %vm46, %v11271, 0.0
      %v11335 = vadd.f32 %v11333, %v11334
      %v11336 = vsel %vm46, %v11216, 0.0
      %v11337 = vsel %vm46, %v11224, 0.0
      %v11338 = vadd.f32 %v11336, %v11337
      %v11339 = vsel %vm46, %v11232, 0.0
      %v11340 = vadd.f32 %v11338, %v11339
      %v11341 = vsel %vm46, %v11240, 0.0
      %v11342 = vadd.f32 %v11340, %v11341
      %v11343 = vsel %vm46, %v11248, 0.0
      %v11344 = vadd.f32 %v11342, %v11343
      %v11345 = vsel %vm46, %v11256, 0.0
      %v11346 = vadd.f32 %v11344, %v11345
      %v11347 = vsel %vm46, %v11264, 0.0
      %v11348 = vadd.f32 %v11346, %v11347
      %v11349 = vsel %vm46, %v11272, 0.0
      %v11350 = vadd.f32 %v11348, %v11349
      %v11351 = vsel %vm46, %v11217, 0.0
      %v11352 = vsel %vm46, %v11225, 0.0
      %v11353 = vadd.f32 %v11351, %v11352
      %v11354 = vsel %vm46, %v11233, 0.0
      %v11355 = vadd.f32 %v11353, %v11354
      %v11356 = vsel %vm46, %v11241, 0.0
      %v11357 = vadd.f32 %v11355, %v11356
      %v11358 = vsel %vm46, %v11249, 0.0
      %v11359 = vadd.f32 %v11357, %v11358
      %v11360 = vsel %vm46, %v11257, 0.0
      %v11361 = vadd.f32 %v11359, %v11360
      %v11362 = vsel %vm46, %v11265, 0.0
      %v11363 = vadd.f32 %v11361, %v11362
      %v11364 = vsel %vm46, %v11273, 0.0
      %v11365 = vadd.f32 %v11363, %v11364
      %v11366 = vsel %vm46, %v11218, 0.0
      %v11367 = vsel %vm46, %v11226, 0.0
      %v11368 = vadd.f32 %v11366, %v11367
      %v11369 = vsel %vm46, %v11234, 0.0
      %v11370 = vadd.f32 %v11368, %v11369
      %v11371 = vsel %vm46, %v11242, 0.0
      %v11372 = vadd.f32 %v11370, %v11371
      %v11373 = vsel %vm46, %v11250, 0.0
      %v11374 = vadd.f32 %v11372, %v11373
      %v11375 = vsel %vm46, %v11258, 0.0
      %v11376 = vadd.f32 %v11374, %v11375
      %v11377 = vsel %vm46, %v11266, 0.0
      %v11378 = vadd.f32 %v11376, %v11377
      %v11379 = vsel %vm46, %v11274, 0.0
      %v11380 = vadd.f32 %v11378, %v11379
      %v11381 = vsel %vm46, %v11219, 0.0
      %v11382 = vsel %vm46, %v11227, 0.0
      %v11383 = vadd.f32 %v11381, %v11382
      %v11384 = vsel %vm46, %v11235, 0.0
      %v11385 = vadd.f32 %v11383, %v11384
      %v11386 = vsel %vm46, %v11243, 0.0
      %v11387 = vadd.f32 %v11385, %v11386
      %v11388 = vsel %vm46, %v11251, 0.0
      %v11389 = vadd.f32 %v11387, %v11388
      %v11390 = vsel %vm46, %v11259, 0.0
      %v11391 = vadd.f32 %v11389, %v11390
      %v11392 = vsel %vm46, %v11267, 0.0
      %v11393 = vadd.f32 %v11391, %v11392
      %v11394 = vsel %vm46, %v11275, 0.0
      %v11395 = vadd.f32 %v11393, %v11394
      %v11396 = vadd.f32 %v10100, %v11290
      %v11397 = vadd.f32 %v10101, %v11305
      %v11398 = vadd.f32 %v10102, %v11320
      %v11399 = vadd.f32 %v10103, %v11335
      %v11400 = vadd.f32 %v10104, %v11350
      %v11401 = vadd.f32 %v10105, %v11365
      %v11402 = vadd.f32 %v10106, %v11380
      %v11403 = vadd.f32 %v10107, %v11395
    $region46: #{fancy_conv_forward.1} parent=1 // loop_footer
      %s10099 = sadd.s32 1, %s10095
    $region47: #{fancy_conv_forward.1} parent=1 // loop_footer_branch
      %10094 = sbr.rel target = $region43
    $region48: #{fancy_conv_forward.1} parent=1 // loop_exit
      _
    %v11404 = vperm.slane %v95, 1
    %v11405 = vmul.f32 %v11404, %v9479
    %v11406 = vmul.f32 %v11404, %v9482
    %v11407 = vmul.f32 %v11404, %v9485
    %v11408 = vmul.f32 %v11404, %v9488
    %v11409 = vmul.f32 %v11404, %v9491
    %v11410 = vmul.f32 %v11404, %v9494
    %v11411 = vmul.f32 %v11404, %v9497
    %v11412 = vmul.f32 %v11404, %v9500
    %v11414 = vsel %vm46, %v10100, 0
    %v11417 = vsel %vm46, %v10101, 0
    %v11420 = vsel %vm46, %v10102, 0
    %v11423 = vsel %vm46, %v10103, 0
    %v11426 = vsel %vm46, %v10104, 0
    %v11429 = vsel %vm46, %v10105, 0
    %v11432 = vsel %vm46, %v10106, 0
    %v11435 = vsel %vm46, %v10107, 0
    %11437 = vmatpush.msra.mxu0 0.0
    %11438 = vmatpush.msra.mxu0 0.0
    %11439 = vmatpush.msra.mxu0 0.0
    %11440 = vmatpush.msra.mxu0 0.0
    %11441 = vmatpush.msra.mxu0 0.0
    %11442 = vmatpush.msra.mxu0 0.0
    %11443 = vmatpush.msra.mxu0 0.0
    %11444 = vmatpush.msra.mxu0 0.0
    %11445 = vmatpush.msra.mxu0 0.0
    %11446 = vmatpush.msra.mxu0 0.0
    %11447 = vmatpush.msra.mxu0 0.0
    %11448 = vmatpush.msra.mxu0 0.0
    %11449 = vmatpush.msra.mxu0 %v103
    %11450 = vmatpush.msra.mxu0 %v102
    %11451 = vmatpush.msra.mxu0 %v101
    %11452 = vmatpush.msra.mxu0 %v100
    %11453 = vmatmul.f32.gmra.mxu0 %v11414
    %v11454 = vpop.f32.mrf.mxu0
    %v11455 = vadd.f32 %v11405, %v11454
    %11456 = vmatmul.f32.gmra.mxu0 %v11417
    %v11457 = vpop.f32.mrf.mxu0
    %v11458 = vadd.f32 %v11406, %v11457
    %11459 = vmatmul.f32.gmra.mxu0 %v11420
    %v11460 = vpop.f32.mrf.mxu0
    %v11461 = vadd.f32 %v11407, %v11460
    %11462 = vmatmul.f32.gmra.mxu0 %v11423
    %v11463 = vpop.f32.mrf.mxu0
    %v11464 = vadd.f32 %v11408, %v11463
    %11465 = vmatmul.f32.gmra.mxu0 %v11426
    %v11466 = vpop.f32.mrf.mxu0
    %v11467 = vadd.f32 %v11409, %v11466
    %11468 = vmatmul.f32.gmra.mxu0 %v11429
    %v11469 = vpop.f32.mrf.mxu0
    %v11470 = vadd.f32 %v11410, %v11469
    %11471 = vmatmul.f32.gmra.mxu0 %v11432
    %v11472 = vpop.f32.mrf.mxu0
    %v11473 = vadd.f32 %v11411, %v11472
    %11474 = vmatmul.f32.gmra.mxu0 %v11435
    %v11475 = vpop.f32.mrf.mxu0
    %v11476 = vadd.f32 %v11412, %v11475
    %11477 = vdwg.mxu0
    %v11478 = vld [vmem:[%s7] sm:$0xff]
    %v11479 = vld [vmem:[%s7 + $0x8] sm:$0xff]
    %v11480 = vld [vmem:[%s7 + $0x10] sm:$0xff]
    %v11481 = vld [vmem:[%s7 + $0x18] sm:$0xff]
    %v11482 = vld [vmem:[%s7 + $0x20] sm:$0x1]
    %v11484 = vsel %vm143, %v11482, 0
    %11486 = vmatpush.msra.mxu0 0.0
    %11487 = vmatpush.msra.mxu0 0.0
    %11488 = vmatpush.msra.mxu0 0.0
    %11489 = vmatpush.msra.mxu0 0.0
    %11490 = vmatpush.msra.mxu0 0.0
    %11491 = vmatpush.msra.mxu0 0.0
    %11492 = vmatpush.msra.mxu0 0.0
    %11493 = vmatpush.msra.mxu0 0.0
    %11494 = vmatpush.msra.mxu0 0.0
    %11495 = vmatpush.msra.mxu0 0.0
    %11496 = vmatpush.msra.mxu0 0.0
    %11497 = vmatpush.msra.mxu0 %v11484
    %11498 = vmatpush.msra.mxu0 %v11481
    %11499 = vmatpush.msra.mxu0 %v11480
    %11500 = vmatpush.msra.mxu0 %v11479
    %11501 = vmatpush.msra.mxu0 %v11478
    %11502 = vmatmul.f32.gmra.mxu0 %v120
    %v11503 = vpop.f32.mrf.mxu0
    %v11504 = vadd.f32 0.0, %v11503
    %11505 = vmatmul.f32.gmra.mxu0 %v123
    %v11506 = vpop.f32.mrf.mxu0
    %v11507 = vadd.f32 0.0, %v11506
    %11508 = vmatmul.f32.gmra.mxu0 %v126
    %v11509 = vpop.f32.mrf.mxu0
    %v11510 = vadd.f32 0.0, %v11509
    %11511 = vmatmul.f32.gmra.mxu0 %v129
    %v11512 = vpop.f32.mrf.mxu0
    %v11513 = vadd.f32 0.0, %v11512
    %11514 = vmatmul.f32.gmra.mxu0 %v132
    %v11515 = vpop.f32.mrf.mxu0
    %v11516 = vadd.f32 0.0, %v11515
    %11517 = vmatmul.f32.gmra.mxu0 %v135
    %v11518 = vpop.f32.mrf.mxu0
    %v11519 = vadd.f32 0.0, %v11518
    %11520 = vmatmul.f32.gmra.mxu0 %v138
    %v11521 = vpop.f32.mrf.mxu0
    %v11522 = vadd.f32 0.0, %v11521
    %11523 = vmatmul.f32.gmra.mxu0 %v141
    %v11524 = vpop.f32.mrf.mxu0
    %v11525 = vadd.f32 0.0, %v11524
    %11526 = vdwg.mxu0
    %v11528 = vsel %vm46, %v11455, 0
    %v11531 = vsel %vm46, %v11458, 0
    %v11534 = vsel %vm46, %v11461, 0
    %v11537 = vsel %vm46, %v11464, 0
    %v11540 = vsel %vm46, %v11467, 0
    %v11543 = vsel %vm46, %v11470, 0
    %v11546 = vsel %vm46, %v11473, 0
    %v11549 = vsel %vm46, %v11476, 0
    %11551 = vmatpush.msra.mxu0 0.0
    %11552 = vmatpush.msra.mxu0 0.0
    %11553 = vmatpush.msra.mxu0 0.0
    %11554 = vmatpush.msra.mxu0 0.0
    %11555 = vmatpush.msra.mxu0 0.0
    %11556 = vmatpush.msra.mxu0 0.0
    %11557 = vmatpush.msra.mxu0 0.0
    %11558 = vmatpush.msra.mxu0 0.0
    %11559 = vmatpush.msra.mxu0 0.0
    %11560 = vmatpush.msra.mxu0 0.0
    %11561 = vmatpush.msra.mxu0 0.0
    %11562 = vmatpush.msra.mxu0 0.0
    %11563 = vmatpush.msra.mxu0 %v107
    %11564 = vmatpush.msra.mxu0 %v106
    %11565 = vmatpush.msra.mxu0 %v105
    %11566 = vmatpush.msra.mxu0 %v104
    %11567 = vmatmul.f32.gmra.mxu0 %v11528
    %v11568 = vpop.f32.mrf.mxu0
    %v11569 = vadd.f32 %v11504, %v11568
    %11570 = vmatmul.f32.gmra.mxu0 %v11531
    %v11571 = vpop.f32.mrf.mxu0
    %v11572 = vadd.f32 %v11507, %v11571
    %11573 = vmatmul.f32.gmra.mxu0 %v11534
    %v11574 = vpop.f32.mrf.mxu0
    %v11575 = vadd.f32 %v11510, %v11574
    %11576 = vmatmul.f32.gmra.mxu0 %v11537
    %v11577 = vpop.f32.mrf.mxu0
    %v11578 = vadd.f32 %v11513, %v11577
    %11579 = vmatmul.f32.gmra.mxu0 %v11540
    %v11580 = vpop.f32.mrf.mxu0
    %v11581 = vadd.f32 %v11516, %v11580
    %11582 = vmatmul.f32.gmra.mxu0 %v11543
    %v11583 = vpop.f32.mrf.mxu0
    %v11584 = vadd.f32 %v11519, %v11583
    %11585 = vmatmul.f32.gmra.mxu0 %v11546
    %v11586 = vpop.f32.mrf.mxu0
    %v11587 = vadd.f32 %v11522, %v11586
    %11588 = vmatmul.f32.gmra.mxu0 %v11549
    %v11589 = vpop.f32.mrf.mxu0
    %v11590 = vadd.f32 %v11525, %v11589
    %11591 = vdwg.mxu0
    %v11592 = vperm.slane %v95, 2
    %v11593 = vadd.f32 %v11569, %v11592
    %v11594 = vadd.f32 %v11572, %v11592
    %v11595 = vadd.f32 %v11575, %v11592
    %v11596 = vadd.f32 %v11578, %v11592
    %v11597 = vadd.f32 %v11581, %v11592
    %v11598 = vadd.f32 %v11584, %v11592
    %v11599 = vadd.f32 %v11587, %v11592
    %v11600 = vadd.f32 %v11590, %v11592
    %v11601 = vsel %vm46, %v11593, 0.0
    %11602 = vadd.xlane.f32.xlu0 %v11601
    %v11603 = vpop.xlane.xlu0 %11602
    %v11604 = vsel %vm46, %v11594, 0.0
    %11605 = vadd.xlane.f32.xlu0 %v11604
    %v11606 = vpop.xlane.xlu0 %11605
    %v11607 = vsel %vm46, %v11595, 0.0
    %11608 = vadd.xlane.f32.xlu0 %v11607
    %v11609 = vpop.xlane.xlu0 %11608
    %v11610 = vsel %vm46, %v11596, 0.0
    %11611 = vadd.xlane.f32.xlu0 %v11610
    %v11612 = vpop.xlane.xlu0 %11611
    %v11613 = vsel %vm46, %v11597, 0.0
    %11614 = vadd.xlane.f32.xlu0 %v11613
    %v11615 = vpop.xlane.xlu0 %11614
    %v11616 = vsel %vm46, %v11598, 0.0
    %11617 = vadd.xlane.f32.xlu0 %v11616
    %v11618 = vpop.xlane.xlu0 %11617
    %v11619 = vsel %vm46, %v11599, 0.0
    %11620 = vadd.xlane.f32.xlu0 %v11619
    %v11621 = vpop.xlane.xlu0 %11620
    %v11622 = vsel %vm46, %v11600, 0.0
    %11623 = vadd.xlane.f32.xlu0 %v11622
    %v11624 = vpop.xlane.xlu0 %11623
    %v11625 = vmul.f32 %v11603, %v77
    %v11626 = vmul.f32 %v11606, %v77
    %v11627 = vmul.f32 %v11609, %v77
    %v11628 = vmul.f32 %v11612, %v77
    %v11629 = vmul.f32 %v11615, %v77
    %v11630 = vmul.f32 %v11618, %v77
    %v11631 = vmul.f32 %v11621, %v77
    %v11632 = vmul.f32 %v11624, %v77
    %v11633 = vsub.f32 %v11593, %v11625
    %v11634 = vsub.f32 %v11594, %v11626
    %v11635 = vsub.f32 %v11595, %v11627
    %v11636 = vsub.f32 %v11596, %v11628
    %v11637 = vsub.f32 %v11597, %v11629
    %v11638 = vsub.f32 %v11598, %v11630
    %v11639 = vsub.f32 %v11599, %v11631
    %v11640 = vsub.f32 %v11600, %v11632
    %v11641 = vmul.f32 %v11633, %v11633
    %v11642 = vmul.f32 %v11634, %v11634
    %v11643 = vmul.f32 %v11635, %v11635
    %v11644 = vmul.f32 %v11636, %v11636
    %v11645 = vmul.f32 %v11637, %v11637
    %v11646 = vmul.f32 %v11638, %v11638
    %v11647 = vmul.f32 %v11639, %v11639
    %v11648 = vmul.f32 %v11640, %v11640
    %v11649 = vsel %vm46, %v11641, 0.0
    %11650 = vadd.xlane.f32.xlu0 %v11649
    %v11651 = vpop.xlane.xlu0 %11650
    %v11652 = vsel %vm46, %v11642, 0.0
    %11653 = vadd.xlane.f32.xlu0 %v11652
    %v11654 = vpop.xlane.xlu0 %11653
    %v11655 = vsel %vm46, %v11643, 0.0
    %11656 = vadd.xlane.f32.xlu0 %v11655
    %v11657 = vpop.xlane.xlu0 %11656
    %v11658 = vsel %vm46, %v11644, 0.0
    %11659 = vadd.xlane.f32.xlu0 %v11658
    %v11660 = vpop.xlane.xlu0 %11659
    %v11661 = vsel %vm46, %v11645, 0.0
    %11662 = vadd.xlane.f32.xlu0 %v11661
    %v11663 = vpop.xlane.xlu0 %11662
    %v11664 = vsel %vm46, %v11646, 0.0
    %11665 = vadd.xlane.f32.xlu0 %v11664
    %v11666 = vpop.xlane.xlu0 %11665
    %v11667 = vsel %vm46, %v11647, 0.0
    %11668 = vadd.xlane.f32.xlu0 %v11667
    %v11669 = vpop.xlane.xlu0 %11668
    %v11670 = vsel %vm46, %v11648, 0.0
    %11671 = vadd.xlane.f32.xlu0 %v11670
    %v11672 = vpop.xlane.xlu0 %11671
    %v11673 = vmul.f32 %v11651, %v77
    %v11674 = vmul.f32 %v11654, %v77
    %v11675 = vmul.f32 %v11657, %v77
    %v11676 = vmul.f32 %v11660, %v77
    %v11677 = vmul.f32 %v11663, %v77
    %v11678 = vmul.f32 %v11666, %v77
    %v11679 = vmul.f32 %v11669, %v77
    %v11680 = vmul.f32 %v11672, %v77
    %v11681 = vadd.f32 %v11673, 1e-05
    %v11682 = vadd.f32 %v11674, 1e-05
    %v11683 = vadd.f32 %v11675, 1e-05
    %v11684 = vadd.f32 %v11676, 1e-05
    %v11685 = vadd.f32 %v11677, 1e-05
    %v11686 = vadd.f32 %v11678, 1e-05
    %v11687 = vadd.f32 %v11679, 1e-05
    %v11688 = vadd.f32 %v11680, 1e-05
    %v11689 = vrsqrt.pop %v11681
    %v11690 = vmul.f32 %v11689, %v11681
    %v11691 = vmul.f32 %v11690, %v11689
    %v11692 = vmul.f32 0.5, %v11691
    %v11693 = vsub.f32 1.5, %v11692
    %v11694 = vmul.f32 %v11689, %v11693
    %vm11695 = vweird.f32 %v11681
    %vm11696 = vweird.f32 %v11689
    %vm11697 = vmor %vm11695, %vm11696
    %v11698 = vsel %vm11697, %v11689, %v11694
    %v11699 = vrsqrt.pop %v11682
    %v11700 = vmul.f32 %v11699, %v11682
    %v11701 = vmul.f32 %v11700, %v11699
    %v11702 = vmul.f32 0.5, %v11701
    %v11703 = vsub.f32 1.5, %v11702
    %v11704 = vmul.f32 %v11699, %v11703
    %vm11705 = vweird.f32 %v11682
    %vm11706 = vweird.f32 %v11699
    %vm11707 = vmor %vm11705, %vm11706
    %v11708 = vsel %vm11707, %v11699, %v11704
    %v11709 = vrsqrt.pop %v11683
    %v11710 = vmul.f32 %v11709, %v11683
    %v11711 = vmul.f32 %v11710, %v11709
    %v11712 = vmul.f32 0.5, %v11711
    %v11713 = vsub.f32 1.5, %v11712
    %v11714 = vmul.f32 %v11709, %v11713
    %vm11715 = vweird.f32 %v11683
    %vm11716 = vweird.f32 %v11709
    %vm11717 = vmor %vm11715, %vm11716
    %v11718 = vsel %vm11717, %v11709, %v11714
    %v11719 = vrsqrt.pop %v11684
    %v11720 = vmul.f32 %v11719, %v11684
    %v11721 = vmul.f32 %v11720, %v11719
    %v11722 = vmul.f32 0.5, %v11721
    %v11723 = vsub.f32 1.5, %v11722
    %v11724 = vmul.f32 %v11719, %v11723
    %vm11725 = vweird.f32 %v11684
    %vm11726 = vweird.f32 %v11719
    %vm11727 = vmor %vm11725, %vm11726
    %v11728 = vsel %vm11727, %v11719, %v11724
    %v11729 = vrsqrt.pop %v11685
    %v11730 = vmul.f32 %v11729, %v11685
    %v11731 = vmul.f32 %v11730, %v11729
    %v11732 = vmul.f32 0.5, %v11731
    %v11733 = vsub.f32 1.5, %v11732
    %v11734 = vmul.f32 %v11729, %v11733
    %vm11735 = vweird.f32 %v11685
    %vm11736 = vweird.f32 %v11729
    %vm11737 = vmor %vm11735, %vm11736
    %v11738 = vsel %vm11737, %v11729, %v11734
    %v11739 = vrsqrt.pop %v11686
    %v11740 = vmul.f32 %v11739, %v11686
    %v11741 = vmul.f32 %v11740, %v11739
    %v11742 = vmul.f32 0.5, %v11741
    %v11743 = vsub.f32 1.5, %v11742
    %v11744 = vmul.f32 %v11739, %v11743
    %vm11745 = vweird.f32 %v11686
    %vm11746 = vweird.f32 %v11739
    %vm11747 = vmor %vm11745, %vm11746
    %v11748 = vsel %vm11747, %v11739, %v11744
    %v11749 = vrsqrt.pop %v11687
    %v11750 = vmul.f32 %v11749, %v11687
    %v11751 = vmul.f32 %v11750, %v11749
    %v11752 = vmul.f32 0.5, %v11751
    %v11753 = vsub.f32 1.5, %v11752
    %v11754 = vmul.f32 %v11749, %v11753
    %vm11755 = vweird.f32 %v11687
    %vm11756 = vweird.f32 %v11749
    %vm11757 = vmor %vm11755, %vm11756
    %v11758 = vsel %vm11757, %v11749, %v11754
    %v11759 = vrsqrt.pop %v11688
    %v11760 = vmul.f32 %v11759, %v11688
    %v11761 = vmul.f32 %v11760, %v11759
    %v11762 = vmul.f32 0.5, %v11761
    %v11763 = vsub.f32 1.5, %v11762
    %v11764 = vmul.f32 %v11759, %v11763
    %vm11765 = vweird.f32 %v11688
    %vm11766 = vweird.f32 %v11759
    %vm11767 = vmor %vm11765, %vm11766
    %v11768 = vsel %vm11767, %v11759, %v11764
    %v11769 = vmul.f32 %v11633, %v11698
    %v11770 = vmul.f32 %v11634, %v11708
    %v11771 = vmul.f32 %v11635, %v11718
    %v11772 = vmul.f32 %v11636, %v11728
    %v11773 = vmul.f32 %v11637, %v11738
    %v11774 = vmul.f32 %v11638, %v11748
    %v11775 = vmul.f32 %v11639, %v11758
    %v11776 = vmul.f32 %v11640, %v11768
    %v11777 = vperm.slane %v95, 3
    %v11778 = vmul.f32 %v11769, %v11777
    %v11779 = vmul.f32 %v11770, %v11777
    %v11780 = vmul.f32 %v11771, %v11777
    %v11781 = vmul.f32 %v11772, %v11777
    %v11782 = vmul.f32 %v11773, %v11777
    %v11783 = vmul.f32 %v11774, %v11777
    %v11784 = vmul.f32 %v11775, %v11777
    %v11785 = vmul.f32 %v11776, %v11777
    %v11786 = vperm.slane %v95, 4
    %v11787 = vadd.f32 %v11778, %v11786
    %v11788 = vadd.f32 %v11779, %v11786
    %v11789 = vadd.f32 %v11780, %v11786
    %v11790 = vadd.f32 %v11781, %v11786
    %v11791 = vadd.f32 %v11782, %v11786
    %v11792 = vadd.f32 %v11783, %v11786
    %v11793 = vadd.f32 %v11784, %v11786
    %v11794 = vadd.f32 %v11785, %v11786
    %v11795 = vmax.f32 %v11787, 0.0
    %v11796 = vmax.f32 %v11788, 0.0
    %v11797 = vmax.f32 %v11789, 0.0
    %v11798 = vmax.f32 %v11790, 0.0
    %v11799 = vmax.f32 %v11791, 0.0
    %v11800 = vmax.f32 %v11792, 0.0
    %v11801 = vmax.f32 %v11793, 0.0
    %v11802 = vmax.f32 %v11794, 0.0
    %v11803 = vperm.slane %v95, 5
    %v11805 = vsel %vm46, %v11795, 0
    %v11808 = vsel %vm46, %v11796, 0
    %v11811 = vsel %vm46, %v11797, 0
    %v11814 = vsel %vm46, %v11798, 0
    %v11817 = vsel %vm46, %v11799, 0
    %v11820 = vsel %vm46, %v11800, 0
    %v11823 = vsel %vm46, %v11801, 0
    %v11826 = vsel %vm46, %v11802, 0
    %11828 = vmatpush.msra.mxu0 0.0
    %11829 = vmatpush.msra.mxu0 0.0
    %11830 = vmatpush.msra.mxu0 0.0
    %11831 = vmatpush.msra.mxu0 0.0
    %11832 = vmatpush.msra.mxu0 0.0
    %11833 = vmatpush.msra.mxu0 0.0
    %11834 = vmatpush.msra.mxu0 0.0
    %11835 = vmatpush.msra.mxu0 0.0
    %11836 = vmatpush.msra.mxu0 0.0
    %11837 = vmatpush.msra.mxu0 0.0
    %11838 = vmatpush.msra.mxu0 0.0
    %11839 = vmatpush.msra.mxu0 0.0
    %11840 = vmatpush.msra.mxu0 %v111
    %11841 = vmatpush.msra.mxu0 %v110
    %11842 = vmatpush.msra.mxu0 %v109
    %11843 = vmatpush.msra.mxu0 %v108
    %11844 = vmatmul.f32.gmra.mxu0 %v11805
    %v11845 = vpop.f32.mrf.mxu0
    %v11846 = vadd.f32 %v11803, %v11845
    %11847 = vmatmul.f32.gmra.mxu0 %v11808
    %v11848 = vpop.f32.mrf.mxu0
    %v11849 = vadd.f32 %v11803, %v11848
    %11850 = vmatmul.f32.gmra.mxu0 %v11811
    %v11851 = vpop.f32.mrf.mxu0
    %v11852 = vadd.f32 %v11803, %v11851
    %11853 = vmatmul.f32.gmra.mxu0 %v11814
    %v11854 = vpop.f32.mrf.mxu0
    %v11855 = vadd.f32 %v11803, %v11854
    %11856 = vmatmul.f32.gmra.mxu0 %v11817
    %v11857 = vpop.f32.mrf.mxu0
    %v11858 = vadd.f32 %v11803, %v11857
    %11859 = vmatmul.f32.gmra.mxu0 %v11820
    %v11860 = vpop.f32.mrf.mxu0
    %v11861 = vadd.f32 %v11803, %v11860
    %11862 = vmatmul.f32.gmra.mxu0 %v11823
    %v11863 = vpop.f32.mrf.mxu0
    %v11864 = vadd.f32 %v11803, %v11863
    %11865 = vmatmul.f32.gmra.mxu0 %v11826
    %v11866 = vpop.f32.mrf.mxu0
    %v11867 = vadd.f32 %v11803, %v11866
    %11868 = vdwg.mxu0
    %v11869 = vsel %vm46, %v11846, 0.0
    %11870 = vadd.xlane.f32.xlu0 %v11869
    %v11871 = vpop.xlane.xlu0 %11870
    %v11872 = vsel %vm46, %v11849, 0.0
    %11873 = vadd.xlane.f32.xlu0 %v11872
    %v11874 = vpop.xlane.xlu0 %11873
    %v11875 = vsel %vm46, %v11852, 0.0
    %11876 = vadd.xlane.f32.xlu0 %v11875
    %v11877 = vpop.xlane.xlu0 %11876
    %v11878 = vsel %vm46, %v11855, 0.0
    %11879 = vadd.xlane.f32.xlu0 %v11878
    %v11880 = vpop.xlane.xlu0 %11879
    %v11881 = vsel %vm46, %v11858, 0.0
    %11882 = vadd.xlane.f32.xlu0 %v11881
    %v11883 = vpop.xlane.xlu0 %11882
    %v11884 = vsel %vm46, %v11861, 0.0
    %11885 = vadd.xlane.f32.xlu0 %v11884
    %v11886 = vpop.xlane.xlu0 %11885
    %v11887 = vsel %vm46, %v11864, 0.0
    %11888 = vadd.xlane.f32.xlu0 %v11887
    %v11889 = vpop.xlane.xlu0 %11888
    %v11890 = vsel %vm46, %v11867, 0.0
    %11891 = vadd.xlane.f32.xlu0 %v11890
    %v11892 = vpop.xlane.xlu0 %11891
    %v11893 = vmul.f32 %v11871, %v77
    %v11894 = vmul.f32 %v11874, %v77
    %v11895 = vmul.f32 %v11877, %v77
    %v11896 = vmul.f32 %v11880, %v77
    %v11897 = vmul.f32 %v11883, %v77
    %v11898 = vmul.f32 %v11886, %v77
    %v11899 = vmul.f32 %v11889, %v77
    %v11900 = vmul.f32 %v11892, %v77
    %v11901 = vsub.f32 %v11846, %v11893
    %v11902 = vsub.f32 %v11849, %v11894
    %v11903 = vsub.f32 %v11852, %v11895
    %v11904 = vsub.f32 %v11855, %v11896
    %v11905 = vsub.f32 %v11858, %v11897
    %v11906 = vsub.f32 %v11861, %v11898
    %v11907 = vsub.f32 %v11864, %v11899
    %v11908 = vsub.f32 %v11867, %v11900
    %v11909 = vmul.f32 %v11901, %v11901
    %v11910 = vmul.f32 %v11902, %v11902
    %v11911 = vmul.f32 %v11903, %v11903
    %v11912 = vmul.f32 %v11904, %v11904
    %v11913 = vmul.f32 %v11905, %v11905
    %v11914 = vmul.f32 %v11906, %v11906
    %v11915 = vmul.f32 %v11907, %v11907
    %v11916 = vmul.f32 %v11908, %v11908
    %v11917 = vsel %vm46, %v11909, 0.0
    %11918 = vadd.xlane.f32.xlu0 %v11917
    %v11919 = vpop.xlane.xlu0 %11918
    %v11920 = vsel %vm46, %v11910, 0.0
    %11921 = vadd.xlane.f32.xlu0 %v11920
    %v11922 = vpop.xlane.xlu0 %11921
    %v11923 = vsel %vm46, %v11911, 0.0
    %11924 = vadd.xlane.f32.xlu0 %v11923
    %v11925 = vpop.xlane.xlu0 %11924
    %v11926 = vsel %vm46, %v11912, 0.0
    %11927 = vadd.xlane.f32.xlu0 %v11926
    %v11928 = vpop.xlane.xlu0 %11927
    %v11929 = vsel %vm46, %v11913, 0.0
    %11930 = vadd.xlane.f32.xlu0 %v11929
    %v11931 = vpop.xlane.xlu0 %11930
    %v11932 = vsel %vm46, %v11914, 0.0
    %11933 = vadd.xlane.f32.xlu0 %v11932
    %v11934 = vpop.xlane.xlu0 %11933
    %v11935 = vsel %vm46, %v11915, 0.0
    %11936 = vadd.xlane.f32.xlu0 %v11935
    %v11937 = vpop.xlane.xlu0 %11936
    %v11938 = vsel %vm46, %v11916, 0.0
    %11939 = vadd.xlane.f32.xlu0 %v11938
    %v11940 = vpop.xlane.xlu0 %11939
    %v11941 = vmul.f32 %v11919, %v77
    %v11942 = vmul.f32 %v11922, %v77
    %v11943 = vmul.f32 %v11925, %v77
    %v11944 = vmul.f32 %v11928, %v77
    %v11945 = vmul.f32 %v11931, %v77
    %v11946 = vmul.f32 %v11934, %v77
    %v11947 = vmul.f32 %v11937, %v77
    %v11948 = vmul.f32 %v11940, %v77
    %v11949 = vadd.f32 %v11941, 1e-05
    %v11950 = vadd.f32 %v11942, 1e-05
    %v11951 = vadd.f32 %v11943, 1e-05
    %v11952 = vadd.f32 %v11944, 1e-05
    %v11953 = vadd.f32 %v11945, 1e-05
    %v11954 = vadd.f32 %v11946, 1e-05
    %v11955 = vadd.f32 %v11947, 1e-05
    %v11956 = vadd.f32 %v11948, 1e-05
    %v11957 = vrsqrt.pop %v11949
    %v11958 = vmul.f32 %v11957, %v11949
    %v11959 = vmul.f32 %v11958, %v11957
    %v11960 = vmul.f32 0.5, %v11959
    %v11961 = vsub.f32 1.5, %v11960
    %v11962 = vmul.f32 %v11957, %v11961
    %vm11963 = vweird.f32 %v11949
    %vm11964 = vweird.f32 %v11957
    %vm11965 = vmor %vm11963, %vm11964
    %v11966 = vsel %vm11965, %v11957, %v11962
    %v11967 = vrsqrt.pop %v11950
    %v11968 = vmul.f32 %v11967, %v11950
    %v11969 = vmul.f32 %v11968, %v11967
    %v11970 = vmul.f32 0.5, %v11969
    %v11971 = vsub.f32 1.5, %v11970
    %v11972 = vmul.f32 %v11967, %v11971
    %vm11973 = vweird.f32 %v11950
    %vm11974 = vweird.f32 %v11967
    %vm11975 = vmor %vm11973, %vm11974
    %v11976 = vsel %vm11975, %v11967, %v11972
    %v11977 = vrsqrt.pop %v11951
    %v11978 = vmul.f32 %v11977, %v11951
    %v11979 = vmul.f32 %v11978, %v11977
    %v11980 = vmul.f32 0.5, %v11979
    %v11981 = vsub.f32 1.5, %v11980
    %v11982 = vmul.f32 %v11977, %v11981
    %vm11983 = vweird.f32 %v11951
    %vm11984 = vweird.f32 %v11977
    %vm11985 = vmor %vm11983, %vm11984
    %v11986 = vsel %vm11985, %v11977, %v11982
    %v11987 = vrsqrt.pop %v11952
    %v11988 = vmul.f32 %v11987, %v11952
    %v11989 = vmul.f32 %v11988, %v11987
    %v11990 = vmul.f32 0.5, %v11989
    %v11991 = vsub.f32 1.5, %v11990
    %v11992 = vmul.f32 %v11987, %v11991
    %vm11993 = vweird.f32 %v11952
    %vm11994 = vweird.f32 %v11987
    %vm11995 = vmor %vm11993, %vm11994
    %v11996 = vsel %vm11995, %v11987, %v11992
    %v11997 = vrsqrt.pop %v11953
    %v11998 = vmul.f32 %v11997, %v11953
    %v11999 = vmul.f32 %v11998, %v11997
    %v12000 = vmul.f32 0.5, %v11999
    %v12001 = vsub.f32 1.5, %v12000
    %v12002 = vmul.f32 %v11997, %v12001
    %vm12003 = vweird.f32 %v11953
    %vm12004 = vweird.f32 %v11997
    %vm12005 = vmor %vm12003, %vm12004
    %v12006 = vsel %vm12005, %v11997, %v12002
    %v12007 = vrsqrt.pop %v11954
    %v12008 = vmul.f32 %v12007, %v11954
    %v12009 = vmul.f32 %v12008, %v12007
    %v12010 = vmul.f32 0.5, %v12009
    %v12011 = vsub.f32 1.5, %v12010
    %v12012 = vmul.f32 %v12007, %v12011
    %vm12013 = vweird.f32 %v11954
    %vm12014 = vweird.f32 %v12007
    %vm12015 = vmor %vm12013, %vm12014
    %v12016 = vsel %vm12015, %v12007, %v12012
    %v12017 = vrsqrt.pop %v11955
    %v12018 = vmul.f32 %v12017, %v11955
    %v12019 = vmul.f32 %v12018, %v12017
    %v12020 = vmul.f32 0.5, %v12019
    %v12021 = vsub.f32 1.5, %v12020
    %v12022 = vmul.f32 %v12017, %v12021
    %vm12023 = vweird.f32 %v11955
    %vm12024 = vweird.f32 %v12017
    %vm12025 = vmor %vm12023, %vm12024
    %v12026 = vsel %vm12025, %v12017, %v12022
    %v12027 = vrsqrt.pop %v11956
    %v12028 = vmul.f32 %v12027, %v11956
    %v12029 = vmul.f32 %v12028, %v12027
    %v12030 = vmul.f32 0.5, %v12029
    %v12031 = vsub.f32 1.5, %v12030
    %v12032 = vmul.f32 %v12027, %v12031
    %vm12033 = vweird.f32 %v11956
    %vm12034 = vweird.f32 %v12027
    %vm12035 = vmor %vm12033, %vm12034
    %v12036 = vsel %vm12035, %v12027, %v12032
    %v12037 = vmul.f32 %v11901, %v11966
    %v12038 = vmul.f32 %v11902, %v11976
    %v12039 = vmul.f32 %v11903, %v11986
    %v12040 = vmul.f32 %v11904, %v11996
    %v12041 = vmul.f32 %v11905, %v12006
    %v12042 = vmul.f32 %v11906, %v12016
    %v12043 = vmul.f32 %v11907, %v12026
    %v12044 = vmul.f32 %v11908, %v12036
    %v12045 = vperm.slane %v95, 6
    %v12046 = vmul.f32 %v12037, %v12045
    %v12047 = vmul.f32 %v12038, %v12045
    %v12048 = vmul.f32 %v12039, %v12045
    %v12049 = vmul.f32 %v12040, %v12045
    %v12050 = vmul.f32 %v12041, %v12045
    %v12051 = vmul.f32 %v12042, %v12045
    %v12052 = vmul.f32 %v12043, %v12045
    %v12053 = vmul.f32 %v12044, %v12045
    %v12054 = vperm.slane %v95, 7
    %v12055 = vadd.f32 %v12046, %v12054
    %v12056 = vadd.f32 %v12047, %v12054
    %v12057 = vadd.f32 %v12048, %v12054
    %v12058 = vadd.f32 %v12049, %v12054
    %v12059 = vadd.f32 %v12050, %v12054
    %v12060 = vadd.f32 %v12051, %v12054
    %v12061 = vadd.f32 %v12052, %v12054
    %v12062 = vadd.f32 %v12053, %v12054
    %v12063 = vmax.f32 %v12055, 0.0
    %v12064 = vmax.f32 %v12056, 0.0
    %v12065 = vmax.f32 %v12057, 0.0
    %v12066 = vmax.f32 %v12058, 0.0
    %v12067 = vmax.f32 %v12059, 0.0
    %v12068 = vmax.f32 %v12060, 0.0
    %v12069 = vmax.f32 %v12061, 0.0
    %v12070 = vmax.f32 %v12062, 0.0
    %12071 = vst.msk [vmem:[%s10] sm:$0xff] %vm46, %v12063
    %12072 = vst.msk [vmem:[%s10 + $0x8] sm:$0xff] %vm46, %v12064
    %12073 = vst.msk [vmem:[%s10 + $0x10] sm:$0xff] %vm46, %v12065
    %12074 = vst.msk [vmem:[%s10 + $0x18] sm:$0xff] %vm46, %v12066
    %12075 = vst.msk [vmem:[%s10 + $0x20] sm:$0xff] %vm46, %v12067
    %12076 = vst.msk [vmem:[%s10 + $0x28] sm:$0xff] %vm46, %v12068
    %12077 = vst.msk [vmem:[%s10 + $0x30] sm:$0xff] %vm46, %v12069
    %12078 = vst.msk [vmem:[%s10 + $0x38] sm:$0xff] %vm46, %v12070
    // Predicated region
    $region49: #{fancy_conv_forward.1} parent=1 // pred_check
      _
    $region50: #{fancy_conv_forward.1} parent=1 // pred_check_branch
      %12080 = sbr.rel (0) target = $region52
    $region51: #{fancy_conv_forward.1} parent=1 // pred_region
      _
    $region52: #{fancy_conv_forward.1} parent=1 // pred_fallthru
      _
    // Predicated region
    $region53: #{fancy_conv_forward.1} parent=1 // pred_check
      _
    $region54: #{fancy_conv_forward.1} parent=1 // pred_check_branch
      %12082 = sbr.rel (0) target = $region56
    $region55: #{fancy_conv_forward.1} parent=1 // pred_region
      %12084 = vsyncadd [#allocation6], 0
      %s12085 = sshll.u32 [#allocation5], 4
      %s12086 = int_to_ptr.vmem [resolvable:$true] %s12085
      %s12087 = sshll.u32 %s11, 4
      %s12088 = int_to_ptr.hbm [resolvable:$true] %s12087
      %12093 = dma.vmem_to_hbm [thread:$0]  %s12086, 1024, %s12088, [#allocation6], 128, 128, 8
    $region56: #{fancy_conv_forward.1} parent=1 // pred_fallthru
      _
    // Predicated region
    $region57: #{fancy_conv_forward.1} parent=1 // pred_check
      _
    $region58: #{fancy_conv_forward.1} parent=1 // pred_check_branch
      %12095 = sbr.rel (0) target = $region60
    $region59: #{fancy_conv_forward.1} parent=1 // pred_region
      _
    $region60: #{fancy_conv_forward.1} parent=1 // pred_fallthru
      _
    // Predicated region
    $region61: #{fancy_conv_forward.1} parent=1 // pred_check
      _
    $region62: #{fancy_conv_forward.1} parent=1 // pred_check_branch
      %12097 = sbr.rel (0) target = $region64
    $region63: #{fancy_conv_forward.1} parent=1 // pred_region
      %12099 = dma.done [#allocation6], 1024
    $region64: #{fancy_conv_forward.1} parent=1 // pred_fallthru
      _
    %12100 = vsyncpa [#allocation6], 1

</llo_original>
